<compile_context>
chip_gen: v5e
topology: v5e:2x2
jax: 0.10.0
libtpu: 0.0.40
codegen_flags: <defaults>
</compile_context>

<pallas_src>
import numpy as np
import jax
import jax.numpy as jnp
from jax.experimental import pallas as pl
from jax.experimental.pallas import tpu as pltpu


def _cdiv(a, b):
    return (a + b - 1) // b


def _round_up(a, m):
    return _cdiv(a, m) * m


def _posenc_kernel(x_ref, f_ref, p_ref, o_ref):
    # x_ref: (tm, D)        input coordinates (any float dtype; cast to f32)
    # f_ref: (D, mm_dim)    frequency scatter, entries 2^(k-1) (lane-aligned)
    # p_ref: (1, out_dim)   phase bias in "turns": 0 for sin slots, 0.25 for cos
    # o_ref: (tm, out_dim)  exact-width output tile
    x = x_ref[...].astype(jnp.float32)
    # MXU does the coordinate->column scatter; HIGHEST keeps full f32 mantissa
    # of x (powers of two in F are exact), K=D is tiny so extra passes are free.
    y = jnp.dot(x, f_ref[...],
                preferred_element_type=jnp.float32,
                precision=jax.lax.Precision.HIGHEST)
    # Drop lane-padding columns (no-op when out_dim is already 128-aligned),
    # add the cos phase (in turns), then reduce exactly: sin/cos have period 1
    # in "turns" and floor(y+0.5) is an exact integer subtract for |y| < 2^23.
    y = y[:, : o_ref.shape[-1]] + p_ref[...]
    frac = y - jnp.floor(y + 0.5)                 # frac in [-0.5, 0.5]
    o_ref[...] = jnp.sin((2.0 * np.pi) * frac).astype(o_ref.dtype)


def positional_encoder(x, L, data_range=None, *, tm=4096, out_dtype=None):
    """Pallas equivalent of PositionalEncoder(data_range, L).forward(x).

    x: (..., D) float array, assumed normalized to [-1, 1].
    Returns: (..., D * 2 * L) in `out_dtype` (default: x.dtype).
    Per-coordinate layout matches PyTorch: [sin 2^0..2^(L-1) | cos 2^0..2^(L-1)].
    """
    del data_range  # unused in the PyTorch forward as well
    orig_shape = x.shape
    D = orig_shape[-1]
    out_dim = D * 2 * L
    mm_dim = _round_up(out_dim, 128)      # lane-aligned matmul width only
    out_dtype = x.dtype if out_dtype is None else out_dtype

    x2 = x.reshape(-1, D)                 # free (metadata) reshape
    N = x2.shape[0]

    # Row tile: big (amortize ~0.35us/step; this kernel is HBM-write bound on
    # v5e/v6e), but keep >=2 grid steps when there is enough work so the
    # "parallel" axis can shard across v7x's two TensorCores.  Multiple of 16
    # sublanes so f32 and bf16 tiles are both cleanly tiled.
    tm_eff = min(tm, _round_up(N, 16))
    if N >= 512:
        tm_eff = min(tm_eff, _round_up(_cdiv(N, 2), 16))
    tm_eff = max(16, _round_up(tm_eff, 16))
    grid = _cdiv(N, tm_eff)               # last block may be partial (masked)

    # Constant frequency-scatter matrix (2^(k-1), exact in f32) and phase bias
    # (in turns: +0.25 turn == +pi/2 -> cos).  Static glue, plain numpy.
    freqs = (2.0 ** (np.arange(L, dtype=np.float64) - 1.0)).astype(np.float32)
    f_np = np.zeros((D, mm_dim), dtype=np.float32)
    p_np = np.zeros((1, out_dim), dtype=np.float32)
    for d in range(D):
        base = d * 2 * L
        f_np[d, base:base + L] = freqs                 # sin slots
        f_np[d, base + L:base + 2 * L] = freqs         # cos slots
        p_np[0, base + L:base + 2 * L] = 0.25          # cos = sin(. + 1/4 turn)
    f_mat = jnp.asarray(f_np)
    phase = jnp.asarray(p_np)

    out = pl.pallas_call(
        _posenc_kernel,
        out_shape=jax.ShapeDtypeStruct((N, out_dim), out_dtype),
        grid_spec=pltpu.PrefetchScalarGridSpec(
            num_scalar_prefetch=0,
            grid=(grid,),
            in_specs=[
                pl.BlockSpec((tm_eff, D), lambda i: (i, 0)),    # x rows
                pl.BlockSpec((D, mm_dim), lambda i: (0, 0)),    # freq scatter
                pl.BlockSpec((1, out_dim), lambda i: (0, 0)),   # phase bias
            ],
            out_specs=pl.BlockSpec((tm_eff, out_dim), lambda i: (i, 0)),
        ),
        compiler_params=pltpu.CompilerParams(
            dimension_semantics=("parallel",),
        ),
    )(x2, f_mat, phase)

    return out.reshape(*orig_shape[:-1], out_dim)   # metadata-only reshape


def _reference(x, L):
    # Pure-JAX transcription of the PyTorch forward (for verification).
    orig_shape = x.shape
    xp = x.astype(jnp.float32) * jnp.pi
    freqs = 2.0 ** jnp.arange(L, dtype=jnp.float32)
    xf = xp[..., None] * freqs
    embed = jnp.concatenate([jnp.sin(xf), jnp.cos(xf)], axis=-1)
    return embed.reshape(*orig_shape[:-1], -1)


def _per_column_atol(D, L, base=2e-5, arg_ulps=16.0):
    # Both the kernel and the reference round the sin/cos argument at ~ulp of
    # its magnitude (|arg| <= pi*2^k for |x| <= 1); the difference between the
    # two is therefore a few argument-ulps per frequency.  Low frequencies stay
    # at ~1e-5.
    max_arg = np.pi * (2.0 ** np.arange(L, dtype=np.float64))
    slack = base + arg_ulps * max_arg * 2.0 ** -24
    return np.tile(np.concatenate([slack, slack]), D)  # shape (D*2*L,)


if __name__ == "__main__":
    key = jax.random.PRNGKey(0)
    k1, k2 = jax.random.split(key)

    # Config A: canonical NeRF (D=3, L=10) -> out_dim=60 exercises the
    # exact-width (sub-128-lane) store path; N=300 exercises the masked partial
    # boundary block; 3-D input exercises the leading-dim flatten/unflatten.
    La = 10
    xa = jax.random.uniform(k1, (4, 75, 3), dtype=jnp.float32,
                            minval=-1.0, maxval=1.0)
    out_a = jax.block_until_ready(positional_encoder(xa, La, data_range=1.0))
    ref_a = _reference(xa, La)
    assert out_a.shape == (4, 75, 3 * 2 * La), out_a.shape
    tol_a = _per_column_atol(3, La)
    err_a = np.abs(np.asarray(out_a, np.float64) - np.asarray(ref_a, np.float64))
    assert (err_a <= tol_a[None, None, :]).all(), float(err_a.max())

    # Config B: D=4, L=16 -> out_dim=128 already lane-dense (slice is a no-op);
    # N=1024 gives a 2-step "parallel" grid (v7x megacore path).
    Lb = 16
    xb = jax.random.uniform(k2, (1024, 4), dtype=jnp.float32,
                            minval=-1.0, maxval=1.0)
    out_b = jax.block_until_ready(positional_encoder(xb, Lb, data_range=1.0))
    ref_b = _reference(xb, Lb)
    assert out_b.shape == (1024, 4 * 2 * Lb), out_b.shape
    tol_b = _per_column_atol(4, Lb)
    err_b = np.abs(np.asarray(out_b, np.float64) - np.asarray(ref_b, np.float64))
    assert (err_b <= tol_b[None, :]).all(), float(err_b.max())

    # Optional bf16 output (halves HBM write traffic on write-bound v5e/v6e);
    # compute is still f32, only the final store casts.
    out_bf = jax.block_until_ready(
        positional_encoder(xb, Lb, data_range=1.0, out_dtype=jnp.bfloat16))
    assert out_bf.dtype == jnp.bfloat16
    err_bf = np.abs(np.asarray(out_bf, np.float64) - np.asarray(ref_b, np.float64))
    assert (err_bf <= tol_b[None, :] + 8e-3).all(), float(err_bf.max())

    print("KERNEL_OK")
</pallas_src>

<mosaic_0001>
module attributes {stable_mosaic.version = 11 : i64} {
  func.func @_posenc_kernel(%arg0: i32, %arg1: memref<304x3xf32, #tpu.memory_space<vmem>>, %arg2: memref<3x128xf32, #tpu.memory_space<vmem>>, %arg3: memref<1x60xf32, #tpu.memory_space<vmem>>, %arg4: memref<304x60xf32, #tpu.memory_space<vmem>>) attributes {dimension_semantics = [#tpu.dimension_semantics<parallel>], iteration_bounds = array<i64: 1>, scalar_prefetch = 0 : i64, scratch_operands = 0 : i64, tpu.core_type = #tpu.core_type<tc>, window_params = [{transform_indices = @transform_0, window_bounds = array<i64: 304, 3>}, {pipeline_mode = #tpu.pipeline_mode<synchronous>, transform_indices = @transform_1, window_bounds = array<i64: 3, 128>}, {pipeline_mode = #tpu.pipeline_mode<synchronous>, transform_indices = @transform_2, window_bounds = array<i64: 1, 60>}, {transform_indices = @transform_3, window_bounds = array<i64: 304, 60>}]} {
    %c0 = arith.constant 0 : index
    %c0_0 = arith.constant 0 : index
    %0 = vector.load %arg1[%c0, %c0_0] : memref<304x3xf32, #tpu.memory_space<vmem>>, vector<304x3xf32>
    %c0_1 = arith.constant 0 : index
    %c0_2 = arith.constant 0 : index
    %1 = vector.load %arg2[%c0_1, %c0_2] : memref<3x128xf32, #tpu.memory_space<vmem>>, vector<3x128xf32>
    %cst = arith.constant dense<0.000000e+00> : vector<304x128xf32>
    %2 = tpu.matmul %0, %1, %cst {dimension_numbers = #tpu.dot_dimension_numbers<[1], [0], [0], [1], [0, 0, 1, 1], [], []>, precision = #tpu.contract_precision<fp32>} : vector<304x3xf32>, vector<3x128xf32>, vector<304x128xf32> -> vector<304x128xf32>
    %3 = vector.extract_strided_slice %2 {offsets = [0, 0], sizes = [304, 60], strides = [1, 1]} : vector<304x128xf32> to vector<304x60xf32>
    %c0_3 = arith.constant 0 : index
    %c0_4 = arith.constant 0 : index
    %4 = vector.load %arg3[%c0_3, %c0_4] : memref<1x60xf32, #tpu.memory_space<vmem>>, vector<1x60xf32>
    %5 = vector.broadcast %4 : vector<1x60xf32> to vector<304x60xf32>
    %6 = arith.addf %3, %5 : vector<304x60xf32>
    %cst_5 = arith.constant 5.000000e-01 : f32
    %7 = vector.broadcast %cst_5 : f32 to vector<304x60xf32>
    %8 = arith.addf %6, %7 : vector<304x60xf32>
    %9 = math.floor %8 : vector<304x60xf32>
    %10 = arith.subf %6, %9 : vector<304x60xf32>
    %cst_6 = arith.constant 6.28318548 : f32
    %11 = vector.broadcast %cst_6 : f32 to vector<304x60xf32>
    %12 = arith.mulf %11, %10 : vector<304x60xf32>
    %13 = math.sin %12 : vector<304x60xf32>
    %c0_7 = arith.constant 0 : index
    %c0_8 = arith.constant 0 : index
    %14 = vector.load %arg4[%c0_7, %c0_8] : memref<304x60xf32, #tpu.memory_space<vmem>>, vector<304x60xf32>
    tpu.vector_store %arg4[%c0_7, %c0_8], %13 {strides = array<i32>} : memref<304x60xf32, #tpu.memory_space<vmem>>, vector<304x60xf32>,
    return
  }
  func.func @transform_0(%arg0: i32) -> (i32, i32) {
    %c0_i32 = arith.constant 0 : i32
    %c0_i32_0 = arith.constant 0 : i32
    return %arg0, %c0_i32 : i32, i32
  }
  func.func @transform_1(%arg0: i32) -> (i32, i32) {
    %c0_i32 = arith.constant 0 : i32
    %c0_i32_0 = arith.constant 0 : i32
    %c0_i32_1 = arith.constant 0 : i32
    return %c0_i32, %c0_i32_0 : i32, i32
  }
  func.func @transform_2(%arg0: i32) -> (i32, i32) {
    %c0_i32 = arith.constant 0 : i32
    %c0_i32_0 = arith.constant 0 : i32
    %c0_i32_1 = arith.constant 0 : i32
    return %c0_i32, %c0_i32_0 : i32, i32
  }
  func.func @transform_3(%arg0: i32) -> (i32, i32) {
    %c0_i32 = arith.constant 0 : i32
    %c0_i32_0 = arith.constant 0 : i32
    return %arg0, %c0_i32 : i32, i32
  }
}

</mosaic_0001>

<llo_original>
// kernel: tpu_custom_call.1
$region0: #{tpu_custom_call.1}
  #allocation0 [shape = 'u32[]', space=smem, size = 0x4, offset = 0x4, fixed_abs, tag = 'smem constant byte address 0x4 - core index']
  #allocation1 [shape = 'u32[72,128]{1,0:T(1,128)}', space=vmem, size = 0x9000, scoped, tag = 'internal scratch']
  %s0 = inlined_call_operand.vmem [shape: f32[300,3], index: 0, kind: input, shape index: {}]
  %s1 = inlined_call_operand.vmem [shape: f32[3,128], index: 1, kind: input, shape index: {}]
  %s2 = inlined_call_operand.vmem [shape: f32[1,60], index: 2, kind: input, shape index: {}]
  %s3 = inlined_call_operand.vmem [shape: f32[300,60], index: 3, kind: output, shape index: {}]
  %s4 = sld [smem:[#allocation0]]
  $region22: #{tpu_custom_call.1} parent=0
    _
  %s6 = ssub.s32 1, %s4
  %s7 = scalar_select 0, %s6, %s4
  // Predicated region
  $region2: #{tpu_custom_call.1} parent=0 // pred_check
    _
  $region3: #{tpu_custom_call.1} parent=0 // pred_check_branch
    %9 = sbr.rel (0) target = $region5
  $region4: #{tpu_custom_call.1} parent=0 // pred_region
    _
  $region5: #{tpu_custom_call.1} parent=0 // pred_fallthru
    _
  // Predicated region
  $region6: #{tpu_custom_call.1} parent=0 // pred_check
    _
  $region7: #{tpu_custom_call.1} parent=0 // pred_check_branch
    %11 = sbr.rel (0) target = $region9
  $region8: #{tpu_custom_call.1} parent=0 // pred_region
    _
  $region9: #{tpu_custom_call.1} parent=0 // pred_fallthru
    _
  // Predicated region
  $region10: #{tpu_custom_call.1} parent=0 // pred_check
    _
  $region11: #{tpu_custom_call.1} parent=0 // pred_check_branch
    %13 = sbr.rel (0) target = $region13
  $region12: #{tpu_custom_call.1} parent=0 // pred_region
    _
  $region13: #{tpu_custom_call.1} parent=0 // pred_fallthru
    _
  %v14 = vld [vmem:[%s0] sm:$0xff]
  %v15 = vld [vmem:[%s0 + $0x8] sm:$0xff]
  %v16 = vld [vmem:[%s0 + $0x10] sm:$0xff]
  %v17 = vld [vmem:[%s0 + $0x18] sm:$0xff]
  %v18 = vld [vmem:[%s0 + $0x20] sm:$0xff]
  %v19 = vld [vmem:[%s0 + $0x28] sm:$0xff]
  %v20 = vld [vmem:[%s0 + $0x30] sm:$0xff]
  %v21 = vld [vmem:[%s0 + $0x38] sm:$0xff]
  %v22 = vld [vmem:[%s0 + $0x40] sm:$0xff]
  %v23 = vld [vmem:[%s0 + $0x48] sm:$0xff]
  %v24 = vld [vmem:[%s0 + $0x50] sm:$0xff]
  %v25 = vld [vmem:[%s0 + $0x58] sm:$0xff]
  %v26 = vld [vmem:[%s0 + $0x60] sm:$0xff]
  %v27 = vld [vmem:[%s0 + $0x68] sm:$0xff]
  %v28 = vld [vmem:[%s0 + $0x70] sm:$0xff]
  %v29 = vld [vmem:[%s0 + $0x78] sm:$0xff]
  %v30 = vld [vmem:[%s0 + $0x80] sm:$0xff]
  %v31 = vld [vmem:[%s0 + $0x88] sm:$0xff]
  %v32 = vld [vmem:[%s0 + $0x90] sm:$0xff]
  %v33 = vld [vmem:[%s0 + $0x98] sm:$0xff]
  %v34 = vld [vmem:[%s0 + $0xa0] sm:$0xff]
  %v35 = vld [vmem:[%s0 + $0xa8] sm:$0xff]
  %v36 = vld [vmem:[%s0 + $0xb0] sm:$0xff]
  %v37 = vld [vmem:[%s0 + $0xb8] sm:$0xff]
  %v38 = vld [vmem:[%s0 + $0xc0] sm:$0xff]
  %v39 = vld [vmem:[%s0 + $0xc8] sm:$0xff]
  %v40 = vld [vmem:[%s0 + $0xd0] sm:$0xff]
  %v41 = vld [vmem:[%s0 + $0xd8] sm:$0xff]
  %v42 = vld [vmem:[%s0 + $0xe0] sm:$0xff]
  %v43 = vld [vmem:[%s0 + $0xe8] sm:$0xff]
  %v44 = vld [vmem:[%s0 + $0xf0] sm:$0xff]
  %v45 = vld [vmem:[%s0 + $0xf8] sm:$0xff]
  %v46 = vld [vmem:[%s0 + $0x100] sm:$0xff]
  %v47 = vld [vmem:[%s0 + $0x108] sm:$0xff]
  %v48 = vld [vmem:[%s0 + $0x110] sm:$0xff]
  %v49 = vld [vmem:[%s0 + $0x118] sm:$0xff]
  %v50 = vld [vmem:[%s0 + $0x120] sm:$0xff]
  %v51 = vld [vmem:[%s0 + $0x128] sm:$0xff]
  %v52 = vld [vmem:[%s1] sm:$0x7]
  %vm53 = vcmask 23552
  %v55 = vsel %vm53, %v14, 0
  %v58 = vsel %vm53, %v15, 0
  %v61 = vsel %vm53, %v16, 0
  %v64 = vsel %vm53, %v17, 0
  %v67 = vsel %vm53, %v18, 0
  %v70 = vsel %vm53, %v19, 0
  %v73 = vsel %vm53, %v20, 0
  %v76 = vsel %vm53, %v21, 0
  %v79 = vsel %vm53, %v22, 0
  %v82 = vsel %vm53, %v23, 0
  %v85 = vsel %vm53, %v24, 0
  %v88 = vsel %vm53, %v25, 0
  %v91 = vsel %vm53, %v26, 0
  %v94 = vsel %vm53, %v27, 0
  %v97 = vsel %vm53, %v28, 0
  %v100 = vsel %vm53, %v29, 0
  %v103 = vsel %vm53, %v30, 0
  %v106 = vsel %vm53, %v31, 0
  %v109 = vsel %vm53, %v32, 0
  %v112 = vsel %vm53, %v33, 0
  %v115 = vsel %vm53, %v34, 0
  %v118 = vsel %vm53, %v35, 0
  %v121 = vsel %vm53, %v36, 0
  %v124 = vsel %vm53, %v37, 0
  %v127 = vsel %vm53, %v38, 0
  %v130 = vsel %vm53, %v39, 0
  %v133 = vsel %vm53, %v40, 0
  %v136 = vsel %vm53, %v41, 0
  %v139 = vsel %vm53, %v42, 0
  %v142 = vsel %vm53, %v43, 0
  %v145 = vsel %vm53, %v44, 0
  %v148 = vsel %vm53, %v45, 0
  %v151 = vsel %vm53, %v46, 0
  %v154 = vsel %vm53, %v47, 0
  %v157 = vsel %vm53, %v48, 0
  %v160 = vsel %vm53, %v49, 0
  %v163 = vsel %vm53, %v50, 0
  %v166 = vsel %vm53, %v51, 0
  %vm168 = vcmask 1042432
  %v170 = vsel %vm168, %v52, 0
  %172 = vmatpush.msra.mxu0 0.0
  %173 = vmatpush.msra.mxu0 0.0
  %174 = vmatpush.msra.mxu0 0.0
  %175 = vmatpush.msra.mxu0 0.0
  %176 = vmatpush.msra.mxu0 0.0
  %177 = vmatpush.msra.mxu0 0.0
  %178 = vmatpush.msra.mxu0 0.0
  %179 = vmatpush.msra.mxu0 0.0
  %180 = vmatpush.msra.mxu0 0.0
  %181 = vmatpush.msra.mxu0 0.0
  %182 = vmatpush.msra.mxu0 0.0
  %183 = vmatpush.msra.mxu0 0.0
  %184 = vmatpush.msra.mxu0 0.0
  %185 = vmatpush.msra.mxu0 0.0
  %186 = vmatpush.msra.mxu0 0.0
  %v187 = vand.u32 %v170, 4294901760
  %188 = vmatpush.msra.mxu0 %v187
  %v189 = vand.u32 %v55, 4294901760
  %v190 = vsub.f32 %v55, %v189
  %v191 = vand.u32 %v190, 4294901760
  %v192 = vsub.f32 %v190, %v191
  %v193 = vand.u32 %v192, 4294901760
  %194 = vmatmul.f32.gmra.mxu0 %v193
  %v195 = vpop.f32.mrf.mxu0
  %v196 = vadd.f32 0.0, %v195
  %v197 = vand.u32 %v58, 4294901760
  %v198 = vsub.f32 %v58, %v197
  %v199 = vand.u32 %v198, 4294901760
  %v200 = vsub.f32 %v198, %v199
  %v201 = vand.u32 %v200, 4294901760
  %202 = vmatmul.f32.gmra.mxu0 %v201
  %v203 = vpop.f32.mrf.mxu0
  %v204 = vadd.f32 0.0, %v203
  %v205 = vand.u32 %v61, 4294901760
  %v206 = vsub.f32 %v61, %v205
  %v207 = vand.u32 %v206, 4294901760
  %v208 = vsub.f32 %v206, %v207
  %v209 = vand.u32 %v208, 4294901760
  %210 = vmatmul.f32.gmra.mxu0 %v209
  %v211 = vpop.f32.mrf.mxu0
  %v212 = vadd.f32 0.0, %v211
  %v213 = vand.u32 %v64, 4294901760
  %v214 = vsub.f32 %v64, %v213
  %v215 = vand.u32 %v214, 4294901760
  %v216 = vsub.f32 %v214, %v215
  %v217 = vand.u32 %v216, 4294901760
  %218 = vmatmul.f32.gmra.mxu0 %v217
  %v219 = vpop.f32.mrf.mxu0
  %v220 = vadd.f32 0.0, %v219
  %v221 = vand.u32 %v67, 4294901760
  %v222 = vsub.f32 %v67, %v221
  %v223 = vand.u32 %v222, 4294901760
  %v224 = vsub.f32 %v222, %v223
  %v225 = vand.u32 %v224, 4294901760
  %226 = vmatmul.f32.gmra.mxu0 %v225
  %v227 = vpop.f32.mrf.mxu0
  %v228 = vadd.f32 0.0, %v227
  %v229 = vand.u32 %v70, 4294901760
  %v230 = vsub.f32 %v70, %v229
  %v231 = vand.u32 %v230, 4294901760
  %v232 = vsub.f32 %v230, %v231
  %v233 = vand.u32 %v232, 4294901760
  %234 = vmatmul.f32.gmra.mxu0 %v233
  %v235 = vpop.f32.mrf.mxu0
  %v236 = vadd.f32 0.0, %v235
  %v237 = vand.u32 %v73, 4294901760
  %v238 = vsub.f32 %v73, %v237
  %v239 = vand.u32 %v238, 4294901760
  %v240 = vsub.f32 %v238, %v239
  %v241 = vand.u32 %v240, 4294901760
  %242 = vmatmul.f32.gmra.mxu0 %v241
  %v243 = vpop.f32.mrf.mxu0
  %v244 = vadd.f32 0.0, %v243
  %v245 = vand.u32 %v76, 4294901760
  %v246 = vsub.f32 %v76, %v245
  %v247 = vand.u32 %v246, 4294901760
  %v248 = vsub.f32 %v246, %v247
  %v249 = vand.u32 %v248, 4294901760
  %250 = vmatmul.f32.gmra.mxu0 %v249
  %v251 = vpop.f32.mrf.mxu0
  %v252 = vadd.f32 0.0, %v251
  %v253 = vand.u32 %v79, 4294901760
  %v254 = vsub.f32 %v79, %v253
  %v255 = vand.u32 %v254, 4294901760
  %v256 = vsub.f32 %v254, %v255
  %v257 = vand.u32 %v256, 4294901760
  %258 = vmatmul.f32.gmra.mxu0 %v257
  %v259 = vpop.f32.mrf.mxu0
  %v260 = vadd.f32 0.0, %v259
  %v261 = vand.u32 %v82, 4294901760
  %v262 = vsub.f32 %v82, %v261
  %v263 = vand.u32 %v262, 4294901760
  %v264 = vsub.f32 %v262, %v263
  %v265 = vand.u32 %v264, 4294901760
  %266 = vmatmul.f32.gmra.mxu0 %v265
  %v267 = vpop.f32.mrf.mxu0
  %v268 = vadd.f32 0.0, %v267
  %v269 = vand.u32 %v85, 4294901760
  %v270 = vsub.f32 %v85, %v269
  %v271 = vand.u32 %v270, 4294901760
  %v272 = vsub.f32 %v270, %v271
  %v273 = vand.u32 %v272, 4294901760
  %274 = vmatmul.f32.gmra.mxu0 %v273
  %v275 = vpop.f32.mrf.mxu0
  %v276 = vadd.f32 0.0, %v275
  %v277 = vand.u32 %v88, 4294901760
  %v278 = vsub.f32 %v88, %v277
  %v279 = vand.u32 %v278, 4294901760
  %v280 = vsub.f32 %v278, %v279
  %v281 = vand.u32 %v280, 4294901760
  %282 = vmatmul.f32.gmra.mxu0 %v281
  %v283 = vpop.f32.mrf.mxu0
  %v284 = vadd.f32 0.0, %v283
  %v285 = vand.u32 %v91, 4294901760
  %v286 = vsub.f32 %v91, %v285
  %v287 = vand.u32 %v286, 4294901760
  %v288 = vsub.f32 %v286, %v287
  %v289 = vand.u32 %v288, 4294901760
  %290 = vmatmul.f32.gmra.mxu0 %v289
  %v291 = vpop.f32.mrf.mxu0
  %v292 = vadd.f32 0.0, %v291
  %v293 = vand.u32 %v94, 4294901760
  %v294 = vsub.f32 %v94, %v293
  %v295 = vand.u32 %v294, 4294901760
  %v296 = vsub.f32 %v294, %v295
  %v297 = vand.u32 %v296, 4294901760
  %298 = vmatmul.f32.gmra.mxu0 %v297
  %v299 = vpop.f32.mrf.mxu0
  %v300 = vadd.f32 0.0, %v299
  %v301 = vand.u32 %v97, 4294901760
  %v302 = vsub.f32 %v97, %v301
  %v303 = vand.u32 %v302, 4294901760
  %v304 = vsub.f32 %v302, %v303
  %v305 = vand.u32 %v304, 4294901760
  %306 = vmatmul.f32.gmra.mxu0 %v305
  %v307 = vpop.f32.mrf.mxu0
  %v308 = vadd.f32 0.0, %v307
  %v309 = vand.u32 %v100, 4294901760
  %v310 = vsub.f32 %v100, %v309
  %v311 = vand.u32 %v310, 4294901760
  %v312 = vsub.f32 %v310, %v311
  %v313 = vand.u32 %v312, 4294901760
  %314 = vmatmul.f32.gmra.mxu0 %v313
  %v315 = vpop.f32.mrf.mxu0
  %v316 = vadd.f32 0.0, %v315
  %v317 = vand.u32 %v103, 4294901760
  %v318 = vsub.f32 %v103, %v317
  %v319 = vand.u32 %v318, 4294901760
  %v320 = vsub.f32 %v318, %v319
  %v321 = vand.u32 %v320, 4294901760
  %322 = vmatmul.f32.gmra.mxu0 %v321
  %v323 = vpop.f32.mrf.mxu0
  %v324 = vadd.f32 0.0, %v323
  %v325 = vand.u32 %v106, 4294901760
  %v326 = vsub.f32 %v106, %v325
  %v327 = vand.u32 %v326, 4294901760
  %v328 = vsub.f32 %v326, %v327
  %v329 = vand.u32 %v328, 4294901760
  %330 = vmatmul.f32.gmra.mxu0 %v329
  %v331 = vpop.f32.mrf.mxu0
  %v332 = vadd.f32 0.0, %v331
  %v333 = vand.u32 %v109, 4294901760
  %v334 = vsub.f32 %v109, %v333
  %v335 = vand.u32 %v334, 4294901760
  %v336 = vsub.f32 %v334, %v335
  %v337 = vand.u32 %v336, 4294901760
  %338 = vmatmul.f32.gmra.mxu0 %v337
  %v339 = vpop.f32.mrf.mxu0
  %v340 = vadd.f32 0.0, %v339
  %v341 = vand.u32 %v112, 4294901760
  %v342 = vsub.f32 %v112, %v341
  %v343 = vand.u32 %v342, 4294901760
  %v344 = vsub.f32 %v342, %v343
  %v345 = vand.u32 %v344, 4294901760
  %346 = vmatmul.f32.gmra.mxu0 %v345
  %v347 = vpop.f32.mrf.mxu0
  %v348 = vadd.f32 0.0, %v347
  %v349 = vand.u32 %v115, 4294901760
  %v350 = vsub.f32 %v115, %v349
  %v351 = vand.u32 %v350, 4294901760
  %v352 = vsub.f32 %v350, %v351
  %v353 = vand.u32 %v352, 4294901760
  %354 = vmatmul.f32.gmra.mxu0 %v353
  %v355 = vpop.f32.mrf.mxu0
  %v356 = vadd.f32 0.0, %v355
  %v357 = vand.u32 %v118, 4294901760
  %v358 = vsub.f32 %v118, %v357
  %v359 = vand.u32 %v358, 4294901760
  %v360 = vsub.f32 %v358, %v359
  %v361 = vand.u32 %v360, 4294901760
  %362 = vmatmul.f32.gmra.mxu0 %v361
  %v363 = vpop.f32.mrf.mxu0
  %v364 = vadd.f32 0.0, %v363
  %v365 = vand.u32 %v121, 4294901760
  %v366 = vsub.f32 %v121, %v365
  %v367 = vand.u32 %v366, 4294901760
  %v368 = vsub.f32 %v366, %v367
  %v369 = vand.u32 %v368, 4294901760
  %370 = vmatmul.f32.gmra.mxu0 %v369
  %v371 = vpop.f32.mrf.mxu0
  %v372 = vadd.f32 0.0, %v371
  %v373 = vand.u32 %v124, 4294901760
  %v374 = vsub.f32 %v124, %v373
  %v375 = vand.u32 %v374, 4294901760
  %v376 = vsub.f32 %v374, %v375
  %v377 = vand.u32 %v376, 4294901760
  %378 = vmatmul.f32.gmra.mxu0 %v377
  %v379 = vpop.f32.mrf.mxu0
  %v380 = vadd.f32 0.0, %v379
  %v381 = vand.u32 %v127, 4294901760
  %v382 = vsub.f32 %v127, %v381
  %v383 = vand.u32 %v382, 4294901760
  %v384 = vsub.f32 %v382, %v383
  %v385 = vand.u32 %v384, 4294901760
  %386 = vmatmul.f32.gmra.mxu0 %v385
  %v387 = vpop.f32.mrf.mxu0
  %v388 = vadd.f32 0.0, %v387
  %v389 = vand.u32 %v130, 4294901760
  %v390 = vsub.f32 %v130, %v389
  %v391 = vand.u32 %v390, 4294901760
  %v392 = vsub.f32 %v390, %v391
  %v393 = vand.u32 %v392, 4294901760
  %394 = vmatmul.f32.gmra.mxu0 %v393
  %v395 = vpop.f32.mrf.mxu0
  %v396 = vadd.f32 0.0, %v395
  %v397 = vand.u32 %v133, 4294901760
  %v398 = vsub.f32 %v133, %v397
  %v399 = vand.u32 %v398, 4294901760
  %v400 = vsub.f32 %v398, %v399
  %v401 = vand.u32 %v400, 4294901760
  %402 = vmatmul.f32.gmra.mxu0 %v401
  %v403 = vpop.f32.mrf.mxu0
  %v404 = vadd.f32 0.0, %v403
  %v405 = vand.u32 %v136, 4294901760
  %v406 = vsub.f32 %v136, %v405
  %v407 = vand.u32 %v406, 4294901760
  %v408 = vsub.f32 %v406, %v407
  %v409 = vand.u32 %v408, 4294901760
  %410 = vmatmul.f32.gmra.mxu0 %v409
  %v411 = vpop.f32.mrf.mxu0
  %v412 = vadd.f32 0.0, %v411
  %v413 = vand.u32 %v139, 4294901760
  %v414 = vsub.f32 %v139, %v413
  %v415 = vand.u32 %v414, 4294901760
  %v416 = vsub.f32 %v414, %v415
  %v417 = vand.u32 %v416, 4294901760
  %418 = vmatmul.f32.gmra.mxu0 %v417
  %v419 = vpop.f32.mrf.mxu0
  %v420 = vadd.f32 0.0, %v419
  %v421 = vand.u32 %v142, 4294901760
  %v422 = vsub.f32 %v142, %v421
  %v423 = vand.u32 %v422, 4294901760
  %v424 = vsub.f32 %v422, %v423
  %v425 = vand.u32 %v424, 4294901760
  %426 = vmatmul.f32.gmra.mxu0 %v425
  %v427 = vpop.f32.mrf.mxu0
  %v428 = vadd.f32 0.0, %v427
  %v429 = vand.u32 %v145, 4294901760
  %v430 = vsub.f32 %v145, %v429
  %v431 = vand.u32 %v430, 4294901760
  %v432 = vsub.f32 %v430, %v431
  %v433 = vand.u32 %v432, 4294901760
  %434 = vmatmul.f32.gmra.mxu0 %v433
  %v435 = vpop.f32.mrf.mxu0
  %v436 = vadd.f32 0.0, %v435
  %v437 = vand.u32 %v148, 4294901760
  %v438 = vsub.f32 %v148, %v437
  %v439 = vand.u32 %v438, 4294901760
  %v440 = vsub.f32 %v438, %v439
  %v441 = vand.u32 %v440, 4294901760
  %442 = vmatmul.f32.gmra.mxu0 %v441
  %v443 = vpop.f32.mrf.mxu0
  %v444 = vadd.f32 0.0, %v443
  %v445 = vand.u32 %v151, 4294901760
  %v446 = vsub.f32 %v151, %v445
  %v447 = vand.u32 %v446, 4294901760
  %v448 = vsub.f32 %v446, %v447
  %v449 = vand.u32 %v448, 4294901760
  %450 = vmatmul.f32.gmra.mxu0 %v449
  %v451 = vpop.f32.mrf.mxu0
  %v452 = vadd.f32 0.0, %v451
  %v453 = vand.u32 %v154, 4294901760
  %v454 = vsub.f32 %v154, %v453
  %v455 = vand.u32 %v454, 4294901760
  %v456 = vsub.f32 %v454, %v455
  %v457 = vand.u32 %v456, 4294901760
  %458 = vmatmul.f32.gmra.mxu0 %v457
  %v459 = vpop.f32.mrf.mxu0
  %v460 = vadd.f32 0.0, %v459
  %v461 = vand.u32 %v157, 4294901760
  %v462 = vsub.f32 %v157, %v461
  %v463 = vand.u32 %v462, 4294901760
  %v464 = vsub.f32 %v462, %v463
  %v465 = vand.u32 %v464, 4294901760
  %466 = vmatmul.f32.gmra.mxu0 %v465
  %v467 = vpop.f32.mrf.mxu0
  %v468 = vadd.f32 0.0, %v467
  %v469 = vand.u32 %v160, 4294901760
  %v470 = vsub.f32 %v160, %v469
  %v471 = vand.u32 %v470, 4294901760
  %v472 = vsub.f32 %v470, %v471
  %v473 = vand.u32 %v472, 4294901760
  %474 = vmatmul.f32.gmra.mxu0 %v473
  %v475 = vpop.f32.mrf.mxu0
  %v476 = vadd.f32 0.0, %v475
  %v477 = vand.u32 %v163, 4294901760
  %v478 = vsub.f32 %v163, %v477
  %v479 = vand.u32 %v478, 4294901760
  %v480 = vsub.f32 %v478, %v479
  %v481 = vand.u32 %v480, 4294901760
  %482 = vmatmul.f32.gmra.mxu0 %v481
  %v483 = vpop.f32.mrf.mxu0
  %v484 = vadd.f32 0.0, %v483
  %v485 = vand.u32 %v166, 4294901760
  %v486 = vsub.f32 %v166, %v485
  %v487 = vand.u32 %v486, 4294901760
  %v488 = vsub.f32 %v486, %v487
  %v489 = vand.u32 %v488, 4294901760
  %490 = vmatmul.f32.gmra.mxu0 %v489
  %v491 = vpop.f32.mrf.mxu0
  %v492 = vadd.f32 0.0, %v491
  %493 = vdwg.mxu0
  %494 = vmatpush.msra.mxu0 0.0
  %495 = vmatpush.msra.mxu0 0.0
  %496 = vmatpush.msra.mxu0 0.0
  %497 = vmatpush.msra.mxu0 0.0
  %498 = vmatpush.msra.mxu0 0.0
  %499 = vmatpush.msra.mxu0 0.0
  %500 = vmatpush.msra.mxu0 0.0
  %501 = vmatpush.msra.mxu0 0.0
  %502 = vmatpush.msra.mxu0 0.0
  %503 = vmatpush.msra.mxu0 0.0
  %504 = vmatpush.msra.mxu0 0.0
  %505 = vmatpush.msra.mxu0 0.0
  %506 = vmatpush.msra.mxu0 0.0
  %507 = vmatpush.msra.mxu0 0.0
  %508 = vmatpush.msra.mxu0 0.0
  %v509 = vand.u32 %v170, 4294901760
  %v510 = vsub.f32 %v170, %v509
  %v511 = vand.u32 %v510, 4294901760
  %v512 = vsub.f32 %v510, %v511
  %v513 = vand.u32 %v512, 4294901760
  %514 = vmatpush.msra.mxu0 %v513
  %v515 = vand.u32 %v55, 4294901760
  %516 = vmatmul.f32.gmra.mxu0 %v515
  %v517 = vpop.f32.mrf.mxu0
  %v518 = vadd.f32 %v196, %v517
  %v519 = vand.u32 %v58, 4294901760
  %520 = vmatmul.f32.gmra.mxu0 %v519
  %v521 = vpop.f32.mrf.mxu0
  %v522 = vadd.f32 %v204, %v521
  %v523 = vand.u32 %v61, 4294901760
  %524 = vmatmul.f32.gmra.mxu0 %v523
  %v525 = vpop.f32.mrf.mxu0
  %v526 = vadd.f32 %v212, %v525
  %v527 = vand.u32 %v64, 4294901760
  %528 = vmatmul.f32.gmra.mxu0 %v527
  %v529 = vpop.f32.mrf.mxu0
  %v530 = vadd.f32 %v220, %v529
  %v531 = vand.u32 %v67, 4294901760
  %532 = vmatmul.f32.gmra.mxu0 %v531
  %v533 = vpop.f32.mrf.mxu0
  %v534 = vadd.f32 %v228, %v533
  %v535 = vand.u32 %v70, 4294901760
  %536 = vmatmul.f32.gmra.mxu0 %v535
  %v537 = vpop.f32.mrf.mxu0
  %v538 = vadd.f32 %v236, %v537
  %v539 = vand.u32 %v73, 4294901760
  %540 = vmatmul.f32.gmra.mxu0 %v539
  %v541 = vpop.f32.mrf.mxu0
  %v542 = vadd.f32 %v244, %v541
  %v543 = vand.u32 %v76, 4294901760
  %544 = vmatmul.f32.gmra.mxu0 %v543
  %v545 = vpop.f32.mrf.mxu0
  %v546 = vadd.f32 %v252, %v545
  %v547 = vand.u32 %v79, 4294901760
  %548 = vmatmul.f32.gmra.mxu0 %v547
  %v549 = vpop.f32.mrf.mxu0
  %v550 = vadd.f32 %v260, %v549
  %v551 = vand.u32 %v82, 4294901760
  %552 = vmatmul.f32.gmra.mxu0 %v551
  %v553 = vpop.f32.mrf.mxu0
  %v554 = vadd.f32 %v268, %v553
  %v555 = vand.u32 %v85, 4294901760
  %556 = vmatmul.f32.gmra.mxu0 %v555
  %v557 = vpop.f32.mrf.mxu0
  %v558 = vadd.f32 %v276, %v557
  %v559 = vand.u32 %v88, 4294901760
  %560 = vmatmul.f32.gmra.mxu0 %v559
  %v561 = vpop.f32.mrf.mxu0
  %v562 = vadd.f32 %v284, %v561
  %v563 = vand.u32 %v91, 4294901760
  %564 = vmatmul.f32.gmra.mxu0 %v563
  %v565 = vpop.f32.mrf.mxu0
  %v566 = vadd.f32 %v292, %v565
  %v567 = vand.u32 %v94, 4294901760
  %568 = vmatmul.f32.gmra.mxu0 %v567
  %v569 = vpop.f32.mrf.mxu0
  %v570 = vadd.f32 %v300, %v569
  %v571 = vand.u32 %v97, 4294901760
  %572 = vmatmul.f32.gmra.mxu0 %v571
  %v573 = vpop.f32.mrf.mxu0
  %v574 = vadd.f32 %v308, %v573
  %v575 = vand.u32 %v100, 4294901760
  %576 = vmatmul.f32.gmra.mxu0 %v575
  %v577 = vpop.f32.mrf.mxu0
  %v578 = vadd.f32 %v316, %v577
  %v579 = vand.u32 %v103, 4294901760
  %580 = vmatmul.f32.gmra.mxu0 %v579
  %v581 = vpop.f32.mrf.mxu0
  %v582 = vadd.f32 %v324, %v581
  %v583 = vand.u32 %v106, 4294901760
  %584 = vmatmul.f32.gmra.mxu0 %v583
  %v585 = vpop.f32.mrf.mxu0
  %v586 = vadd.f32 %v332, %v585
  %v587 = vand.u32 %v109, 4294901760
  %588 = vmatmul.f32.gmra.mxu0 %v587
  %v589 = vpop.f32.mrf.mxu0
  %v590 = vadd.f32 %v340, %v589
  %v591 = vand.u32 %v112, 4294901760
  %592 = vmatmul.f32.gmra.mxu0 %v591
  %v593 = vpop.f32.mrf.mxu0
  %v594 = vadd.f32 %v348, %v593
  %v595 = vand.u32 %v115, 4294901760
  %596 = vmatmul.f32.gmra.mxu0 %v595
  %v597 = vpop.f32.mrf.mxu0
  %v598 = vadd.f32 %v356, %v597
  %v599 = vand.u32 %v118, 4294901760
  %600 = vmatmul.f32.gmra.mxu0 %v599
  %v601 = vpop.f32.mrf.mxu0
  %v602 = vadd.f32 %v364, %v601
  %v603 = vand.u32 %v121, 4294901760
  %604 = vmatmul.f32.gmra.mxu0 %v603
  %v605 = vpop.f32.mrf.mxu0
  %v606 = vadd.f32 %v372, %v605
  %v607 = vand.u32 %v124, 4294901760
  %608 = vmatmul.f32.gmra.mxu0 %v607
  %v609 = vpop.f32.mrf.mxu0
  %v610 = vadd.f32 %v380, %v609
  %v611 = vand.u32 %v127, 4294901760
  %612 = vmatmul.f32.gmra.mxu0 %v611
  %v613 = vpop.f32.mrf.mxu0
  %v614 = vadd.f32 %v388, %v613
  %v615 = vand.u32 %v130, 4294901760
  %616 = vmatmul.f32.gmra.mxu0 %v615
  %v617 = vpop.f32.mrf.mxu0
  %v618 = vadd.f32 %v396, %v617
  %v619 = vand.u32 %v133, 4294901760
  %620 = vmatmul.f32.gmra.mxu0 %v619
  %v621 = vpop.f32.mrf.mxu0
  %v622 = vadd.f32 %v404, %v621
  %v623 = vand.u32 %v136, 4294901760
  %624 = vmatmul.f32.gmra.mxu0 %v623
  %v625 = vpop.f32.mrf.mxu0
  %v626 = vadd.f32 %v412, %v625
  %v627 = vand.u32 %v139, 4294901760
  %628 = vmatmul.f32.gmra.mxu0 %v627
  %v629 = vpop.f32.mrf.mxu0
  %v630 = vadd.f32 %v420, %v629
  %v631 = vand.u32 %v142, 4294901760
  %632 = vmatmul.f32.gmra.mxu0 %v631
  %v633 = vpop.f32.mrf.mxu0
  %v634 = vadd.f32 %v428, %v633
  %v635 = vand.u32 %v145, 4294901760
  %636 = vmatmul.f32.gmra.mxu0 %v635
  %v637 = vpop.f32.mrf.mxu0
  %v638 = vadd.f32 %v436, %v637
  %v639 = vand.u32 %v148, 4294901760
  %640 = vmatmul.f32.gmra.mxu0 %v639
  %v641 = vpop.f32.mrf.mxu0
  %v642 = vadd.f32 %v444, %v641
  %v643 = vand.u32 %v151, 4294901760
  %644 = vmatmul.f32.gmra.mxu0 %v643
  %v645 = vpop.f32.mrf.mxu0
  %v646 = vadd.f32 %v452, %v645
  %v647 = vand.u32 %v154, 4294901760
  %648 = vmatmul.f32.gmra.mxu0 %v647
  %v649 = vpop.f32.mrf.mxu0
  %v650 = vadd.f32 %v460, %v649
  %v651 = vand.u32 %v157, 4294901760
  %652 = vmatmul.f32.gmra.mxu0 %v651
  %v653 = vpop.f32.mrf.mxu0
  %v654 = vadd.f32 %v468, %v653
  %v655 = vand.u32 %v160, 4294901760
  %656 = vmatmul.f32.gmra.mxu0 %v655
  %v657 = vpop.f32.mrf.mxu0
  %v658 = vadd.f32 %v476, %v657
  %v659 = vand.u32 %v163, 4294901760
  %660 = vmatmul.f32.gmra.mxu0 %v659
  %v661 = vpop.f32.mrf.mxu0
  %v662 = vadd.f32 %v484, %v661
  %v663 = vand.u32 %v166, 4294901760
  %664 = vmatmul.f32.gmra.mxu0 %v663
  %v665 = vpop.f32.mrf.mxu0
  %v666 = vadd.f32 %v492, %v665
  %667 = vdwg.mxu0
  %668 = vmatpush.msra.mxu0 0.0
  %669 = vmatpush.msra.mxu0 0.0
  %670 = vmatpush.msra.mxu0 0.0
  %671 = vmatpush.msra.mxu0 0.0
  %672 = vmatpush.msra.mxu0 0.0
  %673 = vmatpush.msra.mxu0 0.0
  %674 = vmatpush.msra.mxu0 0.0
  %675 = vmatpush.msra.mxu0 0.0
  %676 = vmatpush.msra.mxu0 0.0
  %677 = vmatpush.msra.mxu0 0.0
  %678 = vmatpush.msra.mxu0 0.0
  %679 = vmatpush.msra.mxu0 0.0
  %680 = vmatpush.msra.mxu0 0.0
  %681 = vmatpush.msra.mxu0 0.0
  %682 = vmatpush.msra.mxu0 0.0
  %v683 = vand.u32 %v170, 4294901760
  %v684 = vsub.f32 %v170, %v683
  %685 = vmatpush.msra.mxu0 %v684
  %v686 = vand.u32 %v55, 4294901760
  %v687 = vsub.f32 %v55, %v686
  %688 = vmatmul.f32.gmra.mxu0 %v687
  %v689 = vpop.f32.mrf.mxu0
  %v690 = vadd.f32 %v518, %v689
  %v691 = vand.u32 %v58, 4294901760
  %v692 = vsub.f32 %v58, %v691
  %693 = vmatmul.f32.gmra.mxu0 %v692
  %v694 = vpop.f32.mrf.mxu0
  %v695 = vadd.f32 %v522, %v694
  %v696 = vand.u32 %v61, 4294901760
  %v697 = vsub.f32 %v61, %v696
  %698 = vmatmul.f32.gmra.mxu0 %v697
  %v699 = vpop.f32.mrf.mxu0
  %v700 = vadd.f32 %v526, %v699
  %v701 = vand.u32 %v64, 4294901760
  %v702 = vsub.f32 %v64, %v701
  %703 = vmatmul.f32.gmra.mxu0 %v702
  %v704 = vpop.f32.mrf.mxu0
  %v705 = vadd.f32 %v530, %v704
  %v706 = vand.u32 %v67, 4294901760
  %v707 = vsub.f32 %v67, %v706
  %708 = vmatmul.f32.gmra.mxu0 %v707
  %v709 = vpop.f32.mrf.mxu0
  %v710 = vadd.f32 %v534, %v709
  %v711 = vand.u32 %v70, 4294901760
  %v712 = vsub.f32 %v70, %v711
  %713 = vmatmul.f32.gmra.mxu0 %v712
  %v714 = vpop.f32.mrf.mxu0
  %v715 = vadd.f32 %v538, %v714
  %v716 = vand.u32 %v73, 4294901760
  %v717 = vsub.f32 %v73, %v716
  %718 = vmatmul.f32.gmra.mxu0 %v717
  %v719 = vpop.f32.mrf.mxu0
  %v720 = vadd.f32 %v542, %v719
  %v721 = vand.u32 %v76, 4294901760
  %v722 = vsub.f32 %v76, %v721
  %723 = vmatmul.f32.gmra.mxu0 %v722
  %v724 = vpop.f32.mrf.mxu0
  %v725 = vadd.f32 %v546, %v724
  %v726 = vand.u32 %v79, 4294901760
  %v727 = vsub.f32 %v79, %v726
  %728 = vmatmul.f32.gmra.mxu0 %v727
  %v729 = vpop.f32.mrf.mxu0
  %v730 = vadd.f32 %v550, %v729
  %v731 = vand.u32 %v82, 4294901760
  %v732 = vsub.f32 %v82, %v731
  %733 = vmatmul.f32.gmra.mxu0 %v732
  %v734 = vpop.f32.mrf.mxu0
  %v735 = vadd.f32 %v554, %v734
  %v736 = vand.u32 %v85, 4294901760
  %v737 = vsub.f32 %v85, %v736
  %738 = vmatmul.f32.gmra.mxu0 %v737
  %v739 = vpop.f32.mrf.mxu0
  %v740 = vadd.f32 %v558, %v739
  %v741 = vand.u32 %v88, 4294901760
  %v742 = vsub.f32 %v88, %v741
  %743 = vmatmul.f32.gmra.mxu0 %v742
  %v744 = vpop.f32.mrf.mxu0
  %v745 = vadd.f32 %v562, %v744
  %v746 = vand.u32 %v91, 4294901760
  %v747 = vsub.f32 %v91, %v746
  %748 = vmatmul.f32.gmra.mxu0 %v747
  %v749 = vpop.f32.mrf.mxu0
  %v750 = vadd.f32 %v566, %v749
  %v751 = vand.u32 %v94, 4294901760
  %v752 = vsub.f32 %v94, %v751
  %753 = vmatmul.f32.gmra.mxu0 %v752
  %v754 = vpop.f32.mrf.mxu0
  %v755 = vadd.f32 %v570, %v754
  %v756 = vand.u32 %v97, 4294901760
  %v757 = vsub.f32 %v97, %v756
  %758 = vmatmul.f32.gmra.mxu0 %v757
  %v759 = vpop.f32.mrf.mxu0
  %v760 = vadd.f32 %v574, %v759
  %v761 = vand.u32 %v100, 4294901760
  %v762 = vsub.f32 %v100, %v761
  %763 = vmatmul.f32.gmra.mxu0 %v762
  %v764 = vpop.f32.mrf.mxu0
  %v765 = vadd.f32 %v578, %v764
  %v766 = vand.u32 %v103, 4294901760
  %v767 = vsub.f32 %v103, %v766
  %768 = vmatmul.f32.gmra.mxu0 %v767
  %v769 = vpop.f32.mrf.mxu0
  %v770 = vadd.f32 %v582, %v769
  %v771 = vand.u32 %v106, 4294901760
  %v772 = vsub.f32 %v106, %v771
  %773 = vmatmul.f32.gmra.mxu0 %v772
  %v774 = vpop.f32.mrf.mxu0
  %v775 = vadd.f32 %v586, %v774
  %v776 = vand.u32 %v109, 4294901760
  %v777 = vsub.f32 %v109, %v776
  %778 = vmatmul.f32.gmra.mxu0 %v777
  %v779 = vpop.f32.mrf.mxu0
  %v780 = vadd.f32 %v590, %v779
  %v781 = vand.u32 %v112, 4294901760
  %v782 = vsub.f32 %v112, %v781
  %783 = vmatmul.f32.gmra.mxu0 %v782
  %v784 = vpop.f32.mrf.mxu0
  %v785 = vadd.f32 %v594, %v784
  %v786 = vand.u32 %v115, 4294901760
  %v787 = vsub.f32 %v115, %v786
  %788 = vmatmul.f32.gmra.mxu0 %v787
  %v789 = vpop.f32.mrf.mxu0
  %v790 = vadd.f32 %v598, %v789
  %v791 = vand.u32 %v118, 4294901760
  %v792 = vsub.f32 %v118, %v791
  %793 = vmatmul.f32.gmra.mxu0 %v792
  %v794 = vpop.f32.mrf.mxu0
  %v795 = vadd.f32 %v602, %v794
  %v796 = vand.u32 %v121, 4294901760
  %v797 = vsub.f32 %v121, %v796
  %798 = vmatmul.f32.gmra.mxu0 %v797
  %v799 = vpop.f32.mrf.mxu0
  %v800 = vadd.f32 %v606, %v799
  %v801 = vand.u32 %v124, 4294901760
  %v802 = vsub.f32 %v124, %v801
  %803 = vmatmul.f32.gmra.mxu0 %v802
  %v804 = vpop.f32.mrf.mxu0
  %v805 = vadd.f32 %v610, %v804
  %v806 = vand.u32 %v127, 4294901760
  %v807 = vsub.f32 %v127, %v806
  %808 = vmatmul.f32.gmra.mxu0 %v807
  %v809 = vpop.f32.mrf.mxu0
  %v810 = vadd.f32 %v614, %v809
  %v811 = vand.u32 %v130, 4294901760
  %v812 = vsub.f32 %v130, %v811
  %813 = vmatmul.f32.gmra.mxu0 %v812
  %v814 = vpop.f32.mrf.mxu0
  %v815 = vadd.f32 %v618, %v814
  %v816 = vand.u32 %v133, 4294901760
  %v817 = vsub.f32 %v133, %v816
  %818 = vmatmul.f32.gmra.mxu0 %v817
  %v819 = vpop.f32.mrf.mxu0
  %v820 = vadd.f32 %v622, %v819
  %v821 = vand.u32 %v136, 4294901760
  %v822 = vsub.f32 %v136, %v821
  %823 = vmatmul.f32.gmra.mxu0 %v822
  %v824 = vpop.f32.mrf.mxu0
  %v825 = vadd.f32 %v626, %v824
  %v826 = vand.u32 %v139, 4294901760
  %v827 = vsub.f32 %v139, %v826
  %828 = vmatmul.f32.gmra.mxu0 %v827
  %v829 = vpop.f32.mrf.mxu0
  %v830 = vadd.f32 %v630, %v829
  %v831 = vand.u32 %v142, 4294901760
  %v832 = vsub.f32 %v142, %v831
  %833 = vmatmul.f32.gmra.mxu0 %v832
  %v834 = vpop.f32.mrf.mxu0
  %v835 = vadd.f32 %v634, %v834
  %v836 = vand.u32 %v145, 4294901760
  %v837 = vsub.f32 %v145, %v836
  %838 = vmatmul.f32.gmra.mxu0 %v837
  %v839 = vpop.f32.mrf.mxu0
  %v840 = vadd.f32 %v638, %v839
  %v841 = vand.u32 %v148, 4294901760
  %v842 = vsub.f32 %v148, %v841
  %843 = vmatmul.f32.gmra.mxu0 %v842
  %v844 = vpop.f32.mrf.mxu0
  %v845 = vadd.f32 %v642, %v844
  %v846 = vand.u32 %v151, 4294901760
  %v847 = vsub.f32 %v151, %v846
  %848 = vmatmul.f32.gmra.mxu0 %v847
  %v849 = vpop.f32.mrf.mxu0
  %v850 = vadd.f32 %v646, %v849
  %v851 = vand.u32 %v154, 4294901760
  %v852 = vsub.f32 %v154, %v851
  %853 = vmatmul.f32.gmra.mxu0 %v852
  %v854 = vpop.f32.mrf.mxu0
  %v855 = vadd.f32 %v650, %v854
  %v856 = vand.u32 %v157, 4294901760
  %v857 = vsub.f32 %v157, %v856
  %858 = vmatmul.f32.gmra.mxu0 %v857
  %v859 = vpop.f32.mrf.mxu0
  %v860 = vadd.f32 %v654, %v859
  %v861 = vand.u32 %v160, 4294901760
  %v862 = vsub.f32 %v160, %v861
  %863 = vmatmul.f32.gmra.mxu0 %v862
  %v864 = vpop.f32.mrf.mxu0
  %v865 = vadd.f32 %v658, %v864
  %v866 = vand.u32 %v163, 4294901760
  %v867 = vsub.f32 %v163, %v866
  %868 = vmatmul.f32.gmra.mxu0 %v867
  %v869 = vpop.f32.mrf.mxu0
  %v870 = vadd.f32 %v662, %v869
  %v871 = vand.u32 %v166, 4294901760
  %v872 = vsub.f32 %v166, %v871
  %873 = vmatmul.f32.gmra.mxu0 %v872
  %v874 = vpop.f32.mrf.mxu0
  %v875 = vadd.f32 %v666, %v874
  %876 = vdwg.mxu0
  %877 = vmatpush.msra.mxu0 0.0
  %878 = vmatpush.msra.mxu0 0.0
  %879 = vmatpush.msra.mxu0 0.0
  %880 = vmatpush.msra.mxu0 0.0
  %881 = vmatpush.msra.mxu0 0.0
  %882 = vmatpush.msra.mxu0 0.0
  %883 = vmatpush.msra.mxu0 0.0
  %884 = vmatpush.msra.mxu0 0.0
  %885 = vmatpush.msra.mxu0 0.0
  %886 = vmatpush.msra.mxu0 0.0
  %887 = vmatpush.msra.mxu0 0.0
  %888 = vmatpush.msra.mxu0 0.0
  %889 = vmatpush.msra.mxu0 0.0
  %890 = vmatpush.msra.mxu0 0.0
  %891 = vmatpush.msra.mxu0 0.0
  %v892 = vand.u32 %v170, 4294901760
  %893 = vmatpush.msra.mxu0 %v892
  %v894 = vand.u32 %v55, 4294901760
  %v895 = vsub.f32 %v55, %v894
  %v896 = vand.u32 %v895, 4294901760
  %897 = vmatmul.f32.gmra.mxu0 %v896
  %v898 = vpop.f32.mrf.mxu0
  %v899 = vadd.f32 %v690, %v898
  %v900 = vand.u32 %v58, 4294901760
  %v901 = vsub.f32 %v58, %v900
  %v902 = vand.u32 %v901, 4294901760
  %903 = vmatmul.f32.gmra.mxu0 %v902
  %v904 = vpop.f32.mrf.mxu0
  %v905 = vadd.f32 %v695, %v904
  %v906 = vand.u32 %v61, 4294901760
  %v907 = vsub.f32 %v61, %v906
  %v908 = vand.u32 %v907, 4294901760
  %909 = vmatmul.f32.gmra.mxu0 %v908
  %v910 = vpop.f32.mrf.mxu0
  %v911 = vadd.f32 %v700, %v910
  %v912 = vand.u32 %v64, 4294901760
  %v913 = vsub.f32 %v64, %v912
  %v914 = vand.u32 %v913, 4294901760
  %915 = vmatmul.f32.gmra.mxu0 %v914
  %v916 = vpop.f32.mrf.mxu0
  %v917 = vadd.f32 %v705, %v916
  %v918 = vand.u32 %v67, 4294901760
  %v919 = vsub.f32 %v67, %v918
  %v920 = vand.u32 %v919, 4294901760
  %921 = vmatmul.f32.gmra.mxu0 %v920
  %v922 = vpop.f32.mrf.mxu0
  %v923 = vadd.f32 %v710, %v922
  %v924 = vand.u32 %v70, 4294901760
  %v925 = vsub.f32 %v70, %v924
  %v926 = vand.u32 %v925, 4294901760
  %927 = vmatmul.f32.gmra.mxu0 %v926
  %v928 = vpop.f32.mrf.mxu0
  %v929 = vadd.f32 %v715, %v928
  %v930 = vand.u32 %v73, 4294901760
  %v931 = vsub.f32 %v73, %v930
  %v932 = vand.u32 %v931, 4294901760
  %933 = vmatmul.f32.gmra.mxu0 %v932
  %v934 = vpop.f32.mrf.mxu0
  %v935 = vadd.f32 %v720, %v934
  %v936 = vand.u32 %v76, 4294901760
  %v937 = vsub.f32 %v76, %v936
  %v938 = vand.u32 %v937, 4294901760
  %939 = vmatmul.f32.gmra.mxu0 %v938
  %v940 = vpop.f32.mrf.mxu0
  %v941 = vadd.f32 %v725, %v940
  %v942 = vand.u32 %v79, 4294901760
  %v943 = vsub.f32 %v79, %v942
  %v944 = vand.u32 %v943, 4294901760
  %945 = vmatmul.f32.gmra.mxu0 %v944
  %v946 = vpop.f32.mrf.mxu0
  %v947 = vadd.f32 %v730, %v946
  %v948 = vand.u32 %v82, 4294901760
  %v949 = vsub.f32 %v82, %v948
  %v950 = vand.u32 %v949, 4294901760
  %951 = vmatmul.f32.gmra.mxu0 %v950
  %v952 = vpop.f32.mrf.mxu0
  %v953 = vadd.f32 %v735, %v952
  %v954 = vand.u32 %v85, 4294901760
  %v955 = vsub.f32 %v85, %v954
  %v956 = vand.u32 %v955, 4294901760
  %957 = vmatmul.f32.gmra.mxu0 %v956
  %v958 = vpop.f32.mrf.mxu0
  %v959 = vadd.f32 %v740, %v958
  %v960 = vand.u32 %v88, 4294901760
  %v961 = vsub.f32 %v88, %v960
  %v962 = vand.u32 %v961, 4294901760
  %963 = vmatmul.f32.gmra.mxu0 %v962
  %v964 = vpop.f32.mrf.mxu0
  %v965 = vadd.f32 %v745, %v964
  %v966 = vand.u32 %v91, 4294901760
  %v967 = vsub.f32 %v91, %v966
  %v968 = vand.u32 %v967, 4294901760
  %969 = vmatmul.f32.gmra.mxu0 %v968
  %v970 = vpop.f32.mrf.mxu0
  %v971 = vadd.f32 %v750, %v970
  %v972 = vand.u32 %v94, 4294901760
  %v973 = vsub.f32 %v94, %v972
  %v974 = vand.u32 %v973, 4294901760
  %975 = vmatmul.f32.gmra.mxu0 %v974
  %v976 = vpop.f32.mrf.mxu0
  %v977 = vadd.f32 %v755, %v976
  %v978 = vand.u32 %v97, 4294901760
  %v979 = vsub.f32 %v97, %v978
  %v980 = vand.u32 %v979, 4294901760
  %981 = vmatmul.f32.gmra.mxu0 %v980
  %v982 = vpop.f32.mrf.mxu0
  %v983 = vadd.f32 %v760, %v982
  %v984 = vand.u32 %v100, 4294901760
  %v985 = vsub.f32 %v100, %v984
  %v986 = vand.u32 %v985, 4294901760
  %987 = vmatmul.f32.gmra.mxu0 %v986
  %v988 = vpop.f32.mrf.mxu0
  %v989 = vadd.f32 %v765, %v988
  %v990 = vand.u32 %v103, 4294901760
  %v991 = vsub.f32 %v103, %v990
  %v992 = vand.u32 %v991, 4294901760
  %993 = vmatmul.f32.gmra.mxu0 %v992
  %v994 = vpop.f32.mrf.mxu0
  %v995 = vadd.f32 %v770, %v994
  %v996 = vand.u32 %v106, 4294901760
  %v997 = vsub.f32 %v106, %v996
  %v998 = vand.u32 %v997, 4294901760
  %999 = vmatmul.f32.gmra.mxu0 %v998
  %v1000 = vpop.f32.mrf.mxu0
  %v1001 = vadd.f32 %v775, %v1000
  %v1002 = vand.u32 %v109, 4294901760
  %v1003 = vsub.f32 %v109, %v1002
  %v1004 = vand.u32 %v1003, 4294901760
  %1005 = vmatmul.f32.gmra.mxu0 %v1004
  %v1006 = vpop.f32.mrf.mxu0
  %v1007 = vadd.f32 %v780, %v1006
  %v1008 = vand.u32 %v112, 4294901760
  %v1009 = vsub.f32 %v112, %v1008
  %v1010 = vand.u32 %v1009, 4294901760
  %1011 = vmatmul.f32.gmra.mxu0 %v1010
  %v1012 = vpop.f32.mrf.mxu0
  %v1013 = vadd.f32 %v785, %v1012
  %v1014 = vand.u32 %v115, 4294901760
  %v1015 = vsub.f32 %v115, %v1014
  %v1016 = vand.u32 %v1015, 4294901760
  %1017 = vmatmul.f32.gmra.mxu0 %v1016
  %v1018 = vpop.f32.mrf.mxu0
  %v1019 = vadd.f32 %v790, %v1018
  %v1020 = vand.u32 %v118, 4294901760
  %v1021 = vsub.f32 %v118, %v1020
  %v1022 = vand.u32 %v1021, 4294901760
  %1023 = vmatmul.f32.gmra.mxu0 %v1022
  %v1024 = vpop.f32.mrf.mxu0
  %v1025 = vadd.f32 %v795, %v1024
  %v1026 = vand.u32 %v121, 4294901760
  %v1027 = vsub.f32 %v121, %v1026
  %v1028 = vand.u32 %v1027, 4294901760
  %1029 = vmatmul.f32.gmra.mxu0 %v1028
  %v1030 = vpop.f32.mrf.mxu0
  %v1031 = vadd.f32 %v800, %v1030
  %v1032 = vand.u32 %v124, 4294901760
  %v1033 = vsub.f32 %v124, %v1032
  %v1034 = vand.u32 %v1033, 4294901760
  %1035 = vmatmul.f32.gmra.mxu0 %v1034
  %v1036 = vpop.f32.mrf.mxu0
  %v1037 = vadd.f32 %v805, %v1036
  %v1038 = vand.u32 %v127, 4294901760
  %v1039 = vsub.f32 %v127, %v1038
  %v1040 = vand.u32 %v1039, 4294901760
  %1041 = vmatmul.f32.gmra.mxu0 %v1040
  %v1042 = vpop.f32.mrf.mxu0
  %v1043 = vadd.f32 %v810, %v1042
  %v1044 = vand.u32 %v130, 4294901760
  %v1045 = vsub.f32 %v130, %v1044
  %v1046 = vand.u32 %v1045, 4294901760
  %1047 = vmatmul.f32.gmra.mxu0 %v1046
  %v1048 = vpop.f32.mrf.mxu0
  %v1049 = vadd.f32 %v815, %v1048
  %v1050 = vand.u32 %v133, 4294901760
  %v1051 = vsub.f32 %v133, %v1050
  %v1052 = vand.u32 %v1051, 4294901760
  %1053 = vmatmul.f32.gmra.mxu0 %v1052
  %v1054 = vpop.f32.mrf.mxu0
  %v1055 = vadd.f32 %v820, %v1054
  %v1056 = vand.u32 %v136, 4294901760
  %v1057 = vsub.f32 %v136, %v1056
  %v1058 = vand.u32 %v1057, 4294901760
  %1059 = vmatmul.f32.gmra.mxu0 %v1058
  %v1060 = vpop.f32.mrf.mxu0
  %v1061 = vadd.f32 %v825, %v1060
  %v1062 = vand.u32 %v139, 4294901760
  %v1063 = vsub.f32 %v139, %v1062
  %v1064 = vand.u32 %v1063, 4294901760
  %1065 = vmatmul.f32.gmra.mxu0 %v1064
  %v1066 = vpop.f32.mrf.mxu0
  %v1067 = vadd.f32 %v830, %v1066
  %v1068 = vand.u32 %v142, 4294901760
  %v1069 = vsub.f32 %v142, %v1068
  %v1070 = vand.u32 %v1069, 4294901760
  %1071 = vmatmul.f32.gmra.mxu0 %v1070
  %v1072 = vpop.f32.mrf.mxu0
  %v1073 = vadd.f32 %v835, %v1072
  %v1074 = vand.u32 %v145, 4294901760
  %v1075 = vsub.f32 %v145, %v1074
  %v1076 = vand.u32 %v1075, 4294901760
  %1077 = vmatmul.f32.gmra.mxu0 %v1076
  %v1078 = vpop.f32.mrf.mxu0
  %v1079 = vadd.f32 %v840, %v1078
  %v1080 = vand.u32 %v148, 4294901760
  %v1081 = vsub.f32 %v148, %v1080
  %v1082 = vand.u32 %v1081, 4294901760
  %1083 = vmatmul.f32.gmra.mxu0 %v1082
  %v1084 = vpop.f32.mrf.mxu0
  %v1085 = vadd.f32 %v845, %v1084
  %v1086 = vand.u32 %v151, 4294901760
  %v1087 = vsub.f32 %v151, %v1086
  %v1088 = vand.u32 %v1087, 4294901760
  %1089 = vmatmul.f32.gmra.mxu0 %v1088
  %v1090 = vpop.f32.mrf.mxu0
  %v1091 = vadd.f32 %v850, %v1090
  %v1092 = vand.u32 %v154, 4294901760
  %v1093 = vsub.f32 %v154, %v1092
  %v1094 = vand.u32 %v1093, 4294901760
  %1095 = vmatmul.f32.gmra.mxu0 %v1094
  %v1096 = vpop.f32.mrf.mxu0
  %v1097 = vadd.f32 %v855, %v1096
  %v1098 = vand.u32 %v157, 4294901760
  %v1099 = vsub.f32 %v157, %v1098
  %v1100 = vand.u32 %v1099, 4294901760
  %1101 = vmatmul.f32.gmra.mxu0 %v1100
  %v1102 = vpop.f32.mrf.mxu0
  %v1103 = vadd.f32 %v860, %v1102
  %v1104 = vand.u32 %v160, 4294901760
  %v1105 = vsub.f32 %v160, %v1104
  %v1106 = vand.u32 %v1105, 4294901760
  %1107 = vmatmul.f32.gmra.mxu0 %v1106
  %v1108 = vpop.f32.mrf.mxu0
  %v1109 = vadd.f32 %v865, %v1108
  %v1110 = vand.u32 %v163, 4294901760
  %v1111 = vsub.f32 %v163, %v1110
  %v1112 = vand.u32 %v1111, 4294901760
  %1113 = vmatmul.f32.gmra.mxu0 %v1112
  %v1114 = vpop.f32.mrf.mxu0
  %v1115 = vadd.f32 %v870, %v1114
  %v1116 = vand.u32 %v166, 4294901760
  %v1117 = vsub.f32 %v166, %v1116
  %v1118 = vand.u32 %v1117, 4294901760
  %1119 = vmatmul.f32.gmra.mxu0 %v1118
  %v1120 = vpop.f32.mrf.mxu0
  %v1121 = vadd.f32 %v875, %v1120
  %1122 = vdwg.mxu0
  %1123 = vmatpush.msra.mxu0 0.0
  %1124 = vmatpush.msra.mxu0 0.0
  %1125 = vmatpush.msra.mxu0 0.0
  %1126 = vmatpush.msra.mxu0 0.0
  %1127 = vmatpush.msra.mxu0 0.0
  %1128 = vmatpush.msra.mxu0 0.0
  %1129 = vmatpush.msra.mxu0 0.0
  %1130 = vmatpush.msra.mxu0 0.0
  %1131 = vmatpush.msra.mxu0 0.0
  %1132 = vmatpush.msra.mxu0 0.0
  %1133 = vmatpush.msra.mxu0 0.0
  %1134 = vmatpush.msra.mxu0 0.0
  %1135 = vmatpush.msra.mxu0 0.0
  %1136 = vmatpush.msra.mxu0 0.0
  %1137 = vmatpush.msra.mxu0 0.0
  %v1138 = vand.u32 %v170, 4294901760
  %v1139 = vsub.f32 %v170, %v1138
  %v1140 = vand.u32 %v1139, 4294901760
  %1141 = vmatpush.msra.mxu0 %v1140
  %v1142 = vand.u32 %v55, 4294901760
  %1143 = vmatmul.f32.gmra.mxu0 %v1142
  %v1144 = vpop.f32.mrf.mxu0
  %v1145 = vadd.f32 %v899, %v1144
  %v1146 = vand.u32 %v58, 4294901760
  %1147 = vmatmul.f32.gmra.mxu0 %v1146
  %v1148 = vpop.f32.mrf.mxu0
  %v1149 = vadd.f32 %v905, %v1148
  %v1150 = vand.u32 %v61, 4294901760
  %1151 = vmatmul.f32.gmra.mxu0 %v1150
  %v1152 = vpop.f32.mrf.mxu0
  %v1153 = vadd.f32 %v911, %v1152
  %v1154 = vand.u32 %v64, 4294901760
  %1155 = vmatmul.f32.gmra.mxu0 %v1154
  %v1156 = vpop.f32.mrf.mxu0
  %v1157 = vadd.f32 %v917, %v1156
  %v1158 = vand.u32 %v67, 4294901760
  %1159 = vmatmul.f32.gmra.mxu0 %v1158
  %v1160 = vpop.f32.mrf.mxu0
  %v1161 = vadd.f32 %v923, %v1160
  %v1162 = vand.u32 %v70, 4294901760
  %1163 = vmatmul.f32.gmra.mxu0 %v1162
  %v1164 = vpop.f32.mrf.mxu0
  %v1165 = vadd.f32 %v929, %v1164
  %v1166 = vand.u32 %v73, 4294901760
  %1167 = vmatmul.f32.gmra.mxu0 %v1166
  %v1168 = vpop.f32.mrf.mxu0
  %v1169 = vadd.f32 %v935, %v1168
  %v1170 = vand.u32 %v76, 4294901760
  %1171 = vmatmul.f32.gmra.mxu0 %v1170
  %v1172 = vpop.f32.mrf.mxu0
  %v1173 = vadd.f32 %v941, %v1172
  %v1174 = vand.u32 %v79, 4294901760
  %1175 = vmatmul.f32.gmra.mxu0 %v1174
  %v1176 = vpop.f32.mrf.mxu0
  %v1177 = vadd.f32 %v947, %v1176
  %v1178 = vand.u32 %v82, 4294901760
  %1179 = vmatmul.f32.gmra.mxu0 %v1178
  %v1180 = vpop.f32.mrf.mxu0
  %v1181 = vadd.f32 %v953, %v1180
  %v1182 = vand.u32 %v85, 4294901760
  %1183 = vmatmul.f32.gmra.mxu0 %v1182
  %v1184 = vpop.f32.mrf.mxu0
  %v1185 = vadd.f32 %v959, %v1184
  %v1186 = vand.u32 %v88, 4294901760
  %1187 = vmatmul.f32.gmra.mxu0 %v1186
  %v1188 = vpop.f32.mrf.mxu0
  %v1189 = vadd.f32 %v965, %v1188
  %v1190 = vand.u32 %v91, 4294901760
  %1191 = vmatmul.f32.gmra.mxu0 %v1190
  %v1192 = vpop.f32.mrf.mxu0
  %v1193 = vadd.f32 %v971, %v1192
  %v1194 = vand.u32 %v94, 4294901760
  %1195 = vmatmul.f32.gmra.mxu0 %v1194
  %v1196 = vpop.f32.mrf.mxu0
  %v1197 = vadd.f32 %v977, %v1196
  %v1198 = vand.u32 %v97, 4294901760
  %1199 = vmatmul.f32.gmra.mxu0 %v1198
  %v1200 = vpop.f32.mrf.mxu0
  %v1201 = vadd.f32 %v983, %v1200
  %v1202 = vand.u32 %v100, 4294901760
  %1203 = vmatmul.f32.gmra.mxu0 %v1202
  %v1204 = vpop.f32.mrf.mxu0
  %v1205 = vadd.f32 %v989, %v1204
  %v1206 = vand.u32 %v103, 4294901760
  %1207 = vmatmul.f32.gmra.mxu0 %v1206
  %v1208 = vpop.f32.mrf.mxu0
  %v1209 = vadd.f32 %v995, %v1208
  %v1210 = vand.u32 %v106, 4294901760
  %1211 = vmatmul.f32.gmra.mxu0 %v1210
  %v1212 = vpop.f32.mrf.mxu0
  %v1213 = vadd.f32 %v1001, %v1212
  %v1214 = vand.u32 %v109, 4294901760
  %1215 = vmatmul.f32.gmra.mxu0 %v1214
  %v1216 = vpop.f32.mrf.mxu0
  %v1217 = vadd.f32 %v1007, %v1216
  %v1218 = vand.u32 %v112, 4294901760
  %1219 = vmatmul.f32.gmra.mxu0 %v1218
  %v1220 = vpop.f32.mrf.mxu0
  %v1221 = vadd.f32 %v1013, %v1220
  %v1222 = vand.u32 %v115, 4294901760
  %1223 = vmatmul.f32.gmra.mxu0 %v1222
  %v1224 = vpop.f32.mrf.mxu0
  %v1225 = vadd.f32 %v1019, %v1224
  %v1226 = vand.u32 %v118, 4294901760
  %1227 = vmatmul.f32.gmra.mxu0 %v1226
  %v1228 = vpop.f32.mrf.mxu0
  %v1229 = vadd.f32 %v1025, %v1228
  %v1230 = vand.u32 %v121, 4294901760
  %1231 = vmatmul.f32.gmra.mxu0 %v1230
  %v1232 = vpop.f32.mrf.mxu0
  %v1233 = vadd.f32 %v1031, %v1232
  %v1234 = vand.u32 %v124, 4294901760
  %1235 = vmatmul.f32.gmra.mxu0 %v1234
  %v1236 = vpop.f32.mrf.mxu0
  %v1237 = vadd.f32 %v1037, %v1236
  %v1238 = vand.u32 %v127, 4294901760
  %1239 = vmatmul.f32.gmra.mxu0 %v1238
  %v1240 = vpop.f32.mrf.mxu0
  %v1241 = vadd.f32 %v1043, %v1240
  %v1242 = vand.u32 %v130, 4294901760
  %1243 = vmatmul.f32.gmra.mxu0 %v1242
  %v1244 = vpop.f32.mrf.mxu0
  %v1245 = vadd.f32 %v1049, %v1244
  %v1246 = vand.u32 %v133, 4294901760
  %1247 = vmatmul.f32.gmra.mxu0 %v1246
  %v1248 = vpop.f32.mrf.mxu0
  %v1249 = vadd.f32 %v1055, %v1248
  %v1250 = vand.u32 %v136, 4294901760
  %1251 = vmatmul.f32.gmra.mxu0 %v1250
  %v1252 = vpop.f32.mrf.mxu0
  %v1253 = vadd.f32 %v1061, %v1252
  %v1254 = vand.u32 %v139, 4294901760
  %1255 = vmatmul.f32.gmra.mxu0 %v1254
  %v1256 = vpop.f32.mrf.mxu0
  %v1257 = vadd.f32 %v1067, %v1256
  %v1258 = vand.u32 %v142, 4294901760
  %1259 = vmatmul.f32.gmra.mxu0 %v1258
  %v1260 = vpop.f32.mrf.mxu0
  %v1261 = vadd.f32 %v1073, %v1260
  %v1262 = vand.u32 %v145, 4294901760
  %1263 = vmatmul.f32.gmra.mxu0 %v1262
  %v1264 = vpop.f32.mrf.mxu0
  %v1265 = vadd.f32 %v1079, %v1264
  %v1266 = vand.u32 %v148, 4294901760
  %1267 = vmatmul.f32.gmra.mxu0 %v1266
  %v1268 = vpop.f32.mrf.mxu0
  %v1269 = vadd.f32 %v1085, %v1268
  %v1270 = vand.u32 %v151, 4294901760
  %1271 = vmatmul.f32.gmra.mxu0 %v1270
  %v1272 = vpop.f32.mrf.mxu0
  %v1273 = vadd.f32 %v1091, %v1272
  %v1274 = vand.u32 %v154, 4294901760
  %1275 = vmatmul.f32.gmra.mxu0 %v1274
  %v1276 = vpop.f32.mrf.mxu0
  %v1277 = vadd.f32 %v1097, %v1276
  %v1278 = vand.u32 %v157, 4294901760
  %1279 = vmatmul.f32.gmra.mxu0 %v1278
  %v1280 = vpop.f32.mrf.mxu0
  %v1281 = vadd.f32 %v1103, %v1280
  %v1282 = vand.u32 %v160, 4294901760
  %1283 = vmatmul.f32.gmra.mxu0 %v1282
  %v1284 = vpop.f32.mrf.mxu0
  %v1285 = vadd.f32 %v1109, %v1284
  %v1286 = vand.u32 %v163, 4294901760
  %1287 = vmatmul.f32.gmra.mxu0 %v1286
  %v1288 = vpop.f32.mrf.mxu0
  %v1289 = vadd.f32 %v1115, %v1288
  %v1290 = vand.u32 %v166, 4294901760
  %1291 = vmatmul.f32.gmra.mxu0 %v1290
  %v1292 = vpop.f32.mrf.mxu0
  %v1293 = vadd.f32 %v1121, %v1292
  %1294 = vdwg.mxu0
  %1295 = vmatpush.msra.mxu0 0.0
  %1296 = vmatpush.msra.mxu0 0.0
  %1297 = vmatpush.msra.mxu0 0.0
  %1298 = vmatpush.msra.mxu0 0.0
  %1299 = vmatpush.msra.mxu0 0.0
  %1300 = vmatpush.msra.mxu0 0.0
  %1301 = vmatpush.msra.mxu0 0.0
  %1302 = vmatpush.msra.mxu0 0.0
  %1303 = vmatpush.msra.mxu0 0.0
  %1304 = vmatpush.msra.mxu0 0.0
  %1305 = vmatpush.msra.mxu0 0.0
  %1306 = vmatpush.msra.mxu0 0.0
  %1307 = vmatpush.msra.mxu0 0.0
  %1308 = vmatpush.msra.mxu0 0.0
  %1309 = vmatpush.msra.mxu0 0.0
  %v1310 = vand.u32 %v170, 4294901760
  %1311 = vmatpush.msra.mxu0 %v1310
  %v1312 = vand.u32 %v55, 4294901760
  %1313 = vmatmul.f32.gmra.mxu0 %v1312
  %v1314 = vpop.f32.mrf.mxu0
  %v1315 = vadd.f32 %v1145, %v1314
  %v1316 = vand.u32 %v58, 4294901760
  %1317 = vmatmul.f32.gmra.mxu0 %v1316
  %v1318 = vpop.f32.mrf.mxu0
  %v1319 = vadd.f32 %v1149, %v1318
  %v1320 = vand.u32 %v61, 4294901760
  %1321 = vmatmul.f32.gmra.mxu0 %v1320
  %v1322 = vpop.f32.mrf.mxu0
  %v1323 = vadd.f32 %v1153, %v1322
  %v1324 = vand.u32 %v64, 4294901760
  %1325 = vmatmul.f32.gmra.mxu0 %v1324
  %v1326 = vpop.f32.mrf.mxu0
  %v1327 = vadd.f32 %v1157, %v1326
  %v1328 = vand.u32 %v67, 4294901760
  %1329 = vmatmul.f32.gmra.mxu0 %v1328
  %v1330 = vpop.f32.mrf.mxu0
  %v1331 = vadd.f32 %v1161, %v1330
  %v1332 = vand.u32 %v70, 4294901760
  %1333 = vmatmul.f32.gmra.mxu0 %v1332
  %v1334 = vpop.f32.mrf.mxu0
  %v1335 = vadd.f32 %v1165, %v1334
  %v1336 = vand.u32 %v73, 4294901760
  %1337 = vmatmul.f32.gmra.mxu0 %v1336
  %v1338 = vpop.f32.mrf.mxu0
  %v1339 = vadd.f32 %v1169, %v1338
  %v1340 = vand.u32 %v76, 4294901760
  %1341 = vmatmul.f32.gmra.mxu0 %v1340
  %v1342 = vpop.f32.mrf.mxu0
  %v1343 = vadd.f32 %v1173, %v1342
  %v1344 = vand.u32 %v79, 4294901760
  %1345 = vmatmul.f32.gmra.mxu0 %v1344
  %v1346 = vpop.f32.mrf.mxu0
  %v1347 = vadd.f32 %v1177, %v1346
  %v1348 = vand.u32 %v82, 4294901760
  %1349 = vmatmul.f32.gmra.mxu0 %v1348
  %v1350 = vpop.f32.mrf.mxu0
  %v1351 = vadd.f32 %v1181, %v1350
  %v1352 = vand.u32 %v85, 4294901760
  %1353 = vmatmul.f32.gmra.mxu0 %v1352
  %v1354 = vpop.f32.mrf.mxu0
  %v1355 = vadd.f32 %v1185, %v1354
  %v1356 = vand.u32 %v88, 4294901760
  %1357 = vmatmul.f32.gmra.mxu0 %v1356
  %v1358 = vpop.f32.mrf.mxu0
  %v1359 = vadd.f32 %v1189, %v1358
  %v1360 = vand.u32 %v91, 4294901760
  %1361 = vmatmul.f32.gmra.mxu0 %v1360
  %v1362 = vpop.f32.mrf.mxu0
  %v1363 = vadd.f32 %v1193, %v1362
  %v1364 = vand.u32 %v94, 4294901760
  %1365 = vmatmul.f32.gmra.mxu0 %v1364
  %v1366 = vpop.f32.mrf.mxu0
  %v1367 = vadd.f32 %v1197, %v1366
  %v1368 = vand.u32 %v97, 4294901760
  %1369 = vmatmul.f32.gmra.mxu0 %v1368
  %v1370 = vpop.f32.mrf.mxu0
  %v1371 = vadd.f32 %v1201, %v1370
  %v1372 = vand.u32 %v100, 4294901760
  %1373 = vmatmul.f32.gmra.mxu0 %v1372
  %v1374 = vpop.f32.mrf.mxu0
  %v1375 = vadd.f32 %v1205, %v1374
  %v1376 = vand.u32 %v103, 4294901760
  %1377 = vmatmul.f32.gmra.mxu0 %v1376
  %v1378 = vpop.f32.mrf.mxu0
  %v1379 = vadd.f32 %v1209, %v1378
  %v1380 = vand.u32 %v106, 4294901760
  %1381 = vmatmul.f32.gmra.mxu0 %v1380
  %v1382 = vpop.f32.mrf.mxu0
  %v1383 = vadd.f32 %v1213, %v1382
  %v1384 = vand.u32 %v109, 4294901760
  %1385 = vmatmul.f32.gmra.mxu0 %v1384
  %v1386 = vpop.f32.mrf.mxu0
  %v1387 = vadd.f32 %v1217, %v1386
  %v1388 = vand.u32 %v112, 4294901760
  %1389 = vmatmul.f32.gmra.mxu0 %v1388
  %v1390 = vpop.f32.mrf.mxu0
  %v1391 = vadd.f32 %v1221, %v1390
  %v1392 = vand.u32 %v115, 4294901760
  %1393 = vmatmul.f32.gmra.mxu0 %v1392
  %v1394 = vpop.f32.mrf.mxu0
  %v1395 = vadd.f32 %v1225, %v1394
  %v1396 = vand.u32 %v118, 4294901760
  %1397 = vmatmul.f32.gmra.mxu0 %v1396
  %v1398 = vpop.f32.mrf.mxu0
  %v1399 = vadd.f32 %v1229, %v1398
  %v1400 = vand.u32 %v121, 4294901760
  %1401 = vmatmul.f32.gmra.mxu0 %v1400
  %v1402 = vpop.f32.mrf.mxu0
  %v1403 = vadd.f32 %v1233, %v1402
  %v1404 = vand.u32 %v124, 4294901760
  %1405 = vmatmul.f32.gmra.mxu0 %v1404
  %v1406 = vpop.f32.mrf.mxu0
  %v1407 = vadd.f32 %v1237, %v1406
  %v1408 = vand.u32 %v127, 4294901760
  %1409 = vmatmul.f32.gmra.mxu0 %v1408
  %v1410 = vpop.f32.mrf.mxu0
  %v1411 = vadd.f32 %v1241, %v1410
  %v1412 = vand.u32 %v130, 4294901760
  %1413 = vmatmul.f32.gmra.mxu0 %v1412
  %v1414 = vpop.f32.mrf.mxu0
  %v1415 = vadd.f32 %v1245, %v1414
  %v1416 = vand.u32 %v133, 4294901760
  %1417 = vmatmul.f32.gmra.mxu0 %v1416
  %v1418 = vpop.f32.mrf.mxu0
  %v1419 = vadd.f32 %v1249, %v1418
  %v1420 = vand.u32 %v136, 4294901760
  %1421 = vmatmul.f32.gmra.mxu0 %v1420
  %v1422 = vpop.f32.mrf.mxu0
  %v1423 = vadd.f32 %v1253, %v1422
  %v1424 = vand.u32 %v139, 4294901760
  %1425 = vmatmul.f32.gmra.mxu0 %v1424
  %v1426 = vpop.f32.mrf.mxu0
  %v1427 = vadd.f32 %v1257, %v1426
  %v1428 = vand.u32 %v142, 4294901760
  %1429 = vmatmul.f32.gmra.mxu0 %v1428
  %v1430 = vpop.f32.mrf.mxu0
  %v1431 = vadd.f32 %v1261, %v1430
  %v1432 = vand.u32 %v145, 4294901760
  %1433 = vmatmul.f32.gmra.mxu0 %v1432
  %v1434 = vpop.f32.mrf.mxu0
  %v1435 = vadd.f32 %v1265, %v1434
  %v1436 = vand.u32 %v148, 4294901760
  %1437 = vmatmul.f32.gmra.mxu0 %v1436
  %v1438 = vpop.f32.mrf.mxu0
  %v1439 = vadd.f32 %v1269, %v1438
  %v1440 = vand.u32 %v151, 4294901760
  %1441 = vmatmul.f32.gmra.mxu0 %v1440
  %v1442 = vpop.f32.mrf.mxu0
  %v1443 = vadd.f32 %v1273, %v1442
  %v1444 = vand.u32 %v154, 4294901760
  %1445 = vmatmul.f32.gmra.mxu0 %v1444
  %v1446 = vpop.f32.mrf.mxu0
  %v1447 = vadd.f32 %v1277, %v1446
  %v1448 = vand.u32 %v157, 4294901760
  %1449 = vmatmul.f32.gmra.mxu0 %v1448
  %v1450 = vpop.f32.mrf.mxu0
  %v1451 = vadd.f32 %v1281, %v1450
  %v1452 = vand.u32 %v160, 4294901760
  %1453 = vmatmul.f32.gmra.mxu0 %v1452
  %v1454 = vpop.f32.mrf.mxu0
  %v1455 = vadd.f32 %v1285, %v1454
  %v1456 = vand.u32 %v163, 4294901760
  %1457 = vmatmul.f32.gmra.mxu0 %v1456
  %v1458 = vpop.f32.mrf.mxu0
  %v1459 = vadd.f32 %v1289, %v1458
  %v1460 = vand.u32 %v166, 4294901760
  %1461 = vmatmul.f32.gmra.mxu0 %v1460
  %v1462 = vpop.f32.mrf.mxu0
  %v1463 = vadd.f32 %v1293, %v1462
  %1464 = vdwg.mxu0
  %v1465 = vld [vmem:[%s2] sm:$0x1]
  %v1467 = vperm.slane %v1465, 0
  %v1469 = vadd.f32 %v1315, %v1467
  %v1470 = vadd.f32 %v1319, %v1467
  %v1471 = vadd.f32 %v1323, %v1467
  %v1472 = vadd.f32 %v1327, %v1467
  %v1473 = vadd.f32 %v1331, %v1467
  %v1474 = vadd.f32 %v1335, %v1467
  %v1475 = vadd.f32 %v1339, %v1467
  %v1476 = vadd.f32 %v1343, %v1467
  %v1477 = vadd.f32 %v1347, %v1467
  %v1478 = vadd.f32 %v1351, %v1467
  %v1479 = vadd.f32 %v1355, %v1467
  %v1480 = vadd.f32 %v1359, %v1467
  %v1481 = vadd.f32 %v1363, %v1467
  %v1482 = vadd.f32 %v1367, %v1467
  %v1483 = vadd.f32 %v1371, %v1467
  %v1484 = vadd.f32 %v1375, %v1467
  %v1485 = vadd.f32 %v1379, %v1467
  %v1486 = vadd.f32 %v1383, %v1467
  %v1487 = vadd.f32 %v1387, %v1467
  %v1488 = vadd.f32 %v1391, %v1467
  %v1489 = vadd.f32 %v1395, %v1467
  %v1490 = vadd.f32 %v1399, %v1467
  %v1491 = vadd.f32 %v1403, %v1467
  %v1492 = vadd.f32 %v1407, %v1467
  %v1493 = vadd.f32 %v1411, %v1467
  %v1494 = vadd.f32 %v1415, %v1467
  %v1495 = vadd.f32 %v1419, %v1467
  %v1496 = vadd.f32 %v1423, %v1467
  %v1497 = vadd.f32 %v1427, %v1467
  %v1498 = vadd.f32 %v1431, %v1467
  %v1499 = vadd.f32 %v1435, %v1467
  %v1500 = vadd.f32 %v1439, %v1467
  %v1501 = vadd.f32 %v1443, %v1467
  %v1502 = vadd.f32 %v1447, %v1467
  %v1503 = vadd.f32 %v1451, %v1467
  %v1504 = vadd.f32 %v1455, %v1467
  %v1505 = vadd.f32 %v1459, %v1467
  %v1506 = vadd.f32 %v1463, %v1467
  %v1507 = vadd.f32 %v1469, 0.5
  %v1508 = vadd.f32 %v1470, 0.5
  %v1509 = vadd.f32 %v1471, 0.5
  %v1510 = vadd.f32 %v1472, 0.5
  %v1511 = vadd.f32 %v1473, 0.5
  %v1512 = vadd.f32 %v1474, 0.5
  %v1513 = vadd.f32 %v1475, 0.5
  %v1514 = vadd.f32 %v1476, 0.5
  %v1515 = vadd.f32 %v1477, 0.5
  %v1516 = vadd.f32 %v1478, 0.5
  %v1517 = vadd.f32 %v1479, 0.5
  %v1518 = vadd.f32 %v1480, 0.5
  %v1519 = vadd.f32 %v1481, 0.5
  %v1520 = vadd.f32 %v1482, 0.5
  %v1521 = vadd.f32 %v1483, 0.5
  %v1522 = vadd.f32 %v1484, 0.5
  %v1523 = vadd.f32 %v1485, 0.5
  %v1524 = vadd.f32 %v1486, 0.5
  %v1525 = vadd.f32 %v1487, 0.5
  %v1526 = vadd.f32 %v1488, 0.5
  %v1527 = vadd.f32 %v1489, 0.5
  %v1528 = vadd.f32 %v1490, 0.5
  %v1529 = vadd.f32 %v1491, 0.5
  %v1530 = vadd.f32 %v1492, 0.5
  %v1531 = vadd.f32 %v1493, 0.5
  %v1532 = vadd.f32 %v1494, 0.5
  %v1533 = vadd.f32 %v1495, 0.5
  %v1534 = vadd.f32 %v1496, 0.5
  %v1535 = vadd.f32 %v1497, 0.5
  %v1536 = vadd.f32 %v1498, 0.5
  %v1537 = vadd.f32 %v1499, 0.5
  %v1538 = vadd.f32 %v1500, 0.5
  %v1539 = vadd.f32 %v1501, 0.5
  %v1540 = vadd.f32 %v1502, 0.5
  %v1541 = vadd.f32 %v1503, 0.5
  %v1542 = vadd.f32 %v1504, 0.5
  %v1543 = vadd.f32 %v1505, 0.5
  %v1544 = vadd.f32 %v1506, 0.5
  %v1545 = vfloor.f32 %v1507
  %v1546 = vfloor.f32 %v1508
  %v1547 = vfloor.f32 %v1509
  %v1548 = vfloor.f32 %v1510
  %v1549 = vfloor.f32 %v1511
  %v1550 = vfloor.f32 %v1512
  %v1551 = vfloor.f32 %v1513
  %v1552 = vfloor.f32 %v1514
  %v1553 = vfloor.f32 %v1515
  %v1554 = vfloor.f32 %v1516
  %v1555 = vfloor.f32 %v1517
  %v1556 = vfloor.f32 %v1518
  %v1557 = vfloor.f32 %v1519
  %v1558 = vfloor.f32 %v1520
  %v1559 = vfloor.f32 %v1521
  %v1560 = vfloor.f32 %v1522
  %v1561 = vfloor.f32 %v1523
  %v1562 = vfloor.f32 %v1524
  %v1563 = vfloor.f32 %v1525
  %v1564 = vfloor.f32 %v1526
  %v1565 = vfloor.f32 %v1527
  %v1566 = vfloor.f32 %v1528
  %v1567 = vfloor.f32 %v1529
  %v1568 = vfloor.f32 %v1530
  %v1569 = vfloor.f32 %v1531
  %v1570 = vfloor.f32 %v1532
  %v1571 = vfloor.f32 %v1533
  %v1572 = vfloor.f32 %v1534
  %v1573 = vfloor.f32 %v1535
  %v1574 = vfloor.f32 %v1536
  %v1575 = vfloor.f32 %v1537
  %v1576 = vfloor.f32 %v1538
  %v1577 = vfloor.f32 %v1539
  %v1578 = vfloor.f32 %v1540
  %v1579 = vfloor.f32 %v1541
  %v1580 = vfloor.f32 %v1542
  %v1581 = vfloor.f32 %v1543
  %v1582 = vfloor.f32 %v1544
  %v1583 = vsub.f32 %v1469, %v1545
  %v1584 = vsub.f32 %v1470, %v1546
  %v1585 = vsub.f32 %v1471, %v1547
  %v1586 = vsub.f32 %v1472, %v1548
  %v1587 = vsub.f32 %v1473, %v1549
  %v1588 = vsub.f32 %v1474, %v1550
  %v1589 = vsub.f32 %v1475, %v1551
  %v1590 = vsub.f32 %v1476, %v1552
  %v1591 = vsub.f32 %v1477, %v1553
  %v1592 = vsub.f32 %v1478, %v1554
  %v1593 = vsub.f32 %v1479, %v1555
  %v1594 = vsub.f32 %v1480, %v1556
  %v1595 = vsub.f32 %v1481, %v1557
  %v1596 = vsub.f32 %v1482, %v1558
  %v1597 = vsub.f32 %v1483, %v1559
  %v1598 = vsub.f32 %v1484, %v1560
  %v1599 = vsub.f32 %v1485, %v1561
  %v1600 = vsub.f32 %v1486, %v1562
  %v1601 = vsub.f32 %v1487, %v1563
  %v1602 = vsub.f32 %v1488, %v1564
  %v1603 = vsub.f32 %v1489, %v1565
  %v1604 = vsub.f32 %v1490, %v1566
  %v1605 = vsub.f32 %v1491, %v1567
  %v1606 = vsub.f32 %v1492, %v1568
  %v1607 = vsub.f32 %v1493, %v1569
  %v1608 = vsub.f32 %v1494, %v1570
  %v1609 = vsub.f32 %v1495, %v1571
  %v1610 = vsub.f32 %v1496, %v1572
  %v1611 = vsub.f32 %v1497, %v1573
  %v1612 = vsub.f32 %v1498, %v1574
  %v1613 = vsub.f32 %v1499, %v1575
  %v1614 = vsub.f32 %v1500, %v1576
  %v1615 = vsub.f32 %v1501, %v1577
  %v1616 = vsub.f32 %v1502, %v1578
  %v1617 = vsub.f32 %v1503, %v1579
  %v1618 = vsub.f32 %v1504, %v1580
  %v1619 = vsub.f32 %v1505, %v1581
  %v1620 = vsub.f32 %v1506, %v1582
  %v1621 = vmul.f32 %v1583, 6.2831855
  %v1622 = vmul.f32 %v1584, 6.2831855
  %v1623 = vmul.f32 %v1585, 6.2831855
  %v1624 = vmul.f32 %v1586, 6.2831855
  %v1625 = vmul.f32 %v1587, 6.2831855
  %v1626 = vmul.f32 %v1588, 6.2831855
  %v1627 = vmul.f32 %v1589, 6.2831855
  %v1628 = vmul.f32 %v1590, 6.2831855
  %v1629 = vmul.f32 %v1591, 6.2831855
  %v1630 = vmul.f32 %v1592, 6.2831855
  %v1631 = vmul.f32 %v1593, 6.2831855
  %v1632 = vmul.f32 %v1594, 6.2831855
  %v1633 = vmul.f32 %v1595, 6.2831855
  %v1634 = vmul.f32 %v1596, 6.2831855
  %v1635 = vmul.f32 %v1597, 6.2831855
  %v1636 = vmul.f32 %v1598, 6.2831855
  %v1637 = vmul.f32 %v1599, 6.2831855
  %v1638 = vmul.f32 %v1600, 6.2831855
  %v1639 = vmul.f32 %v1601, 6.2831855
  %v1640 = vmul.f32 %v1602, 6.2831855
  %v1641 = vmul.f32 %v1603, 6.2831855
  %v1642 = vmul.f32 %v1604, 6.2831855
  %v1643 = vmul.f32 %v1605, 6.2831855
  %v1644 = vmul.f32 %v1606, 6.2831855
  %v1645 = vmul.f32 %v1607, 6.2831855
  %v1646 = vmul.f32 %v1608, 6.2831855
  %v1647 = vmul.f32 %v1609, 6.2831855
  %v1648 = vmul.f32 %v1610, 6.2831855
  %v1649 = vmul.f32 %v1611, 6.2831855
  %v1650 = vmul.f32 %v1612, 6.2831855
  %v1651 = vmul.f32 %v1613, 6.2831855
  %v1652 = vmul.f32 %v1614, 6.2831855
  %v1653 = vmul.f32 %v1615, 6.2831855
  %v1654 = vmul.f32 %v1616, 6.2831855
  %v1655 = vmul.f32 %v1617, 6.2831855
  %v1656 = vmul.f32 %v1618, 6.2831855
  %v1657 = vmul.f32 %v1619, 6.2831855
  %v1658 = vmul.f32 %v1620, 6.2831855
  %v1659 = vand.u32 2147483647, %v1621
  %vm1660 = vcmp.le.f32.partialorder %v1659, 0.7853982
  %vm1661 = vcmp.lt.s32.totalorder %v1621, 0
  %v1662 = vand.u32 %v1621, 2139095040
  %v1663 = vshrl.u32 %v1662, 23
  %v1664 = vsub.s32 %v1663, 127
  %v1665 = vand.u32 2147483647, %v1621
  %v1666 = vand.u32 %v1665, 8388607
  %v1667 = vor.u32 %v1666, 8388608
  %v1668 = vsub.s32 0, %v1667
  %v1669 = vadd.s32 %v1664, 1
  %vm1670 = vcmp.gt.s32.totalorder %v1669, 0
  %v1671 = vsel %vm1670, %v1669, 0
  %v1672 = vshrl.u32 %v1671, 5
  %v1673 = vand.u32 %v1671, 31
  %v1674 = vsub.s32 32, %v1673
  %v1675 = vshrl.u32 683565275, %v1674
  %v1676 = vshll.u32 683565275, %v1673
  %v1677 = vshrl.u32 2475754826, %v1674
  %v1678 = vor.u32 %v1676, %v1677
  %v1679 = vshll.u32 2475754826, %v1673
  %v1680 = vshrl.u32 2131351028, %v1674
  %v1681 = vor.u32 %v1679, %v1680
  %v1682 = vshll.u32 2131351028, %v1673
  %v1683 = vshrl.u32 2102212464, %v1674
  %v1684 = vor.u32 %v1682, %v1683
  %v1685 = vshll.u32 2102212464, %v1673
  %v1686 = vshrl.u32 920167782, %v1674
  %v1687 = vor.u32 %v1685, %v1686
  %v1688 = vshll.u32 920167782, %v1673
  %v1689 = vshrl.u32 1326507024, %v1674
  %v1690 = vor.u32 %v1688, %v1689
  %vm1691 = vcmp.lt.s32.totalorder %v1672, 1
  %vm1692 = vcmp.lt.s32.totalorder %v1672, 2
  %vm1693 = vcmp.lt.s32.totalorder %v1672, 3
  %vm1694 = vcmp.lt.s32.totalorder %v1672, 4
  %v1695 = vsel %vm1691, %v1675, %v1678
  %v1696 = vsel %vm1694, %v1684, 2102212464
  %v1697 = vsel %vm1693, %v1681, %v1696
  %v1698 = vsel %vm1692, %v1695, %v1697
  %v1699 = vsel %vm1691, %v1678, %v1681
  %v1700 = vsel %vm1694, %v1687, 920167782
  %v1701 = vsel %vm1693, %v1684, %v1700
  %v1702 = vsel %vm1692, %v1699, %v1701
  %v1703 = vsel %vm1691, %v1681, %v1684
  %v1704 = vsel %vm1694, %v1690, 1326507024
  %v1705 = vsel %vm1693, %v1687, %v1704
  %v1706 = vsel %vm1692, %v1703, %v1705
  %v1707 = vshll.u32 %v1667, 8
  %v1708 = vand.u32 %v1707, 65535
  %v1709 = vshrl.u32 %v1707, 16
  %v1710 = vand.u32 %v1706, 65535
  %v1711 = vshrl.u32 %v1706, 16
  %v1712 = vmul.u32 %v1708, %v1710
  %v1713 = vmul.u32 %v1708, %v1711
  %v1714 = vmul.u32 %v1709, %v1710
  %v1715 = vmul.u32 %v1709, %v1711
  %v1716 = vshll.u32 %v1713, 16
  %v1717 = vshrl.u32 %v1713, 16
  %v1718 = vshll.u32 %v1714, 16
  %v1719 = vshrl.u32 %v1714, 16
  %vm1720 = vc.u32 %v1712, %v1716
  %v1721 = vsel %vm1720, 1, 0
  %v1722 = vadd.s32 %v1712, %v1716
  %v1723 = vadd.s32 %v1715, %v1721
  %vm1724 = vc.u32 %v1722, %v1718
  %v1725 = vsel %vm1724, 1, 0
  %v1726 = vadd.s32 %v1722, %v1718
  %v1727 = vadd.s32 %v1723, %v1725
  %v1728 = vadd.s32 %v1727, %v1717
  %v1729 = vadd.s32 %v1728, %v1719
  %v1730 = vand.u32 %v1707, 65535
  %v1731 = vshrl.u32 %v1707, 16
  %v1732 = vand.u32 %v1702, 65535
  %v1733 = vshrl.u32 %v1702, 16
  %v1734 = vmul.u32 %v1730, %v1732
  %v1735 = vmul.u32 %v1730, %v1733
  %v1736 = vmul.u32 %v1731, %v1732
  %v1737 = vmul.u32 %v1731, %v1733
  %v1738 = vshll.u32 %v1735, 16
  %v1739 = vshrl.u32 %v1735, 16
  %v1740 = vshll.u32 %v1736, 16
  %v1741 = vshrl.u32 %v1736, 16
  %vm1742 = vc.u32 %v1734, %v1738
  %v1743 = vsel %vm1742, 1, 0
  %v1744 = vadd.s32 %v1734, %v1738
  %v1745 = vadd.s32 %v1737, %v1743
  %vm1746 = vc.u32 %v1744, %v1740
  %v1747 = vsel %vm1746, 1, 0
  %v1748 = vadd.s32 %v1744, %v1740
  %v1749 = vadd.s32 %v1745, %v1747
  %v1750 = vadd.s32 %v1749, %v1739
  %v1751 = vadd.s32 %v1750, %v1741
  %v1752 = vmul.u32 %v1707, %v1698
  %v1753 = vadd.s32 %v1729, %v1748
  %vm1754 = vc.u32 %v1729, %v1748
  %v1755 = vadd.s32 %v1751, 1
  %v1756 = vsel %vm1754, %v1755, %v1751
  %v1757 = vadd.s32 %v1752, %v1756
  %v1758 = vadd.s32 %v1757, 536870912
  %v1759 = vshrl.u32 %v1758, 30
  %v1760 = vshll.u32 %v1759, 30
  %v1761 = vsub.s32 %v1757, %v1760
  %vm1762 = vcmp.lt.s32.totalorder %v1761, 0
  %v1763 = vsub.s32 0, %v1761
  %v1764 = vsel %vm1762, %v1763, %v1761
  %v1765 = vclz %v1764
  %v1766 = vsub.s32 %v1765, 2
  %vm1767 = vcmp.gt.s32.totalorder 0, %v1766
  %v1768 = vsel %vm1767, 0, %v1766
  %v1769 = vsub.s32 32, %v1768
  %v1770 = vshll.u32 %v1761, %v1768
  %v1771 = vshrl.u32 %v1753, %v1769
  %v1772 = vor.u32 %v1770, %v1771
  %v1773 = vsub.s32 4294967266, %v1768
  %v1774 = vadd.s32 %v1773, 127
  %v1775 = vshll.u32 %v1774, 23
  %v1776 = vor.u32 4788187, %v1775
  %v1777 = vand.u32 2147483647, %v1776
  %v1779 = vcvt.s32.f32 %v1772
  %v1780 = vmul.f32 %v1779, %v1777
  %v1781 = vxor.u32 %v1780, 2147483648
  %v1782 = vsel %vm1661, %v1781, %v1780
  %v1783 = vsub.s32 4, %v1759
  %v1784 = vsel %vm1661, %v1783, %v1759
  %v1785 = vsel %vm1660, %v1621, %v1782
  %v1786 = vsel %vm1660, 0, %v1784
  %v1787 = vmul.f32 %v1785, %v1785
  %v1788 = vmul.f32 %v1787, -0.001358992
  %v1789 = vadd.f32 %v1788, 0.041655596
  %v1790 = vmul.f32 %v1787, %v1789
  %v1791 = vadd.f32 %v1790, -0.4999988
  %v1792 = vmul.f32 %v1787, %v1791
  %v1793 = vadd.f32 1.0, %v1792
  %v1794 = vmul.f32 %v1785, %v1785
  %v1795 = vmul.f32 %v1794, -0.00019511016
  %v1796 = vadd.f32 %v1795, 0.008332121
  %v1797 = vmul.f32 %v1794, %v1796
  %v1798 = vadd.f32 %v1797, -0.16666654
  %v1799 = vmul.f32 %v1794, %v1798
  %v1800 = vadd.f32 %v1799, 1.0
  %v1801 = vmul.f32 %v1800, %v1785
  %vm1802 = vweird.f32 %v1621
  %v1803 = vadd.s32 %v1786, 3
  %v1804 = vand.u32 %v1803, 3
  %vm1805 = vcmp.lt.s32.totalorder %v1804, 2
  %vm1806 = vcmp.eq.s32.totalorder %v1804, 0
  %v1807 = vxor.u32 %v1801, 2147483648
  %v1808 = vsel %vm1806, %v1793, %v1807
  %vm1809 = vcmp.eq.s32.totalorder %v1804, 2
  %v1810 = vxor.u32 %v1793, 2147483648
  %v1811 = vsel %vm1809, %v1810, %v1801
  %v1812 = vsel %vm1805, %v1808, %v1811
  %v1813 = vsel %vm1802, nan, %v1812
  %v1814 = vand.u32 2147483647, %v1622
  %vm1815 = vcmp.le.f32.partialorder %v1814, 0.7853982
  %vm1816 = vcmp.lt.s32.totalorder %v1622, 0
  %v1817 = vand.u32 %v1622, 2139095040
  %v1818 = vshrl.u32 %v1817, 23
  %v1819 = vsub.s32 %v1818, 127
  %v1820 = vand.u32 2147483647, %v1622
  %v1821 = vand.u32 %v1820, 8388607
  %v1822 = vor.u32 %v1821, 8388608
  %v1823 = vsub.s32 0, %v1822
  %v1824 = vadd.s32 %v1819, 1
  %vm1825 = vcmp.gt.s32.totalorder %v1824, 0
  %v1826 = vsel %vm1825, %v1824, 0
  %v1827 = vshrl.u32 %v1826, 5
  %v1828 = vand.u32 %v1826, 31
  %v1829 = vsub.s32 32, %v1828
  %v1830 = vshrl.u32 683565275, %v1829
  %v1831 = vshll.u32 683565275, %v1828
  %v1832 = vshrl.u32 2475754826, %v1829
  %v1833 = vor.u32 %v1831, %v1832
  %v1834 = vshll.u32 2475754826, %v1828
  %v1835 = vshrl.u32 2131351028, %v1829
  %v1836 = vor.u32 %v1834, %v1835
  %v1837 = vshll.u32 2131351028, %v1828
  %v1838 = vshrl.u32 2102212464, %v1829
  %v1839 = vor.u32 %v1837, %v1838
  %v1840 = vshll.u32 2102212464, %v1828
  %v1841 = vshrl.u32 920167782, %v1829
  %v1842 = vor.u32 %v1840, %v1841
  %v1843 = vshll.u32 920167782, %v1828
  %v1844 = vshrl.u32 1326507024, %v1829
  %v1845 = vor.u32 %v1843, %v1844
  %vm1846 = vcmp.lt.s32.totalorder %v1827, 1
  %vm1847 = vcmp.lt.s32.totalorder %v1827, 2
  %vm1848 = vcmp.lt.s32.totalorder %v1827, 3
  %vm1849 = vcmp.lt.s32.totalorder %v1827, 4
  %v1850 = vsel %vm1846, %v1830, %v1833
  %v1851 = vsel %vm1849, %v1839, 2102212464
  %v1852 = vsel %vm1848, %v1836, %v1851
  %v1853 = vsel %vm1847, %v1850, %v1852
  %v1854 = vsel %vm1846, %v1833, %v1836
  %v1855 = vsel %vm1849, %v1842, 920167782
  %v1856 = vsel %vm1848, %v1839, %v1855
  %v1857 = vsel %vm1847, %v1854, %v1856
  %v1858 = vsel %vm1846, %v1836, %v1839
  %v1859 = vsel %vm1849, %v1845, 1326507024
  %v1860 = vsel %vm1848, %v1842, %v1859
  %v1861 = vsel %vm1847, %v1858, %v1860
  %v1862 = vshll.u32 %v1822, 8
  %v1863 = vand.u32 %v1862, 65535
  %v1864 = vshrl.u32 %v1862, 16
  %v1865 = vand.u32 %v1861, 65535
  %v1866 = vshrl.u32 %v1861, 16
  %v1867 = vmul.u32 %v1863, %v1865
  %v1868 = vmul.u32 %v1863, %v1866
  %v1869 = vmul.u32 %v1864, %v1865
  %v1870 = vmul.u32 %v1864, %v1866
  %v1871 = vshll.u32 %v1868, 16
  %v1872 = vshrl.u32 %v1868, 16
  %v1873 = vshll.u32 %v1869, 16
  %v1874 = vshrl.u32 %v1869, 16
  %vm1875 = vc.u32 %v1867, %v1871
  %v1876 = vsel %vm1875, 1, 0
  %v1877 = vadd.s32 %v1867, %v1871
  %v1878 = vadd.s32 %v1870, %v1876
  %vm1879 = vc.u32 %v1877, %v1873
  %v1880 = vsel %vm1879, 1, 0
  %v1881 = vadd.s32 %v1877, %v1873
  %v1882 = vadd.s32 %v1878, %v1880
  %v1883 = vadd.s32 %v1882, %v1872
  %v1884 = vadd.s32 %v1883, %v1874
  %v1885 = vand.u32 %v1862, 65535
  %v1886 = vshrl.u32 %v1862, 16
  %v1887 = vand.u32 %v1857, 65535
  %v1888 = vshrl.u32 %v1857, 16
  %v1889 = vmul.u32 %v1885, %v1887
  %v1890 = vmul.u32 %v1885, %v1888
  %v1891 = vmul.u32 %v1886, %v1887
  %v1892 = vmul.u32 %v1886, %v1888
  %v1893 = vshll.u32 %v1890, 16
  %v1894 = vshrl.u32 %v1890, 16
  %v1895 = vshll.u32 %v1891, 16
  %v1896 = vshrl.u32 %v1891, 16
  %vm1897 = vc.u32 %v1889, %v1893
  %v1898 = vsel %vm1897, 1, 0
  %v1899 = vadd.s32 %v1889, %v1893
  %v1900 = vadd.s32 %v1892, %v1898
  %vm1901 = vc.u32 %v1899, %v1895
  %v1902 = vsel %vm1901, 1, 0
  %v1903 = vadd.s32 %v1899, %v1895
  %v1904 = vadd.s32 %v1900, %v1902
  %v1905 = vadd.s32 %v1904, %v1894
  %v1906 = vadd.s32 %v1905, %v1896
  %v1907 = vmul.u32 %v1862, %v1853
  %v1908 = vadd.s32 %v1884, %v1903
  %vm1909 = vc.u32 %v1884, %v1903
  %v1910 = vadd.s32 %v1906, 1
  %v1911 = vsel %vm1909, %v1910, %v1906
  %v1912 = vadd.s32 %v1907, %v1911
  %v1913 = vadd.s32 %v1912, 536870912
  %v1914 = vshrl.u32 %v1913, 30
  %v1915 = vshll.u32 %v1914, 30
  %v1916 = vsub.s32 %v1912, %v1915
  %vm1917 = vcmp.lt.s32.totalorder %v1916, 0
  %v1918 = vsub.s32 0, %v1916
  %v1919 = vsel %vm1917, %v1918, %v1916
  %v1920 = vclz %v1919
  %v1921 = vsub.s32 %v1920, 2
  %vm1922 = vcmp.gt.s32.totalorder 0, %v1921
  %v1923 = vsel %vm1922, 0, %v1921
  %v1924 = vsub.s32 32, %v1923
  %v1925 = vshll.u32 %v1916, %v1923
  %v1926 = vshrl.u32 %v1908, %v1924
  %v1927 = vor.u32 %v1925, %v1926
  %v1928 = vsub.s32 4294967266, %v1923
  %v1929 = vadd.s32 %v1928, 127
  %v1930 = vshll.u32 %v1929, 23
  %v1931 = vor.u32 4788187, %v1930
  %v1932 = vand.u32 2147483647, %v1931
  %v1934 = vcvt.s32.f32 %v1927
  %v1935 = vmul.f32 %v1934, %v1932
  %v1936 = vxor.u32 %v1935, 2147483648
  %v1937 = vsel %vm1816, %v1936, %v1935
  %v1938 = vsub.s32 4, %v1914
  %v1939 = vsel %vm1816, %v1938, %v1914
  %v1940 = vsel %vm1815, %v1622, %v1937
  %v1941 = vsel %vm1815, 0, %v1939
  %v1942 = vmul.f32 %v1940, %v1940
  %v1943 = vmul.f32 %v1942, -0.001358992
  %v1944 = vadd.f32 %v1943, 0.041655596
  %v1945 = vmul.f32 %v1942, %v1944
  %v1946 = vadd.f32 %v1945, -0.4999988
  %v1947 = vmul.f32 %v1942, %v1946
  %v1948 = vadd.f32 1.0, %v1947
  %v1949 = vmul.f32 %v1940, %v1940
  %v1950 = vmul.f32 %v1949, -0.00019511016
  %v1951 = vadd.f32 %v1950, 0.008332121
  %v1952 = vmul.f32 %v1949, %v1951
  %v1953 = vadd.f32 %v1952, -0.16666654
  %v1954 = vmul.f32 %v1949, %v1953
  %v1955 = vadd.f32 %v1954, 1.0
  %v1956 = vmul.f32 %v1955, %v1940
  %vm1957 = vweird.f32 %v1622
  %v1958 = vadd.s32 %v1941, 3
  %v1959 = vand.u32 %v1958, 3
  %vm1960 = vcmp.lt.s32.totalorder %v1959, 2
  %vm1961 = vcmp.eq.s32.totalorder %v1959, 0
  %v1962 = vxor.u32 %v1956, 2147483648
  %v1963 = vsel %vm1961, %v1948, %v1962
  %vm1964 = vcmp.eq.s32.totalorder %v1959, 2
  %v1965 = vxor.u32 %v1948, 2147483648
  %v1966 = vsel %vm1964, %v1965, %v1956
  %v1967 = vsel %vm1960, %v1963, %v1966
  %v1968 = vsel %vm1957, nan, %v1967
  %v1969 = vand.u32 2147483647, %v1623
  %vm1970 = vcmp.le.f32.partialorder %v1969, 0.7853982
  %vm1971 = vcmp.lt.s32.totalorder %v1623, 0
  %v1972 = vand.u32 %v1623, 2139095040
  %v1973 = vshrl.u32 %v1972, 23
  %v1974 = vsub.s32 %v1973, 127
  %v1975 = vand.u32 2147483647, %v1623
  %v1976 = vand.u32 %v1975, 8388607
  %v1977 = vor.u32 %v1976, 8388608
  %v1978 = vsub.s32 0, %v1977
  %v1979 = vadd.s32 %v1974, 1
  %vm1980 = vcmp.gt.s32.totalorder %v1979, 0
  %v1981 = vsel %vm1980, %v1979, 0
  %v1982 = vshrl.u32 %v1981, 5
  %v1983 = vand.u32 %v1981, 31
  %v1984 = vsub.s32 32, %v1983
  %v1985 = vshrl.u32 683565275, %v1984
  %v1986 = vshll.u32 683565275, %v1983
  %v1987 = vshrl.u32 2475754826, %v1984
  %v1988 = vor.u32 %v1986, %v1987
  %v1989 = vshll.u32 2475754826, %v1983
  %v1990 = vshrl.u32 2131351028, %v1984
  %v1991 = vor.u32 %v1989, %v1990
  %v1992 = vshll.u32 2131351028, %v1983
  %v1993 = vshrl.u32 2102212464, %v1984
  %v1994 = vor.u32 %v1992, %v1993
  %v1995 = vshll.u32 2102212464, %v1983
  %v1996 = vshrl.u32 920167782, %v1984
  %v1997 = vor.u32 %v1995, %v1996
  %v1998 = vshll.u32 920167782, %v1983
  %v1999 = vshrl.u32 1326507024, %v1984
  %v2000 = vor.u32 %v1998, %v1999
  %vm2001 = vcmp.lt.s32.totalorder %v1982, 1
  %vm2002 = vcmp.lt.s32.totalorder %v1982, 2
  %vm2003 = vcmp.lt.s32.totalorder %v1982, 3
  %vm2004 = vcmp.lt.s32.totalorder %v1982, 4
  %v2005 = vsel %vm2001, %v1985, %v1988
  %v2006 = vsel %vm2004, %v1994, 2102212464
  %v2007 = vsel %vm2003, %v1991, %v2006
  %v2008 = vsel %vm2002, %v2005, %v2007
  %v2009 = vsel %vm2001, %v1988, %v1991
  %v2010 = vsel %vm2004, %v1997, 920167782
  %v2011 = vsel %vm2003, %v1994, %v2010
  %v2012 = vsel %vm2002, %v2009, %v2011
  %v2013 = vsel %vm2001, %v1991, %v1994
  %v2014 = vsel %vm2004, %v2000, 1326507024
  %v2015 = vsel %vm2003, %v1997, %v2014
  %v2016 = vsel %vm2002, %v2013, %v2015
  %v2017 = vshll.u32 %v1977, 8
  %v2018 = vand.u32 %v2017, 65535
  %v2019 = vshrl.u32 %v2017, 16
  %v2020 = vand.u32 %v2016, 65535
  %v2021 = vshrl.u32 %v2016, 16
  %v2022 = vmul.u32 %v2018, %v2020
  %v2023 = vmul.u32 %v2018, %v2021
  %v2024 = vmul.u32 %v2019, %v2020
  %v2025 = vmul.u32 %v2019, %v2021
  %v2026 = vshll.u32 %v2023, 16
  %v2027 = vshrl.u32 %v2023, 16
  %v2028 = vshll.u32 %v2024, 16
  %v2029 = vshrl.u32 %v2024, 16
  %vm2030 = vc.u32 %v2022, %v2026
  %v2031 = vsel %vm2030, 1, 0
  %v2032 = vadd.s32 %v2022, %v2026
  %v2033 = vadd.s32 %v2025, %v2031
  %vm2034 = vc.u32 %v2032, %v2028
  %v2035 = vsel %vm2034, 1, 0
  %v2036 = vadd.s32 %v2032, %v2028
  %v2037 = vadd.s32 %v2033, %v2035
  %v2038 = vadd.s32 %v2037, %v2027
  %v2039 = vadd.s32 %v2038, %v2029
  %v2040 = vand.u32 %v2017, 65535
  %v2041 = vshrl.u32 %v2017, 16
  %v2042 = vand.u32 %v2012, 65535
  %v2043 = vshrl.u32 %v2012, 16
  %v2044 = vmul.u32 %v2040, %v2042
  %v2045 = vmul.u32 %v2040, %v2043
  %v2046 = vmul.u32 %v2041, %v2042
  %v2047 = vmul.u32 %v2041, %v2043
  %v2048 = vshll.u32 %v2045, 16
  %v2049 = vshrl.u32 %v2045, 16
  %v2050 = vshll.u32 %v2046, 16
  %v2051 = vshrl.u32 %v2046, 16
  %vm2052 = vc.u32 %v2044, %v2048
  %v2053 = vsel %vm2052, 1, 0
  %v2054 = vadd.s32 %v2044, %v2048
  %v2055 = vadd.s32 %v2047, %v2053
  %vm2056 = vc.u32 %v2054, %v2050
  %v2057 = vsel %vm2056, 1, 0
  %v2058 = vadd.s32 %v2054, %v2050
  %v2059 = vadd.s32 %v2055, %v2057
  %v2060 = vadd.s32 %v2059, %v2049
  %v2061 = vadd.s32 %v2060, %v2051
  %v2062 = vmul.u32 %v2017, %v2008
  %v2063 = vadd.s32 %v2039, %v2058
  %vm2064 = vc.u32 %v2039, %v2058
  %v2065 = vadd.s32 %v2061, 1
  %v2066 = vsel %vm2064, %v2065, %v2061
  %v2067 = vadd.s32 %v2062, %v2066
  %v2068 = vadd.s32 %v2067, 536870912
  %v2069 = vshrl.u32 %v2068, 30
  %v2070 = vshll.u32 %v2069, 30
  %v2071 = vsub.s32 %v2067, %v2070
  %vm2072 = vcmp.lt.s32.totalorder %v2071, 0
  %v2073 = vsub.s32 0, %v2071
  %v2074 = vsel %vm2072, %v2073, %v2071
  %v2075 = vclz %v2074
  %v2076 = vsub.s32 %v2075, 2
  %vm2077 = vcmp.gt.s32.totalorder 0, %v2076
  %v2078 = vsel %vm2077, 0, %v2076
  %v2079 = vsub.s32 32, %v2078
  %v2080 = vshll.u32 %v2071, %v2078
  %v2081 = vshrl.u32 %v2063, %v2079
  %v2082 = vor.u32 %v2080, %v2081
  %v2083 = vsub.s32 4294967266, %v2078
  %v2084 = vadd.s32 %v2083, 127
  %v2085 = vshll.u32 %v2084, 23
  %v2086 = vor.u32 4788187, %v2085
  %v2087 = vand.u32 2147483647, %v2086
  %v2089 = vcvt.s32.f32 %v2082
  %v2090 = vmul.f32 %v2089, %v2087
  %v2091 = vxor.u32 %v2090, 2147483648
  %v2092 = vsel %vm1971, %v2091, %v2090
  %v2093 = vsub.s32 4, %v2069
  %v2094 = vsel %vm1971, %v2093, %v2069
  %v2095 = vsel %vm1970, %v1623, %v2092
  %v2096 = vsel %vm1970, 0, %v2094
  %v2097 = vmul.f32 %v2095, %v2095
  %v2098 = vmul.f32 %v2097, -0.001358992
  %v2099 = vadd.f32 %v2098, 0.041655596
  %v2100 = vmul.f32 %v2097, %v2099
  %v2101 = vadd.f32 %v2100, -0.4999988
  %v2102 = vmul.f32 %v2097, %v2101
  %v2103 = vadd.f32 1.0, %v2102
  %v2104 = vmul.f32 %v2095, %v2095
  %v2105 = vmul.f32 %v2104, -0.00019511016
  %v2106 = vadd.f32 %v2105, 0.008332121
  %v2107 = vmul.f32 %v2104, %v2106
  %v2108 = vadd.f32 %v2107, -0.16666654
  %v2109 = vmul.f32 %v2104, %v2108
  %v2110 = vadd.f32 %v2109, 1.0
  %v2111 = vmul.f32 %v2110, %v2095
  %vm2112 = vweird.f32 %v1623
  %v2113 = vadd.s32 %v2096, 3
  %v2114 = vand.u32 %v2113, 3
  %vm2115 = vcmp.lt.s32.totalorder %v2114, 2
  %vm2116 = vcmp.eq.s32.totalorder %v2114, 0
  %v2117 = vxor.u32 %v2111, 2147483648
  %v2118 = vsel %vm2116, %v2103, %v2117
  %vm2119 = vcmp.eq.s32.totalorder %v2114, 2
  %v2120 = vxor.u32 %v2103, 2147483648
  %v2121 = vsel %vm2119, %v2120, %v2111
  %v2122 = vsel %vm2115, %v2118, %v2121
  %v2123 = vsel %vm2112, nan, %v2122
  %v2124 = vand.u32 2147483647, %v1624
  %vm2125 = vcmp.le.f32.partialorder %v2124, 0.7853982
  %vm2126 = vcmp.lt.s32.totalorder %v1624, 0
  %v2127 = vand.u32 %v1624, 2139095040
  %v2128 = vshrl.u32 %v2127, 23
  %v2129 = vsub.s32 %v2128, 127
  %v2130 = vand.u32 2147483647, %v1624
  %v2131 = vand.u32 %v2130, 8388607
  %v2132 = vor.u32 %v2131, 8388608
  %v2133 = vsub.s32 0, %v2132
  %v2134 = vadd.s32 %v2129, 1
  %vm2135 = vcmp.gt.s32.totalorder %v2134, 0
  %v2136 = vsel %vm2135, %v2134, 0
  %v2137 = vshrl.u32 %v2136, 5
  %v2138 = vand.u32 %v2136, 31
  %v2139 = vsub.s32 32, %v2138
  %v2140 = vshrl.u32 683565275, %v2139
  %v2141 = vshll.u32 683565275, %v2138
  %v2142 = vshrl.u32 2475754826, %v2139
  %v2143 = vor.u32 %v2141, %v2142
  %v2144 = vshll.u32 2475754826, %v2138
  %v2145 = vshrl.u32 2131351028, %v2139
  %v2146 = vor.u32 %v2144, %v2145
  %v2147 = vshll.u32 2131351028, %v2138
  %v2148 = vshrl.u32 2102212464, %v2139
  %v2149 = vor.u32 %v2147, %v2148
  %v2150 = vshll.u32 2102212464, %v2138
  %v2151 = vshrl.u32 920167782, %v2139
  %v2152 = vor.u32 %v2150, %v2151
  %v2153 = vshll.u32 920167782, %v2138
  %v2154 = vshrl.u32 1326507024, %v2139
  %v2155 = vor.u32 %v2153, %v2154
  %vm2156 = vcmp.lt.s32.totalorder %v2137, 1
  %vm2157 = vcmp.lt.s32.totalorder %v2137, 2
  %vm2158 = vcmp.lt.s32.totalorder %v2137, 3
  %vm2159 = vcmp.lt.s32.totalorder %v2137, 4
  %v2160 = vsel %vm2156, %v2140, %v2143
  %v2161 = vsel %vm2159, %v2149, 2102212464
  %v2162 = vsel %vm2158, %v2146, %v2161
  %v2163 = vsel %vm2157, %v2160, %v2162
  %v2164 = vsel %vm2156, %v2143, %v2146
  %v2165 = vsel %vm2159, %v2152, 920167782
  %v2166 = vsel %vm2158, %v2149, %v2165
  %v2167 = vsel %vm2157, %v2164, %v2166
  %v2168 = vsel %vm2156, %v2146, %v2149
  %v2169 = vsel %vm2159, %v2155, 1326507024
  %v2170 = vsel %vm2158, %v2152, %v2169
  %v2171 = vsel %vm2157, %v2168, %v2170
  %v2172 = vshll.u32 %v2132, 8
  %v2173 = vand.u32 %v2172, 65535
  %v2174 = vshrl.u32 %v2172, 16
  %v2175 = vand.u32 %v2171, 65535
  %v2176 = vshrl.u32 %v2171, 16
  %v2177 = vmul.u32 %v2173, %v2175
  %v2178 = vmul.u32 %v2173, %v2176
  %v2179 = vmul.u32 %v2174, %v2175
  %v2180 = vmul.u32 %v2174, %v2176
  %v2181 = vshll.u32 %v2178, 16
  %v2182 = vshrl.u32 %v2178, 16
  %v2183 = vshll.u32 %v2179, 16
  %v2184 = vshrl.u32 %v2179, 16
  %vm2185 = vc.u32 %v2177, %v2181
  %v2186 = vsel %vm2185, 1, 0
  %v2187 = vadd.s32 %v2177, %v2181
  %v2188 = vadd.s32 %v2180, %v2186
  %vm2189 = vc.u32 %v2187, %v2183
  %v2190 = vsel %vm2189, 1, 0
  %v2191 = vadd.s32 %v2187, %v2183
  %v2192 = vadd.s32 %v2188, %v2190
  %v2193 = vadd.s32 %v2192, %v2182
  %v2194 = vadd.s32 %v2193, %v2184
  %v2195 = vand.u32 %v2172, 65535
  %v2196 = vshrl.u32 %v2172, 16
  %v2197 = vand.u32 %v2167, 65535
  %v2198 = vshrl.u32 %v2167, 16
  %v2199 = vmul.u32 %v2195, %v2197
  %v2200 = vmul.u32 %v2195, %v2198
  %v2201 = vmul.u32 %v2196, %v2197
  %v2202 = vmul.u32 %v2196, %v2198
  %v2203 = vshll.u32 %v2200, 16
  %v2204 = vshrl.u32 %v2200, 16
  %v2205 = vshll.u32 %v2201, 16
  %v2206 = vshrl.u32 %v2201, 16
  %vm2207 = vc.u32 %v2199, %v2203
  %v2208 = vsel %vm2207, 1, 0
  %v2209 = vadd.s32 %v2199, %v2203
  %v2210 = vadd.s32 %v2202, %v2208
  %vm2211 = vc.u32 %v2209, %v2205
  %v2212 = vsel %vm2211, 1, 0
  %v2213 = vadd.s32 %v2209, %v2205
  %v2214 = vadd.s32 %v2210, %v2212
  %v2215 = vadd.s32 %v2214, %v2204
  %v2216 = vadd.s32 %v2215, %v2206
  %v2217 = vmul.u32 %v2172, %v2163
  %v2218 = vadd.s32 %v2194, %v2213
  %vm2219 = vc.u32 %v2194, %v2213
  %v2220 = vadd.s32 %v2216, 1
  %v2221 = vsel %vm2219, %v2220, %v2216
  %v2222 = vadd.s32 %v2217, %v2221
  %v2223 = vadd.s32 %v2222, 536870912
  %v2224 = vshrl.u32 %v2223, 30
  %v2225 = vshll.u32 %v2224, 30
  %v2226 = vsub.s32 %v2222, %v2225
  %vm2227 = vcmp.lt.s32.totalorder %v2226, 0
  %v2228 = vsub.s32 0, %v2226
  %v2229 = vsel %vm2227, %v2228, %v2226
  %v2230 = vclz %v2229
  %v2231 = vsub.s32 %v2230, 2
  %vm2232 = vcmp.gt.s32.totalorder 0, %v2231
  %v2233 = vsel %vm2232, 0, %v2231
  %v2234 = vsub.s32 32, %v2233
  %v2235 = vshll.u32 %v2226, %v2233
  %v2236 = vshrl.u32 %v2218, %v2234
  %v2237 = vor.u32 %v2235, %v2236
  %v2238 = vsub.s32 4294967266, %v2233
  %v2239 = vadd.s32 %v2238, 127
  %v2240 = vshll.u32 %v2239, 23
  %v2241 = vor.u32 4788187, %v2240
  %v2242 = vand.u32 2147483647, %v2241
  %v2244 = vcvt.s32.f32 %v2237
  %v2245 = vmul.f32 %v2244, %v2242
  %v2246 = vxor.u32 %v2245, 2147483648
  %v2247 = vsel %vm2126, %v2246, %v2245
  %v2248 = vsub.s32 4, %v2224
  %v2249 = vsel %vm2126, %v2248, %v2224
  %v2250 = vsel %vm2125, %v1624, %v2247
  %v2251 = vsel %vm2125, 0, %v2249
  %v2252 = vmul.f32 %v2250, %v2250
  %v2253 = vmul.f32 %v2252, -0.001358992
  %v2254 = vadd.f32 %v2253, 0.041655596
  %v2255 = vmul.f32 %v2252, %v2254
  %v2256 = vadd.f32 %v2255, -0.4999988
  %v2257 = vmul.f32 %v2252, %v2256
  %v2258 = vadd.f32 1.0, %v2257
  %v2259 = vmul.f32 %v2250, %v2250
  %v2260 = vmul.f32 %v2259, -0.00019511016
  %v2261 = vadd.f32 %v2260, 0.008332121
  %v2262 = vmul.f32 %v2259, %v2261
  %v2263 = vadd.f32 %v2262, -0.16666654
  %v2264 = vmul.f32 %v2259, %v2263
  %v2265 = vadd.f32 %v2264, 1.0
  %v2266 = vmul.f32 %v2265, %v2250
  %vm2267 = vweird.f32 %v1624
  %v2268 = vadd.s32 %v2251, 3
  %v2269 = vand.u32 %v2268, 3
  %vm2270 = vcmp.lt.s32.totalorder %v2269, 2
  %vm2271 = vcmp.eq.s32.totalorder %v2269, 0
  %v2272 = vxor.u32 %v2266, 2147483648
  %v2273 = vsel %vm2271, %v2258, %v2272
  %vm2274 = vcmp.eq.s32.totalorder %v2269, 2
  %v2275 = vxor.u32 %v2258, 2147483648
  %v2276 = vsel %vm2274, %v2275, %v2266
  %v2277 = vsel %vm2270, %v2273, %v2276
  %v2278 = vsel %vm2267, nan, %v2277
  %v2279 = vand.u32 2147483647, %v1625
  %vm2280 = vcmp.le.f32.partialorder %v2279, 0.7853982
  %vm2281 = vcmp.lt.s32.totalorder %v1625, 0
  %v2282 = vand.u32 %v1625, 2139095040
  %v2283 = vshrl.u32 %v2282, 23
  %v2284 = vsub.s32 %v2283, 127
  %v2285 = vand.u32 2147483647, %v1625
  %v2286 = vand.u32 %v2285, 8388607
  %v2287 = vor.u32 %v2286, 8388608
  %v2288 = vsub.s32 0, %v2287
  %v2289 = vadd.s32 %v2284, 1
  %vm2290 = vcmp.gt.s32.totalorder %v2289, 0
  %v2291 = vsel %vm2290, %v2289, 0
  %v2292 = vshrl.u32 %v2291, 5
  %v2293 = vand.u32 %v2291, 31
  %v2294 = vsub.s32 32, %v2293
  %v2295 = vshrl.u32 683565275, %v2294
  %v2296 = vshll.u32 683565275, %v2293
  %v2297 = vshrl.u32 2475754826, %v2294
  %v2298 = vor.u32 %v2296, %v2297
  %v2299 = vshll.u32 2475754826, %v2293
  %v2300 = vshrl.u32 2131351028, %v2294
  %v2301 = vor.u32 %v2299, %v2300
  %v2302 = vshll.u32 2131351028, %v2293
  %v2303 = vshrl.u32 2102212464, %v2294
  %v2304 = vor.u32 %v2302, %v2303
  %v2305 = vshll.u32 2102212464, %v2293
  %v2306 = vshrl.u32 920167782, %v2294
  %v2307 = vor.u32 %v2305, %v2306
  %v2308 = vshll.u32 920167782, %v2293
  %v2309 = vshrl.u32 1326507024, %v2294
  %v2310 = vor.u32 %v2308, %v2309
  %vm2311 = vcmp.lt.s32.totalorder %v2292, 1
  %vm2312 = vcmp.lt.s32.totalorder %v2292, 2
  %vm2313 = vcmp.lt.s32.totalorder %v2292, 3
  %vm2314 = vcmp.lt.s32.totalorder %v2292, 4
  %v2315 = vsel %vm2311, %v2295, %v2298
  %v2316 = vsel %vm2314, %v2304, 2102212464
  %v2317 = vsel %vm2313, %v2301, %v2316
  %v2318 = vsel %vm2312, %v2315, %v2317
  %v2319 = vsel %vm2311, %v2298, %v2301
  %v2320 = vsel %vm2314, %v2307, 920167782
  %v2321 = vsel %vm2313, %v2304, %v2320
  %v2322 = vsel %vm2312, %v2319, %v2321
  %v2323 = vsel %vm2311, %v2301, %v2304
  %v2324 = vsel %vm2314, %v2310, 1326507024
  %v2325 = vsel %vm2313, %v2307, %v2324
  %v2326 = vsel %vm2312, %v2323, %v2325
  %v2327 = vshll.u32 %v2287, 8
  %v2328 = vand.u32 %v2327, 65535
  %v2329 = vshrl.u32 %v2327, 16
  %v2330 = vand.u32 %v2326, 65535
  %v2331 = vshrl.u32 %v2326, 16
  %v2332 = vmul.u32 %v2328, %v2330
  %v2333 = vmul.u32 %v2328, %v2331
  %v2334 = vmul.u32 %v2329, %v2330
  %v2335 = vmul.u32 %v2329, %v2331
  %v2336 = vshll.u32 %v2333, 16
  %v2337 = vshrl.u32 %v2333, 16
  %v2338 = vshll.u32 %v2334, 16
  %v2339 = vshrl.u32 %v2334, 16
  %vm2340 = vc.u32 %v2332, %v2336
  %v2341 = vsel %vm2340, 1, 0
  %v2342 = vadd.s32 %v2332, %v2336
  %v2343 = vadd.s32 %v2335, %v2341
  %vm2344 = vc.u32 %v2342, %v2338
  %v2345 = vsel %vm2344, 1, 0
  %v2346 = vadd.s32 %v2342, %v2338
  %v2347 = vadd.s32 %v2343, %v2345
  %v2348 = vadd.s32 %v2347, %v2337
  %v2349 = vadd.s32 %v2348, %v2339
  %v2350 = vand.u32 %v2327, 65535
  %v2351 = vshrl.u32 %v2327, 16
  %v2352 = vand.u32 %v2322, 65535
  %v2353 = vshrl.u32 %v2322, 16
  %v2354 = vmul.u32 %v2350, %v2352
  %v2355 = vmul.u32 %v2350, %v2353
  %v2356 = vmul.u32 %v2351, %v2352
  %v2357 = vmul.u32 %v2351, %v2353
  %v2358 = vshll.u32 %v2355, 16
  %v2359 = vshrl.u32 %v2355, 16
  %v2360 = vshll.u32 %v2356, 16
  %v2361 = vshrl.u32 %v2356, 16
  %vm2362 = vc.u32 %v2354, %v2358
  %v2363 = vsel %vm2362, 1, 0
  %v2364 = vadd.s32 %v2354, %v2358
  %v2365 = vadd.s32 %v2357, %v2363
  %vm2366 = vc.u32 %v2364, %v2360
  %v2367 = vsel %vm2366, 1, 0
  %v2368 = vadd.s32 %v2364, %v2360
  %v2369 = vadd.s32 %v2365, %v2367
  %v2370 = vadd.s32 %v2369, %v2359
  %v2371 = vadd.s32 %v2370, %v2361
  %v2372 = vmul.u32 %v2327, %v2318
  %v2373 = vadd.s32 %v2349, %v2368
  %vm2374 = vc.u32 %v2349, %v2368
  %v2375 = vadd.s32 %v2371, 1
  %v2376 = vsel %vm2374, %v2375, %v2371
  %v2377 = vadd.s32 %v2372, %v2376
  %v2378 = vadd.s32 %v2377, 536870912
  %v2379 = vshrl.u32 %v2378, 30
  %v2380 = vshll.u32 %v2379, 30
  %v2381 = vsub.s32 %v2377, %v2380
  %vm2382 = vcmp.lt.s32.totalorder %v2381, 0
  %v2383 = vsub.s32 0, %v2381
  %v2384 = vsel %vm2382, %v2383, %v2381
  %v2385 = vclz %v2384
  %v2386 = vsub.s32 %v2385, 2
  %vm2387 = vcmp.gt.s32.totalorder 0, %v2386
  %v2388 = vsel %vm2387, 0, %v2386
  %v2389 = vsub.s32 32, %v2388
  %v2390 = vshll.u32 %v2381, %v2388
  %v2391 = vshrl.u32 %v2373, %v2389
  %v2392 = vor.u32 %v2390, %v2391
  %v2393 = vsub.s32 4294967266, %v2388
  %v2394 = vadd.s32 %v2393, 127
  %v2395 = vshll.u32 %v2394, 23
  %v2396 = vor.u32 4788187, %v2395
  %v2397 = vand.u32 2147483647, %v2396
  %v2399 = vcvt.s32.f32 %v2392
  %v2400 = vmul.f32 %v2399, %v2397
  %v2401 = vxor.u32 %v2400, 2147483648
  %v2402 = vsel %vm2281, %v2401, %v2400
  %v2403 = vsub.s32 4, %v2379
  %v2404 = vsel %vm2281, %v2403, %v2379
  %v2405 = vsel %vm2280, %v1625, %v2402
  %v2406 = vsel %vm2280, 0, %v2404
  %v2407 = vmul.f32 %v2405, %v2405
  %v2408 = vmul.f32 %v2407, -0.001358992
  %v2409 = vadd.f32 %v2408, 0.041655596
  %v2410 = vmul.f32 %v2407, %v2409
  %v2411 = vadd.f32 %v2410, -0.4999988
  %v2412 = vmul.f32 %v2407, %v2411
  %v2413 = vadd.f32 1.0, %v2412
  %v2414 = vmul.f32 %v2405, %v2405
  %v2415 = vmul.f32 %v2414, -0.00019511016
  %v2416 = vadd.f32 %v2415, 0.008332121
  %v2417 = vmul.f32 %v2414, %v2416
  %v2418 = vadd.f32 %v2417, -0.16666654
  %v2419 = vmul.f32 %v2414, %v2418
  %v2420 = vadd.f32 %v2419, 1.0
  %v2421 = vmul.f32 %v2420, %v2405
  %vm2422 = vweird.f32 %v1625
  %v2423 = vadd.s32 %v2406, 3
  %v2424 = vand.u32 %v2423, 3
  %vm2425 = vcmp.lt.s32.totalorder %v2424, 2
  %vm2426 = vcmp.eq.s32.totalorder %v2424, 0
  %v2427 = vxor.u32 %v2421, 2147483648
  %v2428 = vsel %vm2426, %v2413, %v2427
  %vm2429 = vcmp.eq.s32.totalorder %v2424, 2
  %v2430 = vxor.u32 %v2413, 2147483648
  %v2431 = vsel %vm2429, %v2430, %v2421
  %v2432 = vsel %vm2425, %v2428, %v2431
  %v2433 = vsel %vm2422, nan, %v2432
  %v2434 = vand.u32 2147483647, %v1626
  %vm2435 = vcmp.le.f32.partialorder %v2434, 0.7853982
  %vm2436 = vcmp.lt.s32.totalorder %v1626, 0
  %v2437 = vand.u32 %v1626, 2139095040
  %v2438 = vshrl.u32 %v2437, 23
  %v2439 = vsub.s32 %v2438, 127
  %v2440 = vand.u32 2147483647, %v1626
  %v2441 = vand.u32 %v2440, 8388607
  %v2442 = vor.u32 %v2441, 8388608
  %v2443 = vsub.s32 0, %v2442
  %v2444 = vadd.s32 %v2439, 1
  %vm2445 = vcmp.gt.s32.totalorder %v2444, 0
  %v2446 = vsel %vm2445, %v2444, 0
  %v2447 = vshrl.u32 %v2446, 5
  %v2448 = vand.u32 %v2446, 31
  %v2449 = vsub.s32 32, %v2448
  %v2450 = vshrl.u32 683565275, %v2449
  %v2451 = vshll.u32 683565275, %v2448
  %v2452 = vshrl.u32 2475754826, %v2449
  %v2453 = vor.u32 %v2451, %v2452
  %v2454 = vshll.u32 2475754826, %v2448
  %v2455 = vshrl.u32 2131351028, %v2449
  %v2456 = vor.u32 %v2454, %v2455
  %v2457 = vshll.u32 2131351028, %v2448
  %v2458 = vshrl.u32 2102212464, %v2449
  %v2459 = vor.u32 %v2457, %v2458
  %v2460 = vshll.u32 2102212464, %v2448
  %v2461 = vshrl.u32 920167782, %v2449
  %v2462 = vor.u32 %v2460, %v2461
  %v2463 = vshll.u32 920167782, %v2448
  %v2464 = vshrl.u32 1326507024, %v2449
  %v2465 = vor.u32 %v2463, %v2464
  %vm2466 = vcmp.lt.s32.totalorder %v2447, 1
  %vm2467 = vcmp.lt.s32.totalorder %v2447, 2
  %vm2468 = vcmp.lt.s32.totalorder %v2447, 3
  %vm2469 = vcmp.lt.s32.totalorder %v2447, 4
  %v2470 = vsel %vm2466, %v2450, %v2453
  %v2471 = vsel %vm2469, %v2459, 2102212464
  %v2472 = vsel %vm2468, %v2456, %v2471
  %v2473 = vsel %vm2467, %v2470, %v2472
  %v2474 = vsel %vm2466, %v2453, %v2456
  %v2475 = vsel %vm2469, %v2462, 920167782
  %v2476 = vsel %vm2468, %v2459, %v2475
  %v2477 = vsel %vm2467, %v2474, %v2476
  %v2478 = vsel %vm2466, %v2456, %v2459
  %v2479 = vsel %vm2469, %v2465, 1326507024
  %v2480 = vsel %vm2468, %v2462, %v2479
  %v2481 = vsel %vm2467, %v2478, %v2480
  %v2482 = vshll.u32 %v2442, 8
  %v2483 = vand.u32 %v2482, 65535
  %v2484 = vshrl.u32 %v2482, 16
  %v2485 = vand.u32 %v2481, 65535
  %v2486 = vshrl.u32 %v2481, 16
  %v2487 = vmul.u32 %v2483, %v2485
  %v2488 = vmul.u32 %v2483, %v2486
  %v2489 = vmul.u32 %v2484, %v2485
  %v2490 = vmul.u32 %v2484, %v2486
  %v2491 = vshll.u32 %v2488, 16
  %v2492 = vshrl.u32 %v2488, 16
  %v2493 = vshll.u32 %v2489, 16
  %v2494 = vshrl.u32 %v2489, 16
  %vm2495 = vc.u32 %v2487, %v2491
  %v2496 = vsel %vm2495, 1, 0
  %v2497 = vadd.s32 %v2487, %v2491
  %v2498 = vadd.s32 %v2490, %v2496
  %vm2499 = vc.u32 %v2497, %v2493
  %v2500 = vsel %vm2499, 1, 0
  %v2501 = vadd.s32 %v2497, %v2493
  %v2502 = vadd.s32 %v2498, %v2500
  %v2503 = vadd.s32 %v2502, %v2492
  %v2504 = vadd.s32 %v2503, %v2494
  %v2505 = vand.u32 %v2482, 65535
  %v2506 = vshrl.u32 %v2482, 16
  %v2507 = vand.u32 %v2477, 65535
  %v2508 = vshrl.u32 %v2477, 16
  %v2509 = vmul.u32 %v2505, %v2507
  %v2510 = vmul.u32 %v2505, %v2508
  %v2511 = vmul.u32 %v2506, %v2507
  %v2512 = vmul.u32 %v2506, %v2508
  %v2513 = vshll.u32 %v2510, 16
  %v2514 = vshrl.u32 %v2510, 16
  %v2515 = vshll.u32 %v2511, 16
  %v2516 = vshrl.u32 %v2511, 16
  %vm2517 = vc.u32 %v2509, %v2513
  %v2518 = vsel %vm2517, 1, 0
  %v2519 = vadd.s32 %v2509, %v2513
  %v2520 = vadd.s32 %v2512, %v2518
  %vm2521 = vc.u32 %v2519, %v2515
  %v2522 = vsel %vm2521, 1, 0
  %v2523 = vadd.s32 %v2519, %v2515
  %v2524 = vadd.s32 %v2520, %v2522
  %v2525 = vadd.s32 %v2524, %v2514
  %v2526 = vadd.s32 %v2525, %v2516
  %v2527 = vmul.u32 %v2482, %v2473
  %v2528 = vadd.s32 %v2504, %v2523
  %vm2529 = vc.u32 %v2504, %v2523
  %v2530 = vadd.s32 %v2526, 1
  %v2531 = vsel %vm2529, %v2530, %v2526
  %v2532 = vadd.s32 %v2527, %v2531
  %v2533 = vadd.s32 %v2532, 536870912
  %v2534 = vshrl.u32 %v2533, 30
  %v2535 = vshll.u32 %v2534, 30
  %v2536 = vsub.s32 %v2532, %v2535
  %vm2537 = vcmp.lt.s32.totalorder %v2536, 0
  %v2538 = vsub.s32 0, %v2536
  %v2539 = vsel %vm2537, %v2538, %v2536
  %v2540 = vclz %v2539
  %v2541 = vsub.s32 %v2540, 2
  %vm2542 = vcmp.gt.s32.totalorder 0, %v2541
  %v2543 = vsel %vm2542, 0, %v2541
  %v2544 = vsub.s32 32, %v2543
  %v2545 = vshll.u32 %v2536, %v2543
  %v2546 = vshrl.u32 %v2528, %v2544
  %v2547 = vor.u32 %v2545, %v2546
  %v2548 = vsub.s32 4294967266, %v2543
  %v2549 = vadd.s32 %v2548, 127
  %v2550 = vshll.u32 %v2549, 23
  %v2551 = vor.u32 4788187, %v2550
  %v2552 = vand.u32 2147483647, %v2551
  %v2554 = vcvt.s32.f32 %v2547
  %v2555 = vmul.f32 %v2554, %v2552
  %v2556 = vxor.u32 %v2555, 2147483648
  %v2557 = vsel %vm2436, %v2556, %v2555
  %v2558 = vsub.s32 4, %v2534
  %v2559 = vsel %vm2436, %v2558, %v2534
  %v2560 = vsel %vm2435, %v1626, %v2557
  %v2561 = vsel %vm2435, 0, %v2559
  %v2562 = vmul.f32 %v2560, %v2560
  %v2563 = vmul.f32 %v2562, -0.001358992
  %v2564 = vadd.f32 %v2563, 0.041655596
  %v2565 = vmul.f32 %v2562, %v2564
  %v2566 = vadd.f32 %v2565, -0.4999988
  %v2567 = vmul.f32 %v2562, %v2566
  %v2568 = vadd.f32 1.0, %v2567
  %v2569 = vmul.f32 %v2560, %v2560
  %v2570 = vmul.f32 %v2569, -0.00019511016
  %v2571 = vadd.f32 %v2570, 0.008332121
  %v2572 = vmul.f32 %v2569, %v2571
  %v2573 = vadd.f32 %v2572, -0.16666654
  %v2574 = vmul.f32 %v2569, %v2573
  %v2575 = vadd.f32 %v2574, 1.0
  %v2576 = vmul.f32 %v2575, %v2560
  %vm2577 = vweird.f32 %v1626
  %v2578 = vadd.s32 %v2561, 3
  %v2579 = vand.u32 %v2578, 3
  %vm2580 = vcmp.lt.s32.totalorder %v2579, 2
  %vm2581 = vcmp.eq.s32.totalorder %v2579, 0
  %v2582 = vxor.u32 %v2576, 2147483648
  %v2583 = vsel %vm2581, %v2568, %v2582
  %vm2584 = vcmp.eq.s32.totalorder %v2579, 2
  %v2585 = vxor.u32 %v2568, 2147483648
  %v2586 = vsel %vm2584, %v2585, %v2576
  %v2587 = vsel %vm2580, %v2583, %v2586
  %v2588 = vsel %vm2577, nan, %v2587
  %v2589 = vand.u32 2147483647, %v1627
  %vm2590 = vcmp.le.f32.partialorder %v2589, 0.7853982
  %vm2591 = vcmp.lt.s32.totalorder %v1627, 0
  %v2592 = vand.u32 %v1627, 2139095040
  %v2593 = vshrl.u32 %v2592, 23
  %v2594 = vsub.s32 %v2593, 127
  %v2595 = vand.u32 2147483647, %v1627
  %v2596 = vand.u32 %v2595, 8388607
  %v2597 = vor.u32 %v2596, 8388608
  %v2598 = vsub.s32 0, %v2597
  %v2599 = vadd.s32 %v2594, 1
  %vm2600 = vcmp.gt.s32.totalorder %v2599, 0
  %v2601 = vsel %vm2600, %v2599, 0
  %v2602 = vshrl.u32 %v2601, 5
  %v2603 = vand.u32 %v2601, 31
  %v2604 = vsub.s32 32, %v2603
  %v2605 = vshrl.u32 683565275, %v2604
  %v2606 = vshll.u32 683565275, %v2603
  %v2607 = vshrl.u32 2475754826, %v2604
  %v2608 = vor.u32 %v2606, %v2607
  %v2609 = vshll.u32 2475754826, %v2603
  %v2610 = vshrl.u32 2131351028, %v2604
  %v2611 = vor.u32 %v2609, %v2610
  %v2612 = vshll.u32 2131351028, %v2603
  %v2613 = vshrl.u32 2102212464, %v2604
  %v2614 = vor.u32 %v2612, %v2613
  %v2615 = vshll.u32 2102212464, %v2603
  %v2616 = vshrl.u32 920167782, %v2604
  %v2617 = vor.u32 %v2615, %v2616
  %v2618 = vshll.u32 920167782, %v2603
  %v2619 = vshrl.u32 1326507024, %v2604
  %v2620 = vor.u32 %v2618, %v2619
  %vm2621 = vcmp.lt.s32.totalorder %v2602, 1
  %vm2622 = vcmp.lt.s32.totalorder %v2602, 2
  %vm2623 = vcmp.lt.s32.totalorder %v2602, 3
  %vm2624 = vcmp.lt.s32.totalorder %v2602, 4
  %v2625 = vsel %vm2621, %v2605, %v2608
  %v2626 = vsel %vm2624, %v2614, 2102212464
  %v2627 = vsel %vm2623, %v2611, %v2626
  %v2628 = vsel %vm2622, %v2625, %v2627
  %v2629 = vsel %vm2621, %v2608, %v2611
  %v2630 = vsel %vm2624, %v2617, 920167782
  %v2631 = vsel %vm2623, %v2614, %v2630
  %v2632 = vsel %vm2622, %v2629, %v2631
  %v2633 = vsel %vm2621, %v2611, %v2614
  %v2634 = vsel %vm2624, %v2620, 1326507024
  %v2635 = vsel %vm2623, %v2617, %v2634
  %v2636 = vsel %vm2622, %v2633, %v2635
  %v2637 = vshll.u32 %v2597, 8
  %v2638 = vand.u32 %v2637, 65535
  %v2639 = vshrl.u32 %v2637, 16
  %v2640 = vand.u32 %v2636, 65535
  %v2641 = vshrl.u32 %v2636, 16
  %v2642 = vmul.u32 %v2638, %v2640
  %v2643 = vmul.u32 %v2638, %v2641
  %v2644 = vmul.u32 %v2639, %v2640
  %v2645 = vmul.u32 %v2639, %v2641
  %v2646 = vshll.u32 %v2643, 16
  %v2647 = vshrl.u32 %v2643, 16
  %v2648 = vshll.u32 %v2644, 16
  %v2649 = vshrl.u32 %v2644, 16
  %vm2650 = vc.u32 %v2642, %v2646
  %v2651 = vsel %vm2650, 1, 0
  %v2652 = vadd.s32 %v2642, %v2646
  %v2653 = vadd.s32 %v2645, %v2651
  %vm2654 = vc.u32 %v2652, %v2648
  %v2655 = vsel %vm2654, 1, 0
  %v2656 = vadd.s32 %v2652, %v2648
  %v2657 = vadd.s32 %v2653, %v2655
  %v2658 = vadd.s32 %v2657, %v2647
  %v2659 = vadd.s32 %v2658, %v2649
  %v2660 = vand.u32 %v2637, 65535
  %v2661 = vshrl.u32 %v2637, 16
  %v2662 = vand.u32 %v2632, 65535
  %v2663 = vshrl.u32 %v2632, 16
  %v2664 = vmul.u32 %v2660, %v2662
  %v2665 = vmul.u32 %v2660, %v2663
  %v2666 = vmul.u32 %v2661, %v2662
  %v2667 = vmul.u32 %v2661, %v2663
  %v2668 = vshll.u32 %v2665, 16
  %v2669 = vshrl.u32 %v2665, 16
  %v2670 = vshll.u32 %v2666, 16
  %v2671 = vshrl.u32 %v2666, 16
  %vm2672 = vc.u32 %v2664, %v2668
  %v2673 = vsel %vm2672, 1, 0
  %v2674 = vadd.s32 %v2664, %v2668
  %v2675 = vadd.s32 %v2667, %v2673
  %vm2676 = vc.u32 %v2674, %v2670
  %v2677 = vsel %vm2676, 1, 0
  %v2678 = vadd.s32 %v2674, %v2670
  %v2679 = vadd.s32 %v2675, %v2677
  %v2680 = vadd.s32 %v2679, %v2669
  %v2681 = vadd.s32 %v2680, %v2671
  %v2682 = vmul.u32 %v2637, %v2628
  %v2683 = vadd.s32 %v2659, %v2678
  %vm2684 = vc.u32 %v2659, %v2678
  %v2685 = vadd.s32 %v2681, 1
  %v2686 = vsel %vm2684, %v2685, %v2681
  %v2687 = vadd.s32 %v2682, %v2686
  %v2688 = vadd.s32 %v2687, 536870912
  %v2689 = vshrl.u32 %v2688, 30
  %v2690 = vshll.u32 %v2689, 30
  %v2691 = vsub.s32 %v2687, %v2690
  %vm2692 = vcmp.lt.s32.totalorder %v2691, 0
  %v2693 = vsub.s32 0, %v2691
  %v2694 = vsel %vm2692, %v2693, %v2691
  %v2695 = vclz %v2694
  %v2696 = vsub.s32 %v2695, 2
  %vm2697 = vcmp.gt.s32.totalorder 0, %v2696
  %v2698 = vsel %vm2697, 0, %v2696
  %v2699 = vsub.s32 32, %v2698
  %v2700 = vshll.u32 %v2691, %v2698
  %v2701 = vshrl.u32 %v2683, %v2699
  %v2702 = vor.u32 %v2700, %v2701
  %v2703 = vsub.s32 4294967266, %v2698
  %v2704 = vadd.s32 %v2703, 127
  %v2705 = vshll.u32 %v2704, 23
  %v2706 = vor.u32 4788187, %v2705
  %v2707 = vand.u32 2147483647, %v2706
  %v2709 = vcvt.s32.f32 %v2702
  %v2710 = vmul.f32 %v2709, %v2707
  %v2711 = vxor.u32 %v2710, 2147483648
  %v2712 = vsel %vm2591, %v2711, %v2710
  %v2713 = vsub.s32 4, %v2689
  %v2714 = vsel %vm2591, %v2713, %v2689
  %v2715 = vsel %vm2590, %v1627, %v2712
  %v2716 = vsel %vm2590, 0, %v2714
  %v2717 = vmul.f32 %v2715, %v2715
  %v2718 = vmul.f32 %v2717, -0.001358992
  %v2719 = vadd.f32 %v2718, 0.041655596
  %v2720 = vmul.f32 %v2717, %v2719
  %v2721 = vadd.f32 %v2720, -0.4999988
  %v2722 = vmul.f32 %v2717, %v2721
  %v2723 = vadd.f32 1.0, %v2722
  %v2724 = vmul.f32 %v2715, %v2715
  %v2725 = vmul.f32 %v2724, -0.00019511016
  %v2726 = vadd.f32 %v2725, 0.008332121
  %v2727 = vmul.f32 %v2724, %v2726
  %v2728 = vadd.f32 %v2727, -0.16666654
  %v2729 = vmul.f32 %v2724, %v2728
  %v2730 = vadd.f32 %v2729, 1.0
  %v2731 = vmul.f32 %v2730, %v2715
  %vm2732 = vweird.f32 %v1627
  %v2733 = vadd.s32 %v2716, 3
  %v2734 = vand.u32 %v2733, 3
  %vm2735 = vcmp.lt.s32.totalorder %v2734, 2
  %vm2736 = vcmp.eq.s32.totalorder %v2734, 0
  %v2737 = vxor.u32 %v2731, 2147483648
  %v2738 = vsel %vm2736, %v2723, %v2737
  %vm2739 = vcmp.eq.s32.totalorder %v2734, 2
  %v2740 = vxor.u32 %v2723, 2147483648
  %v2741 = vsel %vm2739, %v2740, %v2731
  %v2742 = vsel %vm2735, %v2738, %v2741
  %v2743 = vsel %vm2732, nan, %v2742
  %v2744 = vand.u32 2147483647, %v1628
  %vm2745 = vcmp.le.f32.partialorder %v2744, 0.7853982
  %vm2746 = vcmp.lt.s32.totalorder %v1628, 0
  %v2747 = vand.u32 %v1628, 2139095040
  %v2748 = vshrl.u32 %v2747, 23
  %v2749 = vsub.s32 %v2748, 127
  %v2750 = vand.u32 2147483647, %v1628
  %v2751 = vand.u32 %v2750, 8388607
  %v2752 = vor.u32 %v2751, 8388608
  %v2753 = vsub.s32 0, %v2752
  %v2754 = vadd.s32 %v2749, 1
  %vm2755 = vcmp.gt.s32.totalorder %v2754, 0
  %v2756 = vsel %vm2755, %v2754, 0
  %v2757 = vshrl.u32 %v2756, 5
  %v2758 = vand.u32 %v2756, 31
  %v2759 = vsub.s32 32, %v2758
  %v2760 = vshrl.u32 683565275, %v2759
  %v2761 = vshll.u32 683565275, %v2758
  %v2762 = vshrl.u32 2475754826, %v2759
  %v2763 = vor.u32 %v2761, %v2762
  %v2764 = vshll.u32 2475754826, %v2758
  %v2765 = vshrl.u32 2131351028, %v2759
  %v2766 = vor.u32 %v2764, %v2765
  %v2767 = vshll.u32 2131351028, %v2758
  %v2768 = vshrl.u32 2102212464, %v2759
  %v2769 = vor.u32 %v2767, %v2768
  %v2770 = vshll.u32 2102212464, %v2758
  %v2771 = vshrl.u32 920167782, %v2759
  %v2772 = vor.u32 %v2770, %v2771
  %v2773 = vshll.u32 920167782, %v2758
  %v2774 = vshrl.u32 1326507024, %v2759
  %v2775 = vor.u32 %v2773, %v2774
  %vm2776 = vcmp.lt.s32.totalorder %v2757, 1
  %vm2777 = vcmp.lt.s32.totalorder %v2757, 2
  %vm2778 = vcmp.lt.s32.totalorder %v2757, 3
  %vm2779 = vcmp.lt.s32.totalorder %v2757, 4
  %v2780 = vsel %vm2776, %v2760, %v2763
  %v2781 = vsel %vm2779, %v2769, 2102212464
  %v2782 = vsel %vm2778, %v2766, %v2781
  %v2783 = vsel %vm2777, %v2780, %v2782
  %v2784 = vsel %vm2776, %v2763, %v2766
  %v2785 = vsel %vm2779, %v2772, 920167782
  %v2786 = vsel %vm2778, %v2769, %v2785
  %v2787 = vsel %vm2777, %v2784, %v2786
  %v2788 = vsel %vm2776, %v2766, %v2769
  %v2789 = vsel %vm2779, %v2775, 1326507024
  %v2790 = vsel %vm2778, %v2772, %v2789
  %v2791 = vsel %vm2777, %v2788, %v2790
  %v2792 = vshll.u32 %v2752, 8
  %v2793 = vand.u32 %v2792, 65535
  %v2794 = vshrl.u32 %v2792, 16
  %v2795 = vand.u32 %v2791, 65535
  %v2796 = vshrl.u32 %v2791, 16
  %v2797 = vmul.u32 %v2793, %v2795
  %v2798 = vmul.u32 %v2793, %v2796
  %v2799 = vmul.u32 %v2794, %v2795
  %v2800 = vmul.u32 %v2794, %v2796
  %v2801 = vshll.u32 %v2798, 16
  %v2802 = vshrl.u32 %v2798, 16
  %v2803 = vshll.u32 %v2799, 16
  %v2804 = vshrl.u32 %v2799, 16
  %vm2805 = vc.u32 %v2797, %v2801
  %v2806 = vsel %vm2805, 1, 0
  %v2807 = vadd.s32 %v2797, %v2801
  %v2808 = vadd.s32 %v2800, %v2806
  %vm2809 = vc.u32 %v2807, %v2803
  %v2810 = vsel %vm2809, 1, 0
  %v2811 = vadd.s32 %v2807, %v2803
  %v2812 = vadd.s32 %v2808, %v2810
  %v2813 = vadd.s32 %v2812, %v2802
  %v2814 = vadd.s32 %v2813, %v2804
  %v2815 = vand.u32 %v2792, 65535
  %v2816 = vshrl.u32 %v2792, 16
  %v2817 = vand.u32 %v2787, 65535
  %v2818 = vshrl.u32 %v2787, 16
  %v2819 = vmul.u32 %v2815, %v2817
  %v2820 = vmul.u32 %v2815, %v2818
  %v2821 = vmul.u32 %v2816, %v2817
  %v2822 = vmul.u32 %v2816, %v2818
  %v2823 = vshll.u32 %v2820, 16
  %v2824 = vshrl.u32 %v2820, 16
  %v2825 = vshll.u32 %v2821, 16
  %v2826 = vshrl.u32 %v2821, 16
  %vm2827 = vc.u32 %v2819, %v2823
  %v2828 = vsel %vm2827, 1, 0
  %v2829 = vadd.s32 %v2819, %v2823
  %v2830 = vadd.s32 %v2822, %v2828
  %vm2831 = vc.u32 %v2829, %v2825
  %v2832 = vsel %vm2831, 1, 0
  %v2833 = vadd.s32 %v2829, %v2825
  %v2834 = vadd.s32 %v2830, %v2832
  %v2835 = vadd.s32 %v2834, %v2824
  %v2836 = vadd.s32 %v2835, %v2826
  %v2837 = vmul.u32 %v2792, %v2783
  %v2838 = vadd.s32 %v2814, %v2833
  %vm2839 = vc.u32 %v2814, %v2833
  %v2840 = vadd.s32 %v2836, 1
  %v2841 = vsel %vm2839, %v2840, %v2836
  %v2842 = vadd.s32 %v2837, %v2841
  %v2843 = vadd.s32 %v2842, 536870912
  %v2844 = vshrl.u32 %v2843, 30
  %v2845 = vshll.u32 %v2844, 30
  %v2846 = vsub.s32 %v2842, %v2845
  %vm2847 = vcmp.lt.s32.totalorder %v2846, 0
  %v2848 = vsub.s32 0, %v2846
  %v2849 = vsel %vm2847, %v2848, %v2846
  %v2850 = vclz %v2849
  %v2851 = vsub.s32 %v2850, 2
  %vm2852 = vcmp.gt.s32.totalorder 0, %v2851
  %v2853 = vsel %vm2852, 0, %v2851
  %v2854 = vsub.s32 32, %v2853
  %v2855 = vshll.u32 %v2846, %v2853
  %v2856 = vshrl.u32 %v2838, %v2854
  %v2857 = vor.u32 %v2855, %v2856
  %v2858 = vsub.s32 4294967266, %v2853
  %v2859 = vadd.s32 %v2858, 127
  %v2860 = vshll.u32 %v2859, 23
  %v2861 = vor.u32 4788187, %v2860
  %v2862 = vand.u32 2147483647, %v2861
  %v2864 = vcvt.s32.f32 %v2857
  %v2865 = vmul.f32 %v2864, %v2862
  %v2866 = vxor.u32 %v2865, 2147483648
  %v2867 = vsel %vm2746, %v2866, %v2865
  %v2868 = vsub.s32 4, %v2844
  %v2869 = vsel %vm2746, %v2868, %v2844
  %v2870 = vsel %vm2745, %v1628, %v2867
  %v2871 = vsel %vm2745, 0, %v2869
  %v2872 = vmul.f32 %v2870, %v2870
  %v2873 = vmul.f32 %v2872, -0.001358992
  %v2874 = vadd.f32 %v2873, 0.041655596
  %v2875 = vmul.f32 %v2872, %v2874
  %v2876 = vadd.f32 %v2875, -0.4999988
  %v2877 = vmul.f32 %v2872, %v2876
  %v2878 = vadd.f32 1.0, %v2877
  %v2879 = vmul.f32 %v2870, %v2870
  %v2880 = vmul.f32 %v2879, -0.00019511016
  %v2881 = vadd.f32 %v2880, 0.008332121
  %v2882 = vmul.f32 %v2879, %v2881
  %v2883 = vadd.f32 %v2882, -0.16666654
  %v2884 = vmul.f32 %v2879, %v2883
  %v2885 = vadd.f32 %v2884, 1.0
  %v2886 = vmul.f32 %v2885, %v2870
  %vm2887 = vweird.f32 %v1628
  %v2888 = vadd.s32 %v2871, 3
  %v2889 = vand.u32 %v2888, 3
  %vm2890 = vcmp.lt.s32.totalorder %v2889, 2
  %vm2891 = vcmp.eq.s32.totalorder %v2889, 0
  %v2892 = vxor.u32 %v2886, 2147483648
  %v2893 = vsel %vm2891, %v2878, %v2892
  %vm2894 = vcmp.eq.s32.totalorder %v2889, 2
  %v2895 = vxor.u32 %v2878, 2147483648
  %v2896 = vsel %vm2894, %v2895, %v2886
  %v2897 = vsel %vm2890, %v2893, %v2896
  %v2898 = vsel %vm2887, nan, %v2897
  %v2899 = vand.u32 2147483647, %v1629
  %vm2900 = vcmp.le.f32.partialorder %v2899, 0.7853982
  %vm2901 = vcmp.lt.s32.totalorder %v1629, 0
  %v2902 = vand.u32 %v1629, 2139095040
  %v2903 = vshrl.u32 %v2902, 23
  %v2904 = vsub.s32 %v2903, 127
  %v2905 = vand.u32 2147483647, %v1629
  %v2906 = vand.u32 %v2905, 8388607
  %v2907 = vor.u32 %v2906, 8388608
  %v2908 = vsub.s32 0, %v2907
  %v2909 = vadd.s32 %v2904, 1
  %vm2910 = vcmp.gt.s32.totalorder %v2909, 0
  %v2911 = vsel %vm2910, %v2909, 0
  %v2912 = vshrl.u32 %v2911, 5
  %v2913 = vand.u32 %v2911, 31
  %v2914 = vsub.s32 32, %v2913
  %v2915 = vshrl.u32 683565275, %v2914
  %v2916 = vshll.u32 683565275, %v2913
  %v2917 = vshrl.u32 2475754826, %v2914
  %v2918 = vor.u32 %v2916, %v2917
  %v2919 = vshll.u32 2475754826, %v2913
  %v2920 = vshrl.u32 2131351028, %v2914
  %v2921 = vor.u32 %v2919, %v2920
  %v2922 = vshll.u32 2131351028, %v2913
  %v2923 = vshrl.u32 2102212464, %v2914
  %v2924 = vor.u32 %v2922, %v2923
  %v2925 = vshll.u32 2102212464, %v2913
  %v2926 = vshrl.u32 920167782, %v2914
  %v2927 = vor.u32 %v2925, %v2926
  %v2928 = vshll.u32 920167782, %v2913
  %v2929 = vshrl.u32 1326507024, %v2914
  %v2930 = vor.u32 %v2928, %v2929
  %vm2931 = vcmp.lt.s32.totalorder %v2912, 1
  %vm2932 = vcmp.lt.s32.totalorder %v2912, 2
  %vm2933 = vcmp.lt.s32.totalorder %v2912, 3
  %vm2934 = vcmp.lt.s32.totalorder %v2912, 4
  %v2935 = vsel %vm2931, %v2915, %v2918
  %v2936 = vsel %vm2934, %v2924, 2102212464
  %v2937 = vsel %vm2933, %v2921, %v2936
  %v2938 = vsel %vm2932, %v2935, %v2937
  %v2939 = vsel %vm2931, %v2918, %v2921
  %v2940 = vsel %vm2934, %v2927, 920167782
  %v2941 = vsel %vm2933, %v2924, %v2940
  %v2942 = vsel %vm2932, %v2939, %v2941
  %v2943 = vsel %vm2931, %v2921, %v2924
  %v2944 = vsel %vm2934, %v2930, 1326507024
  %v2945 = vsel %vm2933, %v2927, %v2944
  %v2946 = vsel %vm2932, %v2943, %v2945
  %v2947 = vshll.u32 %v2907, 8
  %v2948 = vand.u32 %v2947, 65535
  %v2949 = vshrl.u32 %v2947, 16
  %v2950 = vand.u32 %v2946, 65535
  %v2951 = vshrl.u32 %v2946, 16
  %v2952 = vmul.u32 %v2948, %v2950
  %v2953 = vmul.u32 %v2948, %v2951
  %v2954 = vmul.u32 %v2949, %v2950
  %v2955 = vmul.u32 %v2949, %v2951
  %v2956 = vshll.u32 %v2953, 16
  %v2957 = vshrl.u32 %v2953, 16
  %v2958 = vshll.u32 %v2954, 16
  %v2959 = vshrl.u32 %v2954, 16
  %vm2960 = vc.u32 %v2952, %v2956
  %v2961 = vsel %vm2960, 1, 0
  %v2962 = vadd.s32 %v2952, %v2956
  %v2963 = vadd.s32 %v2955, %v2961
  %vm2964 = vc.u32 %v2962, %v2958
  %v2965 = vsel %vm2964, 1, 0
  %v2966 = vadd.s32 %v2962, %v2958
  %v2967 = vadd.s32 %v2963, %v2965
  %v2968 = vadd.s32 %v2967, %v2957
  %v2969 = vadd.s32 %v2968, %v2959
  %v2970 = vand.u32 %v2947, 65535
  %v2971 = vshrl.u32 %v2947, 16
  %v2972 = vand.u32 %v2942, 65535
  %v2973 = vshrl.u32 %v2942, 16
  %v2974 = vmul.u32 %v2970, %v2972
  %v2975 = vmul.u32 %v2970, %v2973
  %v2976 = vmul.u32 %v2971, %v2972
  %v2977 = vmul.u32 %v2971, %v2973
  %v2978 = vshll.u32 %v2975, 16
  %v2979 = vshrl.u32 %v2975, 16
  %v2980 = vshll.u32 %v2976, 16
  %v2981 = vshrl.u32 %v2976, 16
  %vm2982 = vc.u32 %v2974, %v2978
  %v2983 = vsel %vm2982, 1, 0
  %v2984 = vadd.s32 %v2974, %v2978
  %v2985 = vadd.s32 %v2977, %v2983
  %vm2986 = vc.u32 %v2984, %v2980
  %v2987 = vsel %vm2986, 1, 0
  %v2988 = vadd.s32 %v2984, %v2980
  %v2989 = vadd.s32 %v2985, %v2987
  %v2990 = vadd.s32 %v2989, %v2979
  %v2991 = vadd.s32 %v2990, %v2981
  %v2992 = vmul.u32 %v2947, %v2938
  %v2993 = vadd.s32 %v2969, %v2988
  %vm2994 = vc.u32 %v2969, %v2988
  %v2995 = vadd.s32 %v2991, 1
  %v2996 = vsel %vm2994, %v2995, %v2991
  %v2997 = vadd.s32 %v2992, %v2996
  %v2998 = vadd.s32 %v2997, 536870912
  %v2999 = vshrl.u32 %v2998, 30
  %v3000 = vshll.u32 %v2999, 30
  %v3001 = vsub.s32 %v2997, %v3000
  %vm3002 = vcmp.lt.s32.totalorder %v3001, 0
  %v3003 = vsub.s32 0, %v3001
  %v3004 = vsel %vm3002, %v3003, %v3001
  %v3005 = vclz %v3004
  %v3006 = vsub.s32 %v3005, 2
  %vm3007 = vcmp.gt.s32.totalorder 0, %v3006
  %v3008 = vsel %vm3007, 0, %v3006
  %v3009 = vsub.s32 32, %v3008
  %v3010 = vshll.u32 %v3001, %v3008
  %v3011 = vshrl.u32 %v2993, %v3009
  %v3012 = vor.u32 %v3010, %v3011
  %v3013 = vsub.s32 4294967266, %v3008
  %v3014 = vadd.s32 %v3013, 127
  %v3015 = vshll.u32 %v3014, 23
  %v3016 = vor.u32 4788187, %v3015
  %v3017 = vand.u32 2147483647, %v3016
  %v3019 = vcvt.s32.f32 %v3012
  %v3020 = vmul.f32 %v3019, %v3017
  %v3021 = vxor.u32 %v3020, 2147483648
  %v3022 = vsel %vm2901, %v3021, %v3020
  %v3023 = vsub.s32 4, %v2999
  %v3024 = vsel %vm2901, %v3023, %v2999
  %v3025 = vsel %vm2900, %v1629, %v3022
  %v3026 = vsel %vm2900, 0, %v3024
  %v3027 = vmul.f32 %v3025, %v3025
  %v3028 = vmul.f32 %v3027, -0.001358992
  %v3029 = vadd.f32 %v3028, 0.041655596
  %v3030 = vmul.f32 %v3027, %v3029
  %v3031 = vadd.f32 %v3030, -0.4999988
  %v3032 = vmul.f32 %v3027, %v3031
  %v3033 = vadd.f32 1.0, %v3032
  %v3034 = vmul.f32 %v3025, %v3025
  %v3035 = vmul.f32 %v3034, -0.00019511016
  %v3036 = vadd.f32 %v3035, 0.008332121
  %v3037 = vmul.f32 %v3034, %v3036
  %v3038 = vadd.f32 %v3037, -0.16666654
  %v3039 = vmul.f32 %v3034, %v3038
  %v3040 = vadd.f32 %v3039, 1.0
  %v3041 = vmul.f32 %v3040, %v3025
  %vm3042 = vweird.f32 %v1629
  %v3043 = vadd.s32 %v3026, 3
  %v3044 = vand.u32 %v3043, 3
  %vm3045 = vcmp.lt.s32.totalorder %v3044, 2
  %vm3046 = vcmp.eq.s32.totalorder %v3044, 0
  %v3047 = vxor.u32 %v3041, 2147483648
  %v3048 = vsel %vm3046, %v3033, %v3047
  %vm3049 = vcmp.eq.s32.totalorder %v3044, 2
  %v3050 = vxor.u32 %v3033, 2147483648
  %v3051 = vsel %vm3049, %v3050, %v3041
  %v3052 = vsel %vm3045, %v3048, %v3051
  %v3053 = vsel %vm3042, nan, %v3052
  %v3054 = vand.u32 2147483647, %v1630
  %vm3055 = vcmp.le.f32.partialorder %v3054, 0.7853982
  %vm3056 = vcmp.lt.s32.totalorder %v1630, 0
  %v3057 = vand.u32 %v1630, 2139095040
  %v3058 = vshrl.u32 %v3057, 23
  %v3059 = vsub.s32 %v3058, 127
  %v3060 = vand.u32 2147483647, %v1630
  %v3061 = vand.u32 %v3060, 8388607
  %v3062 = vor.u32 %v3061, 8388608
  %v3063 = vsub.s32 0, %v3062
  %v3064 = vadd.s32 %v3059, 1
  %vm3065 = vcmp.gt.s32.totalorder %v3064, 0
  %v3066 = vsel %vm3065, %v3064, 0
  %v3067 = vshrl.u32 %v3066, 5
  %v3068 = vand.u32 %v3066, 31
  %v3069 = vsub.s32 32, %v3068
  %v3070 = vshrl.u32 683565275, %v3069
  %v3071 = vshll.u32 683565275, %v3068
  %v3072 = vshrl.u32 2475754826, %v3069
  %v3073 = vor.u32 %v3071, %v3072
  %v3074 = vshll.u32 2475754826, %v3068
  %v3075 = vshrl.u32 2131351028, %v3069
  %v3076 = vor.u32 %v3074, %v3075
  %v3077 = vshll.u32 2131351028, %v3068
  %v3078 = vshrl.u32 2102212464, %v3069
  %v3079 = vor.u32 %v3077, %v3078
  %v3080 = vshll.u32 2102212464, %v3068
  %v3081 = vshrl.u32 920167782, %v3069
  %v3082 = vor.u32 %v3080, %v3081
  %v3083 = vshll.u32 920167782, %v3068
  %v3084 = vshrl.u32 1326507024, %v3069
  %v3085 = vor.u32 %v3083, %v3084
  %vm3086 = vcmp.lt.s32.totalorder %v3067, 1
  %vm3087 = vcmp.lt.s32.totalorder %v3067, 2
  %vm3088 = vcmp.lt.s32.totalorder %v3067, 3
  %vm3089 = vcmp.lt.s32.totalorder %v3067, 4
  %v3090 = vsel %vm3086, %v3070, %v3073
  %v3091 = vsel %vm3089, %v3079, 2102212464
  %v3092 = vsel %vm3088, %v3076, %v3091
  %v3093 = vsel %vm3087, %v3090, %v3092
  %v3094 = vsel %vm3086, %v3073, %v3076
  %v3095 = vsel %vm3089, %v3082, 920167782
  %v3096 = vsel %vm3088, %v3079, %v3095
  %v3097 = vsel %vm3087, %v3094, %v3096
  %v3098 = vsel %vm3086, %v3076, %v3079
  %v3099 = vsel %vm3089, %v3085, 1326507024
  %v3100 = vsel %vm3088, %v3082, %v3099
  %v3101 = vsel %vm3087, %v3098, %v3100
  %v3102 = vshll.u32 %v3062, 8
  %v3103 = vand.u32 %v3102, 65535
  %v3104 = vshrl.u32 %v3102, 16
  %v3105 = vand.u32 %v3101, 65535
  %v3106 = vshrl.u32 %v3101, 16
  %v3107 = vmul.u32 %v3103, %v3105
  %v3108 = vmul.u32 %v3103, %v3106
  %v3109 = vmul.u32 %v3104, %v3105
  %v3110 = vmul.u32 %v3104, %v3106
  %v3111 = vshll.u32 %v3108, 16
  %v3112 = vshrl.u32 %v3108, 16
  %v3113 = vshll.u32 %v3109, 16
  %v3114 = vshrl.u32 %v3109, 16
  %vm3115 = vc.u32 %v3107, %v3111
  %v3116 = vsel %vm3115, 1, 0
  %v3117 = vadd.s32 %v3107, %v3111
  %v3118 = vadd.s32 %v3110, %v3116
  %vm3119 = vc.u32 %v3117, %v3113
  %v3120 = vsel %vm3119, 1, 0
  %v3121 = vadd.s32 %v3117, %v3113
  %v3122 = vadd.s32 %v3118, %v3120
  %v3123 = vadd.s32 %v3122, %v3112
  %v3124 = vadd.s32 %v3123, %v3114
  %v3125 = vand.u32 %v3102, 65535
  %v3126 = vshrl.u32 %v3102, 16
  %v3127 = vand.u32 %v3097, 65535
  %v3128 = vshrl.u32 %v3097, 16
  %v3129 = vmul.u32 %v3125, %v3127
  %v3130 = vmul.u32 %v3125, %v3128
  %v3131 = vmul.u32 %v3126, %v3127
  %v3132 = vmul.u32 %v3126, %v3128
  %v3133 = vshll.u32 %v3130, 16
  %v3134 = vshrl.u32 %v3130, 16
  %v3135 = vshll.u32 %v3131, 16
  %v3136 = vshrl.u32 %v3131, 16
  %vm3137 = vc.u32 %v3129, %v3133
  %v3138 = vsel %vm3137, 1, 0
  %v3139 = vadd.s32 %v3129, %v3133
  %v3140 = vadd.s32 %v3132, %v3138
  %vm3141 = vc.u32 %v3139, %v3135
  %v3142 = vsel %vm3141, 1, 0
  %v3143 = vadd.s32 %v3139, %v3135
  %v3144 = vadd.s32 %v3140, %v3142
  %v3145 = vadd.s32 %v3144, %v3134
  %v3146 = vadd.s32 %v3145, %v3136
  %v3147 = vmul.u32 %v3102, %v3093
  %v3148 = vadd.s32 %v3124, %v3143
  %vm3149 = vc.u32 %v3124, %v3143
  %v3150 = vadd.s32 %v3146, 1
  %v3151 = vsel %vm3149, %v3150, %v3146
  %v3152 = vadd.s32 %v3147, %v3151
  %v3153 = vadd.s32 %v3152, 536870912
  %v3154 = vshrl.u32 %v3153, 30
  %v3155 = vshll.u32 %v3154, 30
  %v3156 = vsub.s32 %v3152, %v3155
  %vm3157 = vcmp.lt.s32.totalorder %v3156, 0
  %v3158 = vsub.s32 0, %v3156
  %v3159 = vsel %vm3157, %v3158, %v3156
  %v3160 = vclz %v3159
  %v3161 = vsub.s32 %v3160, 2
  %vm3162 = vcmp.gt.s32.totalorder 0, %v3161
  %v3163 = vsel %vm3162, 0, %v3161
  %v3164 = vsub.s32 32, %v3163
  %v3165 = vshll.u32 %v3156, %v3163
  %v3166 = vshrl.u32 %v3148, %v3164
  %v3167 = vor.u32 %v3165, %v3166
  %v3168 = vsub.s32 4294967266, %v3163
  %v3169 = vadd.s32 %v3168, 127
  %v3170 = vshll.u32 %v3169, 23
  %v3171 = vor.u32 4788187, %v3170
  %v3172 = vand.u32 2147483647, %v3171
  %v3174 = vcvt.s32.f32 %v3167
  %v3175 = vmul.f32 %v3174, %v3172
  %v3176 = vxor.u32 %v3175, 2147483648
  %v3177 = vsel %vm3056, %v3176, %v3175
  %v3178 = vsub.s32 4, %v3154
  %v3179 = vsel %vm3056, %v3178, %v3154
  %v3180 = vsel %vm3055, %v1630, %v3177
  %v3181 = vsel %vm3055, 0, %v3179
  %v3182 = vmul.f32 %v3180, %v3180
  %v3183 = vmul.f32 %v3182, -0.001358992
  %v3184 = vadd.f32 %v3183, 0.041655596
  %v3185 = vmul.f32 %v3182, %v3184
  %v3186 = vadd.f32 %v3185, -0.4999988
  %v3187 = vmul.f32 %v3182, %v3186
  %v3188 = vadd.f32 1.0, %v3187
  %v3189 = vmul.f32 %v3180, %v3180
  %v3190 = vmul.f32 %v3189, -0.00019511016
  %v3191 = vadd.f32 %v3190, 0.008332121
  %v3192 = vmul.f32 %v3189, %v3191
  %v3193 = vadd.f32 %v3192, -0.16666654
  %v3194 = vmul.f32 %v3189, %v3193
  %v3195 = vadd.f32 %v3194, 1.0
  %v3196 = vmul.f32 %v3195, %v3180
  %vm3197 = vweird.f32 %v1630
  %v3198 = vadd.s32 %v3181, 3
  %v3199 = vand.u32 %v3198, 3
  %vm3200 = vcmp.lt.s32.totalorder %v3199, 2
  %vm3201 = vcmp.eq.s32.totalorder %v3199, 0
  %v3202 = vxor.u32 %v3196, 2147483648
  %v3203 = vsel %vm3201, %v3188, %v3202
  %vm3204 = vcmp.eq.s32.totalorder %v3199, 2
  %v3205 = vxor.u32 %v3188, 2147483648
  %v3206 = vsel %vm3204, %v3205, %v3196
  %v3207 = vsel %vm3200, %v3203, %v3206
  %v3208 = vsel %vm3197, nan, %v3207
  %v3209 = vand.u32 2147483647, %v1631
  %vm3210 = vcmp.le.f32.partialorder %v3209, 0.7853982
  %vm3211 = vcmp.lt.s32.totalorder %v1631, 0
  %v3212 = vand.u32 %v1631, 2139095040
  %v3213 = vshrl.u32 %v3212, 23
  %v3214 = vsub.s32 %v3213, 127
  %v3215 = vand.u32 2147483647, %v1631
  %v3216 = vand.u32 %v3215, 8388607
  %v3217 = vor.u32 %v3216, 8388608
  %v3218 = vsub.s32 0, %v3217
  %v3219 = vadd.s32 %v3214, 1
  %vm3220 = vcmp.gt.s32.totalorder %v3219, 0
  %v3221 = vsel %vm3220, %v3219, 0
  %v3222 = vshrl.u32 %v3221, 5
  %v3223 = vand.u32 %v3221, 31
  %v3224 = vsub.s32 32, %v3223
  %v3225 = vshrl.u32 683565275, %v3224
  %v3226 = vshll.u32 683565275, %v3223
  %v3227 = vshrl.u32 2475754826, %v3224
  %v3228 = vor.u32 %v3226, %v3227
  %v3229 = vshll.u32 2475754826, %v3223
  %v3230 = vshrl.u32 2131351028, %v3224
  %v3231 = vor.u32 %v3229, %v3230
  %v3232 = vshll.u32 2131351028, %v3223
  %v3233 = vshrl.u32 2102212464, %v3224
  %v3234 = vor.u32 %v3232, %v3233
  %v3235 = vshll.u32 2102212464, %v3223
  %v3236 = vshrl.u32 920167782, %v3224
  %v3237 = vor.u32 %v3235, %v3236
  %v3238 = vshll.u32 920167782, %v3223
  %v3239 = vshrl.u32 1326507024, %v3224
  %v3240 = vor.u32 %v3238, %v3239
  %vm3241 = vcmp.lt.s32.totalorder %v3222, 1
  %vm3242 = vcmp.lt.s32.totalorder %v3222, 2
  %vm3243 = vcmp.lt.s32.totalorder %v3222, 3
  %vm3244 = vcmp.lt.s32.totalorder %v3222, 4
  %v3245 = vsel %vm3241, %v3225, %v3228
  %v3246 = vsel %vm3244, %v3234, 2102212464
  %v3247 = vsel %vm3243, %v3231, %v3246
  %v3248 = vsel %vm3242, %v3245, %v3247
  %v3249 = vsel %vm3241, %v3228, %v3231
  %v3250 = vsel %vm3244, %v3237, 920167782
  %v3251 = vsel %vm3243, %v3234, %v3250
  %v3252 = vsel %vm3242, %v3249, %v3251
  %v3253 = vsel %vm3241, %v3231, %v3234
  %v3254 = vsel %vm3244, %v3240, 1326507024
  %v3255 = vsel %vm3243, %v3237, %v3254
  %v3256 = vsel %vm3242, %v3253, %v3255
  %v3257 = vshll.u32 %v3217, 8
  %v3258 = vand.u32 %v3257, 65535
  %v3259 = vshrl.u32 %v3257, 16
  %v3260 = vand.u32 %v3256, 65535
  %v3261 = vshrl.u32 %v3256, 16
  %v3262 = vmul.u32 %v3258, %v3260
  %v3263 = vmul.u32 %v3258, %v3261
  %v3264 = vmul.u32 %v3259, %v3260
  %v3265 = vmul.u32 %v3259, %v3261
  %v3266 = vshll.u32 %v3263, 16
  %v3267 = vshrl.u32 %v3263, 16
  %v3268 = vshll.u32 %v3264, 16
  %v3269 = vshrl.u32 %v3264, 16
  %vm3270 = vc.u32 %v3262, %v3266
  %v3271 = vsel %vm3270, 1, 0
  %v3272 = vadd.s32 %v3262, %v3266
  %v3273 = vadd.s32 %v3265, %v3271
  %vm3274 = vc.u32 %v3272, %v3268
  %v3275 = vsel %vm3274, 1, 0
  %v3276 = vadd.s32 %v3272, %v3268
  %v3277 = vadd.s32 %v3273, %v3275
  %v3278 = vadd.s32 %v3277, %v3267
  %v3279 = vadd.s32 %v3278, %v3269
  %v3280 = vand.u32 %v3257, 65535
  %v3281 = vshrl.u32 %v3257, 16
  %v3282 = vand.u32 %v3252, 65535
  %v3283 = vshrl.u32 %v3252, 16
  %v3284 = vmul.u32 %v3280, %v3282
  %v3285 = vmul.u32 %v3280, %v3283
  %v3286 = vmul.u32 %v3281, %v3282
  %v3287 = vmul.u32 %v3281, %v3283
  %v3288 = vshll.u32 %v3285, 16
  %v3289 = vshrl.u32 %v3285, 16
  %v3290 = vshll.u32 %v3286, 16
  %v3291 = vshrl.u32 %v3286, 16
  %vm3292 = vc.u32 %v3284, %v3288
  %v3293 = vsel %vm3292, 1, 0
  %v3294 = vadd.s32 %v3284, %v3288
  %v3295 = vadd.s32 %v3287, %v3293
  %vm3296 = vc.u32 %v3294, %v3290
  %v3297 = vsel %vm3296, 1, 0
  %v3298 = vadd.s32 %v3294, %v3290
  %v3299 = vadd.s32 %v3295, %v3297
  %v3300 = vadd.s32 %v3299, %v3289
  %v3301 = vadd.s32 %v3300, %v3291
  %v3302 = vmul.u32 %v3257, %v3248
  %v3303 = vadd.s32 %v3279, %v3298
  %vm3304 = vc.u32 %v3279, %v3298
  %v3305 = vadd.s32 %v3301, 1
  %v3306 = vsel %vm3304, %v3305, %v3301
  %v3307 = vadd.s32 %v3302, %v3306
  %v3308 = vadd.s32 %v3307, 536870912
  %v3309 = vshrl.u32 %v3308, 30
  %v3310 = vshll.u32 %v3309, 30
  %v3311 = vsub.s32 %v3307, %v3310
  %vm3312 = vcmp.lt.s32.totalorder %v3311, 0
  %v3313 = vsub.s32 0, %v3311
  %v3314 = vsel %vm3312, %v3313, %v3311
  %v3315 = vclz %v3314
  %v3316 = vsub.s32 %v3315, 2
  %vm3317 = vcmp.gt.s32.totalorder 0, %v3316
  %v3318 = vsel %vm3317, 0, %v3316
  %v3319 = vsub.s32 32, %v3318
  %v3320 = vshll.u32 %v3311, %v3318
  %v3321 = vshrl.u32 %v3303, %v3319
  %v3322 = vor.u32 %v3320, %v3321
  %v3323 = vsub.s32 4294967266, %v3318
  %v3324 = vadd.s32 %v3323, 127
  %v3325 = vshll.u32 %v3324, 23
  %v3326 = vor.u32 4788187, %v3325
  %v3327 = vand.u32 2147483647, %v3326
  %v3329 = vcvt.s32.f32 %v3322
  %v3330 = vmul.f32 %v3329, %v3327
  %v3331 = vxor.u32 %v3330, 2147483648
  %v3332 = vsel %vm3211, %v3331, %v3330
  %v3333 = vsub.s32 4, %v3309
  %v3334 = vsel %vm3211, %v3333, %v3309
  %v3335 = vsel %vm3210, %v1631, %v3332
  %v3336 = vsel %vm3210, 0, %v3334
  %v3337 = vmul.f32 %v3335, %v3335
  %v3338 = vmul.f32 %v3337, -0.001358992
  %v3339 = vadd.f32 %v3338, 0.041655596
  %v3340 = vmul.f32 %v3337, %v3339
  %v3341 = vadd.f32 %v3340, -0.4999988
  %v3342 = vmul.f32 %v3337, %v3341
  %v3343 = vadd.f32 1.0, %v3342
  %v3344 = vmul.f32 %v3335, %v3335
  %v3345 = vmul.f32 %v3344, -0.00019511016
  %v3346 = vadd.f32 %v3345, 0.008332121
  %v3347 = vmul.f32 %v3344, %v3346
  %v3348 = vadd.f32 %v3347, -0.16666654
  %v3349 = vmul.f32 %v3344, %v3348
  %v3350 = vadd.f32 %v3349, 1.0
  %v3351 = vmul.f32 %v3350, %v3335
  %vm3352 = vweird.f32 %v1631
  %v3353 = vadd.s32 %v3336, 3
  %v3354 = vand.u32 %v3353, 3
  %vm3355 = vcmp.lt.s32.totalorder %v3354, 2
  %vm3356 = vcmp.eq.s32.totalorder %v3354, 0
  %v3357 = vxor.u32 %v3351, 2147483648
  %v3358 = vsel %vm3356, %v3343, %v3357
  %vm3359 = vcmp.eq.s32.totalorder %v3354, 2
  %v3360 = vxor.u32 %v3343, 2147483648
  %v3361 = vsel %vm3359, %v3360, %v3351
  %v3362 = vsel %vm3355, %v3358, %v3361
  %v3363 = vsel %vm3352, nan, %v3362
  %v3364 = vand.u32 2147483647, %v1632
  %vm3365 = vcmp.le.f32.partialorder %v3364, 0.7853982
  %vm3366 = vcmp.lt.s32.totalorder %v1632, 0
  %v3367 = vand.u32 %v1632, 2139095040
  %v3368 = vshrl.u32 %v3367, 23
  %v3369 = vsub.s32 %v3368, 127
  %v3370 = vand.u32 2147483647, %v1632
  %v3371 = vand.u32 %v3370, 8388607
  %v3372 = vor.u32 %v3371, 8388608
  %v3373 = vsub.s32 0, %v3372
  %v3374 = vadd.s32 %v3369, 1
  %vm3375 = vcmp.gt.s32.totalorder %v3374, 0
  %v3376 = vsel %vm3375, %v3374, 0
  %v3377 = vshrl.u32 %v3376, 5
  %v3378 = vand.u32 %v3376, 31
  %v3379 = vsub.s32 32, %v3378
  %v3380 = vshrl.u32 683565275, %v3379
  %v3381 = vshll.u32 683565275, %v3378
  %v3382 = vshrl.u32 2475754826, %v3379
  %v3383 = vor.u32 %v3381, %v3382
  %v3384 = vshll.u32 2475754826, %v3378
  %v3385 = vshrl.u32 2131351028, %v3379
  %v3386 = vor.u32 %v3384, %v3385
  %v3387 = vshll.u32 2131351028, %v3378
  %v3388 = vshrl.u32 2102212464, %v3379
  %v3389 = vor.u32 %v3387, %v3388
  %v3390 = vshll.u32 2102212464, %v3378
  %v3391 = vshrl.u32 920167782, %v3379
  %v3392 = vor.u32 %v3390, %v3391
  %v3393 = vshll.u32 920167782, %v3378
  %v3394 = vshrl.u32 1326507024, %v3379
  %v3395 = vor.u32 %v3393, %v3394
  %vm3396 = vcmp.lt.s32.totalorder %v3377, 1
  %vm3397 = vcmp.lt.s32.totalorder %v3377, 2
  %vm3398 = vcmp.lt.s32.totalorder %v3377, 3
  %vm3399 = vcmp.lt.s32.totalorder %v3377, 4
  %v3400 = vsel %vm3396, %v3380, %v3383
  %v3401 = vsel %vm3399, %v3389, 2102212464
  %v3402 = vsel %vm3398, %v3386, %v3401
  %v3403 = vsel %vm3397, %v3400, %v3402
  %v3404 = vsel %vm3396, %v3383, %v3386
  %v3405 = vsel %vm3399, %v3392, 920167782
  %v3406 = vsel %vm3398, %v3389, %v3405
  %v3407 = vsel %vm3397, %v3404, %v3406
  %v3408 = vsel %vm3396, %v3386, %v3389
  %v3409 = vsel %vm3399, %v3395, 1326507024
  %v3410 = vsel %vm3398, %v3392, %v3409
  %v3411 = vsel %vm3397, %v3408, %v3410
  %v3412 = vshll.u32 %v3372, 8
  %v3413 = vand.u32 %v3412, 65535
  %v3414 = vshrl.u32 %v3412, 16
  %v3415 = vand.u32 %v3411, 65535
  %v3416 = vshrl.u32 %v3411, 16
  %v3417 = vmul.u32 %v3413, %v3415
  %v3418 = vmul.u32 %v3413, %v3416
  %v3419 = vmul.u32 %v3414, %v3415
  %v3420 = vmul.u32 %v3414, %v3416
  %v3421 = vshll.u32 %v3418, 16
  %v3422 = vshrl.u32 %v3418, 16
  %v3423 = vshll.u32 %v3419, 16
  %v3424 = vshrl.u32 %v3419, 16
  %vm3425 = vc.u32 %v3417, %v3421
  %v3426 = vsel %vm3425, 1, 0
  %v3427 = vadd.s32 %v3417, %v3421
  %v3428 = vadd.s32 %v3420, %v3426
  %vm3429 = vc.u32 %v3427, %v3423
  %v3430 = vsel %vm3429, 1, 0
  %v3431 = vadd.s32 %v3427, %v3423
  %v3432 = vadd.s32 %v3428, %v3430
  %v3433 = vadd.s32 %v3432, %v3422
  %v3434 = vadd.s32 %v3433, %v3424
  %v3435 = vand.u32 %v3412, 65535
  %v3436 = vshrl.u32 %v3412, 16
  %v3437 = vand.u32 %v3407, 65535
  %v3438 = vshrl.u32 %v3407, 16
  %v3439 = vmul.u32 %v3435, %v3437
  %v3440 = vmul.u32 %v3435, %v3438
  %v3441 = vmul.u32 %v3436, %v3437
  %v3442 = vmul.u32 %v3436, %v3438
  %v3443 = vshll.u32 %v3440, 16
  %v3444 = vshrl.u32 %v3440, 16
  %v3445 = vshll.u32 %v3441, 16
  %v3446 = vshrl.u32 %v3441, 16
  %vm3447 = vc.u32 %v3439, %v3443
  %v3448 = vsel %vm3447, 1, 0
  %v3449 = vadd.s32 %v3439, %v3443
  %v3450 = vadd.s32 %v3442, %v3448
  %vm3451 = vc.u32 %v3449, %v3445
  %v3452 = vsel %vm3451, 1, 0
  %v3453 = vadd.s32 %v3449, %v3445
  %v3454 = vadd.s32 %v3450, %v3452
  %v3455 = vadd.s32 %v3454, %v3444
  %v3456 = vadd.s32 %v3455, %v3446
  %v3457 = vmul.u32 %v3412, %v3403
  %v3458 = vadd.s32 %v3434, %v3453
  %vm3459 = vc.u32 %v3434, %v3453
  %v3460 = vadd.s32 %v3456, 1
  %v3461 = vsel %vm3459, %v3460, %v3456
  %v3462 = vadd.s32 %v3457, %v3461
  %v3463 = vadd.s32 %v3462, 536870912
  %v3464 = vshrl.u32 %v3463, 30
  %v3465 = vshll.u32 %v3464, 30
  %v3466 = vsub.s32 %v3462, %v3465
  %vm3467 = vcmp.lt.s32.totalorder %v3466, 0
  %v3468 = vsub.s32 0, %v3466
  %v3469 = vsel %vm3467, %v3468, %v3466
  %v3470 = vclz %v3469
  %v3471 = vsub.s32 %v3470, 2
  %vm3472 = vcmp.gt.s32.totalorder 0, %v3471
  %v3473 = vsel %vm3472, 0, %v3471
  %v3474 = vsub.s32 32, %v3473
  %v3475 = vshll.u32 %v3466, %v3473
  %v3476 = vshrl.u32 %v3458, %v3474
  %v3477 = vor.u32 %v3475, %v3476
  %v3478 = vsub.s32 4294967266, %v3473
  %v3479 = vadd.s32 %v3478, 127
  %v3480 = vshll.u32 %v3479, 23
  %v3481 = vor.u32 4788187, %v3480
  %v3482 = vand.u32 2147483647, %v3481
  %v3484 = vcvt.s32.f32 %v3477
  %v3485 = vmul.f32 %v3484, %v3482
  %v3486 = vxor.u32 %v3485, 2147483648
  %v3487 = vsel %vm3366, %v3486, %v3485
  %v3488 = vsub.s32 4, %v3464
  %v3489 = vsel %vm3366, %v3488, %v3464
  %v3490 = vsel %vm3365, %v1632, %v3487
  %v3491 = vsel %vm3365, 0, %v3489
  %v3492 = vmul.f32 %v3490, %v3490
  %v3493 = vmul.f32 %v3492, -0.001358992
  %v3494 = vadd.f32 %v3493, 0.041655596
  %v3495 = vmul.f32 %v3492, %v3494
  %v3496 = vadd.f32 %v3495, -0.4999988
  %v3497 = vmul.f32 %v3492, %v3496
  %v3498 = vadd.f32 1.0, %v3497
  %v3499 = vmul.f32 %v3490, %v3490
  %v3500 = vmul.f32 %v3499, -0.00019511016
  %v3501 = vadd.f32 %v3500, 0.008332121
  %v3502 = vmul.f32 %v3499, %v3501
  %v3503 = vadd.f32 %v3502, -0.16666654
  %v3504 = vmul.f32 %v3499, %v3503
  %v3505 = vadd.f32 %v3504, 1.0
  %v3506 = vmul.f32 %v3505, %v3490
  %vm3507 = vweird.f32 %v1632
  %v3508 = vadd.s32 %v3491, 3
  %v3509 = vand.u32 %v3508, 3
  %vm3510 = vcmp.lt.s32.totalorder %v3509, 2
  %vm3511 = vcmp.eq.s32.totalorder %v3509, 0
  %v3512 = vxor.u32 %v3506, 2147483648
  %v3513 = vsel %vm3511, %v3498, %v3512
  %vm3514 = vcmp.eq.s32.totalorder %v3509, 2
  %v3515 = vxor.u32 %v3498, 2147483648
  %v3516 = vsel %vm3514, %v3515, %v3506
  %v3517 = vsel %vm3510, %v3513, %v3516
  %v3518 = vsel %vm3507, nan, %v3517
  %v3519 = vand.u32 2147483647, %v1633
  %vm3520 = vcmp.le.f32.partialorder %v3519, 0.7853982
  %vm3521 = vcmp.lt.s32.totalorder %v1633, 0
  %v3522 = vand.u32 %v1633, 2139095040
  %v3523 = vshrl.u32 %v3522, 23
  %v3524 = vsub.s32 %v3523, 127
  %v3525 = vand.u32 2147483647, %v1633
  %v3526 = vand.u32 %v3525, 8388607
  %v3527 = vor.u32 %v3526, 8388608
  %v3528 = vsub.s32 0, %v3527
  %v3529 = vadd.s32 %v3524, 1
  %vm3530 = vcmp.gt.s32.totalorder %v3529, 0
  %v3531 = vsel %vm3530, %v3529, 0
  %v3532 = vshrl.u32 %v3531, 5
  %v3533 = vand.u32 %v3531, 31
  %v3534 = vsub.s32 32, %v3533
  %v3535 = vshrl.u32 683565275, %v3534
  %v3536 = vshll.u32 683565275, %v3533
  %v3537 = vshrl.u32 2475754826, %v3534
  %v3538 = vor.u32 %v3536, %v3537
  %v3539 = vshll.u32 2475754826, %v3533
  %v3540 = vshrl.u32 2131351028, %v3534
  %v3541 = vor.u32 %v3539, %v3540
  %v3542 = vshll.u32 2131351028, %v3533
  %v3543 = vshrl.u32 2102212464, %v3534
  %v3544 = vor.u32 %v3542, %v3543
  %v3545 = vshll.u32 2102212464, %v3533
  %v3546 = vshrl.u32 920167782, %v3534
  %v3547 = vor.u32 %v3545, %v3546
  %v3548 = vshll.u32 920167782, %v3533
  %v3549 = vshrl.u32 1326507024, %v3534
  %v3550 = vor.u32 %v3548, %v3549
  %vm3551 = vcmp.lt.s32.totalorder %v3532, 1
  %vm3552 = vcmp.lt.s32.totalorder %v3532, 2
  %vm3553 = vcmp.lt.s32.totalorder %v3532, 3
  %vm3554 = vcmp.lt.s32.totalorder %v3532, 4
  %v3555 = vsel %vm3551, %v3535, %v3538
  %v3556 = vsel %vm3554, %v3544, 2102212464
  %v3557 = vsel %vm3553, %v3541, %v3556
  %v3558 = vsel %vm3552, %v3555, %v3557
  %v3559 = vsel %vm3551, %v3538, %v3541
  %v3560 = vsel %vm3554, %v3547, 920167782
  %v3561 = vsel %vm3553, %v3544, %v3560
  %v3562 = vsel %vm3552, %v3559, %v3561
  %v3563 = vsel %vm3551, %v3541, %v3544
  %v3564 = vsel %vm3554, %v3550, 1326507024
  %v3565 = vsel %vm3553, %v3547, %v3564
  %v3566 = vsel %vm3552, %v3563, %v3565
  %v3567 = vshll.u32 %v3527, 8
  %v3568 = vand.u32 %v3567, 65535
  %v3569 = vshrl.u32 %v3567, 16
  %v3570 = vand.u32 %v3566, 65535
  %v3571 = vshrl.u32 %v3566, 16
  %v3572 = vmul.u32 %v3568, %v3570
  %v3573 = vmul.u32 %v3568, %v3571
  %v3574 = vmul.u32 %v3569, %v3570
  %v3575 = vmul.u32 %v3569, %v3571
  %v3576 = vshll.u32 %v3573, 16
  %v3577 = vshrl.u32 %v3573, 16
  %v3578 = vshll.u32 %v3574, 16
  %v3579 = vshrl.u32 %v3574, 16
  %vm3580 = vc.u32 %v3572, %v3576
  %v3581 = vsel %vm3580, 1, 0
  %v3582 = vadd.s32 %v3572, %v3576
  %v3583 = vadd.s32 %v3575, %v3581
  %vm3584 = vc.u32 %v3582, %v3578
  %v3585 = vsel %vm3584, 1, 0
  %v3586 = vadd.s32 %v3582, %v3578
  %v3587 = vadd.s32 %v3583, %v3585
  %v3588 = vadd.s32 %v3587, %v3577
  %v3589 = vadd.s32 %v3588, %v3579
  %v3590 = vand.u32 %v3567, 65535
  %v3591 = vshrl.u32 %v3567, 16
  %v3592 = vand.u32 %v3562, 65535
  %v3593 = vshrl.u32 %v3562, 16
  %v3594 = vmul.u32 %v3590, %v3592
  %v3595 = vmul.u32 %v3590, %v3593
  %v3596 = vmul.u32 %v3591, %v3592
  %v3597 = vmul.u32 %v3591, %v3593
  %v3598 = vshll.u32 %v3595, 16
  %v3599 = vshrl.u32 %v3595, 16
  %v3600 = vshll.u32 %v3596, 16
  %v3601 = vshrl.u32 %v3596, 16
  %vm3602 = vc.u32 %v3594, %v3598
  %v3603 = vsel %vm3602, 1, 0
  %v3604 = vadd.s32 %v3594, %v3598
  %v3605 = vadd.s32 %v3597, %v3603
  %vm3606 = vc.u32 %v3604, %v3600
  %v3607 = vsel %vm3606, 1, 0
  %v3608 = vadd.s32 %v3604, %v3600
  %v3609 = vadd.s32 %v3605, %v3607
  %v3610 = vadd.s32 %v3609, %v3599
  %v3611 = vadd.s32 %v3610, %v3601
  %v3612 = vmul.u32 %v3567, %v3558
  %v3613 = vadd.s32 %v3589, %v3608
  %vm3614 = vc.u32 %v3589, %v3608
  %v3615 = vadd.s32 %v3611, 1
  %v3616 = vsel %vm3614, %v3615, %v3611
  %v3617 = vadd.s32 %v3612, %v3616
  %v3618 = vadd.s32 %v3617, 536870912
  %v3619 = vshrl.u32 %v3618, 30
  %v3620 = vshll.u32 %v3619, 30
  %v3621 = vsub.s32 %v3617, %v3620
  %vm3622 = vcmp.lt.s32.totalorder %v3621, 0
  %v3623 = vsub.s32 0, %v3621
  %v3624 = vsel %vm3622, %v3623, %v3621
  %v3625 = vclz %v3624
  %v3626 = vsub.s32 %v3625, 2
  %vm3627 = vcmp.gt.s32.totalorder 0, %v3626
  %v3628 = vsel %vm3627, 0, %v3626
  %v3629 = vsub.s32 32, %v3628
  %v3630 = vshll.u32 %v3621, %v3628
  %v3631 = vshrl.u32 %v3613, %v3629
  %v3632 = vor.u32 %v3630, %v3631
  %v3633 = vsub.s32 4294967266, %v3628
  %v3634 = vadd.s32 %v3633, 127
  %v3635 = vshll.u32 %v3634, 23
  %v3636 = vor.u32 4788187, %v3635
  %v3637 = vand.u32 2147483647, %v3636
  %v3639 = vcvt.s32.f32 %v3632
  %v3640 = vmul.f32 %v3639, %v3637
  %v3641 = vxor.u32 %v3640, 2147483648
  %v3642 = vsel %vm3521, %v3641, %v3640
  %v3643 = vsub.s32 4, %v3619
  %v3644 = vsel %vm3521, %v3643, %v3619
  %v3645 = vsel %vm3520, %v1633, %v3642
  %v3646 = vsel %vm3520, 0, %v3644
  %v3647 = vmul.f32 %v3645, %v3645
  %v3648 = vmul.f32 %v3647, -0.001358992
  %v3649 = vadd.f32 %v3648, 0.041655596
  %v3650 = vmul.f32 %v3647, %v3649
  %v3651 = vadd.f32 %v3650, -0.4999988
  %v3652 = vmul.f32 %v3647, %v3651
  %v3653 = vadd.f32 1.0, %v3652
  %v3654 = vmul.f32 %v3645, %v3645
  %v3655 = vmul.f32 %v3654, -0.00019511016
  %v3656 = vadd.f32 %v3655, 0.008332121
  %v3657 = vmul.f32 %v3654, %v3656
  %v3658 = vadd.f32 %v3657, -0.16666654
  %v3659 = vmul.f32 %v3654, %v3658
  %v3660 = vadd.f32 %v3659, 1.0
  %v3661 = vmul.f32 %v3660, %v3645
  %vm3662 = vweird.f32 %v1633
  %v3663 = vadd.s32 %v3646, 3
  %v3664 = vand.u32 %v3663, 3
  %vm3665 = vcmp.lt.s32.totalorder %v3664, 2
  %vm3666 = vcmp.eq.s32.totalorder %v3664, 0
  %v3667 = vxor.u32 %v3661, 2147483648
  %v3668 = vsel %vm3666, %v3653, %v3667
  %vm3669 = vcmp.eq.s32.totalorder %v3664, 2
  %v3670 = vxor.u32 %v3653, 2147483648
  %v3671 = vsel %vm3669, %v3670, %v3661
  %v3672 = vsel %vm3665, %v3668, %v3671
  %v3673 = vsel %vm3662, nan, %v3672
  %v3674 = vand.u32 2147483647, %v1634
  %vm3675 = vcmp.le.f32.partialorder %v3674, 0.7853982
  %vm3676 = vcmp.lt.s32.totalorder %v1634, 0
  %v3677 = vand.u32 %v1634, 2139095040
  %v3678 = vshrl.u32 %v3677, 23
  %v3679 = vsub.s32 %v3678, 127
  %v3680 = vand.u32 2147483647, %v1634
  %v3681 = vand.u32 %v3680, 8388607
  %v3682 = vor.u32 %v3681, 8388608
  %v3683 = vsub.s32 0, %v3682
  %v3684 = vadd.s32 %v3679, 1
  %vm3685 = vcmp.gt.s32.totalorder %v3684, 0
  %v3686 = vsel %vm3685, %v3684, 0
  %v3687 = vshrl.u32 %v3686, 5
  %v3688 = vand.u32 %v3686, 31
  %v3689 = vsub.s32 32, %v3688
  %v3690 = vshrl.u32 683565275, %v3689
  %v3691 = vshll.u32 683565275, %v3688
  %v3692 = vshrl.u32 2475754826, %v3689
  %v3693 = vor.u32 %v3691, %v3692
  %v3694 = vshll.u32 2475754826, %v3688
  %v3695 = vshrl.u32 2131351028, %v3689
  %v3696 = vor.u32 %v3694, %v3695
  %v3697 = vshll.u32 2131351028, %v3688
  %v3698 = vshrl.u32 2102212464, %v3689
  %v3699 = vor.u32 %v3697, %v3698
  %v3700 = vshll.u32 2102212464, %v3688
  %v3701 = vshrl.u32 920167782, %v3689
  %v3702 = vor.u32 %v3700, %v3701
  %v3703 = vshll.u32 920167782, %v3688
  %v3704 = vshrl.u32 1326507024, %v3689
  %v3705 = vor.u32 %v3703, %v3704
  %vm3706 = vcmp.lt.s32.totalorder %v3687, 1
  %vm3707 = vcmp.lt.s32.totalorder %v3687, 2
  %vm3708 = vcmp.lt.s32.totalorder %v3687, 3
  %vm3709 = vcmp.lt.s32.totalorder %v3687, 4
  %v3710 = vsel %vm3706, %v3690, %v3693
  %v3711 = vsel %vm3709, %v3699, 2102212464
  %v3712 = vsel %vm3708, %v3696, %v3711
  %v3713 = vsel %vm3707, %v3710, %v3712
  %v3714 = vsel %vm3706, %v3693, %v3696
  %v3715 = vsel %vm3709, %v3702, 920167782
  %v3716 = vsel %vm3708, %v3699, %v3715
  %v3717 = vsel %vm3707, %v3714, %v3716
  %v3718 = vsel %vm3706, %v3696, %v3699
  %v3719 = vsel %vm3709, %v3705, 1326507024
  %v3720 = vsel %vm3708, %v3702, %v3719
  %v3721 = vsel %vm3707, %v3718, %v3720
  %v3722 = vshll.u32 %v3682, 8
  %v3723 = vand.u32 %v3722, 65535
  %v3724 = vshrl.u32 %v3722, 16
  %v3725 = vand.u32 %v3721, 65535
  %v3726 = vshrl.u32 %v3721, 16
  %v3727 = vmul.u32 %v3723, %v3725
  %v3728 = vmul.u32 %v3723, %v3726
  %v3729 = vmul.u32 %v3724, %v3725
  %v3730 = vmul.u32 %v3724, %v3726
  %v3731 = vshll.u32 %v3728, 16
  %v3732 = vshrl.u32 %v3728, 16
  %v3733 = vshll.u32 %v3729, 16
  %v3734 = vshrl.u32 %v3729, 16
  %vm3735 = vc.u32 %v3727, %v3731
  %v3736 = vsel %vm3735, 1, 0
  %v3737 = vadd.s32 %v3727, %v3731
  %v3738 = vadd.s32 %v3730, %v3736
  %vm3739 = vc.u32 %v3737, %v3733
  %v3740 = vsel %vm3739, 1, 0
  %v3741 = vadd.s32 %v3737, %v3733
  %v3742 = vadd.s32 %v3738, %v3740
  %v3743 = vadd.s32 %v3742, %v3732
  %v3744 = vadd.s32 %v3743, %v3734
  %v3745 = vand.u32 %v3722, 65535
  %v3746 = vshrl.u32 %v3722, 16
  %v3747 = vand.u32 %v3717, 65535
  %v3748 = vshrl.u32 %v3717, 16
  %v3749 = vmul.u32 %v3745, %v3747
  %v3750 = vmul.u32 %v3745, %v3748
  %v3751 = vmul.u32 %v3746, %v3747
  %v3752 = vmul.u32 %v3746, %v3748
  %v3753 = vshll.u32 %v3750, 16
  %v3754 = vshrl.u32 %v3750, 16
  %v3755 = vshll.u32 %v3751, 16
  %v3756 = vshrl.u32 %v3751, 16
  %vm3757 = vc.u32 %v3749, %v3753
  %v3758 = vsel %vm3757, 1, 0
  %v3759 = vadd.s32 %v3749, %v3753
  %v3760 = vadd.s32 %v3752, %v3758
  %vm3761 = vc.u32 %v3759, %v3755
  %v3762 = vsel %vm3761, 1, 0
  %v3763 = vadd.s32 %v3759, %v3755
  %v3764 = vadd.s32 %v3760, %v3762
  %v3765 = vadd.s32 %v3764, %v3754
  %v3766 = vadd.s32 %v3765, %v3756
  %v3767 = vmul.u32 %v3722, %v3713
  %v3768 = vadd.s32 %v3744, %v3763
  %vm3769 = vc.u32 %v3744, %v3763
  %v3770 = vadd.s32 %v3766, 1
  %v3771 = vsel %vm3769, %v3770, %v3766
  %v3772 = vadd.s32 %v3767, %v3771
  %v3773 = vadd.s32 %v3772, 536870912
  %v3774 = vshrl.u32 %v3773, 30
  %v3775 = vshll.u32 %v3774, 30
  %v3776 = vsub.s32 %v3772, %v3775
  %vm3777 = vcmp.lt.s32.totalorder %v3776, 0
  %v3778 = vsub.s32 0, %v3776
  %v3779 = vsel %vm3777, %v3778, %v3776
  %v3780 = vclz %v3779
  %v3781 = vsub.s32 %v3780, 2
  %vm3782 = vcmp.gt.s32.totalorder 0, %v3781
  %v3783 = vsel %vm3782, 0, %v3781
  %v3784 = vsub.s32 32, %v3783
  %v3785 = vshll.u32 %v3776, %v3783
  %v3786 = vshrl.u32 %v3768, %v3784
  %v3787 = vor.u32 %v3785, %v3786
  %v3788 = vsub.s32 4294967266, %v3783
  %v3789 = vadd.s32 %v3788, 127
  %v3790 = vshll.u32 %v3789, 23
  %v3791 = vor.u32 4788187, %v3790
  %v3792 = vand.u32 2147483647, %v3791
  %v3794 = vcvt.s32.f32 %v3787
  %v3795 = vmul.f32 %v3794, %v3792
  %v3796 = vxor.u32 %v3795, 2147483648
  %v3797 = vsel %vm3676, %v3796, %v3795
  %v3798 = vsub.s32 4, %v3774
  %v3799 = vsel %vm3676, %v3798, %v3774
  %v3800 = vsel %vm3675, %v1634, %v3797
  %v3801 = vsel %vm3675, 0, %v3799
  %v3802 = vmul.f32 %v3800, %v3800
  %v3803 = vmul.f32 %v3802, -0.001358992
  %v3804 = vadd.f32 %v3803, 0.041655596
  %v3805 = vmul.f32 %v3802, %v3804
  %v3806 = vadd.f32 %v3805, -0.4999988
  %v3807 = vmul.f32 %v3802, %v3806
  %v3808 = vadd.f32 1.0, %v3807
  %v3809 = vmul.f32 %v3800, %v3800
  %v3810 = vmul.f32 %v3809, -0.00019511016
  %v3811 = vadd.f32 %v3810, 0.008332121
  %v3812 = vmul.f32 %v3809, %v3811
  %v3813 = vadd.f32 %v3812, -0.16666654
  %v3814 = vmul.f32 %v3809, %v3813
  %v3815 = vadd.f32 %v3814, 1.0
  %v3816 = vmul.f32 %v3815, %v3800
  %vm3817 = vweird.f32 %v1634
  %v3818 = vadd.s32 %v3801, 3
  %v3819 = vand.u32 %v3818, 3
  %vm3820 = vcmp.lt.s32.totalorder %v3819, 2
  %vm3821 = vcmp.eq.s32.totalorder %v3819, 0
  %v3822 = vxor.u32 %v3816, 2147483648
  %v3823 = vsel %vm3821, %v3808, %v3822
  %vm3824 = vcmp.eq.s32.totalorder %v3819, 2
  %v3825 = vxor.u32 %v3808, 2147483648
  %v3826 = vsel %vm3824, %v3825, %v3816
  %v3827 = vsel %vm3820, %v3823, %v3826
  %v3828 = vsel %vm3817, nan, %v3827
  %v3829 = vand.u32 2147483647, %v1635
  %vm3830 = vcmp.le.f32.partialorder %v3829, 0.7853982
  %vm3831 = vcmp.lt.s32.totalorder %v1635, 0
  %v3832 = vand.u32 %v1635, 2139095040
  %v3833 = vshrl.u32 %v3832, 23
  %v3834 = vsub.s32 %v3833, 127
  %v3835 = vand.u32 2147483647, %v1635
  %v3836 = vand.u32 %v3835, 8388607
  %v3837 = vor.u32 %v3836, 8388608
  %v3838 = vsub.s32 0, %v3837
  %v3839 = vadd.s32 %v3834, 1
  %vm3840 = vcmp.gt.s32.totalorder %v3839, 0
  %v3841 = vsel %vm3840, %v3839, 0
  %v3842 = vshrl.u32 %v3841, 5
  %v3843 = vand.u32 %v3841, 31
  %v3844 = vsub.s32 32, %v3843
  %v3845 = vshrl.u32 683565275, %v3844
  %v3846 = vshll.u32 683565275, %v3843
  %v3847 = vshrl.u32 2475754826, %v3844
  %v3848 = vor.u32 %v3846, %v3847
  %v3849 = vshll.u32 2475754826, %v3843
  %v3850 = vshrl.u32 2131351028, %v3844
  %v3851 = vor.u32 %v3849, %v3850
  %v3852 = vshll.u32 2131351028, %v3843
  %v3853 = vshrl.u32 2102212464, %v3844
  %v3854 = vor.u32 %v3852, %v3853
  %v3855 = vshll.u32 2102212464, %v3843
  %v3856 = vshrl.u32 920167782, %v3844
  %v3857 = vor.u32 %v3855, %v3856
  %v3858 = vshll.u32 920167782, %v3843
  %v3859 = vshrl.u32 1326507024, %v3844
  %v3860 = vor.u32 %v3858, %v3859
  %vm3861 = vcmp.lt.s32.totalorder %v3842, 1
  %vm3862 = vcmp.lt.s32.totalorder %v3842, 2
  %vm3863 = vcmp.lt.s32.totalorder %v3842, 3
  %vm3864 = vcmp.lt.s32.totalorder %v3842, 4
  %v3865 = vsel %vm3861, %v3845, %v3848
  %v3866 = vsel %vm3864, %v3854, 2102212464
  %v3867 = vsel %vm3863, %v3851, %v3866
  %v3868 = vsel %vm3862, %v3865, %v3867
  %v3869 = vsel %vm3861, %v3848, %v3851
  %v3870 = vsel %vm3864, %v3857, 920167782
  %v3871 = vsel %vm3863, %v3854, %v3870
  %v3872 = vsel %vm3862, %v3869, %v3871
  %v3873 = vsel %vm3861, %v3851, %v3854
  %v3874 = vsel %vm3864, %v3860, 1326507024
  %v3875 = vsel %vm3863, %v3857, %v3874
  %v3876 = vsel %vm3862, %v3873, %v3875
  %v3877 = vshll.u32 %v3837, 8
  %v3878 = vand.u32 %v3877, 65535
  %v3879 = vshrl.u32 %v3877, 16
  %v3880 = vand.u32 %v3876, 65535
  %v3881 = vshrl.u32 %v3876, 16
  %v3882 = vmul.u32 %v3878, %v3880
  %v3883 = vmul.u32 %v3878, %v3881
  %v3884 = vmul.u32 %v3879, %v3880
  %v3885 = vmul.u32 %v3879, %v3881
  %v3886 = vshll.u32 %v3883, 16
  %v3887 = vshrl.u32 %v3883, 16
  %v3888 = vshll.u32 %v3884, 16
  %v3889 = vshrl.u32 %v3884, 16
  %vm3890 = vc.u32 %v3882, %v3886
  %v3891 = vsel %vm3890, 1, 0
  %v3892 = vadd.s32 %v3882, %v3886
  %v3893 = vadd.s32 %v3885, %v3891
  %vm3894 = vc.u32 %v3892, %v3888
  %v3895 = vsel %vm3894, 1, 0
  %v3896 = vadd.s32 %v3892, %v3888
  %v3897 = vadd.s32 %v3893, %v3895
  %v3898 = vadd.s32 %v3897, %v3887
  %v3899 = vadd.s32 %v3898, %v3889
  %v3900 = vand.u32 %v3877, 65535
  %v3901 = vshrl.u32 %v3877, 16
  %v3902 = vand.u32 %v3872, 65535
  %v3903 = vshrl.u32 %v3872, 16
  %v3904 = vmul.u32 %v3900, %v3902
  %v3905 = vmul.u32 %v3900, %v3903
  %v3906 = vmul.u32 %v3901, %v3902
  %v3907 = vmul.u32 %v3901, %v3903
  %v3908 = vshll.u32 %v3905, 16
  %v3909 = vshrl.u32 %v3905, 16
  %v3910 = vshll.u32 %v3906, 16
  %v3911 = vshrl.u32 %v3906, 16
  %vm3912 = vc.u32 %v3904, %v3908
  %v3913 = vsel %vm3912, 1, 0
  %v3914 = vadd.s32 %v3904, %v3908
  %v3915 = vadd.s32 %v3907, %v3913
  %vm3916 = vc.u32 %v3914, %v3910
  %v3917 = vsel %vm3916, 1, 0
  %v3918 = vadd.s32 %v3914, %v3910
  %v3919 = vadd.s32 %v3915, %v3917
  %v3920 = vadd.s32 %v3919, %v3909
  %v3921 = vadd.s32 %v3920, %v3911
  %v3922 = vmul.u32 %v3877, %v3868
  %v3923 = vadd.s32 %v3899, %v3918
  %vm3924 = vc.u32 %v3899, %v3918
  %v3925 = vadd.s32 %v3921, 1
  %v3926 = vsel %vm3924, %v3925, %v3921
  %v3927 = vadd.s32 %v3922, %v3926
  %v3928 = vadd.s32 %v3927, 536870912
  %v3929 = vshrl.u32 %v3928, 30
  %v3930 = vshll.u32 %v3929, 30
  %v3931 = vsub.s32 %v3927, %v3930
  %vm3932 = vcmp.lt.s32.totalorder %v3931, 0
  %v3933 = vsub.s32 0, %v3931
  %v3934 = vsel %vm3932, %v3933, %v3931
  %v3935 = vclz %v3934
  %v3936 = vsub.s32 %v3935, 2
  %vm3937 = vcmp.gt.s32.totalorder 0, %v3936
  %v3938 = vsel %vm3937, 0, %v3936
  %v3939 = vsub.s32 32, %v3938
  %v3940 = vshll.u32 %v3931, %v3938
  %v3941 = vshrl.u32 %v3923, %v3939
  %v3942 = vor.u32 %v3940, %v3941
  %v3943 = vsub.s32 4294967266, %v3938
  %v3944 = vadd.s32 %v3943, 127
  %v3945 = vshll.u32 %v3944, 23
  %v3946 = vor.u32 4788187, %v3945
  %v3947 = vand.u32 2147483647, %v3946
  %v3949 = vcvt.s32.f32 %v3942
  %v3950 = vmul.f32 %v3949, %v3947
  %v3951 = vxor.u32 %v3950, 2147483648
  %v3952 = vsel %vm3831, %v3951, %v3950
  %v3953 = vsub.s32 4, %v3929
  %v3954 = vsel %vm3831, %v3953, %v3929
  %v3955 = vsel %vm3830, %v1635, %v3952
  %v3956 = vsel %vm3830, 0, %v3954
  %v3957 = vmul.f32 %v3955, %v3955
  %v3958 = vmul.f32 %v3957, -0.001358992
  %v3959 = vadd.f32 %v3958, 0.041655596
  %v3960 = vmul.f32 %v3957, %v3959
  %v3961 = vadd.f32 %v3960, -0.4999988
  %v3962 = vmul.f32 %v3957, %v3961
  %v3963 = vadd.f32 1.0, %v3962
  %v3964 = vmul.f32 %v3955, %v3955
  %v3965 = vmul.f32 %v3964, -0.00019511016
  %v3966 = vadd.f32 %v3965, 0.008332121
  %v3967 = vmul.f32 %v3964, %v3966
  %v3968 = vadd.f32 %v3967, -0.16666654
  %v3969 = vmul.f32 %v3964, %v3968
  %v3970 = vadd.f32 %v3969, 1.0
  %v3971 = vmul.f32 %v3970, %v3955
  %vm3972 = vweird.f32 %v1635
  %v3973 = vadd.s32 %v3956, 3
  %v3974 = vand.u32 %v3973, 3
  %vm3975 = vcmp.lt.s32.totalorder %v3974, 2
  %vm3976 = vcmp.eq.s32.totalorder %v3974, 0
  %v3977 = vxor.u32 %v3971, 2147483648
  %v3978 = vsel %vm3976, %v3963, %v3977
  %vm3979 = vcmp.eq.s32.totalorder %v3974, 2
  %v3980 = vxor.u32 %v3963, 2147483648
  %v3981 = vsel %vm3979, %v3980, %v3971
  %v3982 = vsel %vm3975, %v3978, %v3981
  %v3983 = vsel %vm3972, nan, %v3982
  %v3984 = vand.u32 2147483647, %v1636
  %vm3985 = vcmp.le.f32.partialorder %v3984, 0.7853982
  %vm3986 = vcmp.lt.s32.totalorder %v1636, 0
  %v3987 = vand.u32 %v1636, 2139095040
  %v3988 = vshrl.u32 %v3987, 23
  %v3989 = vsub.s32 %v3988, 127
  %v3990 = vand.u32 2147483647, %v1636
  %v3991 = vand.u32 %v3990, 8388607
  %v3992 = vor.u32 %v3991, 8388608
  %v3993 = vsub.s32 0, %v3992
  %v3994 = vadd.s32 %v3989, 1
  %vm3995 = vcmp.gt.s32.totalorder %v3994, 0
  %v3996 = vsel %vm3995, %v3994, 0
  %v3997 = vshrl.u32 %v3996, 5
  %v3998 = vand.u32 %v3996, 31
  %v3999 = vsub.s32 32, %v3998
  %v4000 = vshrl.u32 683565275, %v3999
  %v4001 = vshll.u32 683565275, %v3998
  %v4002 = vshrl.u32 2475754826, %v3999
  %v4003 = vor.u32 %v4001, %v4002
  %v4004 = vshll.u32 2475754826, %v3998
  %v4005 = vshrl.u32 2131351028, %v3999
  %v4006 = vor.u32 %v4004, %v4005
  %v4007 = vshll.u32 2131351028, %v3998
  %v4008 = vshrl.u32 2102212464, %v3999
  %v4009 = vor.u32 %v4007, %v4008
  %v4010 = vshll.u32 2102212464, %v3998
  %v4011 = vshrl.u32 920167782, %v3999
  %v4012 = vor.u32 %v4010, %v4011
  %v4013 = vshll.u32 920167782, %v3998
  %v4014 = vshrl.u32 1326507024, %v3999
  %v4015 = vor.u32 %v4013, %v4014
  %vm4016 = vcmp.lt.s32.totalorder %v3997, 1
  %vm4017 = vcmp.lt.s32.totalorder %v3997, 2
  %vm4018 = vcmp.lt.s32.totalorder %v3997, 3
  %vm4019 = vcmp.lt.s32.totalorder %v3997, 4
  %v4020 = vsel %vm4016, %v4000, %v4003
  %v4021 = vsel %vm4019, %v4009, 2102212464
  %v4022 = vsel %vm4018, %v4006, %v4021
  %v4023 = vsel %vm4017, %v4020, %v4022
  %v4024 = vsel %vm4016, %v4003, %v4006
  %v4025 = vsel %vm4019, %v4012, 920167782
  %v4026 = vsel %vm4018, %v4009, %v4025
  %v4027 = vsel %vm4017, %v4024, %v4026
  %v4028 = vsel %vm4016, %v4006, %v4009
  %v4029 = vsel %vm4019, %v4015, 1326507024
  %v4030 = vsel %vm4018, %v4012, %v4029
  %v4031 = vsel %vm4017, %v4028, %v4030
  %v4032 = vshll.u32 %v3992, 8
  %v4033 = vand.u32 %v4032, 65535
  %v4034 = vshrl.u32 %v4032, 16
  %v4035 = vand.u32 %v4031, 65535
  %v4036 = vshrl.u32 %v4031, 16
  %v4037 = vmul.u32 %v4033, %v4035
  %v4038 = vmul.u32 %v4033, %v4036
  %v4039 = vmul.u32 %v4034, %v4035
  %v4040 = vmul.u32 %v4034, %v4036
  %v4041 = vshll.u32 %v4038, 16
  %v4042 = vshrl.u32 %v4038, 16
  %v4043 = vshll.u32 %v4039, 16
  %v4044 = vshrl.u32 %v4039, 16
  %vm4045 = vc.u32 %v4037, %v4041
  %v4046 = vsel %vm4045, 1, 0
  %v4047 = vadd.s32 %v4037, %v4041
  %v4048 = vadd.s32 %v4040, %v4046
  %vm4049 = vc.u32 %v4047, %v4043
  %v4050 = vsel %vm4049, 1, 0
  %v4051 = vadd.s32 %v4047, %v4043
  %v4052 = vadd.s32 %v4048, %v4050
  %v4053 = vadd.s32 %v4052, %v4042
  %v4054 = vadd.s32 %v4053, %v4044
  %v4055 = vand.u32 %v4032, 65535
  %v4056 = vshrl.u32 %v4032, 16
  %v4057 = vand.u32 %v4027, 65535
  %v4058 = vshrl.u32 %v4027, 16
  %v4059 = vmul.u32 %v4055, %v4057
  %v4060 = vmul.u32 %v4055, %v4058
  %v4061 = vmul.u32 %v4056, %v4057
  %v4062 = vmul.u32 %v4056, %v4058
  %v4063 = vshll.u32 %v4060, 16
  %v4064 = vshrl.u32 %v4060, 16
  %v4065 = vshll.u32 %v4061, 16
  %v4066 = vshrl.u32 %v4061, 16
  %vm4067 = vc.u32 %v4059, %v4063
  %v4068 = vsel %vm4067, 1, 0
  %v4069 = vadd.s32 %v4059, %v4063
  %v4070 = vadd.s32 %v4062, %v4068
  %vm4071 = vc.u32 %v4069, %v4065
  %v4072 = vsel %vm4071, 1, 0
  %v4073 = vadd.s32 %v4069, %v4065
  %v4074 = vadd.s32 %v4070, %v4072
  %v4075 = vadd.s32 %v4074, %v4064
  %v4076 = vadd.s32 %v4075, %v4066
  %v4077 = vmul.u32 %v4032, %v4023
  %v4078 = vadd.s32 %v4054, %v4073
  %vm4079 = vc.u32 %v4054, %v4073
  %v4080 = vadd.s32 %v4076, 1
  %v4081 = vsel %vm4079, %v4080, %v4076
  %v4082 = vadd.s32 %v4077, %v4081
  %v4083 = vadd.s32 %v4082, 536870912
  %v4084 = vshrl.u32 %v4083, 30
  %v4085 = vshll.u32 %v4084, 30
  %v4086 = vsub.s32 %v4082, %v4085
  %vm4087 = vcmp.lt.s32.totalorder %v4086, 0
  %v4088 = vsub.s32 0, %v4086
  %v4089 = vsel %vm4087, %v4088, %v4086
  %v4090 = vclz %v4089
  %v4091 = vsub.s32 %v4090, 2
  %vm4092 = vcmp.gt.s32.totalorder 0, %v4091
  %v4093 = vsel %vm4092, 0, %v4091
  %v4094 = vsub.s32 32, %v4093
  %v4095 = vshll.u32 %v4086, %v4093
  %v4096 = vshrl.u32 %v4078, %v4094
  %v4097 = vor.u32 %v4095, %v4096
  %v4098 = vsub.s32 4294967266, %v4093
  %v4099 = vadd.s32 %v4098, 127
  %v4100 = vshll.u32 %v4099, 23
  %v4101 = vor.u32 4788187, %v4100
  %v4102 = vand.u32 2147483647, %v4101
  %v4104 = vcvt.s32.f32 %v4097
  %v4105 = vmul.f32 %v4104, %v4102
  %v4106 = vxor.u32 %v4105, 2147483648
  %v4107 = vsel %vm3986, %v4106, %v4105
  %v4108 = vsub.s32 4, %v4084
  %v4109 = vsel %vm3986, %v4108, %v4084
  %v4110 = vsel %vm3985, %v1636, %v4107
  %v4111 = vsel %vm3985, 0, %v4109
  %v4112 = vmul.f32 %v4110, %v4110
  %v4113 = vmul.f32 %v4112, -0.001358992
  %v4114 = vadd.f32 %v4113, 0.041655596
  %v4115 = vmul.f32 %v4112, %v4114
  %v4116 = vadd.f32 %v4115, -0.4999988
  %v4117 = vmul.f32 %v4112, %v4116
  %v4118 = vadd.f32 1.0, %v4117
  %v4119 = vmul.f32 %v4110, %v4110
  %v4120 = vmul.f32 %v4119, -0.00019511016
  %v4121 = vadd.f32 %v4120, 0.008332121
  %v4122 = vmul.f32 %v4119, %v4121
  %v4123 = vadd.f32 %v4122, -0.16666654
  %v4124 = vmul.f32 %v4119, %v4123
  %v4125 = vadd.f32 %v4124, 1.0
  %v4126 = vmul.f32 %v4125, %v4110
  %vm4127 = vweird.f32 %v1636
  %v4128 = vadd.s32 %v4111, 3
  %v4129 = vand.u32 %v4128, 3
  %vm4130 = vcmp.lt.s32.totalorder %v4129, 2
  %vm4131 = vcmp.eq.s32.totalorder %v4129, 0
  %v4132 = vxor.u32 %v4126, 2147483648
  %v4133 = vsel %vm4131, %v4118, %v4132
  %vm4134 = vcmp.eq.s32.totalorder %v4129, 2
  %v4135 = vxor.u32 %v4118, 2147483648
  %v4136 = vsel %vm4134, %v4135, %v4126
  %v4137 = vsel %vm4130, %v4133, %v4136
  %v4138 = vsel %vm4127, nan, %v4137
  %v4139 = vand.u32 2147483647, %v1637
  %vm4140 = vcmp.le.f32.partialorder %v4139, 0.7853982
  %vm4141 = vcmp.lt.s32.totalorder %v1637, 0
  %v4142 = vand.u32 %v1637, 2139095040
  %v4143 = vshrl.u32 %v4142, 23
  %v4144 = vsub.s32 %v4143, 127
  %v4145 = vand.u32 2147483647, %v1637
  %v4146 = vand.u32 %v4145, 8388607
  %v4147 = vor.u32 %v4146, 8388608
  %v4148 = vsub.s32 0, %v4147
  %v4149 = vadd.s32 %v4144, 1
  %vm4150 = vcmp.gt.s32.totalorder %v4149, 0
  %v4151 = vsel %vm4150, %v4149, 0
  %v4152 = vshrl.u32 %v4151, 5
  %v4153 = vand.u32 %v4151, 31
  %v4154 = vsub.s32 32, %v4153
  %v4155 = vshrl.u32 683565275, %v4154
  %v4156 = vshll.u32 683565275, %v4153
  %v4157 = vshrl.u32 2475754826, %v4154
  %v4158 = vor.u32 %v4156, %v4157
  %v4159 = vshll.u32 2475754826, %v4153
  %v4160 = vshrl.u32 2131351028, %v4154
  %v4161 = vor.u32 %v4159, %v4160
  %v4162 = vshll.u32 2131351028, %v4153
  %v4163 = vshrl.u32 2102212464, %v4154
  %v4164 = vor.u32 %v4162, %v4163
  %v4165 = vshll.u32 2102212464, %v4153
  %v4166 = vshrl.u32 920167782, %v4154
  %v4167 = vor.u32 %v4165, %v4166
  %v4168 = vshll.u32 920167782, %v4153
  %v4169 = vshrl.u32 1326507024, %v4154
  %v4170 = vor.u32 %v4168, %v4169
  %vm4171 = vcmp.lt.s32.totalorder %v4152, 1
  %vm4172 = vcmp.lt.s32.totalorder %v4152, 2
  %vm4173 = vcmp.lt.s32.totalorder %v4152, 3
  %vm4174 = vcmp.lt.s32.totalorder %v4152, 4
  %v4175 = vsel %vm4171, %v4155, %v4158
  %v4176 = vsel %vm4174, %v4164, 2102212464
  %v4177 = vsel %vm4173, %v4161, %v4176
  %v4178 = vsel %vm4172, %v4175, %v4177
  %v4179 = vsel %vm4171, %v4158, %v4161
  %v4180 = vsel %vm4174, %v4167, 920167782
  %v4181 = vsel %vm4173, %v4164, %v4180
  %v4182 = vsel %vm4172, %v4179, %v4181
  %v4183 = vsel %vm4171, %v4161, %v4164
  %v4184 = vsel %vm4174, %v4170, 1326507024
  %v4185 = vsel %vm4173, %v4167, %v4184
  %v4186 = vsel %vm4172, %v4183, %v4185
  %v4187 = vshll.u32 %v4147, 8
  %v4188 = vand.u32 %v4187, 65535
  %v4189 = vshrl.u32 %v4187, 16
  %v4190 = vand.u32 %v4186, 65535
  %v4191 = vshrl.u32 %v4186, 16
  %v4192 = vmul.u32 %v4188, %v4190
  %v4193 = vmul.u32 %v4188, %v4191
  %v4194 = vmul.u32 %v4189, %v4190
  %v4195 = vmul.u32 %v4189, %v4191
  %v4196 = vshll.u32 %v4193, 16
  %v4197 = vshrl.u32 %v4193, 16
  %v4198 = vshll.u32 %v4194, 16
  %v4199 = vshrl.u32 %v4194, 16
  %vm4200 = vc.u32 %v4192, %v4196
  %v4201 = vsel %vm4200, 1, 0
  %v4202 = vadd.s32 %v4192, %v4196
  %v4203 = vadd.s32 %v4195, %v4201
  %vm4204 = vc.u32 %v4202, %v4198
  %v4205 = vsel %vm4204, 1, 0
  %v4206 = vadd.s32 %v4202, %v4198
  %v4207 = vadd.s32 %v4203, %v4205
  %v4208 = vadd.s32 %v4207, %v4197
  %v4209 = vadd.s32 %v4208, %v4199
  %v4210 = vand.u32 %v4187, 65535
  %v4211 = vshrl.u32 %v4187, 16
  %v4212 = vand.u32 %v4182, 65535
  %v4213 = vshrl.u32 %v4182, 16
  %v4214 = vmul.u32 %v4210, %v4212
  %v4215 = vmul.u32 %v4210, %v4213
  %v4216 = vmul.u32 %v4211, %v4212
  %v4217 = vmul.u32 %v4211, %v4213
  %v4218 = vshll.u32 %v4215, 16
  %v4219 = vshrl.u32 %v4215, 16
  %v4220 = vshll.u32 %v4216, 16
  %v4221 = vshrl.u32 %v4216, 16
  %vm4222 = vc.u32 %v4214, %v4218
  %v4223 = vsel %vm4222, 1, 0
  %v4224 = vadd.s32 %v4214, %v4218
  %v4225 = vadd.s32 %v4217, %v4223
  %vm4226 = vc.u32 %v4224, %v4220
  %v4227 = vsel %vm4226, 1, 0
  %v4228 = vadd.s32 %v4224, %v4220
  %v4229 = vadd.s32 %v4225, %v4227
  %v4230 = vadd.s32 %v4229, %v4219
  %v4231 = vadd.s32 %v4230, %v4221
  %v4232 = vmul.u32 %v4187, %v4178
  %v4233 = vadd.s32 %v4209, %v4228
  %vm4234 = vc.u32 %v4209, %v4228
  %v4235 = vadd.s32 %v4231, 1
  %v4236 = vsel %vm4234, %v4235, %v4231
  %v4237 = vadd.s32 %v4232, %v4236
  %v4238 = vadd.s32 %v4237, 536870912
  %v4239 = vshrl.u32 %v4238, 30
  %v4240 = vshll.u32 %v4239, 30
  %v4241 = vsub.s32 %v4237, %v4240
  %vm4242 = vcmp.lt.s32.totalorder %v4241, 0
  %v4243 = vsub.s32 0, %v4241
  %v4244 = vsel %vm4242, %v4243, %v4241
  %v4245 = vclz %v4244
  %v4246 = vsub.s32 %v4245, 2
  %vm4247 = vcmp.gt.s32.totalorder 0, %v4246
  %v4248 = vsel %vm4247, 0, %v4246
  %v4249 = vsub.s32 32, %v4248
  %v4250 = vshll.u32 %v4241, %v4248
  %v4251 = vshrl.u32 %v4233, %v4249
  %v4252 = vor.u32 %v4250, %v4251
  %v4253 = vsub.s32 4294967266, %v4248
  %v4254 = vadd.s32 %v4253, 127
  %v4255 = vshll.u32 %v4254, 23
  %v4256 = vor.u32 4788187, %v4255
  %v4257 = vand.u32 2147483647, %v4256
  %v4259 = vcvt.s32.f32 %v4252
  %v4260 = vmul.f32 %v4259, %v4257
  %v4261 = vxor.u32 %v4260, 2147483648
  %v4262 = vsel %vm4141, %v4261, %v4260
  %v4263 = vsub.s32 4, %v4239
  %v4264 = vsel %vm4141, %v4263, %v4239
  %v4265 = vsel %vm4140, %v1637, %v4262
  %v4266 = vsel %vm4140, 0, %v4264
  %v4267 = vmul.f32 %v4265, %v4265
  %v4268 = vmul.f32 %v4267, -0.001358992
  %v4269 = vadd.f32 %v4268, 0.041655596
  %v4270 = vmul.f32 %v4267, %v4269
  %v4271 = vadd.f32 %v4270, -0.4999988
  %v4272 = vmul.f32 %v4267, %v4271
  %v4273 = vadd.f32 1.0, %v4272
  %v4274 = vmul.f32 %v4265, %v4265
  %v4275 = vmul.f32 %v4274, -0.00019511016
  %v4276 = vadd.f32 %v4275, 0.008332121
  %v4277 = vmul.f32 %v4274, %v4276
  %v4278 = vadd.f32 %v4277, -0.16666654
  %v4279 = vmul.f32 %v4274, %v4278
  %v4280 = vadd.f32 %v4279, 1.0
  %v4281 = vmul.f32 %v4280, %v4265
  %vm4282 = vweird.f32 %v1637
  %v4283 = vadd.s32 %v4266, 3
  %v4284 = vand.u32 %v4283, 3
  %vm4285 = vcmp.lt.s32.totalorder %v4284, 2
  %vm4286 = vcmp.eq.s32.totalorder %v4284, 0
  %v4287 = vxor.u32 %v4281, 2147483648
  %v4288 = vsel %vm4286, %v4273, %v4287
  %vm4289 = vcmp.eq.s32.totalorder %v4284, 2
  %v4290 = vxor.u32 %v4273, 2147483648
  %v4291 = vsel %vm4289, %v4290, %v4281
  %v4292 = vsel %vm4285, %v4288, %v4291
  %v4293 = vsel %vm4282, nan, %v4292
  %v4294 = vand.u32 2147483647, %v1638
  %vm4295 = vcmp.le.f32.partialorder %v4294, 0.7853982
  %vm4296 = vcmp.lt.s32.totalorder %v1638, 0
  %v4297 = vand.u32 %v1638, 2139095040
  %v4298 = vshrl.u32 %v4297, 23
  %v4299 = vsub.s32 %v4298, 127
  %v4300 = vand.u32 2147483647, %v1638
  %v4301 = vand.u32 %v4300, 8388607
  %v4302 = vor.u32 %v4301, 8388608
  %v4303 = vsub.s32 0, %v4302
  %v4304 = vadd.s32 %v4299, 1
  %vm4305 = vcmp.gt.s32.totalorder %v4304, 0
  %v4306 = vsel %vm4305, %v4304, 0
  %v4307 = vshrl.u32 %v4306, 5
  %v4308 = vand.u32 %v4306, 31
  %v4309 = vsub.s32 32, %v4308
  %v4310 = vshrl.u32 683565275, %v4309
  %v4311 = vshll.u32 683565275, %v4308
  %v4312 = vshrl.u32 2475754826, %v4309
  %v4313 = vor.u32 %v4311, %v4312
  %v4314 = vshll.u32 2475754826, %v4308
  %v4315 = vshrl.u32 2131351028, %v4309
  %v4316 = vor.u32 %v4314, %v4315
  %v4317 = vshll.u32 2131351028, %v4308
  %v4318 = vshrl.u32 2102212464, %v4309
  %v4319 = vor.u32 %v4317, %v4318
  %v4320 = vshll.u32 2102212464, %v4308
  %v4321 = vshrl.u32 920167782, %v4309
  %v4322 = vor.u32 %v4320, %v4321
  %v4323 = vshll.u32 920167782, %v4308
  %v4324 = vshrl.u32 1326507024, %v4309
  %v4325 = vor.u32 %v4323, %v4324
  %vm4326 = vcmp.lt.s32.totalorder %v4307, 1
  %vm4327 = vcmp.lt.s32.totalorder %v4307, 2
  %vm4328 = vcmp.lt.s32.totalorder %v4307, 3
  %vm4329 = vcmp.lt.s32.totalorder %v4307, 4
  %v4330 = vsel %vm4326, %v4310, %v4313
  %v4331 = vsel %vm4329, %v4319, 2102212464
  %v4332 = vsel %vm4328, %v4316, %v4331
  %v4333 = vsel %vm4327, %v4330, %v4332
  %v4334 = vsel %vm4326, %v4313, %v4316
  %v4335 = vsel %vm4329, %v4322, 920167782
  %v4336 = vsel %vm4328, %v4319, %v4335
  %v4337 = vsel %vm4327, %v4334, %v4336
  %v4338 = vsel %vm4326, %v4316, %v4319
  %v4339 = vsel %vm4329, %v4325, 1326507024
  %v4340 = vsel %vm4328, %v4322, %v4339
  %v4341 = vsel %vm4327, %v4338, %v4340
  %v4342 = vshll.u32 %v4302, 8
  %v4343 = vand.u32 %v4342, 65535
  %v4344 = vshrl.u32 %v4342, 16
  %v4345 = vand.u32 %v4341, 65535
  %v4346 = vshrl.u32 %v4341, 16
  %v4347 = vmul.u32 %v4343, %v4345
  %v4348 = vmul.u32 %v4343, %v4346
  %v4349 = vmul.u32 %v4344, %v4345
  %v4350 = vmul.u32 %v4344, %v4346
  %v4351 = vshll.u32 %v4348, 16
  %v4352 = vshrl.u32 %v4348, 16
  %v4353 = vshll.u32 %v4349, 16
  %v4354 = vshrl.u32 %v4349, 16
  %vm4355 = vc.u32 %v4347, %v4351
  %v4356 = vsel %vm4355, 1, 0
  %v4357 = vadd.s32 %v4347, %v4351
  %v4358 = vadd.s32 %v4350, %v4356
  %vm4359 = vc.u32 %v4357, %v4353
  %v4360 = vsel %vm4359, 1, 0
  %v4361 = vadd.s32 %v4357, %v4353
  %v4362 = vadd.s32 %v4358, %v4360
  %v4363 = vadd.s32 %v4362, %v4352
  %v4364 = vadd.s32 %v4363, %v4354
  %v4365 = vand.u32 %v4342, 65535
  %v4366 = vshrl.u32 %v4342, 16
  %v4367 = vand.u32 %v4337, 65535
  %v4368 = vshrl.u32 %v4337, 16
  %v4369 = vmul.u32 %v4365, %v4367
  %v4370 = vmul.u32 %v4365, %v4368
  %v4371 = vmul.u32 %v4366, %v4367
  %v4372 = vmul.u32 %v4366, %v4368
  %v4373 = vshll.u32 %v4370, 16
  %v4374 = vshrl.u32 %v4370, 16
  %v4375 = vshll.u32 %v4371, 16
  %v4376 = vshrl.u32 %v4371, 16
  %vm4377 = vc.u32 %v4369, %v4373
  %v4378 = vsel %vm4377, 1, 0
  %v4379 = vadd.s32 %v4369, %v4373
  %v4380 = vadd.s32 %v4372, %v4378
  %vm4381 = vc.u32 %v4379, %v4375
  %v4382 = vsel %vm4381, 1, 0
  %v4383 = vadd.s32 %v4379, %v4375
  %v4384 = vadd.s32 %v4380, %v4382
  %v4385 = vadd.s32 %v4384, %v4374
  %v4386 = vadd.s32 %v4385, %v4376
  %v4387 = vmul.u32 %v4342, %v4333
  %v4388 = vadd.s32 %v4364, %v4383
  %vm4389 = vc.u32 %v4364, %v4383
  %v4390 = vadd.s32 %v4386, 1
  %v4391 = vsel %vm4389, %v4390, %v4386
  %v4392 = vadd.s32 %v4387, %v4391
  %v4393 = vadd.s32 %v4392, 536870912
  %v4394 = vshrl.u32 %v4393, 30
  %v4395 = vshll.u32 %v4394, 30
  %v4396 = vsub.s32 %v4392, %v4395
  %vm4397 = vcmp.lt.s32.totalorder %v4396, 0
  %v4398 = vsub.s32 0, %v4396
  %v4399 = vsel %vm4397, %v4398, %v4396
  %v4400 = vclz %v4399
  %v4401 = vsub.s32 %v4400, 2
  %vm4402 = vcmp.gt.s32.totalorder 0, %v4401
  %v4403 = vsel %vm4402, 0, %v4401
  %v4404 = vsub.s32 32, %v4403
  %v4405 = vshll.u32 %v4396, %v4403
  %v4406 = vshrl.u32 %v4388, %v4404
  %v4407 = vor.u32 %v4405, %v4406
  %v4408 = vsub.s32 4294967266, %v4403
  %v4409 = vadd.s32 %v4408, 127
  %v4410 = vshll.u32 %v4409, 23
  %v4411 = vor.u32 4788187, %v4410
  %v4412 = vand.u32 2147483647, %v4411
  %v4414 = vcvt.s32.f32 %v4407
  %v4415 = vmul.f32 %v4414, %v4412
  %v4416 = vxor.u32 %v4415, 2147483648
  %v4417 = vsel %vm4296, %v4416, %v4415
  %v4418 = vsub.s32 4, %v4394
  %v4419 = vsel %vm4296, %v4418, %v4394
  %v4420 = vsel %vm4295, %v1638, %v4417
  %v4421 = vsel %vm4295, 0, %v4419
  %v4422 = vmul.f32 %v4420, %v4420
  %v4423 = vmul.f32 %v4422, -0.001358992
  %v4424 = vadd.f32 %v4423, 0.041655596
  %v4425 = vmul.f32 %v4422, %v4424
  %v4426 = vadd.f32 %v4425, -0.4999988
  %v4427 = vmul.f32 %v4422, %v4426
  %v4428 = vadd.f32 1.0, %v4427
  %v4429 = vmul.f32 %v4420, %v4420
  %v4430 = vmul.f32 %v4429, -0.00019511016
  %v4431 = vadd.f32 %v4430, 0.008332121
  %v4432 = vmul.f32 %v4429, %v4431
  %v4433 = vadd.f32 %v4432, -0.16666654
  %v4434 = vmul.f32 %v4429, %v4433
  %v4435 = vadd.f32 %v4434, 1.0
  %v4436 = vmul.f32 %v4435, %v4420
  %vm4437 = vweird.f32 %v1638
  %v4438 = vadd.s32 %v4421, 3
  %v4439 = vand.u32 %v4438, 3
  %vm4440 = vcmp.lt.s32.totalorder %v4439, 2
  %vm4441 = vcmp.eq.s32.totalorder %v4439, 0
  %v4442 = vxor.u32 %v4436, 2147483648
  %v4443 = vsel %vm4441, %v4428, %v4442
  %vm4444 = vcmp.eq.s32.totalorder %v4439, 2
  %v4445 = vxor.u32 %v4428, 2147483648
  %v4446 = vsel %vm4444, %v4445, %v4436
  %v4447 = vsel %vm4440, %v4443, %v4446
  %v4448 = vsel %vm4437, nan, %v4447
  %v4449 = vand.u32 2147483647, %v1639
  %vm4450 = vcmp.le.f32.partialorder %v4449, 0.7853982
  %vm4451 = vcmp.lt.s32.totalorder %v1639, 0
  %v4452 = vand.u32 %v1639, 2139095040
  %v4453 = vshrl.u32 %v4452, 23
  %v4454 = vsub.s32 %v4453, 127
  %v4455 = vand.u32 2147483647, %v1639
  %v4456 = vand.u32 %v4455, 8388607
  %v4457 = vor.u32 %v4456, 8388608
  %v4458 = vsub.s32 0, %v4457
  %v4459 = vadd.s32 %v4454, 1
  %vm4460 = vcmp.gt.s32.totalorder %v4459, 0
  %v4461 = vsel %vm4460, %v4459, 0
  %v4462 = vshrl.u32 %v4461, 5
  %v4463 = vand.u32 %v4461, 31
  %v4464 = vsub.s32 32, %v4463
  %v4465 = vshrl.u32 683565275, %v4464
  %v4466 = vshll.u32 683565275, %v4463
  %v4467 = vshrl.u32 2475754826, %v4464
  %v4468 = vor.u32 %v4466, %v4467
  %v4469 = vshll.u32 2475754826, %v4463
  %v4470 = vshrl.u32 2131351028, %v4464
  %v4471 = vor.u32 %v4469, %v4470
  %v4472 = vshll.u32 2131351028, %v4463
  %v4473 = vshrl.u32 2102212464, %v4464
  %v4474 = vor.u32 %v4472, %v4473
  %v4475 = vshll.u32 2102212464, %v4463
  %v4476 = vshrl.u32 920167782, %v4464
  %v4477 = vor.u32 %v4475, %v4476
  %v4478 = vshll.u32 920167782, %v4463
  %v4479 = vshrl.u32 1326507024, %v4464
  %v4480 = vor.u32 %v4478, %v4479
  %vm4481 = vcmp.lt.s32.totalorder %v4462, 1
  %vm4482 = vcmp.lt.s32.totalorder %v4462, 2
  %vm4483 = vcmp.lt.s32.totalorder %v4462, 3
  %vm4484 = vcmp.lt.s32.totalorder %v4462, 4
  %v4485 = vsel %vm4481, %v4465, %v4468
  %v4486 = vsel %vm4484, %v4474, 2102212464
  %v4487 = vsel %vm4483, %v4471, %v4486
  %v4488 = vsel %vm4482, %v4485, %v4487
  %v4489 = vsel %vm4481, %v4468, %v4471
  %v4490 = vsel %vm4484, %v4477, 920167782
  %v4491 = vsel %vm4483, %v4474, %v4490
  %v4492 = vsel %vm4482, %v4489, %v4491
  %v4493 = vsel %vm4481, %v4471, %v4474
  %v4494 = vsel %vm4484, %v4480, 1326507024
  %v4495 = vsel %vm4483, %v4477, %v4494
  %v4496 = vsel %vm4482, %v4493, %v4495
  %v4497 = vshll.u32 %v4457, 8
  %v4498 = vand.u32 %v4497, 65535
  %v4499 = vshrl.u32 %v4497, 16
  %v4500 = vand.u32 %v4496, 65535
  %v4501 = vshrl.u32 %v4496, 16
  %v4502 = vmul.u32 %v4498, %v4500
  %v4503 = vmul.u32 %v4498, %v4501
  %v4504 = vmul.u32 %v4499, %v4500
  %v4505 = vmul.u32 %v4499, %v4501
  %v4506 = vshll.u32 %v4503, 16
  %v4507 = vshrl.u32 %v4503, 16
  %v4508 = vshll.u32 %v4504, 16
  %v4509 = vshrl.u32 %v4504, 16
  %vm4510 = vc.u32 %v4502, %v4506
  %v4511 = vsel %vm4510, 1, 0
  %v4512 = vadd.s32 %v4502, %v4506
  %v4513 = vadd.s32 %v4505, %v4511
  %vm4514 = vc.u32 %v4512, %v4508
  %v4515 = vsel %vm4514, 1, 0
  %v4516 = vadd.s32 %v4512, %v4508
  %v4517 = vadd.s32 %v4513, %v4515
  %v4518 = vadd.s32 %v4517, %v4507
  %v4519 = vadd.s32 %v4518, %v4509
  %v4520 = vand.u32 %v4497, 65535
  %v4521 = vshrl.u32 %v4497, 16
  %v4522 = vand.u32 %v4492, 65535
  %v4523 = vshrl.u32 %v4492, 16
  %v4524 = vmul.u32 %v4520, %v4522
  %v4525 = vmul.u32 %v4520, %v4523
  %v4526 = vmul.u32 %v4521, %v4522
  %v4527 = vmul.u32 %v4521, %v4523
  %v4528 = vshll.u32 %v4525, 16
  %v4529 = vshrl.u32 %v4525, 16
  %v4530 = vshll.u32 %v4526, 16
  %v4531 = vshrl.u32 %v4526, 16
  %vm4532 = vc.u32 %v4524, %v4528
  %v4533 = vsel %vm4532, 1, 0
  %v4534 = vadd.s32 %v4524, %v4528
  %v4535 = vadd.s32 %v4527, %v4533
  %vm4536 = vc.u32 %v4534, %v4530
  %v4537 = vsel %vm4536, 1, 0
  %v4538 = vadd.s32 %v4534, %v4530
  %v4539 = vadd.s32 %v4535, %v4537
  %v4540 = vadd.s32 %v4539, %v4529
  %v4541 = vadd.s32 %v4540, %v4531
  %v4542 = vmul.u32 %v4497, %v4488
  %v4543 = vadd.s32 %v4519, %v4538
  %vm4544 = vc.u32 %v4519, %v4538
  %v4545 = vadd.s32 %v4541, 1
  %v4546 = vsel %vm4544, %v4545, %v4541
  %v4547 = vadd.s32 %v4542, %v4546
  %v4548 = vadd.s32 %v4547, 536870912
  %v4549 = vshrl.u32 %v4548, 30
  %v4550 = vshll.u32 %v4549, 30
  %v4551 = vsub.s32 %v4547, %v4550
  %vm4552 = vcmp.lt.s32.totalorder %v4551, 0
  %v4553 = vsub.s32 0, %v4551
  %v4554 = vsel %vm4552, %v4553, %v4551
  %v4555 = vclz %v4554
  %v4556 = vsub.s32 %v4555, 2
  %vm4557 = vcmp.gt.s32.totalorder 0, %v4556
  %v4558 = vsel %vm4557, 0, %v4556
  %v4559 = vsub.s32 32, %v4558
  %v4560 = vshll.u32 %v4551, %v4558
  %v4561 = vshrl.u32 %v4543, %v4559
  %v4562 = vor.u32 %v4560, %v4561
  %v4563 = vsub.s32 4294967266, %v4558
  %v4564 = vadd.s32 %v4563, 127
  %v4565 = vshll.u32 %v4564, 23
  %v4566 = vor.u32 4788187, %v4565
  %v4567 = vand.u32 2147483647, %v4566
  %v4569 = vcvt.s32.f32 %v4562
  %v4570 = vmul.f32 %v4569, %v4567
  %v4571 = vxor.u32 %v4570, 2147483648
  %v4572 = vsel %vm4451, %v4571, %v4570
  %v4573 = vsub.s32 4, %v4549
  %v4574 = vsel %vm4451, %v4573, %v4549
  %v4575 = vsel %vm4450, %v1639, %v4572
  %v4576 = vsel %vm4450, 0, %v4574
  %v4577 = vmul.f32 %v4575, %v4575
  %v4578 = vmul.f32 %v4577, -0.001358992
  %v4579 = vadd.f32 %v4578, 0.041655596
  %v4580 = vmul.f32 %v4577, %v4579
  %v4581 = vadd.f32 %v4580, -0.4999988
  %v4582 = vmul.f32 %v4577, %v4581
  %v4583 = vadd.f32 1.0, %v4582
  %v4584 = vmul.f32 %v4575, %v4575
  %v4585 = vmul.f32 %v4584, -0.00019511016
  %v4586 = vadd.f32 %v4585, 0.008332121
  %v4587 = vmul.f32 %v4584, %v4586
  %v4588 = vadd.f32 %v4587, -0.16666654
  %v4589 = vmul.f32 %v4584, %v4588
  %v4590 = vadd.f32 %v4589, 1.0
  %v4591 = vmul.f32 %v4590, %v4575
  %vm4592 = vweird.f32 %v1639
  %v4593 = vadd.s32 %v4576, 3
  %v4594 = vand.u32 %v4593, 3
  %vm4595 = vcmp.lt.s32.totalorder %v4594, 2
  %vm4596 = vcmp.eq.s32.totalorder %v4594, 0
  %v4597 = vxor.u32 %v4591, 2147483648
  %v4598 = vsel %vm4596, %v4583, %v4597
  %vm4599 = vcmp.eq.s32.totalorder %v4594, 2
  %v4600 = vxor.u32 %v4583, 2147483648
  %v4601 = vsel %vm4599, %v4600, %v4591
  %v4602 = vsel %vm4595, %v4598, %v4601
  %v4603 = vsel %vm4592, nan, %v4602
  %v4604 = vand.u32 2147483647, %v1640
  %vm4605 = vcmp.le.f32.partialorder %v4604, 0.7853982
  %vm4606 = vcmp.lt.s32.totalorder %v1640, 0
  %v4607 = vand.u32 %v1640, 2139095040
  %v4608 = vshrl.u32 %v4607, 23
  %v4609 = vsub.s32 %v4608, 127
  %v4610 = vand.u32 2147483647, %v1640
  %v4611 = vand.u32 %v4610, 8388607
  %v4612 = vor.u32 %v4611, 8388608
  %v4613 = vsub.s32 0, %v4612
  %v4614 = vadd.s32 %v4609, 1
  %vm4615 = vcmp.gt.s32.totalorder %v4614, 0
  %v4616 = vsel %vm4615, %v4614, 0
  %v4617 = vshrl.u32 %v4616, 5
  %v4618 = vand.u32 %v4616, 31
  %v4619 = vsub.s32 32, %v4618
  %v4620 = vshrl.u32 683565275, %v4619
  %v4621 = vshll.u32 683565275, %v4618
  %v4622 = vshrl.u32 2475754826, %v4619
  %v4623 = vor.u32 %v4621, %v4622
  %v4624 = vshll.u32 2475754826, %v4618
  %v4625 = vshrl.u32 2131351028, %v4619
  %v4626 = vor.u32 %v4624, %v4625
  %v4627 = vshll.u32 2131351028, %v4618
  %v4628 = vshrl.u32 2102212464, %v4619
  %v4629 = vor.u32 %v4627, %v4628
  %v4630 = vshll.u32 2102212464, %v4618
  %v4631 = vshrl.u32 920167782, %v4619
  %v4632 = vor.u32 %v4630, %v4631
  %v4633 = vshll.u32 920167782, %v4618
  %v4634 = vshrl.u32 1326507024, %v4619
  %v4635 = vor.u32 %v4633, %v4634
  %vm4636 = vcmp.lt.s32.totalorder %v4617, 1
  %vm4637 = vcmp.lt.s32.totalorder %v4617, 2
  %vm4638 = vcmp.lt.s32.totalorder %v4617, 3
  %vm4639 = vcmp.lt.s32.totalorder %v4617, 4
  %v4640 = vsel %vm4636, %v4620, %v4623
  %v4641 = vsel %vm4639, %v4629, 2102212464
  %v4642 = vsel %vm4638, %v4626, %v4641
  %v4643 = vsel %vm4637, %v4640, %v4642
  %v4644 = vsel %vm4636, %v4623, %v4626
  %v4645 = vsel %vm4639, %v4632, 920167782
  %v4646 = vsel %vm4638, %v4629, %v4645
  %v4647 = vsel %vm4637, %v4644, %v4646
  %v4648 = vsel %vm4636, %v4626, %v4629
  %v4649 = vsel %vm4639, %v4635, 1326507024
  %v4650 = vsel %vm4638, %v4632, %v4649
  %v4651 = vsel %vm4637, %v4648, %v4650
  %v4652 = vshll.u32 %v4612, 8
  %v4653 = vand.u32 %v4652, 65535
  %v4654 = vshrl.u32 %v4652, 16
  %v4655 = vand.u32 %v4651, 65535
  %v4656 = vshrl.u32 %v4651, 16
  %v4657 = vmul.u32 %v4653, %v4655
  %v4658 = vmul.u32 %v4653, %v4656
  %v4659 = vmul.u32 %v4654, %v4655
  %v4660 = vmul.u32 %v4654, %v4656
  %v4661 = vshll.u32 %v4658, 16
  %v4662 = vshrl.u32 %v4658, 16
  %v4663 = vshll.u32 %v4659, 16
  %v4664 = vshrl.u32 %v4659, 16
  %vm4665 = vc.u32 %v4657, %v4661
  %v4666 = vsel %vm4665, 1, 0
  %v4667 = vadd.s32 %v4657, %v4661
  %v4668 = vadd.s32 %v4660, %v4666
  %vm4669 = vc.u32 %v4667, %v4663
  %v4670 = vsel %vm4669, 1, 0
  %v4671 = vadd.s32 %v4667, %v4663
  %v4672 = vadd.s32 %v4668, %v4670
  %v4673 = vadd.s32 %v4672, %v4662
  %v4674 = vadd.s32 %v4673, %v4664
  %v4675 = vand.u32 %v4652, 65535
  %v4676 = vshrl.u32 %v4652, 16
  %v4677 = vand.u32 %v4647, 65535
  %v4678 = vshrl.u32 %v4647, 16
  %v4679 = vmul.u32 %v4675, %v4677
  %v4680 = vmul.u32 %v4675, %v4678
  %v4681 = vmul.u32 %v4676, %v4677
  %v4682 = vmul.u32 %v4676, %v4678
  %v4683 = vshll.u32 %v4680, 16
  %v4684 = vshrl.u32 %v4680, 16
  %v4685 = vshll.u32 %v4681, 16
  %v4686 = vshrl.u32 %v4681, 16
  %vm4687 = vc.u32 %v4679, %v4683
  %v4688 = vsel %vm4687, 1, 0
  %v4689 = vadd.s32 %v4679, %v4683
  %v4690 = vadd.s32 %v4682, %v4688
  %vm4691 = vc.u32 %v4689, %v4685
  %v4692 = vsel %vm4691, 1, 0
  %v4693 = vadd.s32 %v4689, %v4685
  %v4694 = vadd.s32 %v4690, %v4692
  %v4695 = vadd.s32 %v4694, %v4684
  %v4696 = vadd.s32 %v4695, %v4686
  %v4697 = vmul.u32 %v4652, %v4643
  %v4698 = vadd.s32 %v4674, %v4693
  %vm4699 = vc.u32 %v4674, %v4693
  %v4700 = vadd.s32 %v4696, 1
  %v4701 = vsel %vm4699, %v4700, %v4696
  %v4702 = vadd.s32 %v4697, %v4701
  %v4703 = vadd.s32 %v4702, 536870912
  %v4704 = vshrl.u32 %v4703, 30
  %v4705 = vshll.u32 %v4704, 30
  %v4706 = vsub.s32 %v4702, %v4705
  %vm4707 = vcmp.lt.s32.totalorder %v4706, 0
  %v4708 = vsub.s32 0, %v4706
  %v4709 = vsel %vm4707, %v4708, %v4706
  %v4710 = vclz %v4709
  %v4711 = vsub.s32 %v4710, 2
  %vm4712 = vcmp.gt.s32.totalorder 0, %v4711
  %v4713 = vsel %vm4712, 0, %v4711
  %v4714 = vsub.s32 32, %v4713
  %v4715 = vshll.u32 %v4706, %v4713
  %v4716 = vshrl.u32 %v4698, %v4714
  %v4717 = vor.u32 %v4715, %v4716
  %v4718 = vsub.s32 4294967266, %v4713
  %v4719 = vadd.s32 %v4718, 127
  %v4720 = vshll.u32 %v4719, 23
  %v4721 = vor.u32 4788187, %v4720
  %v4722 = vand.u32 2147483647, %v4721
  %v4724 = vcvt.s32.f32 %v4717
  %v4725 = vmul.f32 %v4724, %v4722
  %v4726 = vxor.u32 %v4725, 2147483648
  %v4727 = vsel %vm4606, %v4726, %v4725
  %v4728 = vsub.s32 4, %v4704
  %v4729 = vsel %vm4606, %v4728, %v4704
  %v4730 = vsel %vm4605, %v1640, %v4727
  %v4731 = vsel %vm4605, 0, %v4729
  %v4732 = vmul.f32 %v4730, %v4730
  %v4733 = vmul.f32 %v4732, -0.001358992
  %v4734 = vadd.f32 %v4733, 0.041655596
  %v4735 = vmul.f32 %v4732, %v4734
  %v4736 = vadd.f32 %v4735, -0.4999988
  %v4737 = vmul.f32 %v4732, %v4736
  %v4738 = vadd.f32 1.0, %v4737
  %v4739 = vmul.f32 %v4730, %v4730
  %v4740 = vmul.f32 %v4739, -0.00019511016
  %v4741 = vadd.f32 %v4740, 0.008332121
  %v4742 = vmul.f32 %v4739, %v4741
  %v4743 = vadd.f32 %v4742, -0.16666654
  %v4744 = vmul.f32 %v4739, %v4743
  %v4745 = vadd.f32 %v4744, 1.0
  %v4746 = vmul.f32 %v4745, %v4730
  %vm4747 = vweird.f32 %v1640
  %v4748 = vadd.s32 %v4731, 3
  %v4749 = vand.u32 %v4748, 3
  %vm4750 = vcmp.lt.s32.totalorder %v4749, 2
  %vm4751 = vcmp.eq.s32.totalorder %v4749, 0
  %v4752 = vxor.u32 %v4746, 2147483648
  %v4753 = vsel %vm4751, %v4738, %v4752
  %vm4754 = vcmp.eq.s32.totalorder %v4749, 2
  %v4755 = vxor.u32 %v4738, 2147483648
  %v4756 = vsel %vm4754, %v4755, %v4746
  %v4757 = vsel %vm4750, %v4753, %v4756
  %v4758 = vsel %vm4747, nan, %v4757
  %v4759 = vand.u32 2147483647, %v1641
  %vm4760 = vcmp.le.f32.partialorder %v4759, 0.7853982
  %vm4761 = vcmp.lt.s32.totalorder %v1641, 0
  %v4762 = vand.u32 %v1641, 2139095040
  %v4763 = vshrl.u32 %v4762, 23
  %v4764 = vsub.s32 %v4763, 127
  %v4765 = vand.u32 2147483647, %v1641
  %v4766 = vand.u32 %v4765, 8388607
  %v4767 = vor.u32 %v4766, 8388608
  %v4768 = vsub.s32 0, %v4767
  %v4769 = vadd.s32 %v4764, 1
  %vm4770 = vcmp.gt.s32.totalorder %v4769, 0
  %v4771 = vsel %vm4770, %v4769, 0
  %v4772 = vshrl.u32 %v4771, 5
  %v4773 = vand.u32 %v4771, 31
  %v4774 = vsub.s32 32, %v4773
  %v4775 = vshrl.u32 683565275, %v4774
  %v4776 = vshll.u32 683565275, %v4773
  %v4777 = vshrl.u32 2475754826, %v4774
  %v4778 = vor.u32 %v4776, %v4777
  %v4779 = vshll.u32 2475754826, %v4773
  %v4780 = vshrl.u32 2131351028, %v4774
  %v4781 = vor.u32 %v4779, %v4780
  %v4782 = vshll.u32 2131351028, %v4773
  %v4783 = vshrl.u32 2102212464, %v4774
  %v4784 = vor.u32 %v4782, %v4783
  %v4785 = vshll.u32 2102212464, %v4773
  %v4786 = vshrl.u32 920167782, %v4774
  %v4787 = vor.u32 %v4785, %v4786
  %v4788 = vshll.u32 920167782, %v4773
  %v4789 = vshrl.u32 1326507024, %v4774
  %v4790 = vor.u32 %v4788, %v4789
  %vm4791 = vcmp.lt.s32.totalorder %v4772, 1
  %vm4792 = vcmp.lt.s32.totalorder %v4772, 2
  %vm4793 = vcmp.lt.s32.totalorder %v4772, 3
  %vm4794 = vcmp.lt.s32.totalorder %v4772, 4
  %v4795 = vsel %vm4791, %v4775, %v4778
  %v4796 = vsel %vm4794, %v4784, 2102212464
  %v4797 = vsel %vm4793, %v4781, %v4796
  %v4798 = vsel %vm4792, %v4795, %v4797
  %v4799 = vsel %vm4791, %v4778, %v4781
  %v4800 = vsel %vm4794, %v4787, 920167782
  %v4801 = vsel %vm4793, %v4784, %v4800
  %v4802 = vsel %vm4792, %v4799, %v4801
  %v4803 = vsel %vm4791, %v4781, %v4784
  %v4804 = vsel %vm4794, %v4790, 1326507024
  %v4805 = vsel %vm4793, %v4787, %v4804
  %v4806 = vsel %vm4792, %v4803, %v4805
  %v4807 = vshll.u32 %v4767, 8
  %v4808 = vand.u32 %v4807, 65535
  %v4809 = vshrl.u32 %v4807, 16
  %v4810 = vand.u32 %v4806, 65535
  %v4811 = vshrl.u32 %v4806, 16
  %v4812 = vmul.u32 %v4808, %v4810
  %v4813 = vmul.u32 %v4808, %v4811
  %v4814 = vmul.u32 %v4809, %v4810
  %v4815 = vmul.u32 %v4809, %v4811
  %v4816 = vshll.u32 %v4813, 16
  %v4817 = vshrl.u32 %v4813, 16
  %v4818 = vshll.u32 %v4814, 16
  %v4819 = vshrl.u32 %v4814, 16
  %vm4820 = vc.u32 %v4812, %v4816
  %v4821 = vsel %vm4820, 1, 0
  %v4822 = vadd.s32 %v4812, %v4816
  %v4823 = vadd.s32 %v4815, %v4821
  %vm4824 = vc.u32 %v4822, %v4818
  %v4825 = vsel %vm4824, 1, 0
  %v4826 = vadd.s32 %v4822, %v4818
  %v4827 = vadd.s32 %v4823, %v4825
  %v4828 = vadd.s32 %v4827, %v4817
  %v4829 = vadd.s32 %v4828, %v4819
  %v4830 = vand.u32 %v4807, 65535
  %v4831 = vshrl.u32 %v4807, 16
  %v4832 = vand.u32 %v4802, 65535
  %v4833 = vshrl.u32 %v4802, 16
  %v4834 = vmul.u32 %v4830, %v4832
  %v4835 = vmul.u32 %v4830, %v4833
  %v4836 = vmul.u32 %v4831, %v4832
  %v4837 = vmul.u32 %v4831, %v4833
  %v4838 = vshll.u32 %v4835, 16
  %v4839 = vshrl.u32 %v4835, 16
  %v4840 = vshll.u32 %v4836, 16
  %v4841 = vshrl.u32 %v4836, 16
  %vm4842 = vc.u32 %v4834, %v4838
  %v4843 = vsel %vm4842, 1, 0
  %v4844 = vadd.s32 %v4834, %v4838
  %v4845 = vadd.s32 %v4837, %v4843
  %vm4846 = vc.u32 %v4844, %v4840
  %v4847 = vsel %vm4846, 1, 0
  %v4848 = vadd.s32 %v4844, %v4840
  %v4849 = vadd.s32 %v4845, %v4847
  %v4850 = vadd.s32 %v4849, %v4839
  %v4851 = vadd.s32 %v4850, %v4841
  %v4852 = vmul.u32 %v4807, %v4798
  %v4853 = vadd.s32 %v4829, %v4848
  %vm4854 = vc.u32 %v4829, %v4848
  %v4855 = vadd.s32 %v4851, 1
  %v4856 = vsel %vm4854, %v4855, %v4851
  %v4857 = vadd.s32 %v4852, %v4856
  %v4858 = vadd.s32 %v4857, 536870912
  %v4859 = vshrl.u32 %v4858, 30
  %v4860 = vshll.u32 %v4859, 30
  %v4861 = vsub.s32 %v4857, %v4860
  %vm4862 = vcmp.lt.s32.totalorder %v4861, 0
  %v4863 = vsub.s32 0, %v4861
  %v4864 = vsel %vm4862, %v4863, %v4861
  %v4865 = vclz %v4864
  %v4866 = vsub.s32 %v4865, 2
  %vm4867 = vcmp.gt.s32.totalorder 0, %v4866
  %v4868 = vsel %vm4867, 0, %v4866
  %v4869 = vsub.s32 32, %v4868
  %v4870 = vshll.u32 %v4861, %v4868
  %v4871 = vshrl.u32 %v4853, %v4869
  %v4872 = vor.u32 %v4870, %v4871
  %v4873 = vsub.s32 4294967266, %v4868
  %v4874 = vadd.s32 %v4873, 127
  %v4875 = vshll.u32 %v4874, 23
  %v4876 = vor.u32 4788187, %v4875
  %v4877 = vand.u32 2147483647, %v4876
  %v4879 = vcvt.s32.f32 %v4872
  %v4880 = vmul.f32 %v4879, %v4877
  %v4881 = vxor.u32 %v4880, 2147483648
  %v4882 = vsel %vm4761, %v4881, %v4880
  %v4883 = vsub.s32 4, %v4859
  %v4884 = vsel %vm4761, %v4883, %v4859
  %v4885 = vsel %vm4760, %v1641, %v4882
  %v4886 = vsel %vm4760, 0, %v4884
  %v4887 = vmul.f32 %v4885, %v4885
  %v4888 = vmul.f32 %v4887, -0.001358992
  %v4889 = vadd.f32 %v4888, 0.041655596
  %v4890 = vmul.f32 %v4887, %v4889
  %v4891 = vadd.f32 %v4890, -0.4999988
  %v4892 = vmul.f32 %v4887, %v4891
  %v4893 = vadd.f32 1.0, %v4892
  %v4894 = vmul.f32 %v4885, %v4885
  %v4895 = vmul.f32 %v4894, -0.00019511016
  %v4896 = vadd.f32 %v4895, 0.008332121
  %v4897 = vmul.f32 %v4894, %v4896
  %v4898 = vadd.f32 %v4897, -0.16666654
  %v4899 = vmul.f32 %v4894, %v4898
  %v4900 = vadd.f32 %v4899, 1.0
  %v4901 = vmul.f32 %v4900, %v4885
  %vm4902 = vweird.f32 %v1641
  %v4903 = vadd.s32 %v4886, 3
  %v4904 = vand.u32 %v4903, 3
  %vm4905 = vcmp.lt.s32.totalorder %v4904, 2
  %vm4906 = vcmp.eq.s32.totalorder %v4904, 0
  %v4907 = vxor.u32 %v4901, 2147483648
  %v4908 = vsel %vm4906, %v4893, %v4907
  %vm4909 = vcmp.eq.s32.totalorder %v4904, 2
  %v4910 = vxor.u32 %v4893, 2147483648
  %v4911 = vsel %vm4909, %v4910, %v4901
  %v4912 = vsel %vm4905, %v4908, %v4911
  %v4913 = vsel %vm4902, nan, %v4912
  %v4914 = vand.u32 2147483647, %v1642
  %vm4915 = vcmp.le.f32.partialorder %v4914, 0.7853982
  %vm4916 = vcmp.lt.s32.totalorder %v1642, 0
  %v4917 = vand.u32 %v1642, 2139095040
  %v4918 = vshrl.u32 %v4917, 23
  %v4919 = vsub.s32 %v4918, 127
  %v4920 = vand.u32 2147483647, %v1642
  %v4921 = vand.u32 %v4920, 8388607
  %v4922 = vor.u32 %v4921, 8388608
  %v4923 = vsub.s32 0, %v4922
  %v4924 = vadd.s32 %v4919, 1
  %vm4925 = vcmp.gt.s32.totalorder %v4924, 0
  %v4926 = vsel %vm4925, %v4924, 0
  %v4927 = vshrl.u32 %v4926, 5
  %v4928 = vand.u32 %v4926, 31
  %v4929 = vsub.s32 32, %v4928
  %v4930 = vshrl.u32 683565275, %v4929
  %v4931 = vshll.u32 683565275, %v4928
  %v4932 = vshrl.u32 2475754826, %v4929
  %v4933 = vor.u32 %v4931, %v4932
  %v4934 = vshll.u32 2475754826, %v4928
  %v4935 = vshrl.u32 2131351028, %v4929
  %v4936 = vor.u32 %v4934, %v4935
  %v4937 = vshll.u32 2131351028, %v4928
  %v4938 = vshrl.u32 2102212464, %v4929
  %v4939 = vor.u32 %v4937, %v4938
  %v4940 = vshll.u32 2102212464, %v4928
  %v4941 = vshrl.u32 920167782, %v4929
  %v4942 = vor.u32 %v4940, %v4941
  %v4943 = vshll.u32 920167782, %v4928
  %v4944 = vshrl.u32 1326507024, %v4929
  %v4945 = vor.u32 %v4943, %v4944
  %vm4946 = vcmp.lt.s32.totalorder %v4927, 1
  %vm4947 = vcmp.lt.s32.totalorder %v4927, 2
  %vm4948 = vcmp.lt.s32.totalorder %v4927, 3
  %vm4949 = vcmp.lt.s32.totalorder %v4927, 4
  %v4950 = vsel %vm4946, %v4930, %v4933
  %v4951 = vsel %vm4949, %v4939, 2102212464
  %v4952 = vsel %vm4948, %v4936, %v4951
  %v4953 = vsel %vm4947, %v4950, %v4952
  %v4954 = vsel %vm4946, %v4933, %v4936
  %v4955 = vsel %vm4949, %v4942, 920167782
  %v4956 = vsel %vm4948, %v4939, %v4955
  %v4957 = vsel %vm4947, %v4954, %v4956
  %v4958 = vsel %vm4946, %v4936, %v4939
  %v4959 = vsel %vm4949, %v4945, 1326507024
  %v4960 = vsel %vm4948, %v4942, %v4959
  %v4961 = vsel %vm4947, %v4958, %v4960
  %v4962 = vshll.u32 %v4922, 8
  %v4963 = vand.u32 %v4962, 65535
  %v4964 = vshrl.u32 %v4962, 16
  %v4965 = vand.u32 %v4961, 65535
  %v4966 = vshrl.u32 %v4961, 16
  %v4967 = vmul.u32 %v4963, %v4965
  %v4968 = vmul.u32 %v4963, %v4966
  %v4969 = vmul.u32 %v4964, %v4965
  %v4970 = vmul.u32 %v4964, %v4966
  %v4971 = vshll.u32 %v4968, 16
  %v4972 = vshrl.u32 %v4968, 16
  %v4973 = vshll.u32 %v4969, 16
  %v4974 = vshrl.u32 %v4969, 16
  %vm4975 = vc.u32 %v4967, %v4971
  %v4976 = vsel %vm4975, 1, 0
  %v4977 = vadd.s32 %v4967, %v4971
  %v4978 = vadd.s32 %v4970, %v4976
  %vm4979 = vc.u32 %v4977, %v4973
  %v4980 = vsel %vm4979, 1, 0
  %v4981 = vadd.s32 %v4977, %v4973
  %v4982 = vadd.s32 %v4978, %v4980
  %v4983 = vadd.s32 %v4982, %v4972
  %v4984 = vadd.s32 %v4983, %v4974
  %v4985 = vand.u32 %v4962, 65535
  %v4986 = vshrl.u32 %v4962, 16
  %v4987 = vand.u32 %v4957, 65535
  %v4988 = vshrl.u32 %v4957, 16
  %v4989 = vmul.u32 %v4985, %v4987
  %v4990 = vmul.u32 %v4985, %v4988
  %v4991 = vmul.u32 %v4986, %v4987
  %v4992 = vmul.u32 %v4986, %v4988
  %v4993 = vshll.u32 %v4990, 16
  %v4994 = vshrl.u32 %v4990, 16
  %v4995 = vshll.u32 %v4991, 16
  %v4996 = vshrl.u32 %v4991, 16
  %vm4997 = vc.u32 %v4989, %v4993
  %v4998 = vsel %vm4997, 1, 0
  %v4999 = vadd.s32 %v4989, %v4993
  %v5000 = vadd.s32 %v4992, %v4998
  %vm5001 = vc.u32 %v4999, %v4995
  %v5002 = vsel %vm5001, 1, 0
  %v5003 = vadd.s32 %v4999, %v4995
  %v5004 = vadd.s32 %v5000, %v5002
  %v5005 = vadd.s32 %v5004, %v4994
  %v5006 = vadd.s32 %v5005, %v4996
  %v5007 = vmul.u32 %v4962, %v4953
  %v5008 = vadd.s32 %v4984, %v5003
  %vm5009 = vc.u32 %v4984, %v5003
  %v5010 = vadd.s32 %v5006, 1
  %v5011 = vsel %vm5009, %v5010, %v5006
  %v5012 = vadd.s32 %v5007, %v5011
  %v5013 = vadd.s32 %v5012, 536870912
  %v5014 = vshrl.u32 %v5013, 30
  %v5015 = vshll.u32 %v5014, 30
  %v5016 = vsub.s32 %v5012, %v5015
  %vm5017 = vcmp.lt.s32.totalorder %v5016, 0
  %v5018 = vsub.s32 0, %v5016
  %v5019 = vsel %vm5017, %v5018, %v5016
  %v5020 = vclz %v5019
  %v5021 = vsub.s32 %v5020, 2
  %vm5022 = vcmp.gt.s32.totalorder 0, %v5021
  %v5023 = vsel %vm5022, 0, %v5021
  %v5024 = vsub.s32 32, %v5023
  %v5025 = vshll.u32 %v5016, %v5023
  %v5026 = vshrl.u32 %v5008, %v5024
  %v5027 = vor.u32 %v5025, %v5026
  %v5028 = vsub.s32 4294967266, %v5023
  %v5029 = vadd.s32 %v5028, 127
  %v5030 = vshll.u32 %v5029, 23
  %v5031 = vor.u32 4788187, %v5030
  %v5032 = vand.u32 2147483647, %v5031
  %v5034 = vcvt.s32.f32 %v5027
  %v5035 = vmul.f32 %v5034, %v5032
  %v5036 = vxor.u32 %v5035, 2147483648
  %v5037 = vsel %vm4916, %v5036, %v5035
  %v5038 = vsub.s32 4, %v5014
  %v5039 = vsel %vm4916, %v5038, %v5014
  %v5040 = vsel %vm4915, %v1642, %v5037
  %v5041 = vsel %vm4915, 0, %v5039
  %v5042 = vmul.f32 %v5040, %v5040
  %v5043 = vmul.f32 %v5042, -0.001358992
  %v5044 = vadd.f32 %v5043, 0.041655596
  %v5045 = vmul.f32 %v5042, %v5044
  %v5046 = vadd.f32 %v5045, -0.4999988
  %v5047 = vmul.f32 %v5042, %v5046
  %v5048 = vadd.f32 1.0, %v5047
  %v5049 = vmul.f32 %v5040, %v5040
  %v5050 = vmul.f32 %v5049, -0.00019511016
  %v5051 = vadd.f32 %v5050, 0.008332121
  %v5052 = vmul.f32 %v5049, %v5051
  %v5053 = vadd.f32 %v5052, -0.16666654
  %v5054 = vmul.f32 %v5049, %v5053
  %v5055 = vadd.f32 %v5054, 1.0
  %v5056 = vmul.f32 %v5055, %v5040
  %vm5057 = vweird.f32 %v1642
  %v5058 = vadd.s32 %v5041, 3
  %v5059 = vand.u32 %v5058, 3
  %vm5060 = vcmp.lt.s32.totalorder %v5059, 2
  %vm5061 = vcmp.eq.s32.totalorder %v5059, 0
  %v5062 = vxor.u32 %v5056, 2147483648
  %v5063 = vsel %vm5061, %v5048, %v5062
  %vm5064 = vcmp.eq.s32.totalorder %v5059, 2
  %v5065 = vxor.u32 %v5048, 2147483648
  %v5066 = vsel %vm5064, %v5065, %v5056
  %v5067 = vsel %vm5060, %v5063, %v5066
  %v5068 = vsel %vm5057, nan, %v5067
  %v5069 = vand.u32 2147483647, %v1643
  %vm5070 = vcmp.le.f32.partialorder %v5069, 0.7853982
  %vm5071 = vcmp.lt.s32.totalorder %v1643, 0
  %v5072 = vand.u32 %v1643, 2139095040
  %v5073 = vshrl.u32 %v5072, 23
  %v5074 = vsub.s32 %v5073, 127
  %v5075 = vand.u32 2147483647, %v1643
  %v5076 = vand.u32 %v5075, 8388607
  %v5077 = vor.u32 %v5076, 8388608
  %v5078 = vsub.s32 0, %v5077
  %v5079 = vadd.s32 %v5074, 1
  %vm5080 = vcmp.gt.s32.totalorder %v5079, 0
  %v5081 = vsel %vm5080, %v5079, 0
  %v5082 = vshrl.u32 %v5081, 5
  %v5083 = vand.u32 %v5081, 31
  %v5084 = vsub.s32 32, %v5083
  %v5085 = vshrl.u32 683565275, %v5084
  %v5086 = vshll.u32 683565275, %v5083
  %v5087 = vshrl.u32 2475754826, %v5084
  %v5088 = vor.u32 %v5086, %v5087
  %v5089 = vshll.u32 2475754826, %v5083
  %v5090 = vshrl.u32 2131351028, %v5084
  %v5091 = vor.u32 %v5089, %v5090
  %v5092 = vshll.u32 2131351028, %v5083
  %v5093 = vshrl.u32 2102212464, %v5084
  %v5094 = vor.u32 %v5092, %v5093
  %v5095 = vshll.u32 2102212464, %v5083
  %v5096 = vshrl.u32 920167782, %v5084
  %v5097 = vor.u32 %v5095, %v5096
  %v5098 = vshll.u32 920167782, %v5083
  %v5099 = vshrl.u32 1326507024, %v5084
  %v5100 = vor.u32 %v5098, %v5099
  %vm5101 = vcmp.lt.s32.totalorder %v5082, 1
  %vm5102 = vcmp.lt.s32.totalorder %v5082, 2
  %vm5103 = vcmp.lt.s32.totalorder %v5082, 3
  %vm5104 = vcmp.lt.s32.totalorder %v5082, 4
  %v5105 = vsel %vm5101, %v5085, %v5088
  %v5106 = vsel %vm5104, %v5094, 2102212464
  %v5107 = vsel %vm5103, %v5091, %v5106
  %v5108 = vsel %vm5102, %v5105, %v5107
  %v5109 = vsel %vm5101, %v5088, %v5091
  %v5110 = vsel %vm5104, %v5097, 920167782
  %v5111 = vsel %vm5103, %v5094, %v5110
  %v5112 = vsel %vm5102, %v5109, %v5111
  %v5113 = vsel %vm5101, %v5091, %v5094
  %v5114 = vsel %vm5104, %v5100, 1326507024
  %v5115 = vsel %vm5103, %v5097, %v5114
  %v5116 = vsel %vm5102, %v5113, %v5115
  %v5117 = vshll.u32 %v5077, 8
  %v5118 = vand.u32 %v5117, 65535
  %v5119 = vshrl.u32 %v5117, 16
  %v5120 = vand.u32 %v5116, 65535
  %v5121 = vshrl.u32 %v5116, 16
  %v5122 = vmul.u32 %v5118, %v5120
  %v5123 = vmul.u32 %v5118, %v5121
  %v5124 = vmul.u32 %v5119, %v5120
  %v5125 = vmul.u32 %v5119, %v5121
  %v5126 = vshll.u32 %v5123, 16
  %v5127 = vshrl.u32 %v5123, 16
  %v5128 = vshll.u32 %v5124, 16
  %v5129 = vshrl.u32 %v5124, 16
  %vm5130 = vc.u32 %v5122, %v5126
  %v5131 = vsel %vm5130, 1, 0
  %v5132 = vadd.s32 %v5122, %v5126
  %v5133 = vadd.s32 %v5125, %v5131
  %vm5134 = vc.u32 %v5132, %v5128
  %v5135 = vsel %vm5134, 1, 0
  %v5136 = vadd.s32 %v5132, %v5128
  %v5137 = vadd.s32 %v5133, %v5135
  %v5138 = vadd.s32 %v5137, %v5127
  %v5139 = vadd.s32 %v5138, %v5129
  %v5140 = vand.u32 %v5117, 65535
  %v5141 = vshrl.u32 %v5117, 16
  %v5142 = vand.u32 %v5112, 65535
  %v5143 = vshrl.u32 %v5112, 16
  %v5144 = vmul.u32 %v5140, %v5142
  %v5145 = vmul.u32 %v5140, %v5143
  %v5146 = vmul.u32 %v5141, %v5142
  %v5147 = vmul.u32 %v5141, %v5143
  %v5148 = vshll.u32 %v5145, 16
  %v5149 = vshrl.u32 %v5145, 16
  %v5150 = vshll.u32 %v5146, 16
  %v5151 = vshrl.u32 %v5146, 16
  %vm5152 = vc.u32 %v5144, %v5148
  %v5153 = vsel %vm5152, 1, 0
  %v5154 = vadd.s32 %v5144, %v5148
  %v5155 = vadd.s32 %v5147, %v5153
  %vm5156 = vc.u32 %v5154, %v5150
  %v5157 = vsel %vm5156, 1, 0
  %v5158 = vadd.s32 %v5154, %v5150
  %v5159 = vadd.s32 %v5155, %v5157
  %v5160 = vadd.s32 %v5159, %v5149
  %v5161 = vadd.s32 %v5160, %v5151
  %v5162 = vmul.u32 %v5117, %v5108
  %v5163 = vadd.s32 %v5139, %v5158
  %vm5164 = vc.u32 %v5139, %v5158
  %v5165 = vadd.s32 %v5161, 1
  %v5166 = vsel %vm5164, %v5165, %v5161
  %v5167 = vadd.s32 %v5162, %v5166
  %v5168 = vadd.s32 %v5167, 536870912
  %v5169 = vshrl.u32 %v5168, 30
  %v5170 = vshll.u32 %v5169, 30
  %v5171 = vsub.s32 %v5167, %v5170
  %vm5172 = vcmp.lt.s32.totalorder %v5171, 0
  %v5173 = vsub.s32 0, %v5171
  %v5174 = vsel %vm5172, %v5173, %v5171
  %v5175 = vclz %v5174
  %v5176 = vsub.s32 %v5175, 2
  %vm5177 = vcmp.gt.s32.totalorder 0, %v5176
  %v5178 = vsel %vm5177, 0, %v5176
  %v5179 = vsub.s32 32, %v5178
  %v5180 = vshll.u32 %v5171, %v5178
  %v5181 = vshrl.u32 %v5163, %v5179
  %v5182 = vor.u32 %v5180, %v5181
  %v5183 = vsub.s32 4294967266, %v5178
  %v5184 = vadd.s32 %v5183, 127
  %v5185 = vshll.u32 %v5184, 23
  %v5186 = vor.u32 4788187, %v5185
  %v5187 = vand.u32 2147483647, %v5186
  %v5189 = vcvt.s32.f32 %v5182
  %v5190 = vmul.f32 %v5189, %v5187
  %v5191 = vxor.u32 %v5190, 2147483648
  %v5192 = vsel %vm5071, %v5191, %v5190
  %v5193 = vsub.s32 4, %v5169
  %v5194 = vsel %vm5071, %v5193, %v5169
  %v5195 = vsel %vm5070, %v1643, %v5192
  %v5196 = vsel %vm5070, 0, %v5194
  %v5197 = vmul.f32 %v5195, %v5195
  %v5198 = vmul.f32 %v5197, -0.001358992
  %v5199 = vadd.f32 %v5198, 0.041655596
  %v5200 = vmul.f32 %v5197, %v5199
  %v5201 = vadd.f32 %v5200, -0.4999988
  %v5202 = vmul.f32 %v5197, %v5201
  %v5203 = vadd.f32 1.0, %v5202
  %v5204 = vmul.f32 %v5195, %v5195
  %v5205 = vmul.f32 %v5204, -0.00019511016
  %v5206 = vadd.f32 %v5205, 0.008332121
  %v5207 = vmul.f32 %v5204, %v5206
  %v5208 = vadd.f32 %v5207, -0.16666654
  %v5209 = vmul.f32 %v5204, %v5208
  %v5210 = vadd.f32 %v5209, 1.0
  %v5211 = vmul.f32 %v5210, %v5195
  %vm5212 = vweird.f32 %v1643
  %v5213 = vadd.s32 %v5196, 3
  %v5214 = vand.u32 %v5213, 3
  %vm5215 = vcmp.lt.s32.totalorder %v5214, 2
  %vm5216 = vcmp.eq.s32.totalorder %v5214, 0
  %v5217 = vxor.u32 %v5211, 2147483648
  %v5218 = vsel %vm5216, %v5203, %v5217
  %vm5219 = vcmp.eq.s32.totalorder %v5214, 2
  %v5220 = vxor.u32 %v5203, 2147483648
  %v5221 = vsel %vm5219, %v5220, %v5211
  %v5222 = vsel %vm5215, %v5218, %v5221
  %v5223 = vsel %vm5212, nan, %v5222
  %v5224 = vand.u32 2147483647, %v1644
  %vm5225 = vcmp.le.f32.partialorder %v5224, 0.7853982
  %vm5226 = vcmp.lt.s32.totalorder %v1644, 0
  %v5227 = vand.u32 %v1644, 2139095040
  %v5228 = vshrl.u32 %v5227, 23
  %v5229 = vsub.s32 %v5228, 127
  %v5230 = vand.u32 2147483647, %v1644
  %v5231 = vand.u32 %v5230, 8388607
  %v5232 = vor.u32 %v5231, 8388608
  %v5233 = vsub.s32 0, %v5232
  %v5234 = vadd.s32 %v5229, 1
  %vm5235 = vcmp.gt.s32.totalorder %v5234, 0
  %v5236 = vsel %vm5235, %v5234, 0
  %v5237 = vshrl.u32 %v5236, 5
  %v5238 = vand.u32 %v5236, 31
  %v5239 = vsub.s32 32, %v5238
  %v5240 = vshrl.u32 683565275, %v5239
  %v5241 = vshll.u32 683565275, %v5238
  %v5242 = vshrl.u32 2475754826, %v5239
  %v5243 = vor.u32 %v5241, %v5242
  %v5244 = vshll.u32 2475754826, %v5238
  %v5245 = vshrl.u32 2131351028, %v5239
  %v5246 = vor.u32 %v5244, %v5245
  %v5247 = vshll.u32 2131351028, %v5238
  %v5248 = vshrl.u32 2102212464, %v5239
  %v5249 = vor.u32 %v5247, %v5248
  %v5250 = vshll.u32 2102212464, %v5238
  %v5251 = vshrl.u32 920167782, %v5239
  %v5252 = vor.u32 %v5250, %v5251
  %v5253 = vshll.u32 920167782, %v5238
  %v5254 = vshrl.u32 1326507024, %v5239
  %v5255 = vor.u32 %v5253, %v5254
  %vm5256 = vcmp.lt.s32.totalorder %v5237, 1
  %vm5257 = vcmp.lt.s32.totalorder %v5237, 2
  %vm5258 = vcmp.lt.s32.totalorder %v5237, 3
  %vm5259 = vcmp.lt.s32.totalorder %v5237, 4
  %v5260 = vsel %vm5256, %v5240, %v5243
  %v5261 = vsel %vm5259, %v5249, 2102212464
  %v5262 = vsel %vm5258, %v5246, %v5261
  %v5263 = vsel %vm5257, %v5260, %v5262
  %v5264 = vsel %vm5256, %v5243, %v5246
  %v5265 = vsel %vm5259, %v5252, 920167782
  %v5266 = vsel %vm5258, %v5249, %v5265
  %v5267 = vsel %vm5257, %v5264, %v5266
  %v5268 = vsel %vm5256, %v5246, %v5249
  %v5269 = vsel %vm5259, %v5255, 1326507024
  %v5270 = vsel %vm5258, %v5252, %v5269
  %v5271 = vsel %vm5257, %v5268, %v5270
  %v5272 = vshll.u32 %v5232, 8
  %v5273 = vand.u32 %v5272, 65535
  %v5274 = vshrl.u32 %v5272, 16
  %v5275 = vand.u32 %v5271, 65535
  %v5276 = vshrl.u32 %v5271, 16
  %v5277 = vmul.u32 %v5273, %v5275
  %v5278 = vmul.u32 %v5273, %v5276
  %v5279 = vmul.u32 %v5274, %v5275
  %v5280 = vmul.u32 %v5274, %v5276
  %v5281 = vshll.u32 %v5278, 16
  %v5282 = vshrl.u32 %v5278, 16
  %v5283 = vshll.u32 %v5279, 16
  %v5284 = vshrl.u32 %v5279, 16
  %vm5285 = vc.u32 %v5277, %v5281
  %v5286 = vsel %vm5285, 1, 0
  %v5287 = vadd.s32 %v5277, %v5281
  %v5288 = vadd.s32 %v5280, %v5286
  %vm5289 = vc.u32 %v5287, %v5283
  %v5290 = vsel %vm5289, 1, 0
  %v5291 = vadd.s32 %v5287, %v5283
  %v5292 = vadd.s32 %v5288, %v5290
  %v5293 = vadd.s32 %v5292, %v5282
  %v5294 = vadd.s32 %v5293, %v5284
  %v5295 = vand.u32 %v5272, 65535
  %v5296 = vshrl.u32 %v5272, 16
  %v5297 = vand.u32 %v5267, 65535
  %v5298 = vshrl.u32 %v5267, 16
  %v5299 = vmul.u32 %v5295, %v5297
  %v5300 = vmul.u32 %v5295, %v5298
  %v5301 = vmul.u32 %v5296, %v5297
  %v5302 = vmul.u32 %v5296, %v5298
  %v5303 = vshll.u32 %v5300, 16
  %v5304 = vshrl.u32 %v5300, 16
  %v5305 = vshll.u32 %v5301, 16
  %v5306 = vshrl.u32 %v5301, 16
  %vm5307 = vc.u32 %v5299, %v5303
  %v5308 = vsel %vm5307, 1, 0
  %v5309 = vadd.s32 %v5299, %v5303
  %v5310 = vadd.s32 %v5302, %v5308
  %vm5311 = vc.u32 %v5309, %v5305
  %v5312 = vsel %vm5311, 1, 0
  %v5313 = vadd.s32 %v5309, %v5305
  %v5314 = vadd.s32 %v5310, %v5312
  %v5315 = vadd.s32 %v5314, %v5304
  %v5316 = vadd.s32 %v5315, %v5306
  %v5317 = vmul.u32 %v5272, %v5263
  %v5318 = vadd.s32 %v5294, %v5313
  %vm5319 = vc.u32 %v5294, %v5313
  %v5320 = vadd.s32 %v5316, 1
  %v5321 = vsel %vm5319, %v5320, %v5316
  %v5322 = vadd.s32 %v5317, %v5321
  %v5323 = vadd.s32 %v5322, 536870912
  %v5324 = vshrl.u32 %v5323, 30
  %v5325 = vshll.u32 %v5324, 30
  %v5326 = vsub.s32 %v5322, %v5325
  %vm5327 = vcmp.lt.s32.totalorder %v5326, 0
  %v5328 = vsub.s32 0, %v5326
  %v5329 = vsel %vm5327, %v5328, %v5326
  %v5330 = vclz %v5329
  %v5331 = vsub.s32 %v5330, 2
  %vm5332 = vcmp.gt.s32.totalorder 0, %v5331
  %v5333 = vsel %vm5332, 0, %v5331
  %v5334 = vsub.s32 32, %v5333
  %v5335 = vshll.u32 %v5326, %v5333
  %v5336 = vshrl.u32 %v5318, %v5334
  %v5337 = vor.u32 %v5335, %v5336
  %v5338 = vsub.s32 4294967266, %v5333
  %v5339 = vadd.s32 %v5338, 127
  %v5340 = vshll.u32 %v5339, 23
  %v5341 = vor.u32 4788187, %v5340
  %v5342 = vand.u32 2147483647, %v5341
  %v5344 = vcvt.s32.f32 %v5337
  %v5345 = vmul.f32 %v5344, %v5342
  %v5346 = vxor.u32 %v5345, 2147483648
  %v5347 = vsel %vm5226, %v5346, %v5345
  %v5348 = vsub.s32 4, %v5324
  %v5349 = vsel %vm5226, %v5348, %v5324
  %v5350 = vsel %vm5225, %v1644, %v5347
  %v5351 = vsel %vm5225, 0, %v5349
  %v5352 = vmul.f32 %v5350, %v5350
  %v5353 = vmul.f32 %v5352, -0.001358992
  %v5354 = vadd.f32 %v5353, 0.041655596
  %v5355 = vmul.f32 %v5352, %v5354
  %v5356 = vadd.f32 %v5355, -0.4999988
  %v5357 = vmul.f32 %v5352, %v5356
  %v5358 = vadd.f32 1.0, %v5357
  %v5359 = vmul.f32 %v5350, %v5350
  %v5360 = vmul.f32 %v5359, -0.00019511016
  %v5361 = vadd.f32 %v5360, 0.008332121
  %v5362 = vmul.f32 %v5359, %v5361
  %v5363 = vadd.f32 %v5362, -0.16666654
  %v5364 = vmul.f32 %v5359, %v5363
  %v5365 = vadd.f32 %v5364, 1.0
  %v5366 = vmul.f32 %v5365, %v5350
  %vm5367 = vweird.f32 %v1644
  %v5368 = vadd.s32 %v5351, 3
  %v5369 = vand.u32 %v5368, 3
  %vm5370 = vcmp.lt.s32.totalorder %v5369, 2
  %vm5371 = vcmp.eq.s32.totalorder %v5369, 0
  %v5372 = vxor.u32 %v5366, 2147483648
  %v5373 = vsel %vm5371, %v5358, %v5372
  %vm5374 = vcmp.eq.s32.totalorder %v5369, 2
  %v5375 = vxor.u32 %v5358, 2147483648
  %v5376 = vsel %vm5374, %v5375, %v5366
  %v5377 = vsel %vm5370, %v5373, %v5376
  %v5378 = vsel %vm5367, nan, %v5377
  %v5379 = vand.u32 2147483647, %v1645
  %vm5380 = vcmp.le.f32.partialorder %v5379, 0.7853982
  %vm5381 = vcmp.lt.s32.totalorder %v1645, 0
  %v5382 = vand.u32 %v1645, 2139095040
  %v5383 = vshrl.u32 %v5382, 23
  %v5384 = vsub.s32 %v5383, 127
  %v5385 = vand.u32 2147483647, %v1645
  %v5386 = vand.u32 %v5385, 8388607
  %v5387 = vor.u32 %v5386, 8388608
  %v5388 = vsub.s32 0, %v5387
  %v5389 = vadd.s32 %v5384, 1
  %vm5390 = vcmp.gt.s32.totalorder %v5389, 0
  %v5391 = vsel %vm5390, %v5389, 0
  %v5392 = vshrl.u32 %v5391, 5
  %v5393 = vand.u32 %v5391, 31
  %v5394 = vsub.s32 32, %v5393
  %v5395 = vshrl.u32 683565275, %v5394
  %v5396 = vshll.u32 683565275, %v5393
  %v5397 = vshrl.u32 2475754826, %v5394
  %v5398 = vor.u32 %v5396, %v5397
  %v5399 = vshll.u32 2475754826, %v5393
  %v5400 = vshrl.u32 2131351028, %v5394
  %v5401 = vor.u32 %v5399, %v5400
  %v5402 = vshll.u32 2131351028, %v5393
  %v5403 = vshrl.u32 2102212464, %v5394
  %v5404 = vor.u32 %v5402, %v5403
  %v5405 = vshll.u32 2102212464, %v5393
  %v5406 = vshrl.u32 920167782, %v5394
  %v5407 = vor.u32 %v5405, %v5406
  %v5408 = vshll.u32 920167782, %v5393
  %v5409 = vshrl.u32 1326507024, %v5394
  %v5410 = vor.u32 %v5408, %v5409
  %vm5411 = vcmp.lt.s32.totalorder %v5392, 1
  %vm5412 = vcmp.lt.s32.totalorder %v5392, 2
  %vm5413 = vcmp.lt.s32.totalorder %v5392, 3
  %vm5414 = vcmp.lt.s32.totalorder %v5392, 4
  %v5415 = vsel %vm5411, %v5395, %v5398
  %v5416 = vsel %vm5414, %v5404, 2102212464
  %v5417 = vsel %vm5413, %v5401, %v5416
  %v5418 = vsel %vm5412, %v5415, %v5417
  %v5419 = vsel %vm5411, %v5398, %v5401
  %v5420 = vsel %vm5414, %v5407, 920167782
  %v5421 = vsel %vm5413, %v5404, %v5420
  %v5422 = vsel %vm5412, %v5419, %v5421
  %v5423 = vsel %vm5411, %v5401, %v5404
  %v5424 = vsel %vm5414, %v5410, 1326507024
  %v5425 = vsel %vm5413, %v5407, %v5424
  %v5426 = vsel %vm5412, %v5423, %v5425
  %v5427 = vshll.u32 %v5387, 8
  %v5428 = vand.u32 %v5427, 65535
  %v5429 = vshrl.u32 %v5427, 16
  %v5430 = vand.u32 %v5426, 65535
  %v5431 = vshrl.u32 %v5426, 16
  %v5432 = vmul.u32 %v5428, %v5430
  %v5433 = vmul.u32 %v5428, %v5431
  %v5434 = vmul.u32 %v5429, %v5430
  %v5435 = vmul.u32 %v5429, %v5431
  %v5436 = vshll.u32 %v5433, 16
  %v5437 = vshrl.u32 %v5433, 16
  %v5438 = vshll.u32 %v5434, 16
  %v5439 = vshrl.u32 %v5434, 16
  %vm5440 = vc.u32 %v5432, %v5436
  %v5441 = vsel %vm5440, 1, 0
  %v5442 = vadd.s32 %v5432, %v5436
  %v5443 = vadd.s32 %v5435, %v5441
  %vm5444 = vc.u32 %v5442, %v5438
  %v5445 = vsel %vm5444, 1, 0
  %v5446 = vadd.s32 %v5442, %v5438
  %v5447 = vadd.s32 %v5443, %v5445
  %v5448 = vadd.s32 %v5447, %v5437
  %v5449 = vadd.s32 %v5448, %v5439
  %v5450 = vand.u32 %v5427, 65535
  %v5451 = vshrl.u32 %v5427, 16
  %v5452 = vand.u32 %v5422, 65535
  %v5453 = vshrl.u32 %v5422, 16
  %v5454 = vmul.u32 %v5450, %v5452
  %v5455 = vmul.u32 %v5450, %v5453
  %v5456 = vmul.u32 %v5451, %v5452
  %v5457 = vmul.u32 %v5451, %v5453
  %v5458 = vshll.u32 %v5455, 16
  %v5459 = vshrl.u32 %v5455, 16
  %v5460 = vshll.u32 %v5456, 16
  %v5461 = vshrl.u32 %v5456, 16
  %vm5462 = vc.u32 %v5454, %v5458
  %v5463 = vsel %vm5462, 1, 0
  %v5464 = vadd.s32 %v5454, %v5458
  %v5465 = vadd.s32 %v5457, %v5463
  %vm5466 = vc.u32 %v5464, %v5460
  %v5467 = vsel %vm5466, 1, 0
  %v5468 = vadd.s32 %v5464, %v5460
  %v5469 = vadd.s32 %v5465, %v5467
  %v5470 = vadd.s32 %v5469, %v5459
  %v5471 = vadd.s32 %v5470, %v5461
  %v5472 = vmul.u32 %v5427, %v5418
  %v5473 = vadd.s32 %v5449, %v5468
  %vm5474 = vc.u32 %v5449, %v5468
  %v5475 = vadd.s32 %v5471, 1
  %v5476 = vsel %vm5474, %v5475, %v5471
  %v5477 = vadd.s32 %v5472, %v5476
  %v5478 = vadd.s32 %v5477, 536870912
  %v5479 = vshrl.u32 %v5478, 30
  %v5480 = vshll.u32 %v5479, 30
  %v5481 = vsub.s32 %v5477, %v5480
  %vm5482 = vcmp.lt.s32.totalorder %v5481, 0
  %v5483 = vsub.s32 0, %v5481
  %v5484 = vsel %vm5482, %v5483, %v5481
  %v5485 = vclz %v5484
  %v5486 = vsub.s32 %v5485, 2
  %vm5487 = vcmp.gt.s32.totalorder 0, %v5486
  %v5488 = vsel %vm5487, 0, %v5486
  %v5489 = vsub.s32 32, %v5488
  %v5490 = vshll.u32 %v5481, %v5488
  %v5491 = vshrl.u32 %v5473, %v5489
  %v5492 = vor.u32 %v5490, %v5491
  %v5493 = vsub.s32 4294967266, %v5488
  %v5494 = vadd.s32 %v5493, 127
  %v5495 = vshll.u32 %v5494, 23
  %v5496 = vor.u32 4788187, %v5495
  %v5497 = vand.u32 2147483647, %v5496
  %v5499 = vcvt.s32.f32 %v5492
  %v5500 = vmul.f32 %v5499, %v5497
  %v5501 = vxor.u32 %v5500, 2147483648
  %v5502 = vsel %vm5381, %v5501, %v5500
  %v5503 = vsub.s32 4, %v5479
  %v5504 = vsel %vm5381, %v5503, %v5479
  %v5505 = vsel %vm5380, %v1645, %v5502
  %v5506 = vsel %vm5380, 0, %v5504
  %v5507 = vmul.f32 %v5505, %v5505
  %v5508 = vmul.f32 %v5507, -0.001358992
  %v5509 = vadd.f32 %v5508, 0.041655596
  %v5510 = vmul.f32 %v5507, %v5509
  %v5511 = vadd.f32 %v5510, -0.4999988
  %v5512 = vmul.f32 %v5507, %v5511
  %v5513 = vadd.f32 1.0, %v5512
  %v5514 = vmul.f32 %v5505, %v5505
  %v5515 = vmul.f32 %v5514, -0.00019511016
  %v5516 = vadd.f32 %v5515, 0.008332121
  %v5517 = vmul.f32 %v5514, %v5516
  %v5518 = vadd.f32 %v5517, -0.16666654
  %v5519 = vmul.f32 %v5514, %v5518
  %v5520 = vadd.f32 %v5519, 1.0
  %v5521 = vmul.f32 %v5520, %v5505
  %vm5522 = vweird.f32 %v1645
  %v5523 = vadd.s32 %v5506, 3
  %v5524 = vand.u32 %v5523, 3
  %vm5525 = vcmp.lt.s32.totalorder %v5524, 2
  %vm5526 = vcmp.eq.s32.totalorder %v5524, 0
  %v5527 = vxor.u32 %v5521, 2147483648
  %v5528 = vsel %vm5526, %v5513, %v5527
  %vm5529 = vcmp.eq.s32.totalorder %v5524, 2
  %v5530 = vxor.u32 %v5513, 2147483648
  %v5531 = vsel %vm5529, %v5530, %v5521
  %v5532 = vsel %vm5525, %v5528, %v5531
  %v5533 = vsel %vm5522, nan, %v5532
  %v5534 = vand.u32 2147483647, %v1646
  %vm5535 = vcmp.le.f32.partialorder %v5534, 0.7853982
  %vm5536 = vcmp.lt.s32.totalorder %v1646, 0
  %v5537 = vand.u32 %v1646, 2139095040
  %v5538 = vshrl.u32 %v5537, 23
  %v5539 = vsub.s32 %v5538, 127
  %v5540 = vand.u32 2147483647, %v1646
  %v5541 = vand.u32 %v5540, 8388607
  %v5542 = vor.u32 %v5541, 8388608
  %v5543 = vsub.s32 0, %v5542
  %v5544 = vadd.s32 %v5539, 1
  %vm5545 = vcmp.gt.s32.totalorder %v5544, 0
  %v5546 = vsel %vm5545, %v5544, 0
  %v5547 = vshrl.u32 %v5546, 5
  %v5548 = vand.u32 %v5546, 31
  %v5549 = vsub.s32 32, %v5548
  %v5550 = vshrl.u32 683565275, %v5549
  %v5551 = vshll.u32 683565275, %v5548
  %v5552 = vshrl.u32 2475754826, %v5549
  %v5553 = vor.u32 %v5551, %v5552
  %v5554 = vshll.u32 2475754826, %v5548
  %v5555 = vshrl.u32 2131351028, %v5549
  %v5556 = vor.u32 %v5554, %v5555
  %v5557 = vshll.u32 2131351028, %v5548
  %v5558 = vshrl.u32 2102212464, %v5549
  %v5559 = vor.u32 %v5557, %v5558
  %v5560 = vshll.u32 2102212464, %v5548
  %v5561 = vshrl.u32 920167782, %v5549
  %v5562 = vor.u32 %v5560, %v5561
  %v5563 = vshll.u32 920167782, %v5548
  %v5564 = vshrl.u32 1326507024, %v5549
  %v5565 = vor.u32 %v5563, %v5564
  %vm5566 = vcmp.lt.s32.totalorder %v5547, 1
  %vm5567 = vcmp.lt.s32.totalorder %v5547, 2
  %vm5568 = vcmp.lt.s32.totalorder %v5547, 3
  %vm5569 = vcmp.lt.s32.totalorder %v5547, 4
  %v5570 = vsel %vm5566, %v5550, %v5553
  %v5571 = vsel %vm5569, %v5559, 2102212464
  %v5572 = vsel %vm5568, %v5556, %v5571
  %v5573 = vsel %vm5567, %v5570, %v5572
  %v5574 = vsel %vm5566, %v5553, %v5556
  %v5575 = vsel %vm5569, %v5562, 920167782
  %v5576 = vsel %vm5568, %v5559, %v5575
  %v5577 = vsel %vm5567, %v5574, %v5576
  %v5578 = vsel %vm5566, %v5556, %v5559
  %v5579 = vsel %vm5569, %v5565, 1326507024
  %v5580 = vsel %vm5568, %v5562, %v5579
  %v5581 = vsel %vm5567, %v5578, %v5580
  %v5582 = vshll.u32 %v5542, 8
  %v5583 = vand.u32 %v5582, 65535
  %v5584 = vshrl.u32 %v5582, 16
  %v5585 = vand.u32 %v5581, 65535
  %v5586 = vshrl.u32 %v5581, 16
  %v5587 = vmul.u32 %v5583, %v5585
  %v5588 = vmul.u32 %v5583, %v5586
  %v5589 = vmul.u32 %v5584, %v5585
  %v5590 = vmul.u32 %v5584, %v5586
  %v5591 = vshll.u32 %v5588, 16
  %v5592 = vshrl.u32 %v5588, 16
  %v5593 = vshll.u32 %v5589, 16
  %v5594 = vshrl.u32 %v5589, 16
  %vm5595 = vc.u32 %v5587, %v5591
  %v5596 = vsel %vm5595, 1, 0
  %v5597 = vadd.s32 %v5587, %v5591
  %v5598 = vadd.s32 %v5590, %v5596
  %vm5599 = vc.u32 %v5597, %v5593
  %v5600 = vsel %vm5599, 1, 0
  %v5601 = vadd.s32 %v5597, %v5593
  %v5602 = vadd.s32 %v5598, %v5600
  %v5603 = vadd.s32 %v5602, %v5592
  %v5604 = vadd.s32 %v5603, %v5594
  %v5605 = vand.u32 %v5582, 65535
  %v5606 = vshrl.u32 %v5582, 16
  %v5607 = vand.u32 %v5577, 65535
  %v5608 = vshrl.u32 %v5577, 16
  %v5609 = vmul.u32 %v5605, %v5607
  %v5610 = vmul.u32 %v5605, %v5608
  %v5611 = vmul.u32 %v5606, %v5607
  %v5612 = vmul.u32 %v5606, %v5608
  %v5613 = vshll.u32 %v5610, 16
  %v5614 = vshrl.u32 %v5610, 16
  %v5615 = vshll.u32 %v5611, 16
  %v5616 = vshrl.u32 %v5611, 16
  %vm5617 = vc.u32 %v5609, %v5613
  %v5618 = vsel %vm5617, 1, 0
  %v5619 = vadd.s32 %v5609, %v5613
  %v5620 = vadd.s32 %v5612, %v5618
  %vm5621 = vc.u32 %v5619, %v5615
  %v5622 = vsel %vm5621, 1, 0
  %v5623 = vadd.s32 %v5619, %v5615
  %v5624 = vadd.s32 %v5620, %v5622
  %v5625 = vadd.s32 %v5624, %v5614
  %v5626 = vadd.s32 %v5625, %v5616
  %v5627 = vmul.u32 %v5582, %v5573
  %v5628 = vadd.s32 %v5604, %v5623
  %vm5629 = vc.u32 %v5604, %v5623
  %v5630 = vadd.s32 %v5626, 1
  %v5631 = vsel %vm5629, %v5630, %v5626
  %v5632 = vadd.s32 %v5627, %v5631
  %v5633 = vadd.s32 %v5632, 536870912
  %v5634 = vshrl.u32 %v5633, 30
  %v5635 = vshll.u32 %v5634, 30
  %v5636 = vsub.s32 %v5632, %v5635
  %vm5637 = vcmp.lt.s32.totalorder %v5636, 0
  %v5638 = vsub.s32 0, %v5636
  %v5639 = vsel %vm5637, %v5638, %v5636
  %v5640 = vclz %v5639
  %v5641 = vsub.s32 %v5640, 2
  %vm5642 = vcmp.gt.s32.totalorder 0, %v5641
  %v5643 = vsel %vm5642, 0, %v5641
  %v5644 = vsub.s32 32, %v5643
  %v5645 = vshll.u32 %v5636, %v5643
  %v5646 = vshrl.u32 %v5628, %v5644
  %v5647 = vor.u32 %v5645, %v5646
  %v5648 = vsub.s32 4294967266, %v5643
  %v5649 = vadd.s32 %v5648, 127
  %v5650 = vshll.u32 %v5649, 23
  %v5651 = vor.u32 4788187, %v5650
  %v5652 = vand.u32 2147483647, %v5651
  %v5654 = vcvt.s32.f32 %v5647
  %v5655 = vmul.f32 %v5654, %v5652
  %v5656 = vxor.u32 %v5655, 2147483648
  %v5657 = vsel %vm5536, %v5656, %v5655
  %v5658 = vsub.s32 4, %v5634
  %v5659 = vsel %vm5536, %v5658, %v5634
  %v5660 = vsel %vm5535, %v1646, %v5657
  %v5661 = vsel %vm5535, 0, %v5659
  %v5662 = vmul.f32 %v5660, %v5660
  %v5663 = vmul.f32 %v5662, -0.001358992
  %v5664 = vadd.f32 %v5663, 0.041655596
  %v5665 = vmul.f32 %v5662, %v5664
  %v5666 = vadd.f32 %v5665, -0.4999988
  %v5667 = vmul.f32 %v5662, %v5666
  %v5668 = vadd.f32 1.0, %v5667
  %v5669 = vmul.f32 %v5660, %v5660
  %v5670 = vmul.f32 %v5669, -0.00019511016
  %v5671 = vadd.f32 %v5670, 0.008332121
  %v5672 = vmul.f32 %v5669, %v5671
  %v5673 = vadd.f32 %v5672, -0.16666654
  %v5674 = vmul.f32 %v5669, %v5673
  %v5675 = vadd.f32 %v5674, 1.0
  %v5676 = vmul.f32 %v5675, %v5660
  %vm5677 = vweird.f32 %v1646
  %v5678 = vadd.s32 %v5661, 3
  %v5679 = vand.u32 %v5678, 3
  %vm5680 = vcmp.lt.s32.totalorder %v5679, 2
  %vm5681 = vcmp.eq.s32.totalorder %v5679, 0
  %v5682 = vxor.u32 %v5676, 2147483648
  %v5683 = vsel %vm5681, %v5668, %v5682
  %vm5684 = vcmp.eq.s32.totalorder %v5679, 2
  %v5685 = vxor.u32 %v5668, 2147483648
  %v5686 = vsel %vm5684, %v5685, %v5676
  %v5687 = vsel %vm5680, %v5683, %v5686
  %v5688 = vsel %vm5677, nan, %v5687
  %v5689 = vand.u32 2147483647, %v1647
  %vm5690 = vcmp.le.f32.partialorder %v5689, 0.7853982
  %vm5691 = vcmp.lt.s32.totalorder %v1647, 0
  %v5692 = vand.u32 %v1647, 2139095040
  %v5693 = vshrl.u32 %v5692, 23
  %v5694 = vsub.s32 %v5693, 127
  %v5695 = vand.u32 2147483647, %v1647
  %v5696 = vand.u32 %v5695, 8388607
  %v5697 = vor.u32 %v5696, 8388608
  %v5698 = vsub.s32 0, %v5697
  %v5699 = vadd.s32 %v5694, 1
  %vm5700 = vcmp.gt.s32.totalorder %v5699, 0
  %v5701 = vsel %vm5700, %v5699, 0
  %v5702 = vshrl.u32 %v5701, 5
  %v5703 = vand.u32 %v5701, 31
  %v5704 = vsub.s32 32, %v5703
  %v5705 = vshrl.u32 683565275, %v5704
  %v5706 = vshll.u32 683565275, %v5703
  %v5707 = vshrl.u32 2475754826, %v5704
  %v5708 = vor.u32 %v5706, %v5707
  %v5709 = vshll.u32 2475754826, %v5703
  %v5710 = vshrl.u32 2131351028, %v5704
  %v5711 = vor.u32 %v5709, %v5710
  %v5712 = vshll.u32 2131351028, %v5703
  %v5713 = vshrl.u32 2102212464, %v5704
  %v5714 = vor.u32 %v5712, %v5713
  %v5715 = vshll.u32 2102212464, %v5703
  %v5716 = vshrl.u32 920167782, %v5704
  %v5717 = vor.u32 %v5715, %v5716
  %v5718 = vshll.u32 920167782, %v5703
  %v5719 = vshrl.u32 1326507024, %v5704
  %v5720 = vor.u32 %v5718, %v5719
  %vm5721 = vcmp.lt.s32.totalorder %v5702, 1
  %vm5722 = vcmp.lt.s32.totalorder %v5702, 2
  %vm5723 = vcmp.lt.s32.totalorder %v5702, 3
  %vm5724 = vcmp.lt.s32.totalorder %v5702, 4
  %v5725 = vsel %vm5721, %v5705, %v5708
  %v5726 = vsel %vm5724, %v5714, 2102212464
  %v5727 = vsel %vm5723, %v5711, %v5726
  %v5728 = vsel %vm5722, %v5725, %v5727
  %v5729 = vsel %vm5721, %v5708, %v5711
  %v5730 = vsel %vm5724, %v5717, 920167782
  %v5731 = vsel %vm5723, %v5714, %v5730
  %v5732 = vsel %vm5722, %v5729, %v5731
  %v5733 = vsel %vm5721, %v5711, %v5714
  %v5734 = vsel %vm5724, %v5720, 1326507024
  %v5735 = vsel %vm5723, %v5717, %v5734
  %v5736 = vsel %vm5722, %v5733, %v5735
  %v5737 = vshll.u32 %v5697, 8
  %v5738 = vand.u32 %v5737, 65535
  %v5739 = vshrl.u32 %v5737, 16
  %v5740 = vand.u32 %v5736, 65535
  %v5741 = vshrl.u32 %v5736, 16
  %v5742 = vmul.u32 %v5738, %v5740
  %v5743 = vmul.u32 %v5738, %v5741
  %v5744 = vmul.u32 %v5739, %v5740
  %v5745 = vmul.u32 %v5739, %v5741
  %v5746 = vshll.u32 %v5743, 16
  %v5747 = vshrl.u32 %v5743, 16
  %v5748 = vshll.u32 %v5744, 16
  %v5749 = vshrl.u32 %v5744, 16
  %vm5750 = vc.u32 %v5742, %v5746
  %v5751 = vsel %vm5750, 1, 0
  %v5752 = vadd.s32 %v5742, %v5746
  %v5753 = vadd.s32 %v5745, %v5751
  %vm5754 = vc.u32 %v5752, %v5748
  %v5755 = vsel %vm5754, 1, 0
  %v5756 = vadd.s32 %v5752, %v5748
  %v5757 = vadd.s32 %v5753, %v5755
  %v5758 = vadd.s32 %v5757, %v5747
  %v5759 = vadd.s32 %v5758, %v5749
  %v5760 = vand.u32 %v5737, 65535
  %v5761 = vshrl.u32 %v5737, 16
  %v5762 = vand.u32 %v5732, 65535
  %v5763 = vshrl.u32 %v5732, 16
  %v5764 = vmul.u32 %v5760, %v5762
  %v5765 = vmul.u32 %v5760, %v5763
  %v5766 = vmul.u32 %v5761, %v5762
  %v5767 = vmul.u32 %v5761, %v5763
  %v5768 = vshll.u32 %v5765, 16
  %v5769 = vshrl.u32 %v5765, 16
  %v5770 = vshll.u32 %v5766, 16
  %v5771 = vshrl.u32 %v5766, 16
  %vm5772 = vc.u32 %v5764, %v5768
  %v5773 = vsel %vm5772, 1, 0
  %v5774 = vadd.s32 %v5764, %v5768
  %v5775 = vadd.s32 %v5767, %v5773
  %vm5776 = vc.u32 %v5774, %v5770
  %v5777 = vsel %vm5776, 1, 0
  %v5778 = vadd.s32 %v5774, %v5770
  %v5779 = vadd.s32 %v5775, %v5777
  %v5780 = vadd.s32 %v5779, %v5769
  %v5781 = vadd.s32 %v5780, %v5771
  %v5782 = vmul.u32 %v5737, %v5728
  %v5783 = vadd.s32 %v5759, %v5778
  %vm5784 = vc.u32 %v5759, %v5778
  %v5785 = vadd.s32 %v5781, 1
  %v5786 = vsel %vm5784, %v5785, %v5781
  %v5787 = vadd.s32 %v5782, %v5786
  %v5788 = vadd.s32 %v5787, 536870912
  %v5789 = vshrl.u32 %v5788, 30
  %v5790 = vshll.u32 %v5789, 30
  %v5791 = vsub.s32 %v5787, %v5790
  %vm5792 = vcmp.lt.s32.totalorder %v5791, 0
  %v5793 = vsub.s32 0, %v5791
  %v5794 = vsel %vm5792, %v5793, %v5791
  %v5795 = vclz %v5794
  %v5796 = vsub.s32 %v5795, 2
  %vm5797 = vcmp.gt.s32.totalorder 0, %v5796
  %v5798 = vsel %vm5797, 0, %v5796
  %v5799 = vsub.s32 32, %v5798
  %v5800 = vshll.u32 %v5791, %v5798
  %v5801 = vshrl.u32 %v5783, %v5799
  %v5802 = vor.u32 %v5800, %v5801
  %v5803 = vsub.s32 4294967266, %v5798
  %v5804 = vadd.s32 %v5803, 127
  %v5805 = vshll.u32 %v5804, 23
  %v5806 = vor.u32 4788187, %v5805
  %v5807 = vand.u32 2147483647, %v5806
  %v5809 = vcvt.s32.f32 %v5802
  %v5810 = vmul.f32 %v5809, %v5807
  %v5811 = vxor.u32 %v5810, 2147483648
  %v5812 = vsel %vm5691, %v5811, %v5810
  %v5813 = vsub.s32 4, %v5789
  %v5814 = vsel %vm5691, %v5813, %v5789
  %v5815 = vsel %vm5690, %v1647, %v5812
  %v5816 = vsel %vm5690, 0, %v5814
  %v5817 = vmul.f32 %v5815, %v5815
  %v5818 = vmul.f32 %v5817, -0.001358992
  %v5819 = vadd.f32 %v5818, 0.041655596
  %v5820 = vmul.f32 %v5817, %v5819
  %v5821 = vadd.f32 %v5820, -0.4999988
  %v5822 = vmul.f32 %v5817, %v5821
  %v5823 = vadd.f32 1.0, %v5822
  %v5824 = vmul.f32 %v5815, %v5815
  %v5825 = vmul.f32 %v5824, -0.00019511016
  %v5826 = vadd.f32 %v5825, 0.008332121
  %v5827 = vmul.f32 %v5824, %v5826
  %v5828 = vadd.f32 %v5827, -0.16666654
  %v5829 = vmul.f32 %v5824, %v5828
  %v5830 = vadd.f32 %v5829, 1.0
  %v5831 = vmul.f32 %v5830, %v5815
  %vm5832 = vweird.f32 %v1647
  %v5833 = vadd.s32 %v5816, 3
  %v5834 = vand.u32 %v5833, 3
  %vm5835 = vcmp.lt.s32.totalorder %v5834, 2
  %vm5836 = vcmp.eq.s32.totalorder %v5834, 0
  %v5837 = vxor.u32 %v5831, 2147483648
  %v5838 = vsel %vm5836, %v5823, %v5837
  %vm5839 = vcmp.eq.s32.totalorder %v5834, 2
  %v5840 = vxor.u32 %v5823, 2147483648
  %v5841 = vsel %vm5839, %v5840, %v5831
  %v5842 = vsel %vm5835, %v5838, %v5841
  %v5843 = vsel %vm5832, nan, %v5842
  %v5844 = vand.u32 2147483647, %v1648
  %vm5845 = vcmp.le.f32.partialorder %v5844, 0.7853982
  %vm5846 = vcmp.lt.s32.totalorder %v1648, 0
  %v5847 = vand.u32 %v1648, 2139095040
  %v5848 = vshrl.u32 %v5847, 23
  %v5849 = vsub.s32 %v5848, 127
  %v5850 = vand.u32 2147483647, %v1648
  %v5851 = vand.u32 %v5850, 8388607
  %v5852 = vor.u32 %v5851, 8388608
  %v5853 = vsub.s32 0, %v5852
  %v5854 = vadd.s32 %v5849, 1
  %vm5855 = vcmp.gt.s32.totalorder %v5854, 0
  %v5856 = vsel %vm5855, %v5854, 0
  %v5857 = vshrl.u32 %v5856, 5
  %v5858 = vand.u32 %v5856, 31
  %v5859 = vsub.s32 32, %v5858
  %v5860 = vshrl.u32 683565275, %v5859
  %v5861 = vshll.u32 683565275, %v5858
  %v5862 = vshrl.u32 2475754826, %v5859
  %v5863 = vor.u32 %v5861, %v5862
  %v5864 = vshll.u32 2475754826, %v5858
  %v5865 = vshrl.u32 2131351028, %v5859
  %v5866 = vor.u32 %v5864, %v5865
  %v5867 = vshll.u32 2131351028, %v5858
  %v5868 = vshrl.u32 2102212464, %v5859
  %v5869 = vor.u32 %v5867, %v5868
  %v5870 = vshll.u32 2102212464, %v5858
  %v5871 = vshrl.u32 920167782, %v5859
  %v5872 = vor.u32 %v5870, %v5871
  %v5873 = vshll.u32 920167782, %v5858
  %v5874 = vshrl.u32 1326507024, %v5859
  %v5875 = vor.u32 %v5873, %v5874
  %vm5876 = vcmp.lt.s32.totalorder %v5857, 1
  %vm5877 = vcmp.lt.s32.totalorder %v5857, 2
  %vm5878 = vcmp.lt.s32.totalorder %v5857, 3
  %vm5879 = vcmp.lt.s32.totalorder %v5857, 4
  %v5880 = vsel %vm5876, %v5860, %v5863
  %v5881 = vsel %vm5879, %v5869, 2102212464
  %v5882 = vsel %vm5878, %v5866, %v5881
  %v5883 = vsel %vm5877, %v5880, %v5882
  %v5884 = vsel %vm5876, %v5863, %v5866
  %v5885 = vsel %vm5879, %v5872, 920167782
  %v5886 = vsel %vm5878, %v5869, %v5885
  %v5887 = vsel %vm5877, %v5884, %v5886
  %v5888 = vsel %vm5876, %v5866, %v5869
  %v5889 = vsel %vm5879, %v5875, 1326507024
  %v5890 = vsel %vm5878, %v5872, %v5889
  %v5891 = vsel %vm5877, %v5888, %v5890
  %v5892 = vshll.u32 %v5852, 8
  %v5893 = vand.u32 %v5892, 65535
  %v5894 = vshrl.u32 %v5892, 16
  %v5895 = vand.u32 %v5891, 65535
  %v5896 = vshrl.u32 %v5891, 16
  %v5897 = vmul.u32 %v5893, %v5895
  %v5898 = vmul.u32 %v5893, %v5896
  %v5899 = vmul.u32 %v5894, %v5895
  %v5900 = vmul.u32 %v5894, %v5896
  %v5901 = vshll.u32 %v5898, 16
  %v5902 = vshrl.u32 %v5898, 16
  %v5903 = vshll.u32 %v5899, 16
  %v5904 = vshrl.u32 %v5899, 16
  %vm5905 = vc.u32 %v5897, %v5901
  %v5906 = vsel %vm5905, 1, 0
  %v5907 = vadd.s32 %v5897, %v5901
  %v5908 = vadd.s32 %v5900, %v5906
  %vm5909 = vc.u32 %v5907, %v5903
  %v5910 = vsel %vm5909, 1, 0
  %v5911 = vadd.s32 %v5907, %v5903
  %v5912 = vadd.s32 %v5908, %v5910
  %v5913 = vadd.s32 %v5912, %v5902
  %v5914 = vadd.s32 %v5913, %v5904
  %v5915 = vand.u32 %v5892, 65535
  %v5916 = vshrl.u32 %v5892, 16
  %v5917 = vand.u32 %v5887, 65535
  %v5918 = vshrl.u32 %v5887, 16
  %v5919 = vmul.u32 %v5915, %v5917
  %v5920 = vmul.u32 %v5915, %v5918
  %v5921 = vmul.u32 %v5916, %v5917
  %v5922 = vmul.u32 %v5916, %v5918
  %v5923 = vshll.u32 %v5920, 16
  %v5924 = vshrl.u32 %v5920, 16
  %v5925 = vshll.u32 %v5921, 16
  %v5926 = vshrl.u32 %v5921, 16
  %vm5927 = vc.u32 %v5919, %v5923
  %v5928 = vsel %vm5927, 1, 0
  %v5929 = vadd.s32 %v5919, %v5923
  %v5930 = vadd.s32 %v5922, %v5928
  %vm5931 = vc.u32 %v5929, %v5925
  %v5932 = vsel %vm5931, 1, 0
  %v5933 = vadd.s32 %v5929, %v5925
  %v5934 = vadd.s32 %v5930, %v5932
  %v5935 = vadd.s32 %v5934, %v5924
  %v5936 = vadd.s32 %v5935, %v5926
  %v5937 = vmul.u32 %v5892, %v5883
  %v5938 = vadd.s32 %v5914, %v5933
  %vm5939 = vc.u32 %v5914, %v5933
  %v5940 = vadd.s32 %v5936, 1
  %v5941 = vsel %vm5939, %v5940, %v5936
  %v5942 = vadd.s32 %v5937, %v5941
  %v5943 = vadd.s32 %v5942, 536870912
  %v5944 = vshrl.u32 %v5943, 30
  %v5945 = vshll.u32 %v5944, 30
  %v5946 = vsub.s32 %v5942, %v5945
  %vm5947 = vcmp.lt.s32.totalorder %v5946, 0
  %v5948 = vsub.s32 0, %v5946
  %v5949 = vsel %vm5947, %v5948, %v5946
  %v5950 = vclz %v5949
  %v5951 = vsub.s32 %v5950, 2
  %vm5952 = vcmp.gt.s32.totalorder 0, %v5951
  %v5953 = vsel %vm5952, 0, %v5951
  %v5954 = vsub.s32 32, %v5953
  %v5955 = vshll.u32 %v5946, %v5953
  %v5956 = vshrl.u32 %v5938, %v5954
  %v5957 = vor.u32 %v5955, %v5956
  %v5958 = vsub.s32 4294967266, %v5953
  %v5959 = vadd.s32 %v5958, 127
  %v5960 = vshll.u32 %v5959, 23
  %v5961 = vor.u32 4788187, %v5960
  %v5962 = vand.u32 2147483647, %v5961
  %v5964 = vcvt.s32.f32 %v5957
  %v5965 = vmul.f32 %v5964, %v5962
  %v5966 = vxor.u32 %v5965, 2147483648
  %v5967 = vsel %vm5846, %v5966, %v5965
  %v5968 = vsub.s32 4, %v5944
  %v5969 = vsel %vm5846, %v5968, %v5944
  %v5970 = vsel %vm5845, %v1648, %v5967
  %v5971 = vsel %vm5845, 0, %v5969
  %v5972 = vmul.f32 %v5970, %v5970
  %v5973 = vmul.f32 %v5972, -0.001358992
  %v5974 = vadd.f32 %v5973, 0.041655596
  %v5975 = vmul.f32 %v5972, %v5974
  %v5976 = vadd.f32 %v5975, -0.4999988
  %v5977 = vmul.f32 %v5972, %v5976
  %v5978 = vadd.f32 1.0, %v5977
  %v5979 = vmul.f32 %v5970, %v5970
  %v5980 = vmul.f32 %v5979, -0.00019511016
  %v5981 = vadd.f32 %v5980, 0.008332121
  %v5982 = vmul.f32 %v5979, %v5981
  %v5983 = vadd.f32 %v5982, -0.16666654
  %v5984 = vmul.f32 %v5979, %v5983
  %v5985 = vadd.f32 %v5984, 1.0
  %v5986 = vmul.f32 %v5985, %v5970
  %vm5987 = vweird.f32 %v1648
  %v5988 = vadd.s32 %v5971, 3
  %v5989 = vand.u32 %v5988, 3
  %vm5990 = vcmp.lt.s32.totalorder %v5989, 2
  %vm5991 = vcmp.eq.s32.totalorder %v5989, 0
  %v5992 = vxor.u32 %v5986, 2147483648
  %v5993 = vsel %vm5991, %v5978, %v5992
  %vm5994 = vcmp.eq.s32.totalorder %v5989, 2
  %v5995 = vxor.u32 %v5978, 2147483648
  %v5996 = vsel %vm5994, %v5995, %v5986
  %v5997 = vsel %vm5990, %v5993, %v5996
  %v5998 = vsel %vm5987, nan, %v5997
  %v5999 = vand.u32 2147483647, %v1649
  %vm6000 = vcmp.le.f32.partialorder %v5999, 0.7853982
  %vm6001 = vcmp.lt.s32.totalorder %v1649, 0
  %v6002 = vand.u32 %v1649, 2139095040
  %v6003 = vshrl.u32 %v6002, 23
  %v6004 = vsub.s32 %v6003, 127
  %v6005 = vand.u32 2147483647, %v1649
  %v6006 = vand.u32 %v6005, 8388607
  %v6007 = vor.u32 %v6006, 8388608
  %v6008 = vsub.s32 0, %v6007
  %v6009 = vadd.s32 %v6004, 1
  %vm6010 = vcmp.gt.s32.totalorder %v6009, 0
  %v6011 = vsel %vm6010, %v6009, 0
  %v6012 = vshrl.u32 %v6011, 5
  %v6013 = vand.u32 %v6011, 31
  %v6014 = vsub.s32 32, %v6013
  %v6015 = vshrl.u32 683565275, %v6014
  %v6016 = vshll.u32 683565275, %v6013
  %v6017 = vshrl.u32 2475754826, %v6014
  %v6018 = vor.u32 %v6016, %v6017
  %v6019 = vshll.u32 2475754826, %v6013
  %v6020 = vshrl.u32 2131351028, %v6014
  %v6021 = vor.u32 %v6019, %v6020
  %v6022 = vshll.u32 2131351028, %v6013
  %v6023 = vshrl.u32 2102212464, %v6014
  %v6024 = vor.u32 %v6022, %v6023
  %v6025 = vshll.u32 2102212464, %v6013
  %v6026 = vshrl.u32 920167782, %v6014
  %v6027 = vor.u32 %v6025, %v6026
  %v6028 = vshll.u32 920167782, %v6013
  %v6029 = vshrl.u32 1326507024, %v6014
  %v6030 = vor.u32 %v6028, %v6029
  %vm6031 = vcmp.lt.s32.totalorder %v6012, 1
  %vm6032 = vcmp.lt.s32.totalorder %v6012, 2
  %vm6033 = vcmp.lt.s32.totalorder %v6012, 3
  %vm6034 = vcmp.lt.s32.totalorder %v6012, 4
  %v6035 = vsel %vm6031, %v6015, %v6018
  %v6036 = vsel %vm6034, %v6024, 2102212464
  %v6037 = vsel %vm6033, %v6021, %v6036
  %v6038 = vsel %vm6032, %v6035, %v6037
  %v6039 = vsel %vm6031, %v6018, %v6021
  %v6040 = vsel %vm6034, %v6027, 920167782
  %v6041 = vsel %vm6033, %v6024, %v6040
  %v6042 = vsel %vm6032, %v6039, %v6041
  %v6043 = vsel %vm6031, %v6021, %v6024
  %v6044 = vsel %vm6034, %v6030, 1326507024
  %v6045 = vsel %vm6033, %v6027, %v6044
  %v6046 = vsel %vm6032, %v6043, %v6045
  %v6047 = vshll.u32 %v6007, 8
  %v6048 = vand.u32 %v6047, 65535
  %v6049 = vshrl.u32 %v6047, 16
  %v6050 = vand.u32 %v6046, 65535
  %v6051 = vshrl.u32 %v6046, 16
  %v6052 = vmul.u32 %v6048, %v6050
  %v6053 = vmul.u32 %v6048, %v6051
  %v6054 = vmul.u32 %v6049, %v6050
  %v6055 = vmul.u32 %v6049, %v6051
  %v6056 = vshll.u32 %v6053, 16
  %v6057 = vshrl.u32 %v6053, 16
  %v6058 = vshll.u32 %v6054, 16
  %v6059 = vshrl.u32 %v6054, 16
  %vm6060 = vc.u32 %v6052, %v6056
  %v6061 = vsel %vm6060, 1, 0
  %v6062 = vadd.s32 %v6052, %v6056
  %v6063 = vadd.s32 %v6055, %v6061
  %vm6064 = vc.u32 %v6062, %v6058
  %v6065 = vsel %vm6064, 1, 0
  %v6066 = vadd.s32 %v6062, %v6058
  %v6067 = vadd.s32 %v6063, %v6065
  %v6068 = vadd.s32 %v6067, %v6057
  %v6069 = vadd.s32 %v6068, %v6059
  %v6070 = vand.u32 %v6047, 65535
  %v6071 = vshrl.u32 %v6047, 16
  %v6072 = vand.u32 %v6042, 65535
  %v6073 = vshrl.u32 %v6042, 16
  %v6074 = vmul.u32 %v6070, %v6072
  %v6075 = vmul.u32 %v6070, %v6073
  %v6076 = vmul.u32 %v6071, %v6072
  %v6077 = vmul.u32 %v6071, %v6073
  %v6078 = vshll.u32 %v6075, 16
  %v6079 = vshrl.u32 %v6075, 16
  %v6080 = vshll.u32 %v6076, 16
  %v6081 = vshrl.u32 %v6076, 16
  %vm6082 = vc.u32 %v6074, %v6078
  %v6083 = vsel %vm6082, 1, 0
  %v6084 = vadd.s32 %v6074, %v6078
  %v6085 = vadd.s32 %v6077, %v6083
  %vm6086 = vc.u32 %v6084, %v6080
  %v6087 = vsel %vm6086, 1, 0
  %v6088 = vadd.s32 %v6084, %v6080
  %v6089 = vadd.s32 %v6085, %v6087
  %v6090 = vadd.s32 %v6089, %v6079
  %v6091 = vadd.s32 %v6090, %v6081
  %v6092 = vmul.u32 %v6047, %v6038
  %v6093 = vadd.s32 %v6069, %v6088
  %vm6094 = vc.u32 %v6069, %v6088
  %v6095 = vadd.s32 %v6091, 1
  %v6096 = vsel %vm6094, %v6095, %v6091
  %v6097 = vadd.s32 %v6092, %v6096
  %v6098 = vadd.s32 %v6097, 536870912
  %v6099 = vshrl.u32 %v6098, 30
  %v6100 = vshll.u32 %v6099, 30
  %v6101 = vsub.s32 %v6097, %v6100
  %vm6102 = vcmp.lt.s32.totalorder %v6101, 0
  %v6103 = vsub.s32 0, %v6101
  %v6104 = vsel %vm6102, %v6103, %v6101
  %v6105 = vclz %v6104
  %v6106 = vsub.s32 %v6105, 2
  %vm6107 = vcmp.gt.s32.totalorder 0, %v6106
  %v6108 = vsel %vm6107, 0, %v6106
  %v6109 = vsub.s32 32, %v6108
  %v6110 = vshll.u32 %v6101, %v6108
  %v6111 = vshrl.u32 %v6093, %v6109
  %v6112 = vor.u32 %v6110, %v6111
  %v6113 = vsub.s32 4294967266, %v6108
  %v6114 = vadd.s32 %v6113, 127
  %v6115 = vshll.u32 %v6114, 23
  %v6116 = vor.u32 4788187, %v6115
  %v6117 = vand.u32 2147483647, %v6116
  %v6119 = vcvt.s32.f32 %v6112
  %v6120 = vmul.f32 %v6119, %v6117
  %v6121 = vxor.u32 %v6120, 2147483648
  %v6122 = vsel %vm6001, %v6121, %v6120
  %v6123 = vsub.s32 4, %v6099
  %v6124 = vsel %vm6001, %v6123, %v6099
  %v6125 = vsel %vm6000, %v1649, %v6122
  %v6126 = vsel %vm6000, 0, %v6124
  %v6127 = vmul.f32 %v6125, %v6125
  %v6128 = vmul.f32 %v6127, -0.001358992
  %v6129 = vadd.f32 %v6128, 0.041655596
  %v6130 = vmul.f32 %v6127, %v6129
  %v6131 = vadd.f32 %v6130, -0.4999988
  %v6132 = vmul.f32 %v6127, %v6131
  %v6133 = vadd.f32 1.0, %v6132
  %v6134 = vmul.f32 %v6125, %v6125
  %v6135 = vmul.f32 %v6134, -0.00019511016
  %v6136 = vadd.f32 %v6135, 0.008332121
  %v6137 = vmul.f32 %v6134, %v6136
  %v6138 = vadd.f32 %v6137, -0.16666654
  %v6139 = vmul.f32 %v6134, %v6138
  %v6140 = vadd.f32 %v6139, 1.0
  %v6141 = vmul.f32 %v6140, %v6125
  %vm6142 = vweird.f32 %v1649
  %v6143 = vadd.s32 %v6126, 3
  %v6144 = vand.u32 %v6143, 3
  %vm6145 = vcmp.lt.s32.totalorder %v6144, 2
  %vm6146 = vcmp.eq.s32.totalorder %v6144, 0
  %v6147 = vxor.u32 %v6141, 2147483648
  %v6148 = vsel %vm6146, %v6133, %v6147
  %vm6149 = vcmp.eq.s32.totalorder %v6144, 2
  %v6150 = vxor.u32 %v6133, 2147483648
  %v6151 = vsel %vm6149, %v6150, %v6141
  %v6152 = vsel %vm6145, %v6148, %v6151
  %v6153 = vsel %vm6142, nan, %v6152
  %v6154 = vand.u32 2147483647, %v1650
  %vm6155 = vcmp.le.f32.partialorder %v6154, 0.7853982
  %vm6156 = vcmp.lt.s32.totalorder %v1650, 0
  %v6157 = vand.u32 %v1650, 2139095040
  %v6158 = vshrl.u32 %v6157, 23
  %v6159 = vsub.s32 %v6158, 127
  %v6160 = vand.u32 2147483647, %v1650
  %v6161 = vand.u32 %v6160, 8388607
  %v6162 = vor.u32 %v6161, 8388608
  %v6163 = vsub.s32 0, %v6162
  %v6164 = vadd.s32 %v6159, 1
  %vm6165 = vcmp.gt.s32.totalorder %v6164, 0
  %v6166 = vsel %vm6165, %v6164, 0
  %v6167 = vshrl.u32 %v6166, 5
  %v6168 = vand.u32 %v6166, 31
  %v6169 = vsub.s32 32, %v6168
  %v6170 = vshrl.u32 683565275, %v6169
  %v6171 = vshll.u32 683565275, %v6168
  %v6172 = vshrl.u32 2475754826, %v6169
  %v6173 = vor.u32 %v6171, %v6172
  %v6174 = vshll.u32 2475754826, %v6168
  %v6175 = vshrl.u32 2131351028, %v6169
  %v6176 = vor.u32 %v6174, %v6175
  %v6177 = vshll.u32 2131351028, %v6168
  %v6178 = vshrl.u32 2102212464, %v6169
  %v6179 = vor.u32 %v6177, %v6178
  %v6180 = vshll.u32 2102212464, %v6168
  %v6181 = vshrl.u32 920167782, %v6169
  %v6182 = vor.u32 %v6180, %v6181
  %v6183 = vshll.u32 920167782, %v6168
  %v6184 = vshrl.u32 1326507024, %v6169
  %v6185 = vor.u32 %v6183, %v6184
  %vm6186 = vcmp.lt.s32.totalorder %v6167, 1
  %vm6187 = vcmp.lt.s32.totalorder %v6167, 2
  %vm6188 = vcmp.lt.s32.totalorder %v6167, 3
  %vm6189 = vcmp.lt.s32.totalorder %v6167, 4
  %v6190 = vsel %vm6186, %v6170, %v6173
  %v6191 = vsel %vm6189, %v6179, 2102212464
  %v6192 = vsel %vm6188, %v6176, %v6191
  %v6193 = vsel %vm6187, %v6190, %v6192
  %v6194 = vsel %vm6186, %v6173, %v6176
  %v6195 = vsel %vm6189, %v6182, 920167782
  %v6196 = vsel %vm6188, %v6179, %v6195
  %v6197 = vsel %vm6187, %v6194, %v6196
  %v6198 = vsel %vm6186, %v6176, %v6179
  %v6199 = vsel %vm6189, %v6185, 1326507024
  %v6200 = vsel %vm6188, %v6182, %v6199
  %v6201 = vsel %vm6187, %v6198, %v6200
  %v6202 = vshll.u32 %v6162, 8
  %v6203 = vand.u32 %v6202, 65535
  %v6204 = vshrl.u32 %v6202, 16
  %v6205 = vand.u32 %v6201, 65535
  %v6206 = vshrl.u32 %v6201, 16
  %v6207 = vmul.u32 %v6203, %v6205
  %v6208 = vmul.u32 %v6203, %v6206
  %v6209 = vmul.u32 %v6204, %v6205
  %v6210 = vmul.u32 %v6204, %v6206
  %v6211 = vshll.u32 %v6208, 16
  %v6212 = vshrl.u32 %v6208, 16
  %v6213 = vshll.u32 %v6209, 16
  %v6214 = vshrl.u32 %v6209, 16
  %vm6215 = vc.u32 %v6207, %v6211
  %v6216 = vsel %vm6215, 1, 0
  %v6217 = vadd.s32 %v6207, %v6211
  %v6218 = vadd.s32 %v6210, %v6216
  %vm6219 = vc.u32 %v6217, %v6213
  %v6220 = vsel %vm6219, 1, 0
  %v6221 = vadd.s32 %v6217, %v6213
  %v6222 = vadd.s32 %v6218, %v6220
  %v6223 = vadd.s32 %v6222, %v6212
  %v6224 = vadd.s32 %v6223, %v6214
  %v6225 = vand.u32 %v6202, 65535
  %v6226 = vshrl.u32 %v6202, 16
  %v6227 = vand.u32 %v6197, 65535
  %v6228 = vshrl.u32 %v6197, 16
  %v6229 = vmul.u32 %v6225, %v6227
  %v6230 = vmul.u32 %v6225, %v6228
  %v6231 = vmul.u32 %v6226, %v6227
  %v6232 = vmul.u32 %v6226, %v6228
  %v6233 = vshll.u32 %v6230, 16
  %v6234 = vshrl.u32 %v6230, 16
  %v6235 = vshll.u32 %v6231, 16
  %v6236 = vshrl.u32 %v6231, 16
  %vm6237 = vc.u32 %v6229, %v6233
  %v6238 = vsel %vm6237, 1, 0
  %v6239 = vadd.s32 %v6229, %v6233
  %v6240 = vadd.s32 %v6232, %v6238
  %vm6241 = vc.u32 %v6239, %v6235
  %v6242 = vsel %vm6241, 1, 0
  %v6243 = vadd.s32 %v6239, %v6235
  %v6244 = vadd.s32 %v6240, %v6242
  %v6245 = vadd.s32 %v6244, %v6234
  %v6246 = vadd.s32 %v6245, %v6236
  %v6247 = vmul.u32 %v6202, %v6193
  %v6248 = vadd.s32 %v6224, %v6243
  %vm6249 = vc.u32 %v6224, %v6243
  %v6250 = vadd.s32 %v6246, 1
  %v6251 = vsel %vm6249, %v6250, %v6246
  %v6252 = vadd.s32 %v6247, %v6251
  %v6253 = vadd.s32 %v6252, 536870912
  %v6254 = vshrl.u32 %v6253, 30
  %v6255 = vshll.u32 %v6254, 30
  %v6256 = vsub.s32 %v6252, %v6255
  %vm6257 = vcmp.lt.s32.totalorder %v6256, 0
  %v6258 = vsub.s32 0, %v6256
  %v6259 = vsel %vm6257, %v6258, %v6256
  %v6260 = vclz %v6259
  %v6261 = vsub.s32 %v6260, 2
  %vm6262 = vcmp.gt.s32.totalorder 0, %v6261
  %v6263 = vsel %vm6262, 0, %v6261
  %v6264 = vsub.s32 32, %v6263
  %v6265 = vshll.u32 %v6256, %v6263
  %v6266 = vshrl.u32 %v6248, %v6264
  %v6267 = vor.u32 %v6265, %v6266
  %v6268 = vsub.s32 4294967266, %v6263
  %v6269 = vadd.s32 %v6268, 127
  %v6270 = vshll.u32 %v6269, 23
  %v6271 = vor.u32 4788187, %v6270
  %v6272 = vand.u32 2147483647, %v6271
  %v6274 = vcvt.s32.f32 %v6267
  %v6275 = vmul.f32 %v6274, %v6272
  %v6276 = vxor.u32 %v6275, 2147483648
  %v6277 = vsel %vm6156, %v6276, %v6275
  %v6278 = vsub.s32 4, %v6254
  %v6279 = vsel %vm6156, %v6278, %v6254
  %v6280 = vsel %vm6155, %v1650, %v6277
  %v6281 = vsel %vm6155, 0, %v6279
  %v6282 = vmul.f32 %v6280, %v6280
  %v6283 = vmul.f32 %v6282, -0.001358992
  %v6284 = vadd.f32 %v6283, 0.041655596
  %v6285 = vmul.f32 %v6282, %v6284
  %v6286 = vadd.f32 %v6285, -0.4999988
  %v6287 = vmul.f32 %v6282, %v6286
  %v6288 = vadd.f32 1.0, %v6287
  %v6289 = vmul.f32 %v6280, %v6280
  %v6290 = vmul.f32 %v6289, -0.00019511016
  %v6291 = vadd.f32 %v6290, 0.008332121
  %v6292 = vmul.f32 %v6289, %v6291
  %v6293 = vadd.f32 %v6292, -0.16666654
  %v6294 = vmul.f32 %v6289, %v6293
  %v6295 = vadd.f32 %v6294, 1.0
  %v6296 = vmul.f32 %v6295, %v6280
  %vm6297 = vweird.f32 %v1650
  %v6298 = vadd.s32 %v6281, 3
  %v6299 = vand.u32 %v6298, 3
  %vm6300 = vcmp.lt.s32.totalorder %v6299, 2
  %vm6301 = vcmp.eq.s32.totalorder %v6299, 0
  %v6302 = vxor.u32 %v6296, 2147483648
  %v6303 = vsel %vm6301, %v6288, %v6302
  %vm6304 = vcmp.eq.s32.totalorder %v6299, 2
  %v6305 = vxor.u32 %v6288, 2147483648
  %v6306 = vsel %vm6304, %v6305, %v6296
  %v6307 = vsel %vm6300, %v6303, %v6306
  %v6308 = vsel %vm6297, nan, %v6307
  %v6309 = vand.u32 2147483647, %v1651
  %vm6310 = vcmp.le.f32.partialorder %v6309, 0.7853982
  %vm6311 = vcmp.lt.s32.totalorder %v1651, 0
  %v6312 = vand.u32 %v1651, 2139095040
  %v6313 = vshrl.u32 %v6312, 23
  %v6314 = vsub.s32 %v6313, 127
  %v6315 = vand.u32 2147483647, %v1651
  %v6316 = vand.u32 %v6315, 8388607
  %v6317 = vor.u32 %v6316, 8388608
  %v6318 = vsub.s32 0, %v6317
  %v6319 = vadd.s32 %v6314, 1
  %vm6320 = vcmp.gt.s32.totalorder %v6319, 0
  %v6321 = vsel %vm6320, %v6319, 0
  %v6322 = vshrl.u32 %v6321, 5
  %v6323 = vand.u32 %v6321, 31
  %v6324 = vsub.s32 32, %v6323
  %v6325 = vshrl.u32 683565275, %v6324
  %v6326 = vshll.u32 683565275, %v6323
  %v6327 = vshrl.u32 2475754826, %v6324
  %v6328 = vor.u32 %v6326, %v6327
  %v6329 = vshll.u32 2475754826, %v6323
  %v6330 = vshrl.u32 2131351028, %v6324
  %v6331 = vor.u32 %v6329, %v6330
  %v6332 = vshll.u32 2131351028, %v6323
  %v6333 = vshrl.u32 2102212464, %v6324
  %v6334 = vor.u32 %v6332, %v6333
  %v6335 = vshll.u32 2102212464, %v6323
  %v6336 = vshrl.u32 920167782, %v6324
  %v6337 = vor.u32 %v6335, %v6336
  %v6338 = vshll.u32 920167782, %v6323
  %v6339 = vshrl.u32 1326507024, %v6324
  %v6340 = vor.u32 %v6338, %v6339
  %vm6341 = vcmp.lt.s32.totalorder %v6322, 1
  %vm6342 = vcmp.lt.s32.totalorder %v6322, 2
  %vm6343 = vcmp.lt.s32.totalorder %v6322, 3
  %vm6344 = vcmp.lt.s32.totalorder %v6322, 4
  %v6345 = vsel %vm6341, %v6325, %v6328
  %v6346 = vsel %vm6344, %v6334, 2102212464
  %v6347 = vsel %vm6343, %v6331, %v6346
  %v6348 = vsel %vm6342, %v6345, %v6347
  %v6349 = vsel %vm6341, %v6328, %v6331
  %v6350 = vsel %vm6344, %v6337, 920167782
  %v6351 = vsel %vm6343, %v6334, %v6350
  %v6352 = vsel %vm6342, %v6349, %v6351
  %v6353 = vsel %vm6341, %v6331, %v6334
  %v6354 = vsel %vm6344, %v6340, 1326507024
  %v6355 = vsel %vm6343, %v6337, %v6354
  %v6356 = vsel %vm6342, %v6353, %v6355
  %v6357 = vshll.u32 %v6317, 8
  %v6358 = vand.u32 %v6357, 65535
  %v6359 = vshrl.u32 %v6357, 16
  %v6360 = vand.u32 %v6356, 65535
  %v6361 = vshrl.u32 %v6356, 16
  %v6362 = vmul.u32 %v6358, %v6360
  %v6363 = vmul.u32 %v6358, %v6361
  %v6364 = vmul.u32 %v6359, %v6360
  %v6365 = vmul.u32 %v6359, %v6361
  %v6366 = vshll.u32 %v6363, 16
  %v6367 = vshrl.u32 %v6363, 16
  %v6368 = vshll.u32 %v6364, 16
  %v6369 = vshrl.u32 %v6364, 16
  %vm6370 = vc.u32 %v6362, %v6366
  %v6371 = vsel %vm6370, 1, 0
  %v6372 = vadd.s32 %v6362, %v6366
  %v6373 = vadd.s32 %v6365, %v6371
  %vm6374 = vc.u32 %v6372, %v6368
  %v6375 = vsel %vm6374, 1, 0
  %v6376 = vadd.s32 %v6372, %v6368
  %v6377 = vadd.s32 %v6373, %v6375
  %v6378 = vadd.s32 %v6377, %v6367
  %v6379 = vadd.s32 %v6378, %v6369
  %v6380 = vand.u32 %v6357, 65535
  %v6381 = vshrl.u32 %v6357, 16
  %v6382 = vand.u32 %v6352, 65535
  %v6383 = vshrl.u32 %v6352, 16
  %v6384 = vmul.u32 %v6380, %v6382
  %v6385 = vmul.u32 %v6380, %v6383
  %v6386 = vmul.u32 %v6381, %v6382
  %v6387 = vmul.u32 %v6381, %v6383
  %v6388 = vshll.u32 %v6385, 16
  %v6389 = vshrl.u32 %v6385, 16
  %v6390 = vshll.u32 %v6386, 16
  %v6391 = vshrl.u32 %v6386, 16
  %vm6392 = vc.u32 %v6384, %v6388
  %v6393 = vsel %vm6392, 1, 0
  %v6394 = vadd.s32 %v6384, %v6388
  %v6395 = vadd.s32 %v6387, %v6393
  %vm6396 = vc.u32 %v6394, %v6390
  %v6397 = vsel %vm6396, 1, 0
  %v6398 = vadd.s32 %v6394, %v6390
  %v6399 = vadd.s32 %v6395, %v6397
  %v6400 = vadd.s32 %v6399, %v6389
  %v6401 = vadd.s32 %v6400, %v6391
  %v6402 = vmul.u32 %v6357, %v6348
  %v6403 = vadd.s32 %v6379, %v6398
  %vm6404 = vc.u32 %v6379, %v6398
  %v6405 = vadd.s32 %v6401, 1
  %v6406 = vsel %vm6404, %v6405, %v6401
  %v6407 = vadd.s32 %v6402, %v6406
  %v6408 = vadd.s32 %v6407, 536870912
  %v6409 = vshrl.u32 %v6408, 30
  %v6410 = vshll.u32 %v6409, 30
  %v6411 = vsub.s32 %v6407, %v6410
  %vm6412 = vcmp.lt.s32.totalorder %v6411, 0
  %v6413 = vsub.s32 0, %v6411
  %v6414 = vsel %vm6412, %v6413, %v6411
  %v6415 = vclz %v6414
  %v6416 = vsub.s32 %v6415, 2
  %vm6417 = vcmp.gt.s32.totalorder 0, %v6416
  %v6418 = vsel %vm6417, 0, %v6416
  %v6419 = vsub.s32 32, %v6418
  %v6420 = vshll.u32 %v6411, %v6418
  %v6421 = vshrl.u32 %v6403, %v6419
  %v6422 = vor.u32 %v6420, %v6421
  %v6423 = vsub.s32 4294967266, %v6418
  %v6424 = vadd.s32 %v6423, 127
  %v6425 = vshll.u32 %v6424, 23
  %v6426 = vor.u32 4788187, %v6425
  %v6427 = vand.u32 2147483647, %v6426
  %v6429 = vcvt.s32.f32 %v6422
  %v6430 = vmul.f32 %v6429, %v6427
  %v6431 = vxor.u32 %v6430, 2147483648
  %v6432 = vsel %vm6311, %v6431, %v6430
  %v6433 = vsub.s32 4, %v6409
  %v6434 = vsel %vm6311, %v6433, %v6409
  %v6435 = vsel %vm6310, %v1651, %v6432
  %v6436 = vsel %vm6310, 0, %v6434
  %v6437 = vmul.f32 %v6435, %v6435
  %v6438 = vmul.f32 %v6437, -0.001358992
  %v6439 = vadd.f32 %v6438, 0.041655596
  %v6440 = vmul.f32 %v6437, %v6439
  %v6441 = vadd.f32 %v6440, -0.4999988
  %v6442 = vmul.f32 %v6437, %v6441
  %v6443 = vadd.f32 1.0, %v6442
  %v6444 = vmul.f32 %v6435, %v6435
  %v6445 = vmul.f32 %v6444, -0.00019511016
  %v6446 = vadd.f32 %v6445, 0.008332121
  %v6447 = vmul.f32 %v6444, %v6446
  %v6448 = vadd.f32 %v6447, -0.16666654
  %v6449 = vmul.f32 %v6444, %v6448
  %v6450 = vadd.f32 %v6449, 1.0
  %v6451 = vmul.f32 %v6450, %v6435
  %vm6452 = vweird.f32 %v1651
  %v6453 = vadd.s32 %v6436, 3
  %v6454 = vand.u32 %v6453, 3
  %vm6455 = vcmp.lt.s32.totalorder %v6454, 2
  %vm6456 = vcmp.eq.s32.totalorder %v6454, 0
  %v6457 = vxor.u32 %v6451, 2147483648
  %v6458 = vsel %vm6456, %v6443, %v6457
  %vm6459 = vcmp.eq.s32.totalorder %v6454, 2
  %v6460 = vxor.u32 %v6443, 2147483648
  %v6461 = vsel %vm6459, %v6460, %v6451
  %v6462 = vsel %vm6455, %v6458, %v6461
  %v6463 = vsel %vm6452, nan, %v6462
  %v6464 = vand.u32 2147483647, %v1652
  %vm6465 = vcmp.le.f32.partialorder %v6464, 0.7853982
  %vm6466 = vcmp.lt.s32.totalorder %v1652, 0
  %v6467 = vand.u32 %v1652, 2139095040
  %v6468 = vshrl.u32 %v6467, 23
  %v6469 = vsub.s32 %v6468, 127
  %v6470 = vand.u32 2147483647, %v1652
  %v6471 = vand.u32 %v6470, 8388607
  %v6472 = vor.u32 %v6471, 8388608
  %v6473 = vsub.s32 0, %v6472
  %v6474 = vadd.s32 %v6469, 1
  %vm6475 = vcmp.gt.s32.totalorder %v6474, 0
  %v6476 = vsel %vm6475, %v6474, 0
  %v6477 = vshrl.u32 %v6476, 5
  %v6478 = vand.u32 %v6476, 31
  %v6479 = vsub.s32 32, %v6478
  %v6480 = vshrl.u32 683565275, %v6479
  %v6481 = vshll.u32 683565275, %v6478
  %v6482 = vshrl.u32 2475754826, %v6479
  %v6483 = vor.u32 %v6481, %v6482
  %v6484 = vshll.u32 2475754826, %v6478
  %v6485 = vshrl.u32 2131351028, %v6479
  %v6486 = vor.u32 %v6484, %v6485
  %v6487 = vshll.u32 2131351028, %v6478
  %v6488 = vshrl.u32 2102212464, %v6479
  %v6489 = vor.u32 %v6487, %v6488
  %v6490 = vshll.u32 2102212464, %v6478
  %v6491 = vshrl.u32 920167782, %v6479
  %v6492 = vor.u32 %v6490, %v6491
  %v6493 = vshll.u32 920167782, %v6478
  %v6494 = vshrl.u32 1326507024, %v6479
  %v6495 = vor.u32 %v6493, %v6494
  %vm6496 = vcmp.lt.s32.totalorder %v6477, 1
  %vm6497 = vcmp.lt.s32.totalorder %v6477, 2
  %vm6498 = vcmp.lt.s32.totalorder %v6477, 3
  %vm6499 = vcmp.lt.s32.totalorder %v6477, 4
  %v6500 = vsel %vm6496, %v6480, %v6483
  %v6501 = vsel %vm6499, %v6489, 2102212464
  %v6502 = vsel %vm6498, %v6486, %v6501
  %v6503 = vsel %vm6497, %v6500, %v6502
  %v6504 = vsel %vm6496, %v6483, %v6486
  %v6505 = vsel %vm6499, %v6492, 920167782
  %v6506 = vsel %vm6498, %v6489, %v6505
  %v6507 = vsel %vm6497, %v6504, %v6506
  %v6508 = vsel %vm6496, %v6486, %v6489
  %v6509 = vsel %vm6499, %v6495, 1326507024
  %v6510 = vsel %vm6498, %v6492, %v6509
  %v6511 = vsel %vm6497, %v6508, %v6510
  %v6512 = vshll.u32 %v6472, 8
  %v6513 = vand.u32 %v6512, 65535
  %v6514 = vshrl.u32 %v6512, 16
  %v6515 = vand.u32 %v6511, 65535
  %v6516 = vshrl.u32 %v6511, 16
  %v6517 = vmul.u32 %v6513, %v6515
  %v6518 = vmul.u32 %v6513, %v6516
  %v6519 = vmul.u32 %v6514, %v6515
  %v6520 = vmul.u32 %v6514, %v6516
  %v6521 = vshll.u32 %v6518, 16
  %v6522 = vshrl.u32 %v6518, 16
  %v6523 = vshll.u32 %v6519, 16
  %v6524 = vshrl.u32 %v6519, 16
  %vm6525 = vc.u32 %v6517, %v6521
  %v6526 = vsel %vm6525, 1, 0
  %v6527 = vadd.s32 %v6517, %v6521
  %v6528 = vadd.s32 %v6520, %v6526
  %vm6529 = vc.u32 %v6527, %v6523
  %v6530 = vsel %vm6529, 1, 0
  %v6531 = vadd.s32 %v6527, %v6523
  %v6532 = vadd.s32 %v6528, %v6530
  %v6533 = vadd.s32 %v6532, %v6522
  %v6534 = vadd.s32 %v6533, %v6524
  %v6535 = vand.u32 %v6512, 65535
  %v6536 = vshrl.u32 %v6512, 16
  %v6537 = vand.u32 %v6507, 65535
  %v6538 = vshrl.u32 %v6507, 16
  %v6539 = vmul.u32 %v6535, %v6537
  %v6540 = vmul.u32 %v6535, %v6538
  %v6541 = vmul.u32 %v6536, %v6537
  %v6542 = vmul.u32 %v6536, %v6538
  %v6543 = vshll.u32 %v6540, 16
  %v6544 = vshrl.u32 %v6540, 16
  %v6545 = vshll.u32 %v6541, 16
  %v6546 = vshrl.u32 %v6541, 16
  %vm6547 = vc.u32 %v6539, %v6543
  %v6548 = vsel %vm6547, 1, 0
  %v6549 = vadd.s32 %v6539, %v6543
  %v6550 = vadd.s32 %v6542, %v6548
  %vm6551 = vc.u32 %v6549, %v6545
  %v6552 = vsel %vm6551, 1, 0
  %v6553 = vadd.s32 %v6549, %v6545
  %v6554 = vadd.s32 %v6550, %v6552
  %v6555 = vadd.s32 %v6554, %v6544
  %v6556 = vadd.s32 %v6555, %v6546
  %v6557 = vmul.u32 %v6512, %v6503
  %v6558 = vadd.s32 %v6534, %v6553
  %vm6559 = vc.u32 %v6534, %v6553
  %v6560 = vadd.s32 %v6556, 1
  %v6561 = vsel %vm6559, %v6560, %v6556
  %v6562 = vadd.s32 %v6557, %v6561
  %v6563 = vadd.s32 %v6562, 536870912
  %v6564 = vshrl.u32 %v6563, 30
  %v6565 = vshll.u32 %v6564, 30
  %v6566 = vsub.s32 %v6562, %v6565
  %vm6567 = vcmp.lt.s32.totalorder %v6566, 0
  %v6568 = vsub.s32 0, %v6566
  %v6569 = vsel %vm6567, %v6568, %v6566
  %v6570 = vclz %v6569
  %v6571 = vsub.s32 %v6570, 2
  %vm6572 = vcmp.gt.s32.totalorder 0, %v6571
  %v6573 = vsel %vm6572, 0, %v6571
  %v6574 = vsub.s32 32, %v6573
  %v6575 = vshll.u32 %v6566, %v6573
  %v6576 = vshrl.u32 %v6558, %v6574
  %v6577 = vor.u32 %v6575, %v6576
  %v6578 = vsub.s32 4294967266, %v6573
  %v6579 = vadd.s32 %v6578, 127
  %v6580 = vshll.u32 %v6579, 23
  %v6581 = vor.u32 4788187, %v6580
  %v6582 = vand.u32 2147483647, %v6581
  %v6584 = vcvt.s32.f32 %v6577
  %v6585 = vmul.f32 %v6584, %v6582
  %v6586 = vxor.u32 %v6585, 2147483648
  %v6587 = vsel %vm6466, %v6586, %v6585
  %v6588 = vsub.s32 4, %v6564
  %v6589 = vsel %vm6466, %v6588, %v6564
  %v6590 = vsel %vm6465, %v1652, %v6587
  %v6591 = vsel %vm6465, 0, %v6589
  %v6592 = vmul.f32 %v6590, %v6590
  %v6593 = vmul.f32 %v6592, -0.001358992
  %v6594 = vadd.f32 %v6593, 0.041655596
  %v6595 = vmul.f32 %v6592, %v6594
  %v6596 = vadd.f32 %v6595, -0.4999988
  %v6597 = vmul.f32 %v6592, %v6596
  %v6598 = vadd.f32 1.0, %v6597
  %v6599 = vmul.f32 %v6590, %v6590
  %v6600 = vmul.f32 %v6599, -0.00019511016
  %v6601 = vadd.f32 %v6600, 0.008332121
  %v6602 = vmul.f32 %v6599, %v6601
  %v6603 = vadd.f32 %v6602, -0.16666654
  %v6604 = vmul.f32 %v6599, %v6603
  %v6605 = vadd.f32 %v6604, 1.0
  %v6606 = vmul.f32 %v6605, %v6590
  %vm6607 = vweird.f32 %v1652
  %v6608 = vadd.s32 %v6591, 3
  %v6609 = vand.u32 %v6608, 3
  %vm6610 = vcmp.lt.s32.totalorder %v6609, 2
  %vm6611 = vcmp.eq.s32.totalorder %v6609, 0
  %v6612 = vxor.u32 %v6606, 2147483648
  %v6613 = vsel %vm6611, %v6598, %v6612
  %vm6614 = vcmp.eq.s32.totalorder %v6609, 2
  %v6615 = vxor.u32 %v6598, 2147483648
  %v6616 = vsel %vm6614, %v6615, %v6606
  %v6617 = vsel %vm6610, %v6613, %v6616
  %v6618 = vsel %vm6607, nan, %v6617
  %v6619 = vand.u32 2147483647, %v1653
  %vm6620 = vcmp.le.f32.partialorder %v6619, 0.7853982
  %vm6621 = vcmp.lt.s32.totalorder %v1653, 0
  %v6622 = vand.u32 %v1653, 2139095040
  %v6623 = vshrl.u32 %v6622, 23
  %v6624 = vsub.s32 %v6623, 127
  %v6625 = vand.u32 2147483647, %v1653
  %v6626 = vand.u32 %v6625, 8388607
  %v6627 = vor.u32 %v6626, 8388608
  %v6628 = vsub.s32 0, %v6627
  %v6629 = vadd.s32 %v6624, 1
  %vm6630 = vcmp.gt.s32.totalorder %v6629, 0
  %v6631 = vsel %vm6630, %v6629, 0
  %v6632 = vshrl.u32 %v6631, 5
  %v6633 = vand.u32 %v6631, 31
  %v6634 = vsub.s32 32, %v6633
  %v6635 = vshrl.u32 683565275, %v6634
  %v6636 = vshll.u32 683565275, %v6633
  %v6637 = vshrl.u32 2475754826, %v6634
  %v6638 = vor.u32 %v6636, %v6637
  %v6639 = vshll.u32 2475754826, %v6633
  %v6640 = vshrl.u32 2131351028, %v6634
  %v6641 = vor.u32 %v6639, %v6640
  %v6642 = vshll.u32 2131351028, %v6633
  %v6643 = vshrl.u32 2102212464, %v6634
  %v6644 = vor.u32 %v6642, %v6643
  %v6645 = vshll.u32 2102212464, %v6633
  %v6646 = vshrl.u32 920167782, %v6634
  %v6647 = vor.u32 %v6645, %v6646
  %v6648 = vshll.u32 920167782, %v6633
  %v6649 = vshrl.u32 1326507024, %v6634
  %v6650 = vor.u32 %v6648, %v6649
  %vm6651 = vcmp.lt.s32.totalorder %v6632, 1
  %vm6652 = vcmp.lt.s32.totalorder %v6632, 2
  %vm6653 = vcmp.lt.s32.totalorder %v6632, 3
  %vm6654 = vcmp.lt.s32.totalorder %v6632, 4
  %v6655 = vsel %vm6651, %v6635, %v6638
  %v6656 = vsel %vm6654, %v6644, 2102212464
  %v6657 = vsel %vm6653, %v6641, %v6656
  %v6658 = vsel %vm6652, %v6655, %v6657
  %v6659 = vsel %vm6651, %v6638, %v6641
  %v6660 = vsel %vm6654, %v6647, 920167782
  %v6661 = vsel %vm6653, %v6644, %v6660
  %v6662 = vsel %vm6652, %v6659, %v6661
  %v6663 = vsel %vm6651, %v6641, %v6644
  %v6664 = vsel %vm6654, %v6650, 1326507024
  %v6665 = vsel %vm6653, %v6647, %v6664
  %v6666 = vsel %vm6652, %v6663, %v6665
  %v6667 = vshll.u32 %v6627, 8
  %v6668 = vand.u32 %v6667, 65535
  %v6669 = vshrl.u32 %v6667, 16
  %v6670 = vand.u32 %v6666, 65535
  %v6671 = vshrl.u32 %v6666, 16
  %v6672 = vmul.u32 %v6668, %v6670
  %v6673 = vmul.u32 %v6668, %v6671
  %v6674 = vmul.u32 %v6669, %v6670
  %v6675 = vmul.u32 %v6669, %v6671
  %v6676 = vshll.u32 %v6673, 16
  %v6677 = vshrl.u32 %v6673, 16
  %v6678 = vshll.u32 %v6674, 16
  %v6679 = vshrl.u32 %v6674, 16
  %vm6680 = vc.u32 %v6672, %v6676
  %v6681 = vsel %vm6680, 1, 0
  %v6682 = vadd.s32 %v6672, %v6676
  %v6683 = vadd.s32 %v6675, %v6681
  %vm6684 = vc.u32 %v6682, %v6678
  %v6685 = vsel %vm6684, 1, 0
  %v6686 = vadd.s32 %v6682, %v6678
  %v6687 = vadd.s32 %v6683, %v6685
  %v6688 = vadd.s32 %v6687, %v6677
  %v6689 = vadd.s32 %v6688, %v6679
  %v6690 = vand.u32 %v6667, 65535
  %v6691 = vshrl.u32 %v6667, 16
  %v6692 = vand.u32 %v6662, 65535
  %v6693 = vshrl.u32 %v6662, 16
  %v6694 = vmul.u32 %v6690, %v6692
  %v6695 = vmul.u32 %v6690, %v6693
  %v6696 = vmul.u32 %v6691, %v6692
  %v6697 = vmul.u32 %v6691, %v6693
  %v6698 = vshll.u32 %v6695, 16
  %v6699 = vshrl.u32 %v6695, 16
  %v6700 = vshll.u32 %v6696, 16
  %v6701 = vshrl.u32 %v6696, 16
  %vm6702 = vc.u32 %v6694, %v6698
  %v6703 = vsel %vm6702, 1, 0
  %v6704 = vadd.s32 %v6694, %v6698
  %v6705 = vadd.s32 %v6697, %v6703
  %vm6706 = vc.u32 %v6704, %v6700
  %v6707 = vsel %vm6706, 1, 0
  %v6708 = vadd.s32 %v6704, %v6700
  %v6709 = vadd.s32 %v6705, %v6707
  %v6710 = vadd.s32 %v6709, %v6699
  %v6711 = vadd.s32 %v6710, %v6701
  %v6712 = vmul.u32 %v6667, %v6658
  %v6713 = vadd.s32 %v6689, %v6708
  %vm6714 = vc.u32 %v6689, %v6708
  %v6715 = vadd.s32 %v6711, 1
  %v6716 = vsel %vm6714, %v6715, %v6711
  %v6717 = vadd.s32 %v6712, %v6716
  %v6718 = vadd.s32 %v6717, 536870912
  %v6719 = vshrl.u32 %v6718, 30
  %v6720 = vshll.u32 %v6719, 30
  %v6721 = vsub.s32 %v6717, %v6720
  %vm6722 = vcmp.lt.s32.totalorder %v6721, 0
  %v6723 = vsub.s32 0, %v6721
  %v6724 = vsel %vm6722, %v6723, %v6721
  %v6725 = vclz %v6724
  %v6726 = vsub.s32 %v6725, 2
  %vm6727 = vcmp.gt.s32.totalorder 0, %v6726
  %v6728 = vsel %vm6727, 0, %v6726
  %v6729 = vsub.s32 32, %v6728
  %v6730 = vshll.u32 %v6721, %v6728
  %v6731 = vshrl.u32 %v6713, %v6729
  %v6732 = vor.u32 %v6730, %v6731
  %v6733 = vsub.s32 4294967266, %v6728
  %v6734 = vadd.s32 %v6733, 127
  %v6735 = vshll.u32 %v6734, 23
  %v6736 = vor.u32 4788187, %v6735
  %v6737 = vand.u32 2147483647, %v6736
  %v6739 = vcvt.s32.f32 %v6732
  %v6740 = vmul.f32 %v6739, %v6737
  %v6741 = vxor.u32 %v6740, 2147483648
  %v6742 = vsel %vm6621, %v6741, %v6740
  %v6743 = vsub.s32 4, %v6719
  %v6744 = vsel %vm6621, %v6743, %v6719
  %v6745 = vsel %vm6620, %v1653, %v6742
  %v6746 = vsel %vm6620, 0, %v6744
  %v6747 = vmul.f32 %v6745, %v6745
  %v6748 = vmul.f32 %v6747, -0.001358992
  %v6749 = vadd.f32 %v6748, 0.041655596
  %v6750 = vmul.f32 %v6747, %v6749
  %v6751 = vadd.f32 %v6750, -0.4999988
  %v6752 = vmul.f32 %v6747, %v6751
  %v6753 = vadd.f32 1.0, %v6752
  %v6754 = vmul.f32 %v6745, %v6745
  %v6755 = vmul.f32 %v6754, -0.00019511016
  %v6756 = vadd.f32 %v6755, 0.008332121
  %v6757 = vmul.f32 %v6754, %v6756
  %v6758 = vadd.f32 %v6757, -0.16666654
  %v6759 = vmul.f32 %v6754, %v6758
  %v6760 = vadd.f32 %v6759, 1.0
  %v6761 = vmul.f32 %v6760, %v6745
  %vm6762 = vweird.f32 %v1653
  %v6763 = vadd.s32 %v6746, 3
  %v6764 = vand.u32 %v6763, 3
  %vm6765 = vcmp.lt.s32.totalorder %v6764, 2
  %vm6766 = vcmp.eq.s32.totalorder %v6764, 0
  %v6767 = vxor.u32 %v6761, 2147483648
  %v6768 = vsel %vm6766, %v6753, %v6767
  %vm6769 = vcmp.eq.s32.totalorder %v6764, 2
  %v6770 = vxor.u32 %v6753, 2147483648
  %v6771 = vsel %vm6769, %v6770, %v6761
  %v6772 = vsel %vm6765, %v6768, %v6771
  %v6773 = vsel %vm6762, nan, %v6772
  %v6774 = vand.u32 2147483647, %v1654
  %vm6775 = vcmp.le.f32.partialorder %v6774, 0.7853982
  %vm6776 = vcmp.lt.s32.totalorder %v1654, 0
  %v6777 = vand.u32 %v1654, 2139095040
  %v6778 = vshrl.u32 %v6777, 23
  %v6779 = vsub.s32 %v6778, 127
  %v6780 = vand.u32 2147483647, %v1654
  %v6781 = vand.u32 %v6780, 8388607
  %v6782 = vor.u32 %v6781, 8388608
  %v6783 = vsub.s32 0, %v6782
  %v6784 = vadd.s32 %v6779, 1
  %vm6785 = vcmp.gt.s32.totalorder %v6784, 0
  %v6786 = vsel %vm6785, %v6784, 0
  %v6787 = vshrl.u32 %v6786, 5
  %v6788 = vand.u32 %v6786, 31
  %v6789 = vsub.s32 32, %v6788
  %v6790 = vshrl.u32 683565275, %v6789
  %v6791 = vshll.u32 683565275, %v6788
  %v6792 = vshrl.u32 2475754826, %v6789
  %v6793 = vor.u32 %v6791, %v6792
  %v6794 = vshll.u32 2475754826, %v6788
  %v6795 = vshrl.u32 2131351028, %v6789
  %v6796 = vor.u32 %v6794, %v6795
  %v6797 = vshll.u32 2131351028, %v6788
  %v6798 = vshrl.u32 2102212464, %v6789
  %v6799 = vor.u32 %v6797, %v6798
  %v6800 = vshll.u32 2102212464, %v6788
  %v6801 = vshrl.u32 920167782, %v6789
  %v6802 = vor.u32 %v6800, %v6801
  %v6803 = vshll.u32 920167782, %v6788
  %v6804 = vshrl.u32 1326507024, %v6789
  %v6805 = vor.u32 %v6803, %v6804
  %vm6806 = vcmp.lt.s32.totalorder %v6787, 1
  %vm6807 = vcmp.lt.s32.totalorder %v6787, 2
  %vm6808 = vcmp.lt.s32.totalorder %v6787, 3
  %vm6809 = vcmp.lt.s32.totalorder %v6787, 4
  %v6810 = vsel %vm6806, %v6790, %v6793
  %v6811 = vsel %vm6809, %v6799, 2102212464
  %v6812 = vsel %vm6808, %v6796, %v6811
  %v6813 = vsel %vm6807, %v6810, %v6812
  %v6814 = vsel %vm6806, %v6793, %v6796
  %v6815 = vsel %vm6809, %v6802, 920167782
  %v6816 = vsel %vm6808, %v6799, %v6815
  %v6817 = vsel %vm6807, %v6814, %v6816
  %v6818 = vsel %vm6806, %v6796, %v6799
  %v6819 = vsel %vm6809, %v6805, 1326507024
  %v6820 = vsel %vm6808, %v6802, %v6819
  %v6821 = vsel %vm6807, %v6818, %v6820
  %v6822 = vshll.u32 %v6782, 8
  %v6823 = vand.u32 %v6822, 65535
  %v6824 = vshrl.u32 %v6822, 16
  %v6825 = vand.u32 %v6821, 65535
  %v6826 = vshrl.u32 %v6821, 16
  %v6827 = vmul.u32 %v6823, %v6825
  %v6828 = vmul.u32 %v6823, %v6826
  %v6829 = vmul.u32 %v6824, %v6825
  %v6830 = vmul.u32 %v6824, %v6826
  %v6831 = vshll.u32 %v6828, 16
  %v6832 = vshrl.u32 %v6828, 16
  %v6833 = vshll.u32 %v6829, 16
  %v6834 = vshrl.u32 %v6829, 16
  %vm6835 = vc.u32 %v6827, %v6831
  %v6836 = vsel %vm6835, 1, 0
  %v6837 = vadd.s32 %v6827, %v6831
  %v6838 = vadd.s32 %v6830, %v6836
  %vm6839 = vc.u32 %v6837, %v6833
  %v6840 = vsel %vm6839, 1, 0
  %v6841 = vadd.s32 %v6837, %v6833
  %v6842 = vadd.s32 %v6838, %v6840
  %v6843 = vadd.s32 %v6842, %v6832
  %v6844 = vadd.s32 %v6843, %v6834
  %v6845 = vand.u32 %v6822, 65535
  %v6846 = vshrl.u32 %v6822, 16
  %v6847 = vand.u32 %v6817, 65535
  %v6848 = vshrl.u32 %v6817, 16
  %v6849 = vmul.u32 %v6845, %v6847
  %v6850 = vmul.u32 %v6845, %v6848
  %v6851 = vmul.u32 %v6846, %v6847
  %v6852 = vmul.u32 %v6846, %v6848
  %v6853 = vshll.u32 %v6850, 16
  %v6854 = vshrl.u32 %v6850, 16
  %v6855 = vshll.u32 %v6851, 16
  %v6856 = vshrl.u32 %v6851, 16
  %vm6857 = vc.u32 %v6849, %v6853
  %v6858 = vsel %vm6857, 1, 0
  %v6859 = vadd.s32 %v6849, %v6853
  %v6860 = vadd.s32 %v6852, %v6858
  %vm6861 = vc.u32 %v6859, %v6855
  %v6862 = vsel %vm6861, 1, 0
  %v6863 = vadd.s32 %v6859, %v6855
  %v6864 = vadd.s32 %v6860, %v6862
  %v6865 = vadd.s32 %v6864, %v6854
  %v6866 = vadd.s32 %v6865, %v6856
  %v6867 = vmul.u32 %v6822, %v6813
  %v6868 = vadd.s32 %v6844, %v6863
  %vm6869 = vc.u32 %v6844, %v6863
  %v6870 = vadd.s32 %v6866, 1
  %v6871 = vsel %vm6869, %v6870, %v6866
  %v6872 = vadd.s32 %v6867, %v6871
  %v6873 = vadd.s32 %v6872, 536870912
  %v6874 = vshrl.u32 %v6873, 30
  %v6875 = vshll.u32 %v6874, 30
  %v6876 = vsub.s32 %v6872, %v6875
  %vm6877 = vcmp.lt.s32.totalorder %v6876, 0
  %v6878 = vsub.s32 0, %v6876
  %v6879 = vsel %vm6877, %v6878, %v6876
  %v6880 = vclz %v6879
  %v6881 = vsub.s32 %v6880, 2
  %vm6882 = vcmp.gt.s32.totalorder 0, %v6881
  %v6883 = vsel %vm6882, 0, %v6881
  %v6884 = vsub.s32 32, %v6883
  %v6885 = vshll.u32 %v6876, %v6883
  %v6886 = vshrl.u32 %v6868, %v6884
  %v6887 = vor.u32 %v6885, %v6886
  %v6888 = vsub.s32 4294967266, %v6883
  %v6889 = vadd.s32 %v6888, 127
  %v6890 = vshll.u32 %v6889, 23
  %v6891 = vor.u32 4788187, %v6890
  %v6892 = vand.u32 2147483647, %v6891
  %v6894 = vcvt.s32.f32 %v6887
  %v6895 = vmul.f32 %v6894, %v6892
  %v6896 = vxor.u32 %v6895, 2147483648
  %v6897 = vsel %vm6776, %v6896, %v6895
  %v6898 = vsub.s32 4, %v6874
  %v6899 = vsel %vm6776, %v6898, %v6874
  %v6900 = vsel %vm6775, %v1654, %v6897
  %v6901 = vsel %vm6775, 0, %v6899
  %v6902 = vmul.f32 %v6900, %v6900
  %v6903 = vmul.f32 %v6902, -0.001358992
  %v6904 = vadd.f32 %v6903, 0.041655596
  %v6905 = vmul.f32 %v6902, %v6904
  %v6906 = vadd.f32 %v6905, -0.4999988
  %v6907 = vmul.f32 %v6902, %v6906
  %v6908 = vadd.f32 1.0, %v6907
  %v6909 = vmul.f32 %v6900, %v6900
  %v6910 = vmul.f32 %v6909, -0.00019511016
  %v6911 = vadd.f32 %v6910, 0.008332121
  %v6912 = vmul.f32 %v6909, %v6911
  %v6913 = vadd.f32 %v6912, -0.16666654
  %v6914 = vmul.f32 %v6909, %v6913
  %v6915 = vadd.f32 %v6914, 1.0
  %v6916 = vmul.f32 %v6915, %v6900
  %vm6917 = vweird.f32 %v1654
  %v6918 = vadd.s32 %v6901, 3
  %v6919 = vand.u32 %v6918, 3
  %vm6920 = vcmp.lt.s32.totalorder %v6919, 2
  %vm6921 = vcmp.eq.s32.totalorder %v6919, 0
  %v6922 = vxor.u32 %v6916, 2147483648
  %v6923 = vsel %vm6921, %v6908, %v6922
  %vm6924 = vcmp.eq.s32.totalorder %v6919, 2
  %v6925 = vxor.u32 %v6908, 2147483648
  %v6926 = vsel %vm6924, %v6925, %v6916
  %v6927 = vsel %vm6920, %v6923, %v6926
  %v6928 = vsel %vm6917, nan, %v6927
  %v6929 = vand.u32 2147483647, %v1655
  %vm6930 = vcmp.le.f32.partialorder %v6929, 0.7853982
  %vm6931 = vcmp.lt.s32.totalorder %v1655, 0
  %v6932 = vand.u32 %v1655, 2139095040
  %v6933 = vshrl.u32 %v6932, 23
  %v6934 = vsub.s32 %v6933, 127
  %v6935 = vand.u32 2147483647, %v1655
  %v6936 = vand.u32 %v6935, 8388607
  %v6937 = vor.u32 %v6936, 8388608
  %v6938 = vsub.s32 0, %v6937
  %v6939 = vadd.s32 %v6934, 1
  %vm6940 = vcmp.gt.s32.totalorder %v6939, 0
  %v6941 = vsel %vm6940, %v6939, 0
  %v6942 = vshrl.u32 %v6941, 5
  %v6943 = vand.u32 %v6941, 31
  %v6944 = vsub.s32 32, %v6943
  %v6945 = vshrl.u32 683565275, %v6944
  %v6946 = vshll.u32 683565275, %v6943
  %v6947 = vshrl.u32 2475754826, %v6944
  %v6948 = vor.u32 %v6946, %v6947
  %v6949 = vshll.u32 2475754826, %v6943
  %v6950 = vshrl.u32 2131351028, %v6944
  %v6951 = vor.u32 %v6949, %v6950
  %v6952 = vshll.u32 2131351028, %v6943
  %v6953 = vshrl.u32 2102212464, %v6944
  %v6954 = vor.u32 %v6952, %v6953
  %v6955 = vshll.u32 2102212464, %v6943
  %v6956 = vshrl.u32 920167782, %v6944
  %v6957 = vor.u32 %v6955, %v6956
  %v6958 = vshll.u32 920167782, %v6943
  %v6959 = vshrl.u32 1326507024, %v6944
  %v6960 = vor.u32 %v6958, %v6959
  %vm6961 = vcmp.lt.s32.totalorder %v6942, 1
  %vm6962 = vcmp.lt.s32.totalorder %v6942, 2
  %vm6963 = vcmp.lt.s32.totalorder %v6942, 3
  %vm6964 = vcmp.lt.s32.totalorder %v6942, 4
  %v6965 = vsel %vm6961, %v6945, %v6948
  %v6966 = vsel %vm6964, %v6954, 2102212464
  %v6967 = vsel %vm6963, %v6951, %v6966
  %v6968 = vsel %vm6962, %v6965, %v6967
  %v6969 = vsel %vm6961, %v6948, %v6951
  %v6970 = vsel %vm6964, %v6957, 920167782
  %v6971 = vsel %vm6963, %v6954, %v6970
  %v6972 = vsel %vm6962, %v6969, %v6971
  %v6973 = vsel %vm6961, %v6951, %v6954
  %v6974 = vsel %vm6964, %v6960, 1326507024
  %v6975 = vsel %vm6963, %v6957, %v6974
  %v6976 = vsel %vm6962, %v6973, %v6975
  %v6977 = vshll.u32 %v6937, 8
  %v6978 = vand.u32 %v6977, 65535
  %v6979 = vshrl.u32 %v6977, 16
  %v6980 = vand.u32 %v6976, 65535
  %v6981 = vshrl.u32 %v6976, 16
  %v6982 = vmul.u32 %v6978, %v6980
  %v6983 = vmul.u32 %v6978, %v6981
  %v6984 = vmul.u32 %v6979, %v6980
  %v6985 = vmul.u32 %v6979, %v6981
  %v6986 = vshll.u32 %v6983, 16
  %v6987 = vshrl.u32 %v6983, 16
  %v6988 = vshll.u32 %v6984, 16
  %v6989 = vshrl.u32 %v6984, 16
  %vm6990 = vc.u32 %v6982, %v6986
  %v6991 = vsel %vm6990, 1, 0
  %v6992 = vadd.s32 %v6982, %v6986
  %v6993 = vadd.s32 %v6985, %v6991
  %vm6994 = vc.u32 %v6992, %v6988
  %v6995 = vsel %vm6994, 1, 0
  %v6996 = vadd.s32 %v6992, %v6988
  %v6997 = vadd.s32 %v6993, %v6995
  %v6998 = vadd.s32 %v6997, %v6987
  %v6999 = vadd.s32 %v6998, %v6989
  %v7000 = vand.u32 %v6977, 65535
  %v7001 = vshrl.u32 %v6977, 16
  %v7002 = vand.u32 %v6972, 65535
  %v7003 = vshrl.u32 %v6972, 16
  %v7004 = vmul.u32 %v7000, %v7002
  %v7005 = vmul.u32 %v7000, %v7003
  %v7006 = vmul.u32 %v7001, %v7002
  %v7007 = vmul.u32 %v7001, %v7003
  %v7008 = vshll.u32 %v7005, 16
  %v7009 = vshrl.u32 %v7005, 16
  %v7010 = vshll.u32 %v7006, 16
  %v7011 = vshrl.u32 %v7006, 16
  %vm7012 = vc.u32 %v7004, %v7008
  %v7013 = vsel %vm7012, 1, 0
  %v7014 = vadd.s32 %v7004, %v7008
  %v7015 = vadd.s32 %v7007, %v7013
  %vm7016 = vc.u32 %v7014, %v7010
  %v7017 = vsel %vm7016, 1, 0
  %v7018 = vadd.s32 %v7014, %v7010
  %v7019 = vadd.s32 %v7015, %v7017
  %v7020 = vadd.s32 %v7019, %v7009
  %v7021 = vadd.s32 %v7020, %v7011
  %v7022 = vmul.u32 %v6977, %v6968
  %v7023 = vadd.s32 %v6999, %v7018
  %vm7024 = vc.u32 %v6999, %v7018
  %v7025 = vadd.s32 %v7021, 1
  %v7026 = vsel %vm7024, %v7025, %v7021
  %v7027 = vadd.s32 %v7022, %v7026
  %v7028 = vadd.s32 %v7027, 536870912
  %v7029 = vshrl.u32 %v7028, 30
  %v7030 = vshll.u32 %v7029, 30
  %v7031 = vsub.s32 %v7027, %v7030
  %vm7032 = vcmp.lt.s32.totalorder %v7031, 0
  %v7033 = vsub.s32 0, %v7031
  %v7034 = vsel %vm7032, %v7033, %v7031
  %v7035 = vclz %v7034
  %v7036 = vsub.s32 %v7035, 2
  %vm7037 = vcmp.gt.s32.totalorder 0, %v7036
  %v7038 = vsel %vm7037, 0, %v7036
  %v7039 = vsub.s32 32, %v7038
  %v7040 = vshll.u32 %v7031, %v7038
  %v7041 = vshrl.u32 %v7023, %v7039
  %v7042 = vor.u32 %v7040, %v7041
  %v7043 = vsub.s32 4294967266, %v7038
  %v7044 = vadd.s32 %v7043, 127
  %v7045 = vshll.u32 %v7044, 23
  %v7046 = vor.u32 4788187, %v7045
  %v7047 = vand.u32 2147483647, %v7046
  %v7049 = vcvt.s32.f32 %v7042
  %v7050 = vmul.f32 %v7049, %v7047
  %v7051 = vxor.u32 %v7050, 2147483648
  %v7052 = vsel %vm6931, %v7051, %v7050
  %v7053 = vsub.s32 4, %v7029
  %v7054 = vsel %vm6931, %v7053, %v7029
  %v7055 = vsel %vm6930, %v1655, %v7052
  %v7056 = vsel %vm6930, 0, %v7054
  %v7057 = vmul.f32 %v7055, %v7055
  %v7058 = vmul.f32 %v7057, -0.001358992
  %v7059 = vadd.f32 %v7058, 0.041655596
  %v7060 = vmul.f32 %v7057, %v7059
  %v7061 = vadd.f32 %v7060, -0.4999988
  %v7062 = vmul.f32 %v7057, %v7061
  %v7063 = vadd.f32 1.0, %v7062
  %v7064 = vmul.f32 %v7055, %v7055
  %v7065 = vmul.f32 %v7064, -0.00019511016
  %v7066 = vadd.f32 %v7065, 0.008332121
  %v7067 = vmul.f32 %v7064, %v7066
  %v7068 = vadd.f32 %v7067, -0.16666654
  %v7069 = vmul.f32 %v7064, %v7068
  %v7070 = vadd.f32 %v7069, 1.0
  %v7071 = vmul.f32 %v7070, %v7055
  %vm7072 = vweird.f32 %v1655
  %v7073 = vadd.s32 %v7056, 3
  %v7074 = vand.u32 %v7073, 3
  %vm7075 = vcmp.lt.s32.totalorder %v7074, 2
  %vm7076 = vcmp.eq.s32.totalorder %v7074, 0
  %v7077 = vxor.u32 %v7071, 2147483648
  %v7078 = vsel %vm7076, %v7063, %v7077
  %vm7079 = vcmp.eq.s32.totalorder %v7074, 2
  %v7080 = vxor.u32 %v7063, 2147483648
  %v7081 = vsel %vm7079, %v7080, %v7071
  %v7082 = vsel %vm7075, %v7078, %v7081
  %v7083 = vsel %vm7072, nan, %v7082
  %v7084 = vand.u32 2147483647, %v1656
  %vm7085 = vcmp.le.f32.partialorder %v7084, 0.7853982
  %vm7086 = vcmp.lt.s32.totalorder %v1656, 0
  %v7087 = vand.u32 %v1656, 2139095040
  %v7088 = vshrl.u32 %v7087, 23
  %v7089 = vsub.s32 %v7088, 127
  %v7090 = vand.u32 2147483647, %v1656
  %v7091 = vand.u32 %v7090, 8388607
  %v7092 = vor.u32 %v7091, 8388608
  %v7093 = vsub.s32 0, %v7092
  %v7094 = vadd.s32 %v7089, 1
  %vm7095 = vcmp.gt.s32.totalorder %v7094, 0
  %v7096 = vsel %vm7095, %v7094, 0
  %v7097 = vshrl.u32 %v7096, 5
  %v7098 = vand.u32 %v7096, 31
  %v7099 = vsub.s32 32, %v7098
  %v7100 = vshrl.u32 683565275, %v7099
  %v7101 = vshll.u32 683565275, %v7098
  %v7102 = vshrl.u32 2475754826, %v7099
  %v7103 = vor.u32 %v7101, %v7102
  %v7104 = vshll.u32 2475754826, %v7098
  %v7105 = vshrl.u32 2131351028, %v7099
  %v7106 = vor.u32 %v7104, %v7105
  %v7107 = vshll.u32 2131351028, %v7098
  %v7108 = vshrl.u32 2102212464, %v7099
  %v7109 = vor.u32 %v7107, %v7108
  %v7110 = vshll.u32 2102212464, %v7098
  %v7111 = vshrl.u32 920167782, %v7099
  %v7112 = vor.u32 %v7110, %v7111
  %v7113 = vshll.u32 920167782, %v7098
  %v7114 = vshrl.u32 1326507024, %v7099
  %v7115 = vor.u32 %v7113, %v7114
  %vm7116 = vcmp.lt.s32.totalorder %v7097, 1
  %vm7117 = vcmp.lt.s32.totalorder %v7097, 2
  %vm7118 = vcmp.lt.s32.totalorder %v7097, 3
  %vm7119 = vcmp.lt.s32.totalorder %v7097, 4
  %v7120 = vsel %vm7116, %v7100, %v7103
  %v7121 = vsel %vm7119, %v7109, 2102212464
  %v7122 = vsel %vm7118, %v7106, %v7121
  %v7123 = vsel %vm7117, %v7120, %v7122
  %v7124 = vsel %vm7116, %v7103, %v7106
  %v7125 = vsel %vm7119, %v7112, 920167782
  %v7126 = vsel %vm7118, %v7109, %v7125
  %v7127 = vsel %vm7117, %v7124, %v7126
  %v7128 = vsel %vm7116, %v7106, %v7109
  %v7129 = vsel %vm7119, %v7115, 1326507024
  %v7130 = vsel %vm7118, %v7112, %v7129
  %v7131 = vsel %vm7117, %v7128, %v7130
  %v7132 = vshll.u32 %v7092, 8
  %v7133 = vand.u32 %v7132, 65535
  %v7134 = vshrl.u32 %v7132, 16
  %v7135 = vand.u32 %v7131, 65535
  %v7136 = vshrl.u32 %v7131, 16
  %v7137 = vmul.u32 %v7133, %v7135
  %v7138 = vmul.u32 %v7133, %v7136
  %v7139 = vmul.u32 %v7134, %v7135
  %v7140 = vmul.u32 %v7134, %v7136
  %v7141 = vshll.u32 %v7138, 16
  %v7142 = vshrl.u32 %v7138, 16
  %v7143 = vshll.u32 %v7139, 16
  %v7144 = vshrl.u32 %v7139, 16
  %vm7145 = vc.u32 %v7137, %v7141
  %v7146 = vsel %vm7145, 1, 0
  %v7147 = vadd.s32 %v7137, %v7141
  %v7148 = vadd.s32 %v7140, %v7146
  %vm7149 = vc.u32 %v7147, %v7143
  %v7150 = vsel %vm7149, 1, 0
  %v7151 = vadd.s32 %v7147, %v7143
  %v7152 = vadd.s32 %v7148, %v7150
  %v7153 = vadd.s32 %v7152, %v7142
  %v7154 = vadd.s32 %v7153, %v7144
  %v7155 = vand.u32 %v7132, 65535
  %v7156 = vshrl.u32 %v7132, 16
  %v7157 = vand.u32 %v7127, 65535
  %v7158 = vshrl.u32 %v7127, 16
  %v7159 = vmul.u32 %v7155, %v7157
  %v7160 = vmul.u32 %v7155, %v7158
  %v7161 = vmul.u32 %v7156, %v7157
  %v7162 = vmul.u32 %v7156, %v7158
  %v7163 = vshll.u32 %v7160, 16
  %v7164 = vshrl.u32 %v7160, 16
  %v7165 = vshll.u32 %v7161, 16
  %v7166 = vshrl.u32 %v7161, 16
  %vm7167 = vc.u32 %v7159, %v7163
  %v7168 = vsel %vm7167, 1, 0
  %v7169 = vadd.s32 %v7159, %v7163
  %v7170 = vadd.s32 %v7162, %v7168
  %vm7171 = vc.u32 %v7169, %v7165
  %v7172 = vsel %vm7171, 1, 0
  %v7173 = vadd.s32 %v7169, %v7165
  %v7174 = vadd.s32 %v7170, %v7172
  %v7175 = vadd.s32 %v7174, %v7164
  %v7176 = vadd.s32 %v7175, %v7166
  %v7177 = vmul.u32 %v7132, %v7123
  %v7178 = vadd.s32 %v7154, %v7173
  %vm7179 = vc.u32 %v7154, %v7173
  %v7180 = vadd.s32 %v7176, 1
  %v7181 = vsel %vm7179, %v7180, %v7176
  %v7182 = vadd.s32 %v7177, %v7181
  %v7183 = vadd.s32 %v7182, 536870912
  %v7184 = vshrl.u32 %v7183, 30
  %v7185 = vshll.u32 %v7184, 30
  %v7186 = vsub.s32 %v7182, %v7185
  %vm7187 = vcmp.lt.s32.totalorder %v7186, 0
  %v7188 = vsub.s32 0, %v7186
  %v7189 = vsel %vm7187, %v7188, %v7186
  %v7190 = vclz %v7189
  %v7191 = vsub.s32 %v7190, 2
  %vm7192 = vcmp.gt.s32.totalorder 0, %v7191
  %v7193 = vsel %vm7192, 0, %v7191
  %v7194 = vsub.s32 32, %v7193
  %v7195 = vshll.u32 %v7186, %v7193
  %v7196 = vshrl.u32 %v7178, %v7194
  %v7197 = vor.u32 %v7195, %v7196
  %v7198 = vsub.s32 4294967266, %v7193
  %v7199 = vadd.s32 %v7198, 127
  %v7200 = vshll.u32 %v7199, 23
  %v7201 = vor.u32 4788187, %v7200
  %v7202 = vand.u32 2147483647, %v7201
  %v7204 = vcvt.s32.f32 %v7197
  %v7205 = vmul.f32 %v7204, %v7202
  %v7206 = vxor.u32 %v7205, 2147483648
  %v7207 = vsel %vm7086, %v7206, %v7205
  %v7208 = vsub.s32 4, %v7184
  %v7209 = vsel %vm7086, %v7208, %v7184
  %v7210 = vsel %vm7085, %v1656, %v7207
  %v7211 = vsel %vm7085, 0, %v7209
  %v7212 = vmul.f32 %v7210, %v7210
  %v7213 = vmul.f32 %v7212, -0.001358992
  %v7214 = vadd.f32 %v7213, 0.041655596
  %v7215 = vmul.f32 %v7212, %v7214
  %v7216 = vadd.f32 %v7215, -0.4999988
  %v7217 = vmul.f32 %v7212, %v7216
  %v7218 = vadd.f32 1.0, %v7217
  %v7219 = vmul.f32 %v7210, %v7210
  %v7220 = vmul.f32 %v7219, -0.00019511016
  %v7221 = vadd.f32 %v7220, 0.008332121
  %v7222 = vmul.f32 %v7219, %v7221
  %v7223 = vadd.f32 %v7222, -0.16666654
  %v7224 = vmul.f32 %v7219, %v7223
  %v7225 = vadd.f32 %v7224, 1.0
  %v7226 = vmul.f32 %v7225, %v7210
  %vm7227 = vweird.f32 %v1656
  %v7228 = vadd.s32 %v7211, 3
  %v7229 = vand.u32 %v7228, 3
  %vm7230 = vcmp.lt.s32.totalorder %v7229, 2
  %vm7231 = vcmp.eq.s32.totalorder %v7229, 0
  %v7232 = vxor.u32 %v7226, 2147483648
  %v7233 = vsel %vm7231, %v7218, %v7232
  %vm7234 = vcmp.eq.s32.totalorder %v7229, 2
  %v7235 = vxor.u32 %v7218, 2147483648
  %v7236 = vsel %vm7234, %v7235, %v7226
  %v7237 = vsel %vm7230, %v7233, %v7236
  %v7238 = vsel %vm7227, nan, %v7237
  %v7239 = vand.u32 2147483647, %v1657
  %vm7240 = vcmp.le.f32.partialorder %v7239, 0.7853982
  %vm7241 = vcmp.lt.s32.totalorder %v1657, 0
  %v7242 = vand.u32 %v1657, 2139095040
  %v7243 = vshrl.u32 %v7242, 23
  %v7244 = vsub.s32 %v7243, 127
  %v7245 = vand.u32 2147483647, %v1657
  %v7246 = vand.u32 %v7245, 8388607
  %v7247 = vor.u32 %v7246, 8388608
  %v7248 = vsub.s32 0, %v7247
  %v7249 = vadd.s32 %v7244, 1
  %vm7250 = vcmp.gt.s32.totalorder %v7249, 0
  %v7251 = vsel %vm7250, %v7249, 0
  %v7252 = vshrl.u32 %v7251, 5
  %v7253 = vand.u32 %v7251, 31
  %v7254 = vsub.s32 32, %v7253
  %v7255 = vshrl.u32 683565275, %v7254
  %v7256 = vshll.u32 683565275, %v7253
  %v7257 = vshrl.u32 2475754826, %v7254
  %v7258 = vor.u32 %v7256, %v7257
  %v7259 = vshll.u32 2475754826, %v7253
  %v7260 = vshrl.u32 2131351028, %v7254
  %v7261 = vor.u32 %v7259, %v7260
  %v7262 = vshll.u32 2131351028, %v7253
  %v7263 = vshrl.u32 2102212464, %v7254
  %v7264 = vor.u32 %v7262, %v7263
  %v7265 = vshll.u32 2102212464, %v7253
  %v7266 = vshrl.u32 920167782, %v7254
  %v7267 = vor.u32 %v7265, %v7266
  %v7268 = vshll.u32 920167782, %v7253
  %v7269 = vshrl.u32 1326507024, %v7254
  %v7270 = vor.u32 %v7268, %v7269
  %vm7271 = vcmp.lt.s32.totalorder %v7252, 1
  %vm7272 = vcmp.lt.s32.totalorder %v7252, 2
  %vm7273 = vcmp.lt.s32.totalorder %v7252, 3
  %vm7274 = vcmp.lt.s32.totalorder %v7252, 4
  %v7275 = vsel %vm7271, %v7255, %v7258
  %v7276 = vsel %vm7274, %v7264, 2102212464
  %v7277 = vsel %vm7273, %v7261, %v7276
  %v7278 = vsel %vm7272, %v7275, %v7277
  %v7279 = vsel %vm7271, %v7258, %v7261
  %v7280 = vsel %vm7274, %v7267, 920167782
  %v7281 = vsel %vm7273, %v7264, %v7280
  %v7282 = vsel %vm7272, %v7279, %v7281
  %v7283 = vsel %vm7271, %v7261, %v7264
  %v7284 = vsel %vm7274, %v7270, 1326507024
  %v7285 = vsel %vm7273, %v7267, %v7284
  %v7286 = vsel %vm7272, %v7283, %v7285
  %v7287 = vshll.u32 %v7247, 8
  %v7288 = vand.u32 %v7287, 65535
  %v7289 = vshrl.u32 %v7287, 16
  %v7290 = vand.u32 %v7286, 65535
  %v7291 = vshrl.u32 %v7286, 16
  %v7292 = vmul.u32 %v7288, %v7290
  %v7293 = vmul.u32 %v7288, %v7291
  %v7294 = vmul.u32 %v7289, %v7290
  %v7295 = vmul.u32 %v7289, %v7291
  %v7296 = vshll.u32 %v7293, 16
  %v7297 = vshrl.u32 %v7293, 16
  %v7298 = vshll.u32 %v7294, 16
  %v7299 = vshrl.u32 %v7294, 16
  %vm7300 = vc.u32 %v7292, %v7296
  %v7301 = vsel %vm7300, 1, 0
  %v7302 = vadd.s32 %v7292, %v7296
  %v7303 = vadd.s32 %v7295, %v7301
  %vm7304 = vc.u32 %v7302, %v7298
  %v7305 = vsel %vm7304, 1, 0
  %v7306 = vadd.s32 %v7302, %v7298
  %v7307 = vadd.s32 %v7303, %v7305
  %v7308 = vadd.s32 %v7307, %v7297
  %v7309 = vadd.s32 %v7308, %v7299
  %v7310 = vand.u32 %v7287, 65535
  %v7311 = vshrl.u32 %v7287, 16
  %v7312 = vand.u32 %v7282, 65535
  %v7313 = vshrl.u32 %v7282, 16
  %v7314 = vmul.u32 %v7310, %v7312
  %v7315 = vmul.u32 %v7310, %v7313
  %v7316 = vmul.u32 %v7311, %v7312
  %v7317 = vmul.u32 %v7311, %v7313
  %v7318 = vshll.u32 %v7315, 16
  %v7319 = vshrl.u32 %v7315, 16
  %v7320 = vshll.u32 %v7316, 16
  %v7321 = vshrl.u32 %v7316, 16
  %vm7322 = vc.u32 %v7314, %v7318
  %v7323 = vsel %vm7322, 1, 0
  %v7324 = vadd.s32 %v7314, %v7318
  %v7325 = vadd.s32 %v7317, %v7323
  %vm7326 = vc.u32 %v7324, %v7320
  %v7327 = vsel %vm7326, 1, 0
  %v7328 = vadd.s32 %v7324, %v7320
  %v7329 = vadd.s32 %v7325, %v7327
  %v7330 = vadd.s32 %v7329, %v7319
  %v7331 = vadd.s32 %v7330, %v7321
  %v7332 = vmul.u32 %v7287, %v7278
  %v7333 = vadd.s32 %v7309, %v7328
  %vm7334 = vc.u32 %v7309, %v7328
  %v7335 = vadd.s32 %v7331, 1
  %v7336 = vsel %vm7334, %v7335, %v7331
  %v7337 = vadd.s32 %v7332, %v7336
  %v7338 = vadd.s32 %v7337, 536870912
  %v7339 = vshrl.u32 %v7338, 30
  %v7340 = vshll.u32 %v7339, 30
  %v7341 = vsub.s32 %v7337, %v7340
  %vm7342 = vcmp.lt.s32.totalorder %v7341, 0
  %v7343 = vsub.s32 0, %v7341
  %v7344 = vsel %vm7342, %v7343, %v7341
  %v7345 = vclz %v7344
  %v7346 = vsub.s32 %v7345, 2
  %vm7347 = vcmp.gt.s32.totalorder 0, %v7346
  %v7348 = vsel %vm7347, 0, %v7346
  %v7349 = vsub.s32 32, %v7348
  %v7350 = vshll.u32 %v7341, %v7348
  %v7351 = vshrl.u32 %v7333, %v7349
  %v7352 = vor.u32 %v7350, %v7351
  %v7353 = vsub.s32 4294967266, %v7348
  %v7354 = vadd.s32 %v7353, 127
  %v7355 = vshll.u32 %v7354, 23
  %v7356 = vor.u32 4788187, %v7355
  %v7357 = vand.u32 2147483647, %v7356
  %v7359 = vcvt.s32.f32 %v7352
  %v7360 = vmul.f32 %v7359, %v7357
  %v7361 = vxor.u32 %v7360, 2147483648
  %v7362 = vsel %vm7241, %v7361, %v7360
  %v7363 = vsub.s32 4, %v7339
  %v7364 = vsel %vm7241, %v7363, %v7339
  %v7365 = vsel %vm7240, %v1657, %v7362
  %v7366 = vsel %vm7240, 0, %v7364
  %v7367 = vmul.f32 %v7365, %v7365
  %v7368 = vmul.f32 %v7367, -0.001358992
  %v7369 = vadd.f32 %v7368, 0.041655596
  %v7370 = vmul.f32 %v7367, %v7369
  %v7371 = vadd.f32 %v7370, -0.4999988
  %v7372 = vmul.f32 %v7367, %v7371
  %v7373 = vadd.f32 1.0, %v7372
  %v7374 = vmul.f32 %v7365, %v7365
  %v7375 = vmul.f32 %v7374, -0.00019511016
  %v7376 = vadd.f32 %v7375, 0.008332121
  %v7377 = vmul.f32 %v7374, %v7376
  %v7378 = vadd.f32 %v7377, -0.16666654
  %v7379 = vmul.f32 %v7374, %v7378
  %v7380 = vadd.f32 %v7379, 1.0
  %v7381 = vmul.f32 %v7380, %v7365
  %vm7382 = vweird.f32 %v1657
  %v7383 = vadd.s32 %v7366, 3
  %v7384 = vand.u32 %v7383, 3
  %vm7385 = vcmp.lt.s32.totalorder %v7384, 2
  %vm7386 = vcmp.eq.s32.totalorder %v7384, 0
  %v7387 = vxor.u32 %v7381, 2147483648
  %v7388 = vsel %vm7386, %v7373, %v7387
  %vm7389 = vcmp.eq.s32.totalorder %v7384, 2
  %v7390 = vxor.u32 %v7373, 2147483648
  %v7391 = vsel %vm7389, %v7390, %v7381
  %v7392 = vsel %vm7385, %v7388, %v7391
  %v7393 = vsel %vm7382, nan, %v7392
  %v7394 = vand.u32 2147483647, %v1658
  %vm7395 = vcmp.le.f32.partialorder %v7394, 0.7853982
  %vm7396 = vcmp.lt.s32.totalorder %v1658, 0
  %v7397 = vand.u32 %v1658, 2139095040
  %v7398 = vshrl.u32 %v7397, 23
  %v7399 = vsub.s32 %v7398, 127
  %v7400 = vand.u32 2147483647, %v1658
  %v7401 = vand.u32 %v7400, 8388607
  %v7402 = vor.u32 %v7401, 8388608
  %v7403 = vsub.s32 0, %v7402
  %v7404 = vadd.s32 %v7399, 1
  %vm7405 = vcmp.gt.s32.totalorder %v7404, 0
  %v7406 = vsel %vm7405, %v7404, 0
  %v7407 = vshrl.u32 %v7406, 5
  %v7408 = vand.u32 %v7406, 31
  %v7409 = vsub.s32 32, %v7408
  %v7410 = vshrl.u32 683565275, %v7409
  %v7411 = vshll.u32 683565275, %v7408
  %v7412 = vshrl.u32 2475754826, %v7409
  %v7413 = vor.u32 %v7411, %v7412
  %v7414 = vshll.u32 2475754826, %v7408
  %v7415 = vshrl.u32 2131351028, %v7409
  %v7416 = vor.u32 %v7414, %v7415
  %v7417 = vshll.u32 2131351028, %v7408
  %v7418 = vshrl.u32 2102212464, %v7409
  %v7419 = vor.u32 %v7417, %v7418
  %v7420 = vshll.u32 2102212464, %v7408
  %v7421 = vshrl.u32 920167782, %v7409
  %v7422 = vor.u32 %v7420, %v7421
  %v7423 = vshll.u32 920167782, %v7408
  %v7424 = vshrl.u32 1326507024, %v7409
  %v7425 = vor.u32 %v7423, %v7424
  %vm7426 = vcmp.lt.s32.totalorder %v7407, 1
  %vm7427 = vcmp.lt.s32.totalorder %v7407, 2
  %vm7428 = vcmp.lt.s32.totalorder %v7407, 3
  %vm7429 = vcmp.lt.s32.totalorder %v7407, 4
  %v7430 = vsel %vm7426, %v7410, %v7413
  %v7431 = vsel %vm7429, %v7419, 2102212464
  %v7432 = vsel %vm7428, %v7416, %v7431
  %v7433 = vsel %vm7427, %v7430, %v7432
  %v7434 = vsel %vm7426, %v7413, %v7416
  %v7435 = vsel %vm7429, %v7422, 920167782
  %v7436 = vsel %vm7428, %v7419, %v7435
  %v7437 = vsel %vm7427, %v7434, %v7436
  %v7438 = vsel %vm7426, %v7416, %v7419
  %v7439 = vsel %vm7429, %v7425, 1326507024
  %v7440 = vsel %vm7428, %v7422, %v7439
  %v7441 = vsel %vm7427, %v7438, %v7440
  %v7442 = vshll.u32 %v7402, 8
  %v7443 = vand.u32 %v7442, 65535
  %v7444 = vshrl.u32 %v7442, 16
  %v7445 = vand.u32 %v7441, 65535
  %v7446 = vshrl.u32 %v7441, 16
  %v7447 = vmul.u32 %v7443, %v7445
  %v7448 = vmul.u32 %v7443, %v7446
  %v7449 = vmul.u32 %v7444, %v7445
  %v7450 = vmul.u32 %v7444, %v7446
  %v7451 = vshll.u32 %v7448, 16
  %v7452 = vshrl.u32 %v7448, 16
  %v7453 = vshll.u32 %v7449, 16
  %v7454 = vshrl.u32 %v7449, 16
  %vm7455 = vc.u32 %v7447, %v7451
  %v7456 = vsel %vm7455, 1, 0
  %v7457 = vadd.s32 %v7447, %v7451
  %v7458 = vadd.s32 %v7450, %v7456
  %vm7459 = vc.u32 %v7457, %v7453
  %v7460 = vsel %vm7459, 1, 0
  %v7461 = vadd.s32 %v7457, %v7453
  %v7462 = vadd.s32 %v7458, %v7460
  %v7463 = vadd.s32 %v7462, %v7452
  %v7464 = vadd.s32 %v7463, %v7454
  %v7465 = vand.u32 %v7442, 65535
  %v7466 = vshrl.u32 %v7442, 16
  %v7467 = vand.u32 %v7437, 65535
  %v7468 = vshrl.u32 %v7437, 16
  %v7469 = vmul.u32 %v7465, %v7467
  %v7470 = vmul.u32 %v7465, %v7468
  %v7471 = vmul.u32 %v7466, %v7467
  %v7472 = vmul.u32 %v7466, %v7468
  %v7473 = vshll.u32 %v7470, 16
  %v7474 = vshrl.u32 %v7470, 16
  %v7475 = vshll.u32 %v7471, 16
  %v7476 = vshrl.u32 %v7471, 16
  %vm7477 = vc.u32 %v7469, %v7473
  %v7478 = vsel %vm7477, 1, 0
  %v7479 = vadd.s32 %v7469, %v7473
  %v7480 = vadd.s32 %v7472, %v7478
  %vm7481 = vc.u32 %v7479, %v7475
  %v7482 = vsel %vm7481, 1, 0
  %v7483 = vadd.s32 %v7479, %v7475
  %v7484 = vadd.s32 %v7480, %v7482
  %v7485 = vadd.s32 %v7484, %v7474
  %v7486 = vadd.s32 %v7485, %v7476
  %v7487 = vmul.u32 %v7442, %v7433
  %v7488 = vadd.s32 %v7464, %v7483
  %vm7489 = vc.u32 %v7464, %v7483
  %v7490 = vadd.s32 %v7486, 1
  %v7491 = vsel %vm7489, %v7490, %v7486
  %v7492 = vadd.s32 %v7487, %v7491
  %v7493 = vadd.s32 %v7492, 536870912
  %v7494 = vshrl.u32 %v7493, 30
  %v7495 = vshll.u32 %v7494, 30
  %v7496 = vsub.s32 %v7492, %v7495
  %vm7497 = vcmp.lt.s32.totalorder %v7496, 0
  %v7498 = vsub.s32 0, %v7496
  %v7499 = vsel %vm7497, %v7498, %v7496
  %v7500 = vclz %v7499
  %v7501 = vsub.s32 %v7500, 2
  %vm7502 = vcmp.gt.s32.totalorder 0, %v7501
  %v7503 = vsel %vm7502, 0, %v7501
  %v7504 = vsub.s32 32, %v7503
  %v7505 = vshll.u32 %v7496, %v7503
  %v7506 = vshrl.u32 %v7488, %v7504
  %v7507 = vor.u32 %v7505, %v7506
  %v7508 = vsub.s32 4294967266, %v7503
  %v7509 = vadd.s32 %v7508, 127
  %v7510 = vshll.u32 %v7509, 23
  %v7511 = vor.u32 4788187, %v7510
  %v7512 = vand.u32 2147483647, %v7511
  %v7514 = vcvt.s32.f32 %v7507
  %v7515 = vmul.f32 %v7514, %v7512
  %v7516 = vxor.u32 %v7515, 2147483648
  %v7517 = vsel %vm7396, %v7516, %v7515
  %v7518 = vsub.s32 4, %v7494
  %v7519 = vsel %vm7396, %v7518, %v7494
  %v7520 = vsel %vm7395, %v1658, %v7517
  %v7521 = vsel %vm7395, 0, %v7519
  %v7522 = vmul.f32 %v7520, %v7520
  %v7523 = vmul.f32 %v7522, -0.001358992
  %v7524 = vadd.f32 %v7523, 0.041655596
  %v7525 = vmul.f32 %v7522, %v7524
  %v7526 = vadd.f32 %v7525, -0.4999988
  %v7527 = vmul.f32 %v7522, %v7526
  %v7528 = vadd.f32 1.0, %v7527
  %v7529 = vmul.f32 %v7520, %v7520
  %v7530 = vmul.f32 %v7529, -0.00019511016
  %v7531 = vadd.f32 %v7530, 0.008332121
  %v7532 = vmul.f32 %v7529, %v7531
  %v7533 = vadd.f32 %v7532, -0.16666654
  %v7534 = vmul.f32 %v7529, %v7533
  %v7535 = vadd.f32 %v7534, 1.0
  %v7536 = vmul.f32 %v7535, %v7520
  %vm7537 = vweird.f32 %v1658
  %v7538 = vadd.s32 %v7521, 3
  %v7539 = vand.u32 %v7538, 3
  %vm7540 = vcmp.lt.s32.totalorder %v7539, 2
  %vm7541 = vcmp.eq.s32.totalorder %v7539, 0
  %v7542 = vxor.u32 %v7536, 2147483648
  %v7543 = vsel %vm7541, %v7528, %v7542
  %vm7544 = vcmp.eq.s32.totalorder %v7539, 2
  %v7545 = vxor.u32 %v7528, 2147483648
  %v7546 = vsel %vm7544, %v7545, %v7536
  %v7547 = vsel %vm7540, %v7543, %v7546
  %v7548 = vsel %vm7537, nan, %v7547
  %vm7549 = vcmask 490496
  %7550 = vst.msk [vmem:[%s3] sm:$0xff] %vm7549, %v1813
  %7551 = vst.msk [vmem:[%s3 + $0x8] sm:$0xff] %vm7549, %v1968
  %7552 = vst.msk [vmem:[%s3 + $0x10] sm:$0xff] %vm7549, %v2123
  %7553 = vst.msk [vmem:[%s3 + $0x18] sm:$0xff] %vm7549, %v2278
  %7554 = vst.msk [vmem:[%s3 + $0x20] sm:$0xff] %vm7549, %v2433
  %7555 = vst.msk [vmem:[%s3 + $0x28] sm:$0xff] %vm7549, %v2588
  %7556 = vst.msk [vmem:[%s3 + $0x30] sm:$0xff] %vm7549, %v2743
  %7557 = vst.msk [vmem:[%s3 + $0x38] sm:$0xff] %vm7549, %v2898
  %7558 = vst.msk [vmem:[%s3 + $0x40] sm:$0xff] %vm7549, %v3053
  %7559 = vst.msk [vmem:[%s3 + $0x48] sm:$0xff] %vm7549, %v3208
  %7560 = vst.msk [vmem:[%s3 + $0x50] sm:$0xff] %vm7549, %v3363
  %7561 = vst.msk [vmem:[%s3 + $0x58] sm:$0xff] %vm7549, %v3518
  %7562 = vst.msk [vmem:[%s3 + $0x60] sm:$0xff] %vm7549, %v3673
  %7563 = vst.msk [vmem:[%s3 + $0x68] sm:$0xff] %vm7549, %v3828
  %7564 = vst.msk [vmem:[%s3 + $0x70] sm:$0xff] %vm7549, %v3983
  %7565 = vst.msk [vmem:[%s3 + $0x78] sm:$0xff] %vm7549, %v4138
  %7566 = vst.msk [vmem:[%s3 + $0x80] sm:$0xff] %vm7549, %v4293
  %7567 = vst.msk [vmem:[%s3 + $0x88] sm:$0xff] %vm7549, %v4448
  %7568 = vst.msk [vmem:[%s3 + $0x90] sm:$0xff] %vm7549, %v4603
  %7569 = vst.msk [vmem:[%s3 + $0x98] sm:$0xff] %vm7549, %v4758
  %7570 = vst.msk [vmem:[%s3 + $0xa0] sm:$0xff] %vm7549, %v4913
  %7571 = vst.msk [vmem:[%s3 + $0xa8] sm:$0xff] %vm7549, %v5068
  %7572 = vst.msk [vmem:[%s3 + $0xb0] sm:$0xff] %vm7549, %v5223
  %7573 = vst.msk [vmem:[%s3 + $0xb8] sm:$0xff] %vm7549, %v5378
  %7574 = vst.msk [vmem:[%s3 + $0xc0] sm:$0xff] %vm7549, %v5533
  %7575 = vst.msk [vmem:[%s3 + $0xc8] sm:$0xff] %vm7549, %v5688
  %7576 = vst.msk [vmem:[%s3 + $0xd0] sm:$0xff] %vm7549, %v5843
  %7577 = vst.msk [vmem:[%s3 + $0xd8] sm:$0xff] %vm7549, %v5998
  %7578 = vst.msk [vmem:[%s3 + $0xe0] sm:$0xff] %vm7549, %v6153
  %7579 = vst.msk [vmem:[%s3 + $0xe8] sm:$0xff] %vm7549, %v6308
  %7580 = vst.msk [vmem:[%s3 + $0xf0] sm:$0xff] %vm7549, %v6463
  %7581 = vst.msk [vmem:[%s3 + $0xf8] sm:$0xff] %vm7549, %v6618
  %7582 = vst.msk [vmem:[%s3 + $0x100] sm:$0xff] %vm7549, %v6773
  %7583 = vst.msk [vmem:[%s3 + $0x108] sm:$0xff] %vm7549, %v6928
  %7584 = vst.msk [vmem:[%s3 + $0x110] sm:$0xff] %vm7549, %v7083
  %7585 = vst.msk [vmem:[%s3 + $0x118] sm:$0xff] %vm7549, %v7238
  %7586 = vst.msk [vmem:[%s3 + $0x120] sm:$0xff] %vm7549, %v7393
  %7587 = vst.msk [vmem:[%s3 + $0x128] sm:$0xff] %vm7549, %v7548
  // Predicated region
  $region14: #{tpu_custom_call.1} parent=0 // pred_check
    _
  $region15: #{tpu_custom_call.1} parent=0 // pred_check_branch
    %7589 = sbr.rel (0) target = $region17
  $region16: #{tpu_custom_call.1} parent=0 // pred_region
    _
  $region17: #{tpu_custom_call.1} parent=0 // pred_fallthru
    _
  // Predicated region
  $region18: #{tpu_custom_call.1} parent=0 // pred_check
    _
  $region19: #{tpu_custom_call.1} parent=0 // pred_check_branch
    %7591 = sbr.rel (0) target = $region21
  $region20: #{tpu_custom_call.1} parent=0 // pred_region
    _
  $region21: #{tpu_custom_call.1} parent=0 // pred_fallthru
    _

</llo_original>
